<compile_context>
chip_gen: v7x
topology: tpu7x:2x2x1
jax: 0.10.0
libtpu: 0.0.40
codegen_flags: <defaults>
</compile_context>

<pallas_src>
import functools

import jax
import jax.numpy as jnp
from jax import lax
from jax.experimental import pallas as pl
from jax.experimental.pallas import tpu as pltpu

INPUT_SIZE = 257
HIDDEN = 128
IN_PAD = ((INPUT_SIZE + 127) // 128) * 128   # 384


def _sep_block_kernel(
    x_ref, h1_ref, c1_ref, h2_ref, c2_ref,
    w_ih1_ref, w_hh1_ref, b1_ref, w_cat2_ref, b2_ref, wd_ref, bd_ref,
    mask_ref, h1o_ref, c1o_ref, h2o_ref, c2o_ref,
    xproj_s, h2seq_s,
):
    T, B, _ = x_ref.shape
    H = HIDDEN
    bf = jnp.bfloat16

    # ---- hoisted, time-independent layer-1 input projection (one M=T*B matmul)
    x_flat = x_ref[...].reshape(T * B, IN_PAD)                     # bf16
    xproj = jnp.dot(x_flat, w_ih1_ref[...],
                    preferred_element_type=jnp.float32) + b1_ref[...]
    xproj_s[...] = xproj.reshape(T, B, 4 * H)

    w_hh1 = w_hh1_ref[...]                                         # (H, 4H) bf16
    w_cat2 = w_cat2_ref[...]                                       # (2H, 4H) bf16
    b2 = b2_ref[...]                                               # (B, 4H) f32

    def gate_math(gates, c):
        # PyTorch LSTM gate order i, f, g, o; f32 gate math & carried state.
        i = jax.nn.sigmoid(gates[:, 0 * H:1 * H])
        f = jax.nn.sigmoid(gates[:, 1 * H:2 * H])
        g = jnp.tanh(gates[:, 2 * H:3 * H])
        o = jax.nn.sigmoid(gates[:, 3 * H:4 * H])
        c_new = f * c + i * g
        h_new = o * jnp.tanh(c_new)
        return h_new, c_new

    def step(t, carry):
        h1, c1, h2, c2 = carry
        # layer 1: only the recurrent K=128 matmul sits on the serial path
        g1 = xproj_s[t] + jnp.dot(h1.astype(bf), w_hh1,
                                  preferred_element_type=jnp.float32)
        h1, c1 = gate_math(g1, c1)
        # layer 2: single fused matmul for input + recurrent contributions
        cat = jnp.concatenate([h1.astype(bf), h2.astype(bf)], axis=1)
        g2 = jnp.dot(cat, w_cat2, preferred_element_type=jnp.float32) + b2
        h2, c2 = gate_math(g2, c2)
        h2seq_s[t] = h2
        return (h1, c1, h2, c2)

    carry0 = (h1_ref[...], c1_ref[...], h2_ref[...], c2_ref[...])
    h1, c1, h2, c2 = lax.fori_loop(0, T, step, carry0, unroll=True)

    # ---- hoisted dense + sigmoid mask head over all frames (one M=T*B matmul)
    # TODO(synk): could emit the mask in bf16 / (B,T,F) order to also remove
    # the wrapper transpose; kept f32 (T,B,F_pad) for exact-ish comparison.
    h2_all = h2seq_s[...].reshape(T * B, H).astype(bf)
    mask = jax.nn.sigmoid(
        jnp.dot(h2_all, wd_ref[...], preferred_element_type=jnp.float32)
        + bd_ref[...])
    mask_ref[...] = mask.reshape(T, B, IN_PAD)

    h1o_ref[...] = h1
    c1o_ref[...] = c1
    h2o_ref[...] = h2
    c2o_ref[...] = c2


@functools.partial(jax.jit, static_argnames=("num_groups",))
def seperation_block_forward(x, h1_in, c1_in, h2_in, c2_in, params,
                             num_groups=1):
    """x: [B, T, 257]; h/c: [1, B, 128] (PyTorch LSTM state layout).

    Returns (mask [B, T, 257], h1, c1, h2, c2 each [1, B, 128])."""
    B, T, F = x.shape
    assert F == INPUT_SIZE
    H = HIDDEN
    assert B % num_groups == 0
    Bg = B // num_groups
    assert Bg % 8 == 0, "keep >=8 streams per group to fill vreg sublanes"

    # Time-major, lane-padded (257 -> 384), bf16 MXU operand.
    x_t = jnp.transpose(x, (1, 0, 2)).astype(jnp.bfloat16)
    x_t = jnp.pad(x_t, ((0, 0), (0, 0), (0, IN_PAD - F)))

    h1 = h1_in.reshape(B, H).astype(jnp.float32)
    c1 = c1_in.reshape(B, H).astype(jnp.float32)
    h2 = h2_in.reshape(B, H).astype(jnp.float32)
    c2 = c2_in.reshape(B, H).astype(jnp.float32)

    # Pre-broadcast the per-step layer-2 bias (JAX does not CSE broadcasts).
    b2_b = jnp.tile(params["b2"], (B, 1))

    inputs = (
        x_t, h1, c1, h2, c2,
        params["w_ih1_t"], params["w_hh1_t"], params["b1"],
        params["w_cat2"], b2_b, params["wd_t"], params["bd"],
    )

    def resident(a):
        # Whole-array block, constant index -> stays VMEM-resident.
        nd = a.ndim
        return pl.BlockSpec(a.shape, lambda g, _nd=nd: (0,) * _nd)

    state_spec = pl.BlockSpec((Bg, H), lambda g: (g, 0))

    in_specs = [
        pl.BlockSpec((T, Bg, IN_PAD), lambda g: (0, g, 0)),     # x
        state_spec, state_spec, state_spec, state_spec,         # h1,c1,h2,c2
        resident(params["w_ih1_t"]), resident(params["w_hh1_t"]),
        resident(params["b1"]), resident(params["w_cat2"]),
        pl.BlockSpec((Bg, 4 * H), lambda g: (g, 0)),            # b2 (broadcast)
        resident(params["wd_t"]), resident(params["bd"]),
    ]

    out_shape = (
        jax.ShapeDtypeStruct((T, B, IN_PAD), jnp.float32),      # mask (padded)
        jax.ShapeDtypeStruct((B, H), jnp.float32),              # h1
        jax.ShapeDtypeStruct((B, H), jnp.float32),              # c1
        jax.ShapeDtypeStruct((B, H), jnp.float32),              # h2
        jax.ShapeDtypeStruct((B, H), jnp.float32),              # c2
    )
    out_specs = (
        pl.BlockSpec((T, Bg, IN_PAD), lambda g: (0, g, 0)),
        state_spec, state_spec, state_spec, state_spec,
    )

    grid_spec = pltpu.PrefetchScalarGridSpec(
        num_scalar_prefetch=0,
        grid=(num_groups,),
        in_specs=in_specs,
        out_specs=out_specs,
        scratch_shapes=[
            pltpu.VMEM((T, Bg, 4 * H), jnp.float32),   # hoisted x@W_ih1 + b1
            pltpu.VMEM((T, Bg, H), jnp.float32),       # per-frame h2 for head
        ],
    )

    mask_pad, h1o, c1o, h2o, c2o = pl.pallas_call(
        _sep_block_kernel,
        out_shape=out_shape,
        grid_spec=grid_spec,
        compiler_params=pltpu.CompilerParams(
            dimension_semantics=("parallel",)),   # independent stream groups
    )(*inputs)

    mask = jnp.transpose(mask_pad[:, :, :F], (1, 0, 2))
    return (
        mask,
        h1o.reshape(1, B, H), c1o.reshape(1, B, H),
        h2o.reshape(1, B, H), c2o.reshape(1, B, H),
    )


def init_params(key, input_size=INPUT_SIZE, hidden=HIDDEN):
    """PyTorch-like uniform(+-1/sqrt(H)) init; weights pre-transposed to
    (in, out), feature dims zero-padded to IN_PAD, matmul weights in bf16,
    biases (b_ih + b_hh pre-summed) in f32.  Layer-2 input/recurrent weights
    are fused into one (2H, 4H) matrix."""
    ks = jax.random.split(key, 10)
    bound = 1.0 / (hidden ** 0.5)
    H4 = 4 * hidden

    def u(k, shape):
        return jax.random.uniform(k, shape, jnp.float32, -bound, bound)

    # LSTM1: W_ih [4H, F] -> (IN_PAD, 4H), W_hh [4H, H] -> (H, 4H)
    w_ih1_t = jnp.zeros((IN_PAD, H4), jnp.float32).at[:input_size].set(
        u(ks[0], (H4, input_size)).T)
    w_hh1_t = u(ks[1], (H4, hidden)).T
    b1 = u(ks[2], (1, H4)) + u(ks[3], (1, H4))
    # LSTM2: fused [W_ih2^T; W_hh2^T] -> (2H, 4H)
    w_ih2_t = u(ks[4], (H4, hidden)).T
    w_hh2_t = u(ks[5], (H4, hidden)).T
    w_cat2 = jnp.concatenate([w_ih2_t, w_hh2_t], axis=0)
    b2 = u(ks[6], (1, H4)) + u(ks[7], (1, H4))
    # Dense: weight [F, H] -> (H, F_pad), bias [F] -> (1, F_pad)
    wd_t = jnp.zeros((hidden, IN_PAD), jnp.float32).at[:, :input_size].set(
        u(ks[8], (input_size, hidden)).T)
    bd = jnp.zeros((1, IN_PAD), jnp.float32).at[:, :input_size].set(
        u(ks[9], (input_size,)))

    bf = jnp.bfloat16
    return dict(
        w_ih1_t=w_ih1_t.astype(bf), w_hh1_t=w_hh1_t.astype(bf), b1=b1,
        w_cat2=w_cat2.astype(bf), b2=b2,
        wd_t=wd_t.astype(bf), bd=bd,
    )


def _reference_forward(x, h1_in, c1_in, h2_in, c2_in, p):
    """Pure-JAX reference (bf16 matmul operands, f32 gate math / state)."""
    B, T, F = x.shape
    H = HIDDEN
    bf = jnp.bfloat16

    wi1 = p["w_ih1_t"][:F]
    wh1 = p["w_hh1_t"]
    wcat2 = p["w_cat2"]
    wd = p["wd_t"][:, :F]
    b1, b2 = p["b1"], p["b2"]
    bd = p["bd"][:, :F]

    def gate_math(g, c):
        i = jax.nn.sigmoid(g[:, :H])
        f = jax.nn.sigmoid(g[:, H:2 * H])
        gg = jnp.tanh(g[:, 2 * H:3 * H])
        o = jax.nn.sigmoid(g[:, 3 * H:])
        c_new = f * c + i * gg
        return o * jnp.tanh(c_new), c_new

    h1 = h1_in.reshape(B, H).astype(jnp.float32)
    c1 = c1_in.reshape(B, H).astype(jnp.float32)
    h2 = h2_in.reshape(B, H).astype(jnp.float32)
    c2 = c2_in.reshape(B, H).astype(jnp.float32)

    masks = []
    for t in range(T):
        xt = x[:, t, :].astype(bf)
        g1 = (jnp.dot(xt, wi1, preferred_element_type=jnp.float32)
              + jnp.dot(h1.astype(bf), wh1, preferred_element_type=jnp.float32)
              + b1)
        h1, c1 = gate_math(g1, c1)
        cat = jnp.concatenate([h1.astype(bf), h2.astype(bf)], axis=1)
        g2 = jnp.dot(cat, wcat2, preferred_element_type=jnp.float32) + b2
        h2, c2 = gate_math(g2, c2)
        masks.append(jax.nn.sigmoid(
            jnp.dot(h2.astype(bf), wd, preferred_element_type=jnp.float32) + bd))
    mask = jnp.stack(masks, axis=1)                          # (B, T, F)
    return (mask, h1.reshape(1, B, H), c1.reshape(1, B, H),
            h2.reshape(1, B, H), c2.reshape(1, B, H))


if __name__ == "__main__":
    key = jax.random.PRNGKey(0)
    k_x, k_h1, k_c1, k_h2, k_c2, k_p = jax.random.split(key, 6)

    B, T = 8, 16   # 8 independent streams (fills sublanes), 16-frame chunk
    x = jax.random.uniform(k_x, (B, T, INPUT_SIZE), jnp.float32)
    h1_in = jax.random.normal(k_h1, (1, B, HIDDEN), jnp.float32) * 0.1
    c1_in = jax.random.normal(k_c1, (1, B, HIDDEN), jnp.float32) * 0.1
    h2_in = jax.random.normal(k_h2, (1, B, HIDDEN), jnp.float32) * 0.1
    c2_in = jax.random.normal(k_c2, (1, B, HIDDEN), jnp.float32) * 0.1
    params = init_params(k_p)

    outs = seperation_block_forward(x, h1_in, c1_in, h2_in, c2_in, params,
                                    num_groups=1)
    outs = jax.block_until_ready(outs)

    refs = _reference_forward(x, h1_in, c1_in, h2_in, c2_in, params)
    names = ["mask", "h1", "c1", "h2", "c2"]
    for name, o, r in zip(names, outs, refs):
        assert o.shape == r.shape, (name, o.shape, r.shape)
        assert jnp.allclose(o, r, atol=2e-3, rtol=2e-3), f"mismatch in {name}"

    print("KERNEL_OK")
</pallas_src>

<mosaic_0001>
module attributes {stable_mosaic.version = 11 : i64} {
  func.func @_sep_block_kernel(%arg0: i32, %arg1: memref<16x8x384xbf16, #tpu.memory_space<vmem>>, %arg2: memref<8x128xf32, #tpu.memory_space<vmem>>, %arg3: memref<8x128xf32, #tpu.memory_space<vmem>>, %arg4: memref<8x128xf32, #tpu.memory_space<vmem>>, %arg5: memref<8x128xf32, #tpu.memory_space<vmem>>, %arg6: memref<384x512xbf16, #tpu.memory_space<vmem>>, %arg7: memref<128x512xbf16, #tpu.memory_space<vmem>>, %arg8: memref<1x512xf32, #tpu.memory_space<vmem>>, %arg9: memref<256x512xbf16, #tpu.memory_space<vmem>>, %arg10: memref<8x512xf32, #tpu.memory_space<vmem>>, %arg11: memref<128x384xbf16, #tpu.memory_space<vmem>>, %arg12: memref<1x384xf32, #tpu.memory_space<vmem>>, %arg13: memref<16x8x384xf32, #tpu.memory_space<vmem>>, %arg14: memref<8x128xf32, #tpu.memory_space<vmem>>, %arg15: memref<8x128xf32, #tpu.memory_space<vmem>>, %arg16: memref<8x128xf32, #tpu.memory_space<vmem>>, %arg17: memref<8x128xf32, #tpu.memory_space<vmem>>, %arg18: memref<16x8x512xf32, #tpu.memory_space<vmem>>, %arg19: memref<16x8x128xf32, #tpu.memory_space<vmem>>) attributes {dimension_semantics = [#tpu.dimension_semantics<parallel>], iteration_bounds = array<i64: 1>, scalar_prefetch = 0 : i64, scratch_operands = 2 : i64, tpu.core_type = #tpu.core_type<tc>, window_params = [{transform_indices = @transform_0, window_bounds = array<i64: 16, 8, 384>}, {transform_indices = @transform_1, window_bounds = array<i64: 8, 128>}, {transform_indices = @transform_2, window_bounds = array<i64: 8, 128>}, {transform_indices = @transform_3, window_bounds = array<i64: 8, 128>}, {transform_indices = @transform_4, window_bounds = array<i64: 8, 128>}, {pipeline_mode = #tpu.pipeline_mode<synchronous>, transform_indices = @transform_5, window_bounds = array<i64: 384, 512>}, {pipeline_mode = #tpu.pipeline_mode<synchronous>, transform_indices = @transform_6, window_bounds = array<i64: 128, 512>}, {pipeline_mode = #tpu.pipeline_mode<synchronous>, transform_indices = @transform_7, window_bounds = array<i64: 1, 512>}, {pipeline_mode = #tpu.pipeline_mode<synchronous>, transform_indices = @transform_8, window_bounds = array<i64: 256, 512>}, {transform_indices = @transform_9, window_bounds = array<i64: 8, 512>}, {pipeline_mode = #tpu.pipeline_mode<synchronous>, transform_indices = @transform_10, window_bounds = array<i64: 128, 384>}, {pipeline_mode = #tpu.pipeline_mode<synchronous>, transform_indices = @transform_11, window_bounds = array<i64: 1, 384>}, {transform_indices = @transform_12, window_bounds = array<i64: 16, 8, 384>}, {transform_indices = @transform_13, window_bounds = array<i64: 8, 128>}, {transform_indices = @transform_14, window_bounds = array<i64: 8, 128>}, {transform_indices = @transform_15, window_bounds = array<i64: 8, 128>}, {transform_indices = @transform_16, window_bounds = array<i64: 8, 128>}]} {
    %c0 = arith.constant 0 : index
    %c0_0 = arith.constant 0 : index
    %c0_1 = arith.constant 0 : index
    %0 = vector.load %arg1[%c0, %c0_0, %c0_1] : memref<16x8x384xbf16, #tpu.memory_space<vmem>>, vector<16x8x384xbf16>
    %1 = vector.shape_cast %0 : vector<16x8x384xbf16> to vector<128x384xbf16>
    %c0_2 = arith.constant 0 : index
    %c0_3 = arith.constant 0 : index
    %2 = vector.load %arg6[%c0_2, %c0_3] : memref<384x512xbf16, #tpu.memory_space<vmem>>, vector<384x512xbf16>
    %cst = arith.constant dense<0.000000e+00> : vector<128x512xf32>
    %3 = tpu.matmul %1, %2, %cst {dimension_numbers = #tpu.dot_dimension_numbers<[1], [0], [0], [1], [0, 0, 1, 1], [], []>} : vector<128x384xbf16>, vector<384x512xbf16>, vector<128x512xf32> -> vector<128x512xf32>
    %c0_4 = arith.constant 0 : index
    %c0_5 = arith.constant 0 : index
    %4 = vector.load %arg8[%c0_4, %c0_5] : memref<1x512xf32, #tpu.memory_space<vmem>>, vector<1x512xf32>
    %5 = vector.broadcast %4 : vector<1x512xf32> to vector<128x512xf32>
    %6 = arith.addf %3, %5 : vector<128x512xf32>
    %7 = vector.shape_cast %6 : vector<128x512xf32> to vector<16x8x512xf32>
    %c0_6 = arith.constant 0 : index
    %c0_7 = arith.constant 0 : index
    %c0_8 = arith.constant 0 : index
    %8 = vector.load %arg18[%c0_6, %c0_7, %c0_8] : memref<16x8x512xf32, #tpu.memory_space<vmem>>, vector<16x8x512xf32>
    tpu.vector_store %arg18[%c0_6, %c0_7, %c0_8], %7 {strides = array<i32>} : memref<16x8x512xf32, #tpu.memory_space<vmem>>, vector<16x8x512xf32>,
    %c0_9 = arith.constant 0 : index
    %c0_10 = arith.constant 0 : index
    %9 = vector.load %arg7[%c0_9, %c0_10] : memref<128x512xbf16, #tpu.memory_space<vmem>>, vector<128x512xbf16>
    %c0_11 = arith.constant 0 : index
    %c0_12 = arith.constant 0 : index
    %10 = vector.load %arg9[%c0_11, %c0_12] : memref<256x512xbf16, #tpu.memory_space<vmem>>, vector<256x512xbf16>
    %c0_13 = arith.constant 0 : index
    %c0_14 = arith.constant 0 : index
    %11 = vector.load %arg10[%c0_13, %c0_14] : memref<8x512xf32, #tpu.memory_space<vmem>>, vector<8x512xf32>
    %c0_15 = arith.constant 0 : index
    %c0_16 = arith.constant 0 : index
    %12 = vector.load %arg2[%c0_15, %c0_16] : memref<8x128xf32, #tpu.memory_space<vmem>>, vector<8x128xf32>
    %c0_17 = arith.constant 0 : index
    %c0_18 = arith.constant 0 : index
    %13 = vector.load %arg3[%c0_17, %c0_18] : memref<8x128xf32, #tpu.memory_space<vmem>>, vector<8x128xf32>
    %c0_19 = arith.constant 0 : index
    %c0_20 = arith.constant 0 : index
    %14 = vector.load %arg4[%c0_19, %c0_20] : memref<8x128xf32, #tpu.memory_space<vmem>>, vector<8x128xf32>
    %c0_21 = arith.constant 0 : index
    %c0_22 = arith.constant 0 : index
    %15 = vector.load %arg5[%c0_21, %c0_22] : memref<8x128xf32, #tpu.memory_space<vmem>>, vector<8x128xf32>
    %c0_i32 = arith.constant 0 : i32
    %16 = arith.index_cast %c0_i32 : i32 to index
    %c0_23 = arith.constant 0 : index
    %c0_24 = arith.constant 0 : index
    %17 = vector.load %arg18[%16, %c0_23, %c0_24] : memref<16x8x512xf32, #tpu.memory_space<vmem>>, vector<1x8x512xf32>
    %18 = vector.shape_cast %17 : vector<1x8x512xf32> to vector<8x512xf32>
    %19 = arith.truncf %12 : vector<8x128xf32> to vector<8x128xbf16>
    %cst_25 = arith.constant dense<0.000000e+00> : vector<8x512xf32>
    %20 = tpu.matmul %19, %9, %cst_25 {dimension_numbers = #tpu.dot_dimension_numbers<[1], [0], [0], [1], [0, 0, 1, 1], [], []>} : vector<8x128xbf16>, vector<128x512xbf16>, vector<8x512xf32> -> vector<8x512xf32>
    %21 = arith.addf %18, %20 : vector<8x512xf32>
    %22 = vector.extract_strided_slice %21 {offsets = [0, 0], sizes = [8, 128], strides = [1, 1]} : vector<8x512xf32> to vector<8x128xf32>
    %23 = arith.negf %22 : vector<8x128xf32>
    %24 = math.exp %23 : vector<8x128xf32>
    %cst_26 = arith.constant 1.000000e+00 : f32
    %25 = vector.broadcast %cst_26 : f32 to vector<8x128xf32>
    %26 = arith.addf %25, %24 : vector<8x128xf32>
    %27 = arith.divf %25, %26 : vector<8x128xf32>
    %28 = vector.extract_strided_slice %21 {offsets = [0, 128], sizes = [8, 128], strides = [1, 1]} : vector<8x512xf32> to vector<8x128xf32>
    %29 = arith.negf %28 : vector<8x128xf32>
    %30 = math.exp %29 : vector<8x128xf32>
    %cst_27 = arith.constant 1.000000e+00 : f32
    %31 = vector.broadcast %cst_27 : f32 to vector<8x128xf32>
    %32 = arith.addf %31, %30 : vector<8x128xf32>
    %33 = arith.divf %31, %32 : vector<8x128xf32>
    %34 = vector.extract_strided_slice %21 {offsets = [0, 256], sizes = [8, 128], strides = [1, 1]} : vector<8x512xf32> to vector<8x128xf32>
    %35 = math.tanh %34 : vector<8x128xf32>
    %36 = vector.extract_strided_slice %21 {offsets = [0, 384], sizes = [8, 128], strides = [1, 1]} : vector<8x512xf32> to vector<8x128xf32>
    %37 = arith.negf %36 : vector<8x128xf32>
    %38 = math.exp %37 : vector<8x128xf32>
    %cst_28 = arith.constant 1.000000e+00 : f32
    %39 = vector.broadcast %cst_28 : f32 to vector<8x128xf32>
    %40 = arith.addf %39, %38 : vector<8x128xf32>
    %41 = arith.divf %39, %40 : vector<8x128xf32>
    %42 = arith.mulf %33, %13 : vector<8x128xf32>
    %43 = arith.mulf %27, %35 : vector<8x128xf32>
    %44 = arith.addf %42, %43 : vector<8x128xf32>
    %45 = math.tanh %44 : vector<8x128xf32>
    %46 = arith.mulf %41, %45 : vector<8x128xf32>
    %47 = arith.truncf %46 : vector<8x128xf32> to vector<8x128xbf16>
    %48 = arith.truncf %14 : vector<8x128xf32> to vector<8x128xbf16>
    %49 = tpu.concatenate %47, %48 in 1 : vector<8x128xbf16>, vector<8x128xbf16> -> vector<8x256xbf16>
    %cst_29 = arith.constant dense<0.000000e+00> : vector<8x512xf32>
    %50 = tpu.matmul %49, %10, %cst_29 {dimension_numbers = #tpu.dot_dimension_numbers<[1], [0], [0], [1], [0, 0, 1, 1], [], []>} : vector<8x256xbf16>, vector<256x512xbf16>, vector<8x512xf32> -> vector<8x512xf32>
    %51 = arith.addf %50, %11 : vector<8x512xf32>
    %52 = vector.extract_strided_slice %51 {offsets = [0, 0], sizes = [8, 128], strides = [1, 1]} : vector<8x512xf32> to vector<8x128xf32>
    %53 = arith.negf %52 : vector<8x128xf32>
    %54 = math.exp %53 : vector<8x128xf32>
    %cst_30 = arith.constant 1.000000e+00 : f32
    %55 = vector.broadcast %cst_30 : f32 to vector<8x128xf32>
    %56 = arith.addf %55, %54 : vector<8x128xf32>
    %57 = arith.divf %55, %56 : vector<8x128xf32>
    %58 = vector.extract_strided_slice %51 {offsets = [0, 128], sizes = [8, 128], strides = [1, 1]} : vector<8x512xf32> to vector<8x128xf32>
    %59 = arith.negf %58 : vector<8x128xf32>
    %60 = math.exp %59 : vector<8x128xf32>
    %cst_31 = arith.constant 1.000000e+00 : f32
    %61 = vector.broadcast %cst_31 : f32 to vector<8x128xf32>
    %62 = arith.addf %61, %60 : vector<8x128xf32>
    %63 = arith.divf %61, %62 : vector<8x128xf32>
    %64 = vector.extract_strided_slice %51 {offsets = [0, 256], sizes = [8, 128], strides = [1, 1]} : vector<8x512xf32> to vector<8x128xf32>
    %65 = math.tanh %64 : vector<8x128xf32>
    %66 = vector.extract_strided_slice %51 {offsets = [0, 384], sizes = [8, 128], strides = [1, 1]} : vector<8x512xf32> to vector<8x128xf32>
    %67 = arith.negf %66 : vector<8x128xf32>
    %68 = math.exp %67 : vector<8x128xf32>
    %cst_32 = arith.constant 1.000000e+00 : f32
    %69 = vector.broadcast %cst_32 : f32 to vector<8x128xf32>
    %70 = arith.addf %69, %68 : vector<8x128xf32>
    %71 = arith.divf %69, %70 : vector<8x128xf32>
    %72 = arith.mulf %63, %15 : vector<8x128xf32>
    %73 = arith.mulf %57, %65 : vector<8x128xf32>
    %74 = arith.addf %72, %73 : vector<8x128xf32>
    %75 = math.tanh %74 : vector<8x128xf32>
    %76 = arith.mulf %71, %75 : vector<8x128xf32>
    %77 = arith.index_cast %c0_i32 : i32 to index
    %c0_33 = arith.constant 0 : index
    %c0_34 = arith.constant 0 : index
    %78 = vector.load %arg19[%77, %c0_33, %c0_34] : memref<16x8x128xf32, #tpu.memory_space<vmem>>, vector<1x8x128xf32>
    %79 = vector.shape_cast %78 : vector<1x8x128xf32> to vector<8x128xf32>
    %80 = vector.shape_cast %76 : vector<8x128xf32> to vector<1x8x128xf32>
    tpu.vector_store %arg19[%77, %c0_33, %c0_34], %80 {strides = array<i32>} : memref<16x8x128xf32, #tpu.memory_space<vmem>>, vector<1x8x128xf32>,
    %c1_i32 = arith.constant 1 : i32
    %81 = arith.index_cast %c1_i32 : i32 to index
    %c0_35 = arith.constant 0 : index
    %c0_36 = arith.constant 0 : index
    %82 = vector.load %arg18[%81, %c0_35, %c0_36] : memref<16x8x512xf32, #tpu.memory_space<vmem>>, vector<1x8x512xf32>
    %83 = vector.shape_cast %82 : vector<1x8x512xf32> to vector<8x512xf32>
    %84 = arith.truncf %46 : vector<8x128xf32> to vector<8x128xbf16>
    %cst_37 = arith.constant dense<0.000000e+00> : vector<8x512xf32>
    %85 = tpu.matmul %84, %9, %cst_37 {dimension_numbers = #tpu.dot_dimension_numbers<[1], [0], [0], [1], [0, 0, 1, 1], [], []>} : vector<8x128xbf16>, vector<128x512xbf16>, vector<8x512xf32> -> vector<8x512xf32>
    %86 = arith.addf %83, %85 : vector<8x512xf32>
    %87 = vector.extract_strided_slice %86 {offsets = [0, 0], sizes = [8, 128], strides = [1, 1]} : vector<8x512xf32> to vector<8x128xf32>
    %88 = arith.negf %87 : vector<8x128xf32>
    %89 = math.exp %88 : vector<8x128xf32>
    %cst_38 = arith.constant 1.000000e+00 : f32
    %90 = vector.broadcast %cst_38 : f32 to vector<8x128xf32>
    %91 = arith.addf %90, %89 : vector<8x128xf32>
    %92 = arith.divf %90, %91 : vector<8x128xf32>
    %93 = vector.extract_strided_slice %86 {offsets = [0, 128], sizes = [8, 128], strides = [1, 1]} : vector<8x512xf32> to vector<8x128xf32>
    %94 = arith.negf %93 : vector<8x128xf32>
    %95 = math.exp %94 : vector<8x128xf32>
    %cst_39 = arith.constant 1.000000e+00 : f32
    %96 = vector.broadcast %cst_39 : f32 to vector<8x128xf32>
    %97 = arith.addf %96, %95 : vector<8x128xf32>
    %98 = arith.divf %96, %97 : vector<8x128xf32>
    %99 = vector.extract_strided_slice %86 {offsets = [0, 256], sizes = [8, 128], strides = [1, 1]} : vector<8x512xf32> to vector<8x128xf32>
    %100 = math.tanh %99 : vector<8x128xf32>
    %101 = vector.extract_strided_slice %86 {offsets = [0, 384], sizes = [8, 128], strides = [1, 1]} : vector<8x512xf32> to vector<8x128xf32>
    %102 = arith.negf %101 : vector<8x128xf32>
    %103 = math.exp %102 : vector<8x128xf32>
    %cst_40 = arith.constant 1.000000e+00 : f32
    %104 = vector.broadcast %cst_40 : f32 to vector<8x128xf32>
    %105 = arith.addf %104, %103 : vector<8x128xf32>
    %106 = arith.divf %104, %105 : vector<8x128xf32>
    %107 = arith.mulf %98, %44 : vector<8x128xf32>
    %108 = arith.mulf %92, %100 : vector<8x128xf32>
    %109 = arith.addf %107, %108 : vector<8x128xf32>
    %110 = math.tanh %109 : vector<8x128xf32>
    %111 = arith.mulf %106, %110 : vector<8x128xf32>
    %112 = arith.truncf %111 : vector<8x128xf32> to vector<8x128xbf16>
    %113 = arith.truncf %76 : vector<8x128xf32> to vector<8x128xbf16>
    %114 = tpu.concatenate %112, %113 in 1 : vector<8x128xbf16>, vector<8x128xbf16> -> vector<8x256xbf16>
    %cst_41 = arith.constant dense<0.000000e+00> : vector<8x512xf32>
    %115 = tpu.matmul %114, %10, %cst_41 {dimension_numbers = #tpu.dot_dimension_numbers<[1], [0], [0], [1], [0, 0, 1, 1], [], []>} : vector<8x256xbf16>, vector<256x512xbf16>, vector<8x512xf32> -> vector<8x512xf32>
    %116 = arith.addf %115, %11 : vector<8x512xf32>
    %117 = vector.extract_strided_slice %116 {offsets = [0, 0], sizes = [8, 128], strides = [1, 1]} : vector<8x512xf32> to vector<8x128xf32>
    %118 = arith.negf %117 : vector<8x128xf32>
    %119 = math.exp %118 : vector<8x128xf32>
    %cst_42 = arith.constant 1.000000e+00 : f32
    %120 = vector.broadcast %cst_42 : f32 to vector<8x128xf32>
    %121 = arith.addf %120, %119 : vector<8x128xf32>
    %122 = arith.divf %120, %121 : vector<8x128xf32>
    %123 = vector.extract_strided_slice %116 {offsets = [0, 128], sizes = [8, 128], strides = [1, 1]} : vector<8x512xf32> to vector<8x128xf32>
    %124 = arith.negf %123 : vector<8x128xf32>
    %125 = math.exp %124 : vector<8x128xf32>
    %cst_43 = arith.constant 1.000000e+00 : f32
    %126 = vector.broadcast %cst_43 : f32 to vector<8x128xf32>
    %127 = arith.addf %126, %125 : vector<8x128xf32>
    %128 = arith.divf %126, %127 : vector<8x128xf32>
    %129 = vector.extract_strided_slice %116 {offsets = [0, 256], sizes = [8, 128], strides = [1, 1]} : vector<8x512xf32> to vector<8x128xf32>
    %130 = math.tanh %129 : vector<8x128xf32>
    %131 = vector.extract_strided_slice %116 {offsets = [0, 384], sizes = [8, 128], strides = [1, 1]} : vector<8x512xf32> to vector<8x128xf32>
    %132 = arith.negf %131 : vector<8x128xf32>
    %133 = math.exp %132 : vector<8x128xf32>
    %cst_44 = arith.constant 1.000000e+00 : f32
    %134 = vector.broadcast %cst_44 : f32 to vector<8x128xf32>
    %135 = arith.addf %134, %133 : vector<8x128xf32>
    %136 = arith.divf %134, %135 : vector<8x128xf32>
    %137 = arith.mulf %128, %74 : vector<8x128xf32>
    %138 = arith.mulf %122, %130 : vector<8x128xf32>
    %139 = arith.addf %137, %138 : vector<8x128xf32>
    %140 = math.tanh %139 : vector<8x128xf32>
    %141 = arith.mulf %136, %140 : vector<8x128xf32>
    %142 = arith.index_cast %c1_i32 : i32 to index
    %c0_45 = arith.constant 0 : index
    %c0_46 = arith.constant 0 : index
    %143 = vector.load %arg19[%142, %c0_45, %c0_46] : memref<16x8x128xf32, #tpu.memory_space<vmem>>, vector<1x8x128xf32>
    %144 = vector.shape_cast %143 : vector<1x8x128xf32> to vector<8x128xf32>
    %145 = vector.shape_cast %141 : vector<8x128xf32> to vector<1x8x128xf32>
    tpu.vector_store %arg19[%142, %c0_45, %c0_46], %145 {strides = array<i32>} : memref<16x8x128xf32, #tpu.memory_space<vmem>>, vector<1x8x128xf32>,
    %c2_i32 = arith.constant 2 : i32
    %146 = arith.index_cast %c2_i32 : i32 to index
    %c0_47 = arith.constant 0 : index
    %c0_48 = arith.constant 0 : index
    %147 = vector.load %arg18[%146, %c0_47, %c0_48] : memref<16x8x512xf32, #tpu.memory_space<vmem>>, vector<1x8x512xf32>
    %148 = vector.shape_cast %147 : vector<1x8x512xf32> to vector<8x512xf32>
    %149 = arith.truncf %111 : vector<8x128xf32> to vector<8x128xbf16>
    %cst_49 = arith.constant dense<0.000000e+00> : vector<8x512xf32>
    %150 = tpu.matmul %149, %9, %cst_49 {dimension_numbers = #tpu.dot_dimension_numbers<[1], [0], [0], [1], [0, 0, 1, 1], [], []>} : vector<8x128xbf16>, vector<128x512xbf16>, vector<8x512xf32> -> vector<8x512xf32>
    %151 = arith.addf %148, %150 : vector<8x512xf32>
    %152 = vector.extract_strided_slice %151 {offsets = [0, 0], sizes = [8, 128], strides = [1, 1]} : vector<8x512xf32> to vector<8x128xf32>
    %153 = arith.negf %152 : vector<8x128xf32>
    %154 = math.exp %153 : vector<8x128xf32>
    %cst_50 = arith.constant 1.000000e+00 : f32
    %155 = vector.broadcast %cst_50 : f32 to vector<8x128xf32>
    %156 = arith.addf %155, %154 : vector<8x128xf32>
    %157 = arith.divf %155, %156 : vector<8x128xf32>
    %158 = vector.extract_strided_slice %151 {offsets = [0, 128], sizes = [8, 128], strides = [1, 1]} : vector<8x512xf32> to vector<8x128xf32>
    %159 = arith.negf %158 : vector<8x128xf32>
    %160 = math.exp %159 : vector<8x128xf32>
    %cst_51 = arith.constant 1.000000e+00 : f32
    %161 = vector.broadcast %cst_51 : f32 to vector<8x128xf32>
    %162 = arith.addf %161, %160 : vector<8x128xf32>
    %163 = arith.divf %161, %162 : vector<8x128xf32>
    %164 = vector.extract_strided_slice %151 {offsets = [0, 256], sizes = [8, 128], strides = [1, 1]} : vector<8x512xf32> to vector<8x128xf32>
    %165 = math.tanh %164 : vector<8x128xf32>
    %166 = vector.extract_strided_slice %151 {offsets = [0, 384], sizes = [8, 128], strides = [1, 1]} : vector<8x512xf32> to vector<8x128xf32>
    %167 = arith.negf %166 : vector<8x128xf32>
    %168 = math.exp %167 : vector<8x128xf32>
    %cst_52 = arith.constant 1.000000e+00 : f32
    %169 = vector.broadcast %cst_52 : f32 to vector<8x128xf32>
    %170 = arith.addf %169, %168 : vector<8x128xf32>
    %171 = arith.divf %169, %170 : vector<8x128xf32>
    %172 = arith.mulf %163, %109 : vector<8x128xf32>
    %173 = arith.mulf %157, %165 : vector<8x128xf32>
    %174 = arith.addf %172, %173 : vector<8x128xf32>
    %175 = math.tanh %174 : vector<8x128xf32>
    %176 = arith.mulf %171, %175 : vector<8x128xf32>
    %177 = arith.truncf %176 : vector<8x128xf32> to vector<8x128xbf16>
    %178 = arith.truncf %141 : vector<8x128xf32> to vector<8x128xbf16>
    %179 = tpu.concatenate %177, %178 in 1 : vector<8x128xbf16>, vector<8x128xbf16> -> vector<8x256xbf16>
    %cst_53 = arith.constant dense<0.000000e+00> : vector<8x512xf32>
    %180 = tpu.matmul %179, %10, %cst_53 {dimension_numbers = #tpu.dot_dimension_numbers<[1], [0], [0], [1], [0, 0, 1, 1], [], []>} : vector<8x256xbf16>, vector<256x512xbf16>, vector<8x512xf32> -> vector<8x512xf32>
    %181 = arith.addf %180, %11 : vector<8x512xf32>
    %182 = vector.extract_strided_slice %181 {offsets = [0, 0], sizes = [8, 128], strides = [1, 1]} : vector<8x512xf32> to vector<8x128xf32>
    %183 = arith.negf %182 : vector<8x128xf32>
    %184 = math.exp %183 : vector<8x128xf32>
    %cst_54 = arith.constant 1.000000e+00 : f32
    %185 = vector.broadcast %cst_54 : f32 to vector<8x128xf32>
    %186 = arith.addf %185, %184 : vector<8x128xf32>
    %187 = arith.divf %185, %186 : vector<8x128xf32>
    %188 = vector.extract_strided_slice %181 {offsets = [0, 128], sizes = [8, 128], strides = [1, 1]} : vector<8x512xf32> to vector<8x128xf32>
    %189 = arith.negf %188 : vector<8x128xf32>
    %190 = math.exp %189 : vector<8x128xf32>
    %cst_55 = arith.constant 1.000000e+00 : f32
    %191 = vector.broadcast %cst_55 : f32 to vector<8x128xf32>
    %192 = arith.addf %191, %190 : vector<8x128xf32>
    %193 = arith.divf %191, %192 : vector<8x128xf32>
    %194 = vector.extract_strided_slice %181 {offsets = [0, 256], sizes = [8, 128], strides = [1, 1]} : vector<8x512xf32> to vector<8x128xf32>
    %195 = math.tanh %194 : vector<8x128xf32>
    %196 = vector.extract_strided_slice %181 {offsets = [0, 384], sizes = [8, 128], strides = [1, 1]} : vector<8x512xf32> to vector<8x128xf32>
    %197 = arith.negf %196 : vector<8x128xf32>
    %198 = math.exp %197 : vector<8x128xf32>
    %cst_56 = arith.constant 1.000000e+00 : f32
    %199 = vector.broadcast %cst_56 : f32 to vector<8x128xf32>
    %200 = arith.addf %199, %198 : vector<8x128xf32>
    %201 = arith.divf %199, %200 : vector<8x128xf32>
    %202 = arith.mulf %193, %139 : vector<8x128xf32>
    %203 = arith.mulf %187, %195 : vector<8x128xf32>
    %204 = arith.addf %202, %203 : vector<8x128xf32>
    %205 = math.tanh %204 : vector<8x128xf32>
    %206 = arith.mulf %201, %205 : vector<8x128xf32>
    %207 = arith.index_cast %c2_i32 : i32 to index
    %c0_57 = arith.constant 0 : index
    %c0_58 = arith.constant 0 : index
    %208 = vector.load %arg19[%207, %c0_57, %c0_58] : memref<16x8x128xf32, #tpu.memory_space<vmem>>, vector<1x8x128xf32>
    %209 = vector.shape_cast %208 : vector<1x8x128xf32> to vector<8x128xf32>
    %210 = vector.shape_cast %206 : vector<8x128xf32> to vector<1x8x128xf32>
    tpu.vector_store %arg19[%207, %c0_57, %c0_58], %210 {strides = array<i32>} : memref<16x8x128xf32, #tpu.memory_space<vmem>>, vector<1x8x128xf32>,
    %c3_i32 = arith.constant 3 : i32
    %211 = arith.index_cast %c3_i32 : i32 to index
    %c0_59 = arith.constant 0 : index
    %c0_60 = arith.constant 0 : index
    %212 = vector.load %arg18[%211, %c0_59, %c0_60] : memref<16x8x512xf32, #tpu.memory_space<vmem>>, vector<1x8x512xf32>
    %213 = vector.shape_cast %212 : vector<1x8x512xf32> to vector<8x512xf32>
    %214 = arith.truncf %176 : vector<8x128xf32> to vector<8x128xbf16>
    %cst_61 = arith.constant dense<0.000000e+00> : vector<8x512xf32>
    %215 = tpu.matmul %214, %9, %cst_61 {dimension_numbers = #tpu.dot_dimension_numbers<[1], [0], [0], [1], [0, 0, 1, 1], [], []>} : vector<8x128xbf16>, vector<128x512xbf16>, vector<8x512xf32> -> vector<8x512xf32>
    %216 = arith.addf %213, %215 : vector<8x512xf32>
    %217 = vector.extract_strided_slice %216 {offsets = [0, 0], sizes = [8, 128], strides = [1, 1]} : vector<8x512xf32> to vector<8x128xf32>
    %218 = arith.negf %217 : vector<8x128xf32>
    %219 = math.exp %218 : vector<8x128xf32>
    %cst_62 = arith.constant 1.000000e+00 : f32
    %220 = vector.broadcast %cst_62 : f32 to vector<8x128xf32>
    %221 = arith.addf %220, %219 : vector<8x128xf32>
    %222 = arith.divf %220, %221 : vector<8x128xf32>
    %223 = vector.extract_strided_slice %216 {offsets = [0, 128], sizes = [8, 128], strides = [1, 1]} : vector<8x512xf32> to vector<8x128xf32>
    %224 = arith.negf %223 : vector<8x128xf32>
    %225 = math.exp %224 : vector<8x128xf32>
    %cst_63 = arith.constant 1.000000e+00 : f32
    %226 = vector.broadcast %cst_63 : f32 to vector<8x128xf32>
    %227 = arith.addf %226, %225 : vector<8x128xf32>
    %228 = arith.divf %226, %227 : vector<8x128xf32>
    %229 = vector.extract_strided_slice %216 {offsets = [0, 256], sizes = [8, 128], strides = [1, 1]} : vector<8x512xf32> to vector<8x128xf32>
    %230 = math.tanh %229 : vector<8x128xf32>
    %231 = vector.extract_strided_slice %216 {offsets = [0, 384], sizes = [8, 128], strides = [1, 1]} : vector<8x512xf32> to vector<8x128xf32>
    %232 = arith.negf %231 : vector<8x128xf32>
    %233 = math.exp %232 : vector<8x128xf32>
    %cst_64 = arith.constant 1.000000e+00 : f32
    %234 = vector.broadcast %cst_64 : f32 to vector<8x128xf32>
    %235 = arith.addf %234, %233 : vector<8x128xf32>
    %236 = arith.divf %234, %235 : vector<8x128xf32>
    %237 = arith.mulf %228, %174 : vector<8x128xf32>
    %238 = arith.mulf %222, %230 : vector<8x128xf32>
    %239 = arith.addf %237, %238 : vector<8x128xf32>
    %240 = math.tanh %239 : vector<8x128xf32>
    %241 = arith.mulf %236, %240 : vector<8x128xf32>
    %242 = arith.truncf %241 : vector<8x128xf32> to vector<8x128xbf16>
    %243 = arith.truncf %206 : vector<8x128xf32> to vector<8x128xbf16>
    %244 = tpu.concatenate %242, %243 in 1 : vector<8x128xbf16>, vector<8x128xbf16> -> vector<8x256xbf16>
    %cst_65 = arith.constant dense<0.000000e+00> : vector<8x512xf32>
    %245 = tpu.matmul %244, %10, %cst_65 {dimension_numbers = #tpu.dot_dimension_numbers<[1], [0], [0], [1], [0, 0, 1, 1], [], []>} : vector<8x256xbf16>, vector<256x512xbf16>, vector<8x512xf32> -> vector<8x512xf32>
    %246 = arith.addf %245, %11 : vector<8x512xf32>
    %247 = vector.extract_strided_slice %246 {offsets = [0, 0], sizes = [8, 128], strides = [1, 1]} : vector<8x512xf32> to vector<8x128xf32>
    %248 = arith.negf %247 : vector<8x128xf32>
    %249 = math.exp %248 : vector<8x128xf32>
    %cst_66 = arith.constant 1.000000e+00 : f32
    %250 = vector.broadcast %cst_66 : f32 to vector<8x128xf32>
    %251 = arith.addf %250, %249 : vector<8x128xf32>
    %252 = arith.divf %250, %251 : vector<8x128xf32>
    %253 = vector.extract_strided_slice %246 {offsets = [0, 128], sizes = [8, 128], strides = [1, 1]} : vector<8x512xf32> to vector<8x128xf32>
    %254 = arith.negf %253 : vector<8x128xf32>
    %255 = math.exp %254 : vector<8x128xf32>
    %cst_67 = arith.constant 1.000000e+00 : f32
    %256 = vector.broadcast %cst_67 : f32 to vector<8x128xf32>
    %257 = arith.addf %256, %255 : vector<8x128xf32>
    %258 = arith.divf %256, %257 : vector<8x128xf32>
    %259 = vector.extract_strided_slice %246 {offsets = [0, 256], sizes = [8, 128], strides = [1, 1]} : vector<8x512xf32> to vector<8x128xf32>
    %260 = math.tanh %259 : vector<8x128xf32>
    %261 = vector.extract_strided_slice %246 {offsets = [0, 384], sizes = [8, 128], strides = [1, 1]} : vector<8x512xf32> to vector<8x128xf32>
    %262 = arith.negf %261 : vector<8x128xf32>
    %263 = math.exp %262 : vector<8x128xf32>
    %cst_68 = arith.constant 1.000000e+00 : f32
    %264 = vector.broadcast %cst_68 : f32 to vector<8x128xf32>
    %265 = arith.addf %264, %263 : vector<8x128xf32>
    %266 = arith.divf %264, %265 : vector<8x128xf32>
    %267 = arith.mulf %258, %204 : vector<8x128xf32>
    %268 = arith.mulf %252, %260 : vector<8x128xf32>
    %269 = arith.addf %267, %268 : vector<8x128xf32>
    %270 = math.tanh %269 : vector<8x128xf32>
    %271 = arith.mulf %266, %270 : vector<8x128xf32>
    %272 = arith.index_cast %c3_i32 : i32 to index
    %c0_69 = arith.constant 0 : index
    %c0_70 = arith.constant 0 : index
    %273 = vector.load %arg19[%272, %c0_69, %c0_70] : memref<16x8x128xf32, #tpu.memory_space<vmem>>, vector<1x8x128xf32>
    %274 = vector.shape_cast %273 : vector<1x8x128xf32> to vector<8x128xf32>
    %275 = vector.shape_cast %271 : vector<8x128xf32> to vector<1x8x128xf32>
    tpu.vector_store %arg19[%272, %c0_69, %c0_70], %275 {strides = array<i32>} : memref<16x8x128xf32, #tpu.memory_space<vmem>>, vector<1x8x128xf32>,
    %c4_i32 = arith.constant 4 : i32
    %276 = arith.index_cast %c4_i32 : i32 to index
    %c0_71 = arith.constant 0 : index
    %c0_72 = arith.constant 0 : index
    %277 = vector.load %arg18[%276, %c0_71, %c0_72] : memref<16x8x512xf32, #tpu.memory_space<vmem>>, vector<1x8x512xf32>
    %278 = vector.shape_cast %277 : vector<1x8x512xf32> to vector<8x512xf32>
    %279 = arith.truncf %241 : vector<8x128xf32> to vector<8x128xbf16>
    %cst_73 = arith.constant dense<0.000000e+00> : vector<8x512xf32>
    %280 = tpu.matmul %279, %9, %cst_73 {dimension_numbers = #tpu.dot_dimension_numbers<[1], [0], [0], [1], [0, 0, 1, 1], [], []>} : vector<8x128xbf16>, vector<128x512xbf16>, vector<8x512xf32> -> vector<8x512xf32>
    %281 = arith.addf %278, %280 : vector<8x512xf32>
    %282 = vector.extract_strided_slice %281 {offsets = [0, 0], sizes = [8, 128], strides = [1, 1]} : vector<8x512xf32> to vector<8x128xf32>
    %283 = arith.negf %282 : vector<8x128xf32>
    %284 = math.exp %283 : vector<8x128xf32>
    %cst_74 = arith.constant 1.000000e+00 : f32
    %285 = vector.broadcast %cst_74 : f32 to vector<8x128xf32>
    %286 = arith.addf %285, %284 : vector<8x128xf32>
    %287 = arith.divf %285, %286 : vector<8x128xf32>
    %288 = vector.extract_strided_slice %281 {offsets = [0, 128], sizes = [8, 128], strides = [1, 1]} : vector<8x512xf32> to vector<8x128xf32>
    %289 = arith.negf %288 : vector<8x128xf32>
    %290 = math.exp %289 : vector<8x128xf32>
    %cst_75 = arith.constant 1.000000e+00 : f32
    %291 = vector.broadcast %cst_75 : f32 to vector<8x128xf32>
    %292 = arith.addf %291, %290 : vector<8x128xf32>
    %293 = arith.divf %291, %292 : vector<8x128xf32>
    %294 = vector.extract_strided_slice %281 {offsets = [0, 256], sizes = [8, 128], strides = [1, 1]} : vector<8x512xf32> to vector<8x128xf32>
    %295 = math.tanh %294 : vector<8x128xf32>
    %296 = vector.extract_strided_slice %281 {offsets = [0, 384], sizes = [8, 128], strides = [1, 1]} : vector<8x512xf32> to vector<8x128xf32>
    %297 = arith.negf %296 : vector<8x128xf32>
    %298 = math.exp %297 : vector<8x128xf32>
    %cst_76 = arith.constant 1.000000e+00 : f32
    %299 = vector.broadcast %cst_76 : f32 to vector<8x128xf32>
    %300 = arith.addf %299, %298 : vector<8x128xf32>
    %301 = arith.divf %299, %300 : vector<8x128xf32>
    %302 = arith.mulf %293, %239 : vector<8x128xf32>
    %303 = arith.mulf %287, %295 : vector<8x128xf32>
    %304 = arith.addf %302, %303 : vector<8x128xf32>
    %305 = math.tanh %304 : vector<8x128xf32>
    %306 = arith.mulf %301, %305 : vector<8x128xf32>
    %307 = arith.truncf %306 : vector<8x128xf32> to vector<8x128xbf16>
    %308 = arith.truncf %271 : vector<8x128xf32> to vector<8x128xbf16>
    %309 = tpu.concatenate %307, %308 in 1 : vector<8x128xbf16>, vector<8x128xbf16> -> vector<8x256xbf16>
    %cst_77 = arith.constant dense<0.000000e+00> : vector<8x512xf32>
    %310 = tpu.matmul %309, %10, %cst_77 {dimension_numbers = #tpu.dot_dimension_numbers<[1], [0], [0], [1], [0, 0, 1, 1], [], []>} : vector<8x256xbf16>, vector<256x512xbf16>, vector<8x512xf32> -> vector<8x512xf32>
    %311 = arith.addf %310, %11 : vector<8x512xf32>
    %312 = vector.extract_strided_slice %311 {offsets = [0, 0], sizes = [8, 128], strides = [1, 1]} : vector<8x512xf32> to vector<8x128xf32>
    %313 = arith.negf %312 : vector<8x128xf32>
    %314 = math.exp %313 : vector<8x128xf32>
    %cst_78 = arith.constant 1.000000e+00 : f32
    %315 = vector.broadcast %cst_78 : f32 to vector<8x128xf32>
    %316 = arith.addf %315, %314 : vector<8x128xf32>
    %317 = arith.divf %315, %316 : vector<8x128xf32>
    %318 = vector.extract_strided_slice %311 {offsets = [0, 128], sizes = [8, 128], strides = [1, 1]} : vector<8x512xf32> to vector<8x128xf32>
    %319 = arith.negf %318 : vector<8x128xf32>
    %320 = math.exp %319 : vector<8x128xf32>
    %cst_79 = arith.constant 1.000000e+00 : f32
    %321 = vector.broadcast %cst_79 : f32 to vector<8x128xf32>
    %322 = arith.addf %321, %320 : vector<8x128xf32>
    %323 = arith.divf %321, %322 : vector<8x128xf32>
    %324 = vector.extract_strided_slice %311 {offsets = [0, 256], sizes = [8, 128], strides = [1, 1]} : vector<8x512xf32> to vector<8x128xf32>
    %325 = math.tanh %324 : vector<8x128xf32>
    %326 = vector.extract_strided_slice %311 {offsets = [0, 384], sizes = [8, 128], strides = [1, 1]} : vector<8x512xf32> to vector<8x128xf32>
    %327 = arith.negf %326 : vector<8x128xf32>
    %328 = math.exp %327 : vector<8x128xf32>
    %cst_80 = arith.constant 1.000000e+00 : f32
    %329 = vector.broadcast %cst_80 : f32 to vector<8x128xf32>
    %330 = arith.addf %329, %328 : vector<8x128xf32>
    %331 = arith.divf %329, %330 : vector<8x128xf32>
    %332 = arith.mulf %323, %269 : vector<8x128xf32>
    %333 = arith.mulf %317, %325 : vector<8x128xf32>
    %334 = arith.addf %332, %333 : vector<8x128xf32>
    %335 = math.tanh %334 : vector<8x128xf32>
    %336 = arith.mulf %331, %335 : vector<8x128xf32>
    %337 = arith.index_cast %c4_i32 : i32 to index
    %c0_81 = arith.constant 0 : index
    %c0_82 = arith.constant 0 : index
    %338 = vector.load %arg19[%337, %c0_81, %c0_82] : memref<16x8x128xf32, #tpu.memory_space<vmem>>, vector<1x8x128xf32>
    %339 = vector.shape_cast %338 : vector<1x8x128xf32> to vector<8x128xf32>
    %340 = vector.shape_cast %336 : vector<8x128xf32> to vector<1x8x128xf32>
    tpu.vector_store %arg19[%337, %c0_81, %c0_82], %340 {strides = array<i32>} : memref<16x8x128xf32, #tpu.memory_space<vmem>>, vector<1x8x128xf32>,
    %c5_i32 = arith.constant 5 : i32
    %341 = arith.index_cast %c5_i32 : i32 to index
    %c0_83 = arith.constant 0 : index
    %c0_84 = arith.constant 0 : index
    %342 = vector.load %arg18[%341, %c0_83, %c0_84] : memref<16x8x512xf32, #tpu.memory_space<vmem>>, vector<1x8x512xf32>
    %343 = vector.shape_cast %342 : vector<1x8x512xf32> to vector<8x512xf32>
    %344 = arith.truncf %306 : vector<8x128xf32> to vector<8x128xbf16>
    %cst_85 = arith.constant dense<0.000000e+00> : vector<8x512xf32>
    %345 = tpu.matmul %344, %9, %cst_85 {dimension_numbers = #tpu.dot_dimension_numbers<[1], [0], [0], [1], [0, 0, 1, 1], [], []>} : vector<8x128xbf16>, vector<128x512xbf16>, vector<8x512xf32> -> vector<8x512xf32>
    %346 = arith.addf %343, %345 : vector<8x512xf32>
    %347 = vector.extract_strided_slice %346 {offsets = [0, 0], sizes = [8, 128], strides = [1, 1]} : vector<8x512xf32> to vector<8x128xf32>
    %348 = arith.negf %347 : vector<8x128xf32>
    %349 = math.exp %348 : vector<8x128xf32>
    %cst_86 = arith.constant 1.000000e+00 : f32
    %350 = vector.broadcast %cst_86 : f32 to vector<8x128xf32>
    %351 = arith.addf %350, %349 : vector<8x128xf32>
    %352 = arith.divf %350, %351 : vector<8x128xf32>
    %353 = vector.extract_strided_slice %346 {offsets = [0, 128], sizes = [8, 128], strides = [1, 1]} : vector<8x512xf32> to vector<8x128xf32>
    %354 = arith.negf %353 : vector<8x128xf32>
    %355 = math.exp %354 : vector<8x128xf32>
    %cst_87 = arith.constant 1.000000e+00 : f32
    %356 = vector.broadcast %cst_87 : f32 to vector<8x128xf32>
    %357 = arith.addf %356, %355 : vector<8x128xf32>
    %358 = arith.divf %356, %357 : vector<8x128xf32>
    %359 = vector.extract_strided_slice %346 {offsets = [0, 256], sizes = [8, 128], strides = [1, 1]} : vector<8x512xf32> to vector<8x128xf32>
    %360 = math.tanh %359 : vector<8x128xf32>
    %361 = vector.extract_strided_slice %346 {offsets = [0, 384], sizes = [8, 128], strides = [1, 1]} : vector<8x512xf32> to vector<8x128xf32>
    %362 = arith.negf %361 : vector<8x128xf32>
    %363 = math.exp %362 : vector<8x128xf32>
    %cst_88 = arith.constant 1.000000e+00 : f32
    %364 = vector.broadcast %cst_88 : f32 to vector<8x128xf32>
    %365 = arith.addf %364, %363 : vector<8x128xf32>
    %366 = arith.divf %364, %365 : vector<8x128xf32>
    %367 = arith.mulf %358, %304 : vector<8x128xf32>
    %368 = arith.mulf %352, %360 : vector<8x128xf32>
    %369 = arith.addf %367, %368 : vector<8x128xf32>
    %370 = math.tanh %369 : vector<8x128xf32>
    %371 = arith.mulf %366, %370 : vector<8x128xf32>
    %372 = arith.truncf %371 : vector<8x128xf32> to vector<8x128xbf16>
    %373 = arith.truncf %336 : vector<8x128xf32> to vector<8x128xbf16>
    %374 = tpu.concatenate %372, %373 in 1 : vector<8x128xbf16>, vector<8x128xbf16> -> vector<8x256xbf16>
    %cst_89 = arith.constant dense<0.000000e+00> : vector<8x512xf32>
    %375 = tpu.matmul %374, %10, %cst_89 {dimension_numbers = #tpu.dot_dimension_numbers<[1], [0], [0], [1], [0, 0, 1, 1], [], []>} : vector<8x256xbf16>, vector<256x512xbf16>, vector<8x512xf32> -> vector<8x512xf32>
    %376 = arith.addf %375, %11 : vector<8x512xf32>
    %377 = vector.extract_strided_slice %376 {offsets = [0, 0], sizes = [8, 128], strides = [1, 1]} : vector<8x512xf32> to vector<8x128xf32>
    %378 = arith.negf %377 : vector<8x128xf32>
    %379 = math.exp %378 : vector<8x128xf32>
    %cst_90 = arith.constant 1.000000e+00 : f32
    %380 = vector.broadcast %cst_90 : f32 to vector<8x128xf32>
    %381 = arith.addf %380, %379 : vector<8x128xf32>
    %382 = arith.divf %380, %381 : vector<8x128xf32>
    %383 = vector.extract_strided_slice %376 {offsets = [0, 128], sizes = [8, 128], strides = [1, 1]} : vector<8x512xf32> to vector<8x128xf32>
    %384 = arith.negf %383 : vector<8x128xf32>
    %385 = math.exp %384 : vector<8x128xf32>
    %cst_91 = arith.constant 1.000000e+00 : f32
    %386 = vector.broadcast %cst_91 : f32 to vector<8x128xf32>
    %387 = arith.addf %386, %385 : vector<8x128xf32>
    %388 = arith.divf %386, %387 : vector<8x128xf32>
    %389 = vector.extract_strided_slice %376 {offsets = [0, 256], sizes = [8, 128], strides = [1, 1]} : vector<8x512xf32> to vector<8x128xf32>
    %390 = math.tanh %389 : vector<8x128xf32>
    %391 = vector.extract_strided_slice %376 {offsets = [0, 384], sizes = [8, 128], strides = [1, 1]} : vector<8x512xf32> to vector<8x128xf32>
    %392 = arith.negf %391 : vector<8x128xf32>
    %393 = math.exp %392 : vector<8x128xf32>
    %cst_92 = arith.constant 1.000000e+00 : f32
    %394 = vector.broadcast %cst_92 : f32 to vector<8x128xf32>
    %395 = arith.addf %394, %393 : vector<8x128xf32>
    %396 = arith.divf %394, %395 : vector<8x128xf32>
    %397 = arith.mulf %388, %334 : vector<8x128xf32>
    %398 = arith.mulf %382, %390 : vector<8x128xf32>
    %399 = arith.addf %397, %398 : vector<8x128xf32>
    %400 = math.tanh %399 : vector<8x128xf32>
    %401 = arith.mulf %396, %400 : vector<8x128xf32>
    %402 = arith.index_cast %c5_i32 : i32 to index
    %c0_93 = arith.constant 0 : index
    %c0_94 = arith.constant 0 : index
    %403 = vector.load %arg19[%402, %c0_93, %c0_94] : memref<16x8x128xf32, #tpu.memory_space<vmem>>, vector<1x8x128xf32>
    %404 = vector.shape_cast %403 : vector<1x8x128xf32> to vector<8x128xf32>
    %405 = vector.shape_cast %401 : vector<8x128xf32> to vector<1x8x128xf32>
    tpu.vector_store %arg19[%402, %c0_93, %c0_94], %405 {strides = array<i32>} : memref<16x8x128xf32, #tpu.memory_space<vmem>>, vector<1x8x128xf32>,
    %c6_i32 = arith.constant 6 : i32
    %406 = arith.index_cast %c6_i32 : i32 to index
    %c0_95 = arith.constant 0 : index
    %c0_96 = arith.constant 0 : index
    %407 = vector.load %arg18[%406, %c0_95, %c0_96] : memref<16x8x512xf32, #tpu.memory_space<vmem>>, vector<1x8x512xf32>
    %408 = vector.shape_cast %407 : vector<1x8x512xf32> to vector<8x512xf32>
    %409 = arith.truncf %371 : vector<8x128xf32> to vector<8x128xbf16>
    %cst_97 = arith.constant dense<0.000000e+00> : vector<8x512xf32>
    %410 = tpu.matmul %409, %9, %cst_97 {dimension_numbers = #tpu.dot_dimension_numbers<[1], [0], [0], [1], [0, 0, 1, 1], [], []>} : vector<8x128xbf16>, vector<128x512xbf16>, vector<8x512xf32> -> vector<8x512xf32>
    %411 = arith.addf %408, %410 : vector<8x512xf32>
    %412 = vector.extract_strided_slice %411 {offsets = [0, 0], sizes = [8, 128], strides = [1, 1]} : vector<8x512xf32> to vector<8x128xf32>
    %413 = arith.negf %412 : vector<8x128xf32>
    %414 = math.exp %413 : vector<8x128xf32>
    %cst_98 = arith.constant 1.000000e+00 : f32
    %415 = vector.broadcast %cst_98 : f32 to vector<8x128xf32>
    %416 = arith.addf %415, %414 : vector<8x128xf32>
    %417 = arith.divf %415, %416 : vector<8x128xf32>
    %418 = vector.extract_strided_slice %411 {offsets = [0, 128], sizes = [8, 128], strides = [1, 1]} : vector<8x512xf32> to vector<8x128xf32>
    %419 = arith.negf %418 : vector<8x128xf32>
    %420 = math.exp %419 : vector<8x128xf32>
    %cst_99 = arith.constant 1.000000e+00 : f32
    %421 = vector.broadcast %cst_99 : f32 to vector<8x128xf32>
    %422 = arith.addf %421, %420 : vector<8x128xf32>
    %423 = arith.divf %421, %422 : vector<8x128xf32>
    %424 = vector.extract_strided_slice %411 {offsets = [0, 256], sizes = [8, 128], strides = [1, 1]} : vector<8x512xf32> to vector<8x128xf32>
    %425 = math.tanh %424 : vector<8x128xf32>
    %426 = vector.extract_strided_slice %411 {offsets = [0, 384], sizes = [8, 128], strides = [1, 1]} : vector<8x512xf32> to vector<8x128xf32>
    %427 = arith.negf %426 : vector<8x128xf32>
    %428 = math.exp %427 : vector<8x128xf32>
    %cst_100 = arith.constant 1.000000e+00 : f32
    %429 = vector.broadcast %cst_100 : f32 to vector<8x128xf32>
    %430 = arith.addf %429, %428 : vector<8x128xf32>
    %431 = arith.divf %429, %430 : vector<8x128xf32>
    %432 = arith.mulf %423, %369 : vector<8x128xf32>
    %433 = arith.mulf %417, %425 : vector<8x128xf32>
    %434 = arith.addf %432, %433 : vector<8x128xf32>
    %435 = math.tanh %434 : vector<8x128xf32>
    %436 = arith.mulf %431, %435 : vector<8x128xf32>
    %437 = arith.truncf %436 : vector<8x128xf32> to vector<8x128xbf16>
    %438 = arith.truncf %401 : vector<8x128xf32> to vector<8x128xbf16>
    %439 = tpu.concatenate %437, %438 in 1 : vector<8x128xbf16>, vector<8x128xbf16> -> vector<8x256xbf16>
    %cst_101 = arith.constant dense<0.000000e+00> : vector<8x512xf32>
    %440 = tpu.matmul %439, %10, %cst_101 {dimension_numbers = #tpu.dot_dimension_numbers<[1], [0], [0], [1], [0, 0, 1, 1], [], []>} : vector<8x256xbf16>, vector<256x512xbf16>, vector<8x512xf32> -> vector<8x512xf32>
    %441 = arith.addf %440, %11 : vector<8x512xf32>
    %442 = vector.extract_strided_slice %441 {offsets = [0, 0], sizes = [8, 128], strides = [1, 1]} : vector<8x512xf32> to vector<8x128xf32>
    %443 = arith.negf %442 : vector<8x128xf32>
    %444 = math.exp %443 : vector<8x128xf32>
    %cst_102 = arith.constant 1.000000e+00 : f32
    %445 = vector.broadcast %cst_102 : f32 to vector<8x128xf32>
    %446 = arith.addf %445, %444 : vector<8x128xf32>
    %447 = arith.divf %445, %446 : vector<8x128xf32>
    %448 = vector.extract_strided_slice %441 {offsets = [0, 128], sizes = [8, 128], strides = [1, 1]} : vector<8x512xf32> to vector<8x128xf32>
    %449 = arith.negf %448 : vector<8x128xf32>
    %450 = math.exp %449 : vector<8x128xf32>
    %cst_103 = arith.constant 1.000000e+00 : f32
    %451 = vector.broadcast %cst_103 : f32 to vector<8x128xf32>
    %452 = arith.addf %451, %450 : vector<8x128xf32>
    %453 = arith.divf %451, %452 : vector<8x128xf32>
    %454 = vector.extract_strided_slice %441 {offsets = [0, 256], sizes = [8, 128], strides = [1, 1]} : vector<8x512xf32> to vector<8x128xf32>
    %455 = math.tanh %454 : vector<8x128xf32>
    %456 = vector.extract_strided_slice %441 {offsets = [0, 384], sizes = [8, 128], strides = [1, 1]} : vector<8x512xf32> to vector<8x128xf32>
    %457 = arith.negf %456 : vector<8x128xf32>
    %458 = math.exp %457 : vector<8x128xf32>
    %cst_104 = arith.constant 1.000000e+00 : f32
    %459 = vector.broadcast %cst_104 : f32 to vector<8x128xf32>
    %460 = arith.addf %459, %458 : vector<8x128xf32>
    %461 = arith.divf %459, %460 : vector<8x128xf32>
    %462 = arith.mulf %453, %399 : vector<8x128xf32>
    %463 = arith.mulf %447, %455 : vector<8x128xf32>
    %464 = arith.addf %462, %463 : vector<8x128xf32>
    %465 = math.tanh %464 : vector<8x128xf32>
    %466 = arith.mulf %461, %465 : vector<8x128xf32>
    %467 = arith.index_cast %c6_i32 : i32 to index
    %c0_105 = arith.constant 0 : index
    %c0_106 = arith.constant 0 : index
    %468 = vector.load %arg19[%467, %c0_105, %c0_106] : memref<16x8x128xf32, #tpu.memory_space<vmem>>, vector<1x8x128xf32>
    %469 = vector.shape_cast %468 : vector<1x8x128xf32> to vector<8x128xf32>
    %470 = vector.shape_cast %466 : vector<8x128xf32> to vector<1x8x128xf32>
    tpu.vector_store %arg19[%467, %c0_105, %c0_106], %470 {strides = array<i32>} : memref<16x8x128xf32, #tpu.memory_space<vmem>>, vector<1x8x128xf32>,
    %c7_i32 = arith.constant 7 : i32
    %471 = arith.index_cast %c7_i32 : i32 to index
    %c0_107 = arith.constant 0 : index
    %c0_108 = arith.constant 0 : index
    %472 = vector.load %arg18[%471, %c0_107, %c0_108] : memref<16x8x512xf32, #tpu.memory_space<vmem>>, vector<1x8x512xf32>
    %473 = vector.shape_cast %472 : vector<1x8x512xf32> to vector<8x512xf32>
    %474 = arith.truncf %436 : vector<8x128xf32> to vector<8x128xbf16>
    %cst_109 = arith.constant dense<0.000000e+00> : vector<8x512xf32>
    %475 = tpu.matmul %474, %9, %cst_109 {dimension_numbers = #tpu.dot_dimension_numbers<[1], [0], [0], [1], [0, 0, 1, 1], [], []>} : vector<8x128xbf16>, vector<128x512xbf16>, vector<8x512xf32> -> vector<8x512xf32>
    %476 = arith.addf %473, %475 : vector<8x512xf32>
    %477 = vector.extract_strided_slice %476 {offsets = [0, 0], sizes = [8, 128], strides = [1, 1]} : vector<8x512xf32> to vector<8x128xf32>
    %478 = arith.negf %477 : vector<8x128xf32>
    %479 = math.exp %478 : vector<8x128xf32>
    %cst_110 = arith.constant 1.000000e+00 : f32
    %480 = vector.broadcast %cst_110 : f32 to vector<8x128xf32>
    %481 = arith.addf %480, %479 : vector<8x128xf32>
    %482 = arith.divf %480, %481 : vector<8x128xf32>
    %483 = vector.extract_strided_slice %476 {offsets = [0, 128], sizes = [8, 128], strides = [1, 1]} : vector<8x512xf32> to vector<8x128xf32>
    %484 = arith.negf %483 : vector<8x128xf32>
    %485 = math.exp %484 : vector<8x128xf32>
    %cst_111 = arith.constant 1.000000e+00 : f32
    %486 = vector.broadcast %cst_111 : f32 to vector<8x128xf32>
    %487 = arith.addf %486, %485 : vector<8x128xf32>
    %488 = arith.divf %486, %487 : vector<8x128xf32>
    %489 = vector.extract_strided_slice %476 {offsets = [0, 256], sizes = [8, 128], strides = [1, 1]} : vector<8x512xf32> to vector<8x128xf32>
    %490 = math.tanh %489 : vector<8x128xf32>
    %491 = vector.extract_strided_slice %476 {offsets = [0, 384], sizes = [8, 128], strides = [1, 1]} : vector<8x512xf32> to vector<8x128xf32>
    %492 = arith.negf %491 : vector<8x128xf32>
    %493 = math.exp %492 : vector<8x128xf32>
    %cst_112 = arith.constant 1.000000e+00 : f32
    %494 = vector.broadcast %cst_112 : f32 to vector<8x128xf32>
    %495 = arith.addf %494, %493 : vector<8x128xf32>
    %496 = arith.divf %494, %495 : vector<8x128xf32>
    %497 = arith.mulf %488, %434 : vector<8x128xf32>
    %498 = arith.mulf %482, %490 : vector<8x128xf32>
    %499 = arith.addf %497, %498 : vector<8x128xf32>
    %500 = math.tanh %499 : vector<8x128xf32>
    %501 = arith.mulf %496, %500 : vector<8x128xf32>
    %502 = arith.truncf %501 : vector<8x128xf32> to vector<8x128xbf16>
    %503 = arith.truncf %466 : vector<8x128xf32> to vector<8x128xbf16>
    %504 = tpu.concatenate %502, %503 in 1 : vector<8x128xbf16>, vector<8x128xbf16> -> vector<8x256xbf16>
    %cst_113 = arith.constant dense<0.000000e+00> : vector<8x512xf32>
    %505 = tpu.matmul %504, %10, %cst_113 {dimension_numbers = #tpu.dot_dimension_numbers<[1], [0], [0], [1], [0, 0, 1, 1], [], []>} : vector<8x256xbf16>, vector<256x512xbf16>, vector<8x512xf32> -> vector<8x512xf32>
    %506 = arith.addf %505, %11 : vector<8x512xf32>
    %507 = vector.extract_strided_slice %506 {offsets = [0, 0], sizes = [8, 128], strides = [1, 1]} : vector<8x512xf32> to vector<8x128xf32>
    %508 = arith.negf %507 : vector<8x128xf32>
    %509 = math.exp %508 : vector<8x128xf32>
    %cst_114 = arith.constant 1.000000e+00 : f32
    %510 = vector.broadcast %cst_114 : f32 to vector<8x128xf32>
    %511 = arith.addf %510, %509 : vector<8x128xf32>
    %512 = arith.divf %510, %511 : vector<8x128xf32>
    %513 = vector.extract_strided_slice %506 {offsets = [0, 128], sizes = [8, 128], strides = [1, 1]} : vector<8x512xf32> to vector<8x128xf32>
    %514 = arith.negf %513 : vector<8x128xf32>
    %515 = math.exp %514 : vector<8x128xf32>
    %cst_115 = arith.constant 1.000000e+00 : f32
    %516 = vector.broadcast %cst_115 : f32 to vector<8x128xf32>
    %517 = arith.addf %516, %515 : vector<8x128xf32>
    %518 = arith.divf %516, %517 : vector<8x128xf32>
    %519 = vector.extract_strided_slice %506 {offsets = [0, 256], sizes = [8, 128], strides = [1, 1]} : vector<8x512xf32> to vector<8x128xf32>
    %520 = math.tanh %519 : vector<8x128xf32>
    %521 = vector.extract_strided_slice %506 {offsets = [0, 384], sizes = [8, 128], strides = [1, 1]} : vector<8x512xf32> to vector<8x128xf32>
    %522 = arith.negf %521 : vector<8x128xf32>
    %523 = math.exp %522 : vector<8x128xf32>
    %cst_116 = arith.constant 1.000000e+00 : f32
    %524 = vector.broadcast %cst_116 : f32 to vector<8x128xf32>
    %525 = arith.addf %524, %523 : vector<8x128xf32>
    %526 = arith.divf %524, %525 : vector<8x128xf32>
    %527 = arith.mulf %518, %464 : vector<8x128xf32>
    %528 = arith.mulf %512, %520 : vector<8x128xf32>
    %529 = arith.addf %527, %528 : vector<8x128xf32>
    %530 = math.tanh %529 : vector<8x128xf32>
    %531 = arith.mulf %526, %530 : vector<8x128xf32>
    %532 = arith.index_cast %c7_i32 : i32 to index
    %c0_117 = arith.constant 0 : index
    %c0_118 = arith.constant 0 : index
    %533 = vector.load %arg19[%532, %c0_117, %c0_118] : memref<16x8x128xf32, #tpu.memory_space<vmem>>, vector<1x8x128xf32>
    %534 = vector.shape_cast %533 : vector<1x8x128xf32> to vector<8x128xf32>
    %535 = vector.shape_cast %531 : vector<8x128xf32> to vector<1x8x128xf32>
    tpu.vector_store %arg19[%532, %c0_117, %c0_118], %535 {strides = array<i32>} : memref<16x8x128xf32, #tpu.memory_space<vmem>>, vector<1x8x128xf32>,
    %c8_i32 = arith.constant 8 : i32
    %536 = arith.index_cast %c8_i32 : i32 to index
    %c0_119 = arith.constant 0 : index
    %c0_120 = arith.constant 0 : index
    %537 = vector.load %arg18[%536, %c0_119, %c0_120] : memref<16x8x512xf32, #tpu.memory_space<vmem>>, vector<1x8x512xf32>
    %538 = vector.shape_cast %537 : vector<1x8x512xf32> to vector<8x512xf32>
    %539 = arith.truncf %501 : vector<8x128xf32> to vector<8x128xbf16>
    %cst_121 = arith.constant dense<0.000000e+00> : vector<8x512xf32>
    %540 = tpu.matmul %539, %9, %cst_121 {dimension_numbers = #tpu.dot_dimension_numbers<[1], [0], [0], [1], [0, 0, 1, 1], [], []>} : vector<8x128xbf16>, vector<128x512xbf16>, vector<8x512xf32> -> vector<8x512xf32>
    %541 = arith.addf %538, %540 : vector<8x512xf32>
    %542 = vector.extract_strided_slice %541 {offsets = [0, 0], sizes = [8, 128], strides = [1, 1]} : vector<8x512xf32> to vector<8x128xf32>
    %543 = arith.negf %542 : vector<8x128xf32>
    %544 = math.exp %543 : vector<8x128xf32>
    %cst_122 = arith.constant 1.000000e+00 : f32
    %545 = vector.broadcast %cst_122 : f32 to vector<8x128xf32>
    %546 = arith.addf %545, %544 : vector<8x128xf32>
    %547 = arith.divf %545, %546 : vector<8x128xf32>
    %548 = vector.extract_strided_slice %541 {offsets = [0, 128], sizes = [8, 128], strides = [1, 1]} : vector<8x512xf32> to vector<8x128xf32>
    %549 = arith.negf %548 : vector<8x128xf32>
    %550 = math.exp %549 : vector<8x128xf32>
    %cst_123 = arith.constant 1.000000e+00 : f32
    %551 = vector.broadcast %cst_123 : f32 to vector<8x128xf32>
    %552 = arith.addf %551, %550 : vector<8x128xf32>
    %553 = arith.divf %551, %552 : vector<8x128xf32>
    %554 = vector.extract_strided_slice %541 {offsets = [0, 256], sizes = [8, 128], strides = [1, 1]} : vector<8x512xf32> to vector<8x128xf32>
    %555 = math.tanh %554 : vector<8x128xf32>
    %556 = vector.extract_strided_slice %541 {offsets = [0, 384], sizes = [8, 128], strides = [1, 1]} : vector<8x512xf32> to vector<8x128xf32>
    %557 = arith.negf %556 : vector<8x128xf32>
    %558 = math.exp %557 : vector<8x128xf32>
    %cst_124 = arith.constant 1.000000e+00 : f32
    %559 = vector.broadcast %cst_124 : f32 to vector<8x128xf32>
    %560 = arith.addf %559, %558 : vector<8x128xf32>
    %561 = arith.divf %559, %560 : vector<8x128xf32>
    %562 = arith.mulf %553, %499 : vector<8x128xf32>
    %563 = arith.mulf %547, %555 : vector<8x128xf32>
    %564 = arith.addf %562, %563 : vector<8x128xf32>
    %565 = math.tanh %564 : vector<8x128xf32>
    %566 = arith.mulf %561, %565 : vector<8x128xf32>
    %567 = arith.truncf %566 : vector<8x128xf32> to vector<8x128xbf16>
    %568 = arith.truncf %531 : vector<8x128xf32> to vector<8x128xbf16>
    %569 = tpu.concatenate %567, %568 in 1 : vector<8x128xbf16>, vector<8x128xbf16> -> vector<8x256xbf16>
    %cst_125 = arith.constant dense<0.000000e+00> : vector<8x512xf32>
    %570 = tpu.matmul %569, %10, %cst_125 {dimension_numbers = #tpu.dot_dimension_numbers<[1], [0], [0], [1], [0, 0, 1, 1], [], []>} : vector<8x256xbf16>, vector<256x512xbf16>, vector<8x512xf32> -> vector<8x512xf32>
    %571 = arith.addf %570, %11 : vector<8x512xf32>
    %572 = vector.extract_strided_slice %571 {offsets = [0, 0], sizes = [8, 128], strides = [1, 1]} : vector<8x512xf32> to vector<8x128xf32>
    %573 = arith.negf %572 : vector<8x128xf32>
    %574 = math.exp %573 : vector<8x128xf32>
    %cst_126 = arith.constant 1.000000e+00 : f32
    %575 = vector.broadcast %cst_126 : f32 to vector<8x128xf32>
    %576 = arith.addf %575, %574 : vector<8x128xf32>
    %577 = arith.divf %575, %576 : vector<8x128xf32>
    %578 = vector.extract_strided_slice %571 {offsets = [0, 128], sizes = [8, 128], strides = [1, 1]} : vector<8x512xf32> to vector<8x128xf32>
    %579 = arith.negf %578 : vector<8x128xf32>
    %580 = math.exp %579 : vector<8x128xf32>
    %cst_127 = arith.constant 1.000000e+00 : f32
    %581 = vector.broadcast %cst_127 : f32 to vector<8x128xf32>
    %582 = arith.addf %581, %580 : vector<8x128xf32>
    %583 = arith.divf %581, %582 : vector<8x128xf32>
    %584 = vector.extract_strided_slice %571 {offsets = [0, 256], sizes = [8, 128], strides = [1, 1]} : vector<8x512xf32> to vector<8x128xf32>
    %585 = math.tanh %584 : vector<8x128xf32>
    %586 = vector.extract_strided_slice %571 {offsets = [0, 384], sizes = [8, 128], strides = [1, 1]} : vector<8x512xf32> to vector<8x128xf32>
    %587 = arith.negf %586 : vector<8x128xf32>
    %588 = math.exp %587 : vector<8x128xf32>
    %cst_128 = arith.constant 1.000000e+00 : f32
    %589 = vector.broadcast %cst_128 : f32 to vector<8x128xf32>
    %590 = arith.addf %589, %588 : vector<8x128xf32>
    %591 = arith.divf %589, %590 : vector<8x128xf32>
    %592 = arith.mulf %583, %529 : vector<8x128xf32>
    %593 = arith.mulf %577, %585 : vector<8x128xf32>
    %594 = arith.addf %592, %593 : vector<8x128xf32>
    %595 = math.tanh %594 : vector<8x128xf32>
    %596 = arith.mulf %591, %595 : vector<8x128xf32>
    %597 = arith.index_cast %c8_i32 : i32 to index
    %c0_129 = arith.constant 0 : index
    %c0_130 = arith.constant 0 : index
    %598 = vector.load %arg19[%597, %c0_129, %c0_130] : memref<16x8x128xf32, #tpu.memory_space<vmem>>, vector<1x8x128xf32>
    %599 = vector.shape_cast %598 : vector<1x8x128xf32> to vector<8x128xf32>
    %600 = vector.shape_cast %596 : vector<8x128xf32> to vector<1x8x128xf32>
    tpu.vector_store %arg19[%597, %c0_129, %c0_130], %600 {strides = array<i32>} : memref<16x8x128xf32, #tpu.memory_space<vmem>>, vector<1x8x128xf32>,
    %c9_i32 = arith.constant 9 : i32
    %601 = arith.index_cast %c9_i32 : i32 to index
    %c0_131 = arith.constant 0 : index
    %c0_132 = arith.constant 0 : index
    %602 = vector.load %arg18[%601, %c0_131, %c0_132] : memref<16x8x512xf32, #tpu.memory_space<vmem>>, vector<1x8x512xf32>
    %603 = vector.shape_cast %602 : vector<1x8x512xf32> to vector<8x512xf32>
    %604 = arith.truncf %566 : vector<8x128xf32> to vector<8x128xbf16>
    %cst_133 = arith.constant dense<0.000000e+00> : vector<8x512xf32>
    %605 = tpu.matmul %604, %9, %cst_133 {dimension_numbers = #tpu.dot_dimension_numbers<[1], [0], [0], [1], [0, 0, 1, 1], [], []>} : vector<8x128xbf16>, vector<128x512xbf16>, vector<8x512xf32> -> vector<8x512xf32>
    %606 = arith.addf %603, %605 : vector<8x512xf32>
    %607 = vector.extract_strided_slice %606 {offsets = [0, 0], sizes = [8, 128], strides = [1, 1]} : vector<8x512xf32> to vector<8x128xf32>
    %608 = arith.negf %607 : vector<8x128xf32>
    %609 = math.exp %608 : vector<8x128xf32>
    %cst_134 = arith.constant 1.000000e+00 : f32
    %610 = vector.broadcast %cst_134 : f32 to vector<8x128xf32>
    %611 = arith.addf %610, %609 : vector<8x128xf32>
    %612 = arith.divf %610, %611 : vector<8x128xf32>
    %613 = vector.extract_strided_slice %606 {offsets = [0, 128], sizes = [8, 128], strides = [1, 1]} : vector<8x512xf32> to vector<8x128xf32>
    %614 = arith.negf %613 : vector<8x128xf32>
    %615 = math.exp %614 : vector<8x128xf32>
    %cst_135 = arith.constant 1.000000e+00 : f32
    %616 = vector.broadcast %cst_135 : f32 to vector<8x128xf32>
    %617 = arith.addf %616, %615 : vector<8x128xf32>
    %618 = arith.divf %616, %617 : vector<8x128xf32>
    %619 = vector.extract_strided_slice %606 {offsets = [0, 256], sizes = [8, 128], strides = [1, 1]} : vector<8x512xf32> to vector<8x128xf32>
    %620 = math.tanh %619 : vector<8x128xf32>
    %621 = vector.extract_strided_slice %606 {offsets = [0, 384], sizes = [8, 128], strides = [1, 1]} : vector<8x512xf32> to vector<8x128xf32>
    %622 = arith.negf %621 : vector<8x128xf32>
    %623 = math.exp %622 : vector<8x128xf32>
    %cst_136 = arith.constant 1.000000e+00 : f32
    %624 = vector.broadcast %cst_136 : f32 to vector<8x128xf32>
    %625 = arith.addf %624, %623 : vector<8x128xf32>
    %626 = arith.divf %624, %625 : vector<8x128xf32>
    %627 = arith.mulf %618, %564 : vector<8x128xf32>
    %628 = arith.mulf %612, %620 : vector<8x128xf32>
    %629 = arith.addf %627, %628 : vector<8x128xf32>
    %630 = math.tanh %629 : vector<8x128xf32>
    %631 = arith.mulf %626, %630 : vector<8x128xf32>
    %632 = arith.truncf %631 : vector<8x128xf32> to vector<8x128xbf16>
    %633 = arith.truncf %596 : vector<8x128xf32> to vector<8x128xbf16>
    %634 = tpu.concatenate %632, %633 in 1 : vector<8x128xbf16>, vector<8x128xbf16> -> vector<8x256xbf16>
    %cst_137 = arith.constant dense<0.000000e+00> : vector<8x512xf32>
    %635 = tpu.matmul %634, %10, %cst_137 {dimension_numbers = #tpu.dot_dimension_numbers<[1], [0], [0], [1], [0, 0, 1, 1], [], []>} : vector<8x256xbf16>, vector<256x512xbf16>, vector<8x512xf32> -> vector<8x512xf32>
    %636 = arith.addf %635, %11 : vector<8x512xf32>
    %637 = vector.extract_strided_slice %636 {offsets = [0, 0], sizes = [8, 128], strides = [1, 1]} : vector<8x512xf32> to vector<8x128xf32>
    %638 = arith.negf %637 : vector<8x128xf32>
    %639 = math.exp %638 : vector<8x128xf32>
    %cst_138 = arith.constant 1.000000e+00 : f32
    %640 = vector.broadcast %cst_138 : f32 to vector<8x128xf32>
    %641 = arith.addf %640, %639 : vector<8x128xf32>
    %642 = arith.divf %640, %641 : vector<8x128xf32>
    %643 = vector.extract_strided_slice %636 {offsets = [0, 128], sizes = [8, 128], strides = [1, 1]} : vector<8x512xf32> to vector<8x128xf32>
    %644 = arith.negf %643 : vector<8x128xf32>
    %645 = math.exp %644 : vector<8x128xf32>
    %cst_139 = arith.constant 1.000000e+00 : f32
    %646 = vector.broadcast %cst_139 : f32 to vector<8x128xf32>
    %647 = arith.addf %646, %645 : vector<8x128xf32>
    %648 = arith.divf %646, %647 : vector<8x128xf32>
    %649 = vector.extract_strided_slice %636 {offsets = [0, 256], sizes = [8, 128], strides = [1, 1]} : vector<8x512xf32> to vector<8x128xf32>
    %650 = math.tanh %649 : vector<8x128xf32>
    %651 = vector.extract_strided_slice %636 {offsets = [0, 384], sizes = [8, 128], strides = [1, 1]} : vector<8x512xf32> to vector<8x128xf32>
    %652 = arith.negf %651 : vector<8x128xf32>
    %653 = math.exp %652 : vector<8x128xf32>
    %cst_140 = arith.constant 1.000000e+00 : f32
    %654 = vector.broadcast %cst_140 : f32 to vector<8x128xf32>
    %655 = arith.addf %654, %653 : vector<8x128xf32>
    %656 = arith.divf %654, %655 : vector<8x128xf32>
    %657 = arith.mulf %648, %594 : vector<8x128xf32>
    %658 = arith.mulf %642, %650 : vector<8x128xf32>
    %659 = arith.addf %657, %658 : vector<8x128xf32>
    %660 = math.tanh %659 : vector<8x128xf32>
    %661 = arith.mulf %656, %660 : vector<8x128xf32>
    %662 = arith.index_cast %c9_i32 : i32 to index
    %c0_141 = arith.constant 0 : index
    %c0_142 = arith.constant 0 : index
    %663 = vector.load %arg19[%662, %c0_141, %c0_142] : memref<16x8x128xf32, #tpu.memory_space<vmem>>, vector<1x8x128xf32>
    %664 = vector.shape_cast %663 : vector<1x8x128xf32> to vector<8x128xf32>
    %665 = vector.shape_cast %661 : vector<8x128xf32> to vector<1x8x128xf32>
    tpu.vector_store %arg19[%662, %c0_141, %c0_142], %665 {strides = array<i32>} : memref<16x8x128xf32, #tpu.memory_space<vmem>>, vector<1x8x128xf32>,
    %c10_i32 = arith.constant 10 : i32
    %666 = arith.index_cast %c10_i32 : i32 to index
    %c0_143 = arith.constant 0 : index
    %c0_144 = arith.constant 0 : index
    %667 = vector.load %arg18[%666, %c0_143, %c0_144] : memref<16x8x512xf32, #tpu.memory_space<vmem>>, vector<1x8x512xf32>
    %668 = vector.shape_cast %667 : vector<1x8x512xf32> to vector<8x512xf32>
    %669 = arith.truncf %631 : vector<8x128xf32> to vector<8x128xbf16>
    %cst_145 = arith.constant dense<0.000000e+00> : vector<8x512xf32>
    %670 = tpu.matmul %669, %9, %cst_145 {dimension_numbers = #tpu.dot_dimension_numbers<[1], [0], [0], [1], [0, 0, 1, 1], [], []>} : vector<8x128xbf16>, vector<128x512xbf16>, vector<8x512xf32> -> vector<8x512xf32>
    %671 = arith.addf %668, %670 : vector<8x512xf32>
    %672 = vector.extract_strided_slice %671 {offsets = [0, 0], sizes = [8, 128], strides = [1, 1]} : vector<8x512xf32> to vector<8x128xf32>
    %673 = arith.negf %672 : vector<8x128xf32>
    %674 = math.exp %673 : vector<8x128xf32>
    %cst_146 = arith.constant 1.000000e+00 : f32
    %675 = vector.broadcast %cst_146 : f32 to vector<8x128xf32>
    %676 = arith.addf %675, %674 : vector<8x128xf32>
    %677 = arith.divf %675, %676 : vector<8x128xf32>
    %678 = vector.extract_strided_slice %671 {offsets = [0, 128], sizes = [8, 128], strides = [1, 1]} : vector<8x512xf32> to vector<8x128xf32>
    %679 = arith.negf %678 : vector<8x128xf32>
    %680 = math.exp %679 : vector<8x128xf32>
    %cst_147 = arith.constant 1.000000e+00 : f32
    %681 = vector.broadcast %cst_147 : f32 to vector<8x128xf32>
    %682 = arith.addf %681, %680 : vector<8x128xf32>
    %683 = arith.divf %681, %682 : vector<8x128xf32>
    %684 = vector.extract_strided_slice %671 {offsets = [0, 256], sizes = [8, 128], strides = [1, 1]} : vector<8x512xf32> to vector<8x128xf32>
    %685 = math.tanh %684 : vector<8x128xf32>
    %686 = vector.extract_strided_slice %671 {offsets = [0, 384], sizes = [8, 128], strides = [1, 1]} : vector<8x512xf32> to vector<8x128xf32>
    %687 = arith.negf %686 : vector<8x128xf32>
    %688 = math.exp %687 : vector<8x128xf32>
    %cst_148 = arith.constant 1.000000e+00 : f32
    %689 = vector.broadcast %cst_148 : f32 to vector<8x128xf32>
    %690 = arith.addf %689, %688 : vector<8x128xf32>
    %691 = arith.divf %689, %690 : vector<8x128xf32>
    %692 = arith.mulf %683, %629 : vector<8x128xf32>
    %693 = arith.mulf %677, %685 : vector<8x128xf32>
    %694 = arith.addf %692, %693 : vector<8x128xf32>
    %695 = math.tanh %694 : vector<8x128xf32>
    %696 = arith.mulf %691, %695 : vector<8x128xf32>
    %697 = arith.truncf %696 : vector<8x128xf32> to vector<8x128xbf16>
    %698 = arith.truncf %661 : vector<8x128xf32> to vector<8x128xbf16>
    %699 = tpu.concatenate %697, %698 in 1 : vector<8x128xbf16>, vector<8x128xbf16> -> vector<8x256xbf16>
    %cst_149 = arith.constant dense<0.000000e+00> : vector<8x512xf32>
    %700 = tpu.matmul %699, %10, %cst_149 {dimension_numbers = #tpu.dot_dimension_numbers<[1], [0], [0], [1], [0, 0, 1, 1], [], []>} : vector<8x256xbf16>, vector<256x512xbf16>, vector<8x512xf32> -> vector<8x512xf32>
    %701 = arith.addf %700, %11 : vector<8x512xf32>
    %702 = vector.extract_strided_slice %701 {offsets = [0, 0], sizes = [8, 128], strides = [1, 1]} : vector<8x512xf32> to vector<8x128xf32>
    %703 = arith.negf %702 : vector<8x128xf32>
    %704 = math.exp %703 : vector<8x128xf32>
    %cst_150 = arith.constant 1.000000e+00 : f32
    %705 = vector.broadcast %cst_150 : f32 to vector<8x128xf32>
    %706 = arith.addf %705, %704 : vector<8x128xf32>
    %707 = arith.divf %705, %706 : vector<8x128xf32>
    %708 = vector.extract_strided_slice %701 {offsets = [0, 128], sizes = [8, 128], strides = [1, 1]} : vector<8x512xf32> to vector<8x128xf32>
    %709 = arith.negf %708 : vector<8x128xf32>
    %710 = math.exp %709 : vector<8x128xf32>
    %cst_151 = arith.constant 1.000000e+00 : f32
    %711 = vector.broadcast %cst_151 : f32 to vector<8x128xf32>
    %712 = arith.addf %711, %710 : vector<8x128xf32>
    %713 = arith.divf %711, %712 : vector<8x128xf32>
    %714 = vector.extract_strided_slice %701 {offsets = [0, 256], sizes = [8, 128], strides = [1, 1]} : vector<8x512xf32> to vector<8x128xf32>
    %715 = math.tanh %714 : vector<8x128xf32>
    %716 = vector.extract_strided_slice %701 {offsets = [0, 384], sizes = [8, 128], strides = [1, 1]} : vector<8x512xf32> to vector<8x128xf32>
    %717 = arith.negf %716 : vector<8x128xf32>
    %718 = math.exp %717 : vector<8x128xf32>
    %cst_152 = arith.constant 1.000000e+00 : f32
    %719 = vector.broadcast %cst_152 : f32 to vector<8x128xf32>
    %720 = arith.addf %719, %718 : vector<8x128xf32>
    %721 = arith.divf %719, %720 : vector<8x128xf32>
    %722 = arith.mulf %713, %659 : vector<8x128xf32>
    %723 = arith.mulf %707, %715 : vector<8x128xf32>
    %724 = arith.addf %722, %723 : vector<8x128xf32>
    %725 = math.tanh %724 : vector<8x128xf32>
    %726 = arith.mulf %721, %725 : vector<8x128xf32>
    %727 = arith.index_cast %c10_i32 : i32 to index
    %c0_153 = arith.constant 0 : index
    %c0_154 = arith.constant 0 : index
    %728 = vector.load %arg19[%727, %c0_153, %c0_154] : memref<16x8x128xf32, #tpu.memory_space<vmem>>, vector<1x8x128xf32>
    %729 = vector.shape_cast %728 : vector<1x8x128xf32> to vector<8x128xf32>
    %730 = vector.shape_cast %726 : vector<8x128xf32> to vector<1x8x128xf32>
    tpu.vector_store %arg19[%727, %c0_153, %c0_154], %730 {strides = array<i32>} : memref<16x8x128xf32, #tpu.memory_space<vmem>>, vector<1x8x128xf32>,
    %c11_i32 = arith.constant 11 : i32
    %731 = arith.index_cast %c11_i32 : i32 to index
    %c0_155 = arith.constant 0 : index
    %c0_156 = arith.constant 0 : index
    %732 = vector.load %arg18[%731, %c0_155, %c0_156] : memref<16x8x512xf32, #tpu.memory_space<vmem>>, vector<1x8x512xf32>
    %733 = vector.shape_cast %732 : vector<1x8x512xf32> to vector<8x512xf32>
    %734 = arith.truncf %696 : vector<8x128xf32> to vector<8x128xbf16>
    %cst_157 = arith.constant dense<0.000000e+00> : vector<8x512xf32>
    %735 = tpu.matmul %734, %9, %cst_157 {dimension_numbers = #tpu.dot_dimension_numbers<[1], [0], [0], [1], [0, 0, 1, 1], [], []>} : vector<8x128xbf16>, vector<128x512xbf16>, vector<8x512xf32> -> vector<8x512xf32>
    %736 = arith.addf %733, %735 : vector<8x512xf32>
    %737 = vector.extract_strided_slice %736 {offsets = [0, 0], sizes = [8, 128], strides = [1, 1]} : vector<8x512xf32> to vector<8x128xf32>
    %738 = arith.negf %737 : vector<8x128xf32>
    %739 = math.exp %738 : vector<8x128xf32>
    %cst_158 = arith.constant 1.000000e+00 : f32
    %740 = vector.broadcast %cst_158 : f32 to vector<8x128xf32>
    %741 = arith.addf %740, %739 : vector<8x128xf32>
    %742 = arith.divf %740, %741 : vector<8x128xf32>
    %743 = vector.extract_strided_slice %736 {offsets = [0, 128], sizes = [8, 128], strides = [1, 1]} : vector<8x512xf32> to vector<8x128xf32>
    %744 = arith.negf %743 : vector<8x128xf32>
    %745 = math.exp %744 : vector<8x128xf32>
    %cst_159 = arith.constant 1.000000e+00 : f32
    %746 = vector.broadcast %cst_159 : f32 to vector<8x128xf32>
    %747 = arith.addf %746, %745 : vector<8x128xf32>
    %748 = arith.divf %746, %747 : vector<8x128xf32>
    %749 = vector.extract_strided_slice %736 {offsets = [0, 256], sizes = [8, 128], strides = [1, 1]} : vector<8x512xf32> to vector<8x128xf32>
    %750 = math.tanh %749 : vector<8x128xf32>
    %751 = vector.extract_strided_slice %736 {offsets = [0, 384], sizes = [8, 128], strides = [1, 1]} : vector<8x512xf32> to vector<8x128xf32>
    %752 = arith.negf %751 : vector<8x128xf32>
    %753 = math.exp %752 : vector<8x128xf32>
    %cst_160 = arith.constant 1.000000e+00 : f32
    %754 = vector.broadcast %cst_160 : f32 to vector<8x128xf32>
    %755 = arith.addf %754, %753 : vector<8x128xf32>
    %756 = arith.divf %754, %755 : vector<8x128xf32>
    %757 = arith.mulf %748, %694 : vector<8x128xf32>
    %758 = arith.mulf %742, %750 : vector<8x128xf32>
    %759 = arith.addf %757, %758 : vector<8x128xf32>
    %760 = math.tanh %759 : vector<8x128xf32>
    %761 = arith.mulf %756, %760 : vector<8x128xf32>
    %762 = arith.truncf %761 : vector<8x128xf32> to vector<8x128xbf16>
    %763 = arith.truncf %726 : vector<8x128xf32> to vector<8x128xbf16>
    %764 = tpu.concatenate %762, %763 in 1 : vector<8x128xbf16>, vector<8x128xbf16> -> vector<8x256xbf16>
    %cst_161 = arith.constant dense<0.000000e+00> : vector<8x512xf32>
    %765 = tpu.matmul %764, %10, %cst_161 {dimension_numbers = #tpu.dot_dimension_numbers<[1], [0], [0], [1], [0, 0, 1, 1], [], []>} : vector<8x256xbf16>, vector<256x512xbf16>, vector<8x512xf32> -> vector<8x512xf32>
    %766 = arith.addf %765, %11 : vector<8x512xf32>
    %767 = vector.extract_strided_slice %766 {offsets = [0, 0], sizes = [8, 128], strides = [1, 1]} : vector<8x512xf32> to vector<8x128xf32>
    %768 = arith.negf %767 : vector<8x128xf32>
    %769 = math.exp %768 : vector<8x128xf32>
    %cst_162 = arith.constant 1.000000e+00 : f32
    %770 = vector.broadcast %cst_162 : f32 to vector<8x128xf32>
    %771 = arith.addf %770, %769 : vector<8x128xf32>
    %772 = arith.divf %770, %771 : vector<8x128xf32>
    %773 = vector.extract_strided_slice %766 {offsets = [0, 128], sizes = [8, 128], strides = [1, 1]} : vector<8x512xf32> to vector<8x128xf32>
    %774 = arith.negf %773 : vector<8x128xf32>
    %775 = math.exp %774 : vector<8x128xf32>
    %cst_163 = arith.constant 1.000000e+00 : f32
    %776 = vector.broadcast %cst_163 : f32 to vector<8x128xf32>
    %777 = arith.addf %776, %775 : vector<8x128xf32>
    %778 = arith.divf %776, %777 : vector<8x128xf32>
    %779 = vector.extract_strided_slice %766 {offsets = [0, 256], sizes = [8, 128], strides = [1, 1]} : vector<8x512xf32> to vector<8x128xf32>
    %780 = math.tanh %779 : vector<8x128xf32>
    %781 = vector.extract_strided_slice %766 {offsets = [0, 384], sizes = [8, 128], strides = [1, 1]} : vector<8x512xf32> to vector<8x128xf32>
    %782 = arith.negf %781 : vector<8x128xf32>
    %783 = math.exp %782 : vector<8x128xf32>
    %cst_164 = arith.constant 1.000000e+00 : f32
    %784 = vector.broadcast %cst_164 : f32 to vector<8x128xf32>
    %785 = arith.addf %784, %783 : vector<8x128xf32>
    %786 = arith.divf %784, %785 : vector<8x128xf32>
    %787 = arith.mulf %778, %724 : vector<8x128xf32>
    %788 = arith.mulf %772, %780 : vector<8x128xf32>
    %789 = arith.addf %787, %788 : vector<8x128xf32>
    %790 = math.tanh %789 : vector<8x128xf32>
    %791 = arith.mulf %786, %790 : vector<8x128xf32>
    %792 = arith.index_cast %c11_i32 : i32 to index
    %c0_165 = arith.constant 0 : index
    %c0_166 = arith.constant 0 : index
    %793 = vector.load %arg19[%792, %c0_165, %c0_166] : memref<16x8x128xf32, #tpu.memory_space<vmem>>, vector<1x8x128xf32>
    %794 = vector.shape_cast %793 : vector<1x8x128xf32> to vector<8x128xf32>
    %795 = vector.shape_cast %791 : vector<8x128xf32> to vector<1x8x128xf32>
    tpu.vector_store %arg19[%792, %c0_165, %c0_166], %795 {strides = array<i32>} : memref<16x8x128xf32, #tpu.memory_space<vmem>>, vector<1x8x128xf32>,
    %c12_i32 = arith.constant 12 : i32
    %796 = arith.index_cast %c12_i32 : i32 to index
    %c0_167 = arith.constant 0 : index
    %c0_168 = arith.constant 0 : index
    %797 = vector.load %arg18[%796, %c0_167, %c0_168] : memref<16x8x512xf32, #tpu.memory_space<vmem>>, vector<1x8x512xf32>
    %798 = vector.shape_cast %797 : vector<1x8x512xf32> to vector<8x512xf32>
    %799 = arith.truncf %761 : vector<8x128xf32> to vector<8x128xbf16>
    %cst_169 = arith.constant dense<0.000000e+00> : vector<8x512xf32>
    %800 = tpu.matmul %799, %9, %cst_169 {dimension_numbers = #tpu.dot_dimension_numbers<[1], [0], [0], [1], [0, 0, 1, 1], [], []>} : vector<8x128xbf16>, vector<128x512xbf16>, vector<8x512xf32> -> vector<8x512xf32>
    %801 = arith.addf %798, %800 : vector<8x512xf32>
    %802 = vector.extract_strided_slice %801 {offsets = [0, 0], sizes = [8, 128], strides = [1, 1]} : vector<8x512xf32> to vector<8x128xf32>
    %803 = arith.negf %802 : vector<8x128xf32>
    %804 = math.exp %803 : vector<8x128xf32>
    %cst_170 = arith.constant 1.000000e+00 : f32
    %805 = vector.broadcast %cst_170 : f32 to vector<8x128xf32>
    %806 = arith.addf %805, %804 : vector<8x128xf32>
    %807 = arith.divf %805, %806 : vector<8x128xf32>
    %808 = vector.extract_strided_slice %801 {offsets = [0, 128], sizes = [8, 128], strides = [1, 1]} : vector<8x512xf32> to vector<8x128xf32>
    %809 = arith.negf %808 : vector<8x128xf32>
    %810 = math.exp %809 : vector<8x128xf32>
    %cst_171 = arith.constant 1.000000e+00 : f32
    %811 = vector.broadcast %cst_171 : f32 to vector<8x128xf32>
    %812 = arith.addf %811, %810 : vector<8x128xf32>
    %813 = arith.divf %811, %812 : vector<8x128xf32>
    %814 = vector.extract_strided_slice %801 {offsets = [0, 256], sizes = [8, 128], strides = [1, 1]} : vector<8x512xf32> to vector<8x128xf32>
    %815 = math.tanh %814 : vector<8x128xf32>
    %816 = vector.extract_strided_slice %801 {offsets = [0, 384], sizes = [8, 128], strides = [1, 1]} : vector<8x512xf32> to vector<8x128xf32>
    %817 = arith.negf %816 : vector<8x128xf32>
    %818 = math.exp %817 : vector<8x128xf32>
    %cst_172 = arith.constant 1.000000e+00 : f32
    %819 = vector.broadcast %cst_172 : f32 to vector<8x128xf32>
    %820 = arith.addf %819, %818 : vector<8x128xf32>
    %821 = arith.divf %819, %820 : vector<8x128xf32>
    %822 = arith.mulf %813, %759 : vector<8x128xf32>
    %823 = arith.mulf %807, %815 : vector<8x128xf32>
    %824 = arith.addf %822, %823 : vector<8x128xf32>
    %825 = math.tanh %824 : vector<8x128xf32>
    %826 = arith.mulf %821, %825 : vector<8x128xf32>
    %827 = arith.truncf %826 : vector<8x128xf32> to vector<8x128xbf16>
    %828 = arith.truncf %791 : vector<8x128xf32> to vector<8x128xbf16>
    %829 = tpu.concatenate %827, %828 in 1 : vector<8x128xbf16>, vector<8x128xbf16> -> vector<8x256xbf16>
    %cst_173 = arith.constant dense<0.000000e+00> : vector<8x512xf32>
    %830 = tpu.matmul %829, %10, %cst_173 {dimension_numbers = #tpu.dot_dimension_numbers<[1], [0], [0], [1], [0, 0, 1, 1], [], []>} : vector<8x256xbf16>, vector<256x512xbf16>, vector<8x512xf32> -> vector<8x512xf32>
    %831 = arith.addf %830, %11 : vector<8x512xf32>
    %832 = vector.extract_strided_slice %831 {offsets = [0, 0], sizes = [8, 128], strides = [1, 1]} : vector<8x512xf32> to vector<8x128xf32>
    %833 = arith.negf %832 : vector<8x128xf32>
    %834 = math.exp %833 : vector<8x128xf32>
    %cst_174 = arith.constant 1.000000e+00 : f32
    %835 = vector.broadcast %cst_174 : f32 to vector<8x128xf32>
    %836 = arith.addf %835, %834 : vector<8x128xf32>
    %837 = arith.divf %835, %836 : vector<8x128xf32>
    %838 = vector.extract_strided_slice %831 {offsets = [0, 128], sizes = [8, 128], strides = [1, 1]} : vector<8x512xf32> to vector<8x128xf32>
    %839 = arith.negf %838 : vector<8x128xf32>
    %840 = math.exp %839 : vector<8x128xf32>
    %cst_175 = arith.constant 1.000000e+00 : f32
    %841 = vector.broadcast %cst_175 : f32 to vector<8x128xf32>
    %842 = arith.addf %841, %840 : vector<8x128xf32>
    %843 = arith.divf %841, %842 : vector<8x128xf32>
    %844 = vector.extract_strided_slice %831 {offsets = [0, 256], sizes = [8, 128], strides = [1, 1]} : vector<8x512xf32> to vector<8x128xf32>
    %845 = math.tanh %844 : vector<8x128xf32>
    %846 = vector.extract_strided_slice %831 {offsets = [0, 384], sizes = [8, 128], strides = [1, 1]} : vector<8x512xf32> to vector<8x128xf32>
    %847 = arith.negf %846 : vector<8x128xf32>
    %848 = math.exp %847 : vector<8x128xf32>
    %cst_176 = arith.constant 1.000000e+00 : f32
    %849 = vector.broadcast %cst_176 : f32 to vector<8x128xf32>
    %850 = arith.addf %849, %848 : vector<8x128xf32>
    %851 = arith.divf %849, %850 : vector<8x128xf32>
    %852 = arith.mulf %843, %789 : vector<8x128xf32>
    %853 = arith.mulf %837, %845 : vector<8x128xf32>
    %854 = arith.addf %852, %853 : vector<8x128xf32>
    %855 = math.tanh %854 : vector<8x128xf32>
    %856 = arith.mulf %851, %855 : vector<8x128xf32>
    %857 = arith.index_cast %c12_i32 : i32 to index
    %c0_177 = arith.constant 0 : index
    %c0_178 = arith.constant 0 : index
    %858 = vector.load %arg19[%857, %c0_177, %c0_178] : memref<16x8x128xf32, #tpu.memory_space<vmem>>, vector<1x8x128xf32>
    %859 = vector.shape_cast %858 : vector<1x8x128xf32> to vector<8x128xf32>
    %860 = vector.shape_cast %856 : vector<8x128xf32> to vector<1x8x128xf32>
    tpu.vector_store %arg19[%857, %c0_177, %c0_178], %860 {strides = array<i32>} : memref<16x8x128xf32, #tpu.memory_space<vmem>>, vector<1x8x128xf32>,
    %c13_i32 = arith.constant 13 : i32
    %861 = arith.index_cast %c13_i32 : i32 to index
    %c0_179 = arith.constant 0 : index
    %c0_180 = arith.constant 0 : index
    %862 = vector.load %arg18[%861, %c0_179, %c0_180] : memref<16x8x512xf32, #tpu.memory_space<vmem>>, vector<1x8x512xf32>
    %863 = vector.shape_cast %862 : vector<1x8x512xf32> to vector<8x512xf32>
    %864 = arith.truncf %826 : vector<8x128xf32> to vector<8x128xbf16>
    %cst_181 = arith.constant dense<0.000000e+00> : vector<8x512xf32>
    %865 = tpu.matmul %864, %9, %cst_181 {dimension_numbers = #tpu.dot_dimension_numbers<[1], [0], [0], [1], [0, 0, 1, 1], [], []>} : vector<8x128xbf16>, vector<128x512xbf16>, vector<8x512xf32> -> vector<8x512xf32>
    %866 = arith.addf %863, %865 : vector<8x512xf32>
    %867 = vector.extract_strided_slice %866 {offsets = [0, 0], sizes = [8, 128], strides = [1, 1]} : vector<8x512xf32> to vector<8x128xf32>
    %868 = arith.negf %867 : vector<8x128xf32>
    %869 = math.exp %868 : vector<8x128xf32>
    %cst_182 = arith.constant 1.000000e+00 : f32
    %870 = vector.broadcast %cst_182 : f32 to vector<8x128xf32>
    %871 = arith.addf %870, %869 : vector<8x128xf32>
    %872 = arith.divf %870, %871 : vector<8x128xf32>
    %873 = vector.extract_strided_slice %866 {offsets = [0, 128], sizes = [8, 128], strides = [1, 1]} : vector<8x512xf32> to vector<8x128xf32>
    %874 = arith.negf %873 : vector<8x128xf32>
    %875 = math.exp %874 : vector<8x128xf32>
    %cst_183 = arith.constant 1.000000e+00 : f32
    %876 = vector.broadcast %cst_183 : f32 to vector<8x128xf32>
    %877 = arith.addf %876, %875 : vector<8x128xf32>
    %878 = arith.divf %876, %877 : vector<8x128xf32>
    %879 = vector.extract_strided_slice %866 {offsets = [0, 256], sizes = [8, 128], strides = [1, 1]} : vector<8x512xf32> to vector<8x128xf32>
    %880 = math.tanh %879 : vector<8x128xf32>
    %881 = vector.extract_strided_slice %866 {offsets = [0, 384], sizes = [8, 128], strides = [1, 1]} : vector<8x512xf32> to vector<8x128xf32>
    %882 = arith.negf %881 : vector<8x128xf32>
    %883 = math.exp %882 : vector<8x128xf32>
    %cst_184 = arith.constant 1.000000e+00 : f32
    %884 = vector.broadcast %cst_184 : f32 to vector<8x128xf32>
    %885 = arith.addf %884, %883 : vector<8x128xf32>
    %886 = arith.divf %884, %885 : vector<8x128xf32>
    %887 = arith.mulf %878, %824 : vector<8x128xf32>
    %888 = arith.mulf %872, %880 : vector<8x128xf32>
    %889 = arith.addf %887, %888 : vector<8x128xf32>
    %890 = math.tanh %889 : vector<8x128xf32>
    %891 = arith.mulf %886, %890 : vector<8x128xf32>
    %892 = arith.truncf %891 : vector<8x128xf32> to vector<8x128xbf16>
    %893 = arith.truncf %856 : vector<8x128xf32> to vector<8x128xbf16>
    %894 = tpu.concatenate %892, %893 in 1 : vector<8x128xbf16>, vector<8x128xbf16> -> vector<8x256xbf16>
    %cst_185 = arith.constant dense<0.000000e+00> : vector<8x512xf32>
    %895 = tpu.matmul %894, %10, %cst_185 {dimension_numbers = #tpu.dot_dimension_numbers<[1], [0], [0], [1], [0, 0, 1, 1], [], []>} : vector<8x256xbf16>, vector<256x512xbf16>, vector<8x512xf32> -> vector<8x512xf32>
    %896 = arith.addf %895, %11 : vector<8x512xf32>
    %897 = vector.extract_strided_slice %896 {offsets = [0, 0], sizes = [8, 128], strides = [1, 1]} : vector<8x512xf32> to vector<8x128xf32>
    %898 = arith.negf %897 : vector<8x128xf32>
    %899 = math.exp %898 : vector<8x128xf32>
    %cst_186 = arith.constant 1.000000e+00 : f32
    %900 = vector.broadcast %cst_186 : f32 to vector<8x128xf32>
    %901 = arith.addf %900, %899 : vector<8x128xf32>
    %902 = arith.divf %900, %901 : vector<8x128xf32>
    %903 = vector.extract_strided_slice %896 {offsets = [0, 128], sizes = [8, 128], strides = [1, 1]} : vector<8x512xf32> to vector<8x128xf32>
    %904 = arith.negf %903 : vector<8x128xf32>
    %905 = math.exp %904 : vector<8x128xf32>
    %cst_187 = arith.constant 1.000000e+00 : f32
    %906 = vector.broadcast %cst_187 : f32 to vector<8x128xf32>
    %907 = arith.addf %906, %905 : vector<8x128xf32>
    %908 = arith.divf %906, %907 : vector<8x128xf32>
    %909 = vector.extract_strided_slice %896 {offsets = [0, 256], sizes = [8, 128], strides = [1, 1]} : vector<8x512xf32> to vector<8x128xf32>
    %910 = math.tanh %909 : vector<8x128xf32>
    %911 = vector.extract_strided_slice %896 {offsets = [0, 384], sizes = [8, 128], strides = [1, 1]} : vector<8x512xf32> to vector<8x128xf32>
    %912 = arith.negf %911 : vector<8x128xf32>
    %913 = math.exp %912 : vector<8x128xf32>
    %cst_188 = arith.constant 1.000000e+00 : f32
    %914 = vector.broadcast %cst_188 : f32 to vector<8x128xf32>
    %915 = arith.addf %914, %913 : vector<8x128xf32>
    %916 = arith.divf %914, %915 : vector<8x128xf32>
    %917 = arith.mulf %908, %854 : vector<8x128xf32>
    %918 = arith.mulf %902, %910 : vector<8x128xf32>
    %919 = arith.addf %917, %918 : vector<8x128xf32>
    %920 = math.tanh %919 : vector<8x128xf32>
    %921 = arith.mulf %916, %920 : vector<8x128xf32>
    %922 = arith.index_cast %c13_i32 : i32 to index
    %c0_189 = arith.constant 0 : index
    %c0_190 = arith.constant 0 : index
    %923 = vector.load %arg19[%922, %c0_189, %c0_190] : memref<16x8x128xf32, #tpu.memory_space<vmem>>, vector<1x8x128xf32>
    %924 = vector.shape_cast %923 : vector<1x8x128xf32> to vector<8x128xf32>
    %925 = vector.shape_cast %921 : vector<8x128xf32> to vector<1x8x128xf32>
    tpu.vector_store %arg19[%922, %c0_189, %c0_190], %925 {strides = array<i32>} : memref<16x8x128xf32, #tpu.memory_space<vmem>>, vector<1x8x128xf32>,
    %c14_i32 = arith.constant 14 : i32
    %926 = arith.index_cast %c14_i32 : i32 to index
    %c0_191 = arith.constant 0 : index
    %c0_192 = arith.constant 0 : index
    %927 = vector.load %arg18[%926, %c0_191, %c0_192] : memref<16x8x512xf32, #tpu.memory_space<vmem>>, vector<1x8x512xf32>
    %928 = vector.shape_cast %927 : vector<1x8x512xf32> to vector<8x512xf32>
    %929 = arith.truncf %891 : vector<8x128xf32> to vector<8x128xbf16>
    %cst_193 = arith.constant dense<0.000000e+00> : vector<8x512xf32>
    %930 = tpu.matmul %929, %9, %cst_193 {dimension_numbers = #tpu.dot_dimension_numbers<[1], [0], [0], [1], [0, 0, 1, 1], [], []>} : vector<8x128xbf16>, vector<128x512xbf16>, vector<8x512xf32> -> vector<8x512xf32>
    %931 = arith.addf %928, %930 : vector<8x512xf32>
    %932 = vector.extract_strided_slice %931 {offsets = [0, 0], sizes = [8, 128], strides = [1, 1]} : vector<8x512xf32> to vector<8x128xf32>
    %933 = arith.negf %932 : vector<8x128xf32>
    %934 = math.exp %933 : vector<8x128xf32>
    %cst_194 = arith.constant 1.000000e+00 : f32
    %935 = vector.broadcast %cst_194 : f32 to vector<8x128xf32>
    %936 = arith.addf %935, %934 : vector<8x128xf32>
    %937 = arith.divf %935, %936 : vector<8x128xf32>
    %938 = vector.extract_strided_slice %931 {offsets = [0, 128], sizes = [8, 128], strides = [1, 1]} : vector<8x512xf32> to vector<8x128xf32>
    %939 = arith.negf %938 : vector<8x128xf32>
    %940 = math.exp %939 : vector<8x128xf32>
    %cst_195 = arith.constant 1.000000e+00 : f32
    %941 = vector.broadcast %cst_195 : f32 to vector<8x128xf32>
    %942 = arith.addf %941, %940 : vector<8x128xf32>
    %943 = arith.divf %941, %942 : vector<8x128xf32>
    %944 = vector.extract_strided_slice %931 {offsets = [0, 256], sizes = [8, 128], strides = [1, 1]} : vector<8x512xf32> to vector<8x128xf32>
    %945 = math.tanh %944 : vector<8x128xf32>
    %946 = vector.extract_strided_slice %931 {offsets = [0, 384], sizes = [8, 128], strides = [1, 1]} : vector<8x512xf32> to vector<8x128xf32>
    %947 = arith.negf %946 : vector<8x128xf32>
    %948 = math.exp %947 : vector<8x128xf32>
    %cst_196 = arith.constant 1.000000e+00 : f32
    %949 = vector.broadcast %cst_196 : f32 to vector<8x128xf32>
    %950 = arith.addf %949, %948 : vector<8x128xf32>
    %951 = arith.divf %949, %950 : vector<8x128xf32>
    %952 = arith.mulf %943, %889 : vector<8x128xf32>
    %953 = arith.mulf %937, %945 : vector<8x128xf32>
    %954 = arith.addf %952, %953 : vector<8x128xf32>
    %955 = math.tanh %954 : vector<8x128xf32>
    %956 = arith.mulf %951, %955 : vector<8x128xf32>
    %957 = arith.truncf %956 : vector<8x128xf32> to vector<8x128xbf16>
    %958 = arith.truncf %921 : vector<8x128xf32> to vector<8x128xbf16>
    %959 = tpu.concatenate %957, %958 in 1 : vector<8x128xbf16>, vector<8x128xbf16> -> vector<8x256xbf16>
    %cst_197 = arith.constant dense<0.000000e+00> : vector<8x512xf32>
    %960 = tpu.matmul %959, %10, %cst_197 {dimension_numbers = #tpu.dot_dimension_numbers<[1], [0], [0], [1], [0, 0, 1, 1], [], []>} : vector<8x256xbf16>, vector<256x512xbf16>, vector<8x512xf32> -> vector<8x512xf32>
    %961 = arith.addf %960, %11 : vector<8x512xf32>
    %962 = vector.extract_strided_slice %961 {offsets = [0, 0], sizes = [8, 128], strides = [1, 1]} : vector<8x512xf32> to vector<8x128xf32>
    %963 = arith.negf %962 : vector<8x128xf32>
    %964 = math.exp %963 : vector<8x128xf32>
    %cst_198 = arith.constant 1.000000e+00 : f32
    %965 = vector.broadcast %cst_198 : f32 to vector<8x128xf32>
    %966 = arith.addf %965, %964 : vector<8x128xf32>
    %967 = arith.divf %965, %966 : vector<8x128xf32>
    %968 = vector.extract_strided_slice %961 {offsets = [0, 128], sizes = [8, 128], strides = [1, 1]} : vector<8x512xf32> to vector<8x128xf32>
    %969 = arith.negf %968 : vector<8x128xf32>
    %970 = math.exp %969 : vector<8x128xf32>
    %cst_199 = arith.constant 1.000000e+00 : f32
    %971 = vector.broadcast %cst_199 : f32 to vector<8x128xf32>
    %972 = arith.addf %971, %970 : vector<8x128xf32>
    %973 = arith.divf %971, %972 : vector<8x128xf32>
    %974 = vector.extract_strided_slice %961 {offsets = [0, 256], sizes = [8, 128], strides = [1, 1]} : vector<8x512xf32> to vector<8x128xf32>
    %975 = math.tanh %974 : vector<8x128xf32>
    %976 = vector.extract_strided_slice %961 {offsets = [0, 384], sizes = [8, 128], strides = [1, 1]} : vector<8x512xf32> to vector<8x128xf32>
    %977 = arith.negf %976 : vector<8x128xf32>
    %978 = math.exp %977 : vector<8x128xf32>
    %cst_200 = arith.constant 1.000000e+00 : f32
    %979 = vector.broadcast %cst_200 : f32 to vector<8x128xf32>
    %980 = arith.addf %979, %978 : vector<8x128xf32>
    %981 = arith.divf %979, %980 : vector<8x128xf32>
    %982 = arith.mulf %973, %919 : vector<8x128xf32>
    %983 = arith.mulf %967, %975 : vector<8x128xf32>
    %984 = arith.addf %982, %983 : vector<8x128xf32>
    %985 = math.tanh %984 : vector<8x128xf32>
    %986 = arith.mulf %981, %985 : vector<8x128xf32>
    %987 = arith.index_cast %c14_i32 : i32 to index
    %c0_201 = arith.constant 0 : index
    %c0_202 = arith.constant 0 : index
    %988 = vector.load %arg19[%987, %c0_201, %c0_202] : memref<16x8x128xf32, #tpu.memory_space<vmem>>, vector<1x8x128xf32>
    %989 = vector.shape_cast %988 : vector<1x8x128xf32> to vector<8x128xf32>
    %990 = vector.shape_cast %986 : vector<8x128xf32> to vector<1x8x128xf32>
    tpu.vector_store %arg19[%987, %c0_201, %c0_202], %990 {strides = array<i32>} : memref<16x8x128xf32, #tpu.memory_space<vmem>>, vector<1x8x128xf32>,
    %c15_i32 = arith.constant 15 : i32
    %991 = arith.index_cast %c15_i32 : i32 to index
    %c0_203 = arith.constant 0 : index
    %c0_204 = arith.constant 0 : index
    %992 = vector.load %arg18[%991, %c0_203, %c0_204] : memref<16x8x512xf32, #tpu.memory_space<vmem>>, vector<1x8x512xf32>
    %993 = vector.shape_cast %992 : vector<1x8x512xf32> to vector<8x512xf32>
    %994 = arith.truncf %956 : vector<8x128xf32> to vector<8x128xbf16>
    %cst_205 = arith.constant dense<0.000000e+00> : vector<8x512xf32>
    %995 = tpu.matmul %994, %9, %cst_205 {dimension_numbers = #tpu.dot_dimension_numbers<[1], [0], [0], [1], [0, 0, 1, 1], [], []>} : vector<8x128xbf16>, vector<128x512xbf16>, vector<8x512xf32> -> vector<8x512xf32>
    %996 = arith.addf %993, %995 : vector<8x512xf32>
    %997 = vector.extract_strided_slice %996 {offsets = [0, 0], sizes = [8, 128], strides = [1, 1]} : vector<8x512xf32> to vector<8x128xf32>
    %998 = arith.negf %997 : vector<8x128xf32>
    %999 = math.exp %998 : vector<8x128xf32>
    %cst_206 = arith.constant 1.000000e+00 : f32
    %1000 = vector.broadcast %cst_206 : f32 to vector<8x128xf32>
    %1001 = arith.addf %1000, %999 : vector<8x128xf32>
    %1002 = arith.divf %1000, %1001 : vector<8x128xf32>
    %1003 = vector.extract_strided_slice %996 {offsets = [0, 128], sizes = [8, 128], strides = [1, 1]} : vector<8x512xf32> to vector<8x128xf32>
    %1004 = arith.negf %1003 : vector<8x128xf32>
    %1005 = math.exp %1004 : vector<8x128xf32>
    %cst_207 = arith.constant 1.000000e+00 : f32
    %1006 = vector.broadcast %cst_207 : f32 to vector<8x128xf32>
    %1007 = arith.addf %1006, %1005 : vector<8x128xf32>
    %1008 = arith.divf %1006, %1007 : vector<8x128xf32>
    %1009 = vector.extract_strided_slice %996 {offsets = [0, 256], sizes = [8, 128], strides = [1, 1]} : vector<8x512xf32> to vector<8x128xf32>
    %1010 = math.tanh %1009 : vector<8x128xf32>
    %1011 = vector.extract_strided_slice %996 {offsets = [0, 384], sizes = [8, 128], strides = [1, 1]} : vector<8x512xf32> to vector<8x128xf32>
    %1012 = arith.negf %1011 : vector<8x128xf32>
    %1013 = math.exp %1012 : vector<8x128xf32>
    %cst_208 = arith.constant 1.000000e+00 : f32
    %1014 = vector.broadcast %cst_208 : f32 to vector<8x128xf32>
    %1015 = arith.addf %1014, %1013 : vector<8x128xf32>
    %1016 = arith.divf %1014, %1015 : vector<8x128xf32>
    %1017 = arith.mulf %1008, %954 : vector<8x128xf32>
    %1018 = arith.mulf %1002, %1010 : vector<8x128xf32>
    %1019 = arith.addf %1017, %1018 : vector<8x128xf32>
    %1020 = math.tanh %1019 : vector<8x128xf32>
    %1021 = arith.mulf %1016, %1020 : vector<8x128xf32>
    %1022 = arith.truncf %1021 : vector<8x128xf32> to vector<8x128xbf16>
    %1023 = arith.truncf %986 : vector<8x128xf32> to vector<8x128xbf16>
    %1024 = tpu.concatenate %1022, %1023 in 1 : vector<8x128xbf16>, vector<8x128xbf16> -> vector<8x256xbf16>
    %cst_209 = arith.constant dense<0.000000e+00> : vector<8x512xf32>
    %1025 = tpu.matmul %1024, %10, %cst_209 {dimension_numbers = #tpu.dot_dimension_numbers<[1], [0], [0], [1], [0, 0, 1, 1], [], []>} : vector<8x256xbf16>, vector<256x512xbf16>, vector<8x512xf32> -> vector<8x512xf32>
    %1026 = arith.addf %1025, %11 : vector<8x512xf32>
    %1027 = vector.extract_strided_slice %1026 {offsets = [0, 0], sizes = [8, 128], strides = [1, 1]} : vector<8x512xf32> to vector<8x128xf32>
    %1028 = arith.negf %1027 : vector<8x128xf32>
    %1029 = math.exp %1028 : vector<8x128xf32>
    %cst_210 = arith.constant 1.000000e+00 : f32
    %1030 = vector.broadcast %cst_210 : f32 to vector<8x128xf32>
    %1031 = arith.addf %1030, %1029 : vector<8x128xf32>
    %1032 = arith.divf %1030, %1031 : vector<8x128xf32>
    %1033 = vector.extract_strided_slice %1026 {offsets = [0, 128], sizes = [8, 128], strides = [1, 1]} : vector<8x512xf32> to vector<8x128xf32>
    %1034 = arith.negf %1033 : vector<8x128xf32>
    %1035 = math.exp %1034 : vector<8x128xf32>
    %cst_211 = arith.constant 1.000000e+00 : f32
    %1036 = vector.broadcast %cst_211 : f32 to vector<8x128xf32>
    %1037 = arith.addf %1036, %1035 : vector<8x128xf32>
    %1038 = arith.divf %1036, %1037 : vector<8x128xf32>
    %1039 = vector.extract_strided_slice %1026 {offsets = [0, 256], sizes = [8, 128], strides = [1, 1]} : vector<8x512xf32> to vector<8x128xf32>
    %1040 = math.tanh %1039 : vector<8x128xf32>
    %1041 = vector.extract_strided_slice %1026 {offsets = [0, 384], sizes = [8, 128], strides = [1, 1]} : vector<8x512xf32> to vector<8x128xf32>
    %1042 = arith.negf %1041 : vector<8x128xf32>
    %1043 = math.exp %1042 : vector<8x128xf32>
    %cst_212 = arith.constant 1.000000e+00 : f32
    %1044 = vector.broadcast %cst_212 : f32 to vector<8x128xf32>
    %1045 = arith.addf %1044, %1043 : vector<8x128xf32>
    %1046 = arith.divf %1044, %1045 : vector<8x128xf32>
    %1047 = arith.mulf %1038, %984 : vector<8x128xf32>
    %1048 = arith.mulf %1032, %1040 : vector<8x128xf32>
    %1049 = arith.addf %1047, %1048 : vector<8x128xf32>
    %1050 = math.tanh %1049 : vector<8x128xf32>
    %1051 = arith.mulf %1046, %1050 : vector<8x128xf32>
    %1052 = arith.index_cast %c15_i32 : i32 to index
    %c0_213 = arith.constant 0 : index
    %c0_214 = arith.constant 0 : index
    %1053 = vector.load %arg19[%1052, %c0_213, %c0_214] : memref<16x8x128xf32, #tpu.memory_space<vmem>>, vector<1x8x128xf32>
    %1054 = vector.shape_cast %1053 : vector<1x8x128xf32> to vector<8x128xf32>
    %1055 = vector.shape_cast %1051 : vector<8x128xf32> to vector<1x8x128xf32>
    tpu.vector_store %arg19[%1052, %c0_213, %c0_214], %1055 {strides = array<i32>} : memref<16x8x128xf32, #tpu.memory_space<vmem>>, vector<1x8x128xf32>,
    %c16_i32 = arith.constant 16 : i32
    %c0_215 = arith.constant 0 : index
    %c0_216 = arith.constant 0 : index
    %c0_217 = arith.constant 0 : index
    %1056 = vector.load %arg19[%c0_215, %c0_216, %c0_217] : memref<16x8x128xf32, #tpu.memory_space<vmem>>, vector<16x8x128xf32>
    %1057 = vector.shape_cast %1056 : vector<16x8x128xf32> to vector<128x128xf32>
    %1058 = arith.truncf %1057 : vector<128x128xf32> to vector<128x128xbf16>
    %c0_218 = arith.constant 0 : index
    %c0_219 = arith.constant 0 : index
    %1059 = vector.load %arg11[%c0_218, %c0_219] : memref<128x384xbf16, #tpu.memory_space<vmem>>, vector<128x384xbf16>
    %cst_220 = arith.constant dense<0.000000e+00> : vector<128x384xf32>
    %1060 = tpu.matmul %1058, %1059, %cst_220 {dimension_numbers = #tpu.dot_dimension_numbers<[1], [0], [0], [1], [0, 0, 1, 1], [], []>} : vector<128x128xbf16>, vector<128x384xbf16>, vector<128x384xf32> -> vector<128x384xf32>
    %c0_221 = arith.constant 0 : index
    %c0_222 = arith.constant 0 : index
    %1061 = vector.load %arg12[%c0_221, %c0_222] : memref<1x384xf32, #tpu.memory_space<vmem>>, vector<1x384xf32>
    %1062 = vector.broadcast %1061 : vector<1x384xf32> to vector<128x384xf32>
    %1063 = arith.addf %1060, %1062 : vector<128x384xf32>
    %1064 = arith.negf %1063 : vector<128x384xf32>
    %1065 = math.exp %1064 : vector<128x384xf32>
    %cst_223 = arith.constant 1.000000e+00 : f32
    %1066 = vector.broadcast %cst_223 : f32 to vector<128x384xf32>
    %1067 = arith.addf %1066, %1065 : vector<128x384xf32>
    %1068 = arith.divf %1066, %1067 : vector<128x384xf32>
    %1069 = vector.shape_cast %1068 : vector<128x384xf32> to vector<16x8x384xf32>
    %c0_224 = arith.constant 0 : index
    %c0_225 = arith.constant 0 : index
    %c0_226 = arith.constant 0 : index
    %1070 = vector.load %arg13[%c0_224, %c0_225, %c0_226] : memref<16x8x384xf32, #tpu.memory_space<vmem>>, vector<16x8x384xf32>
    tpu.vector_store %arg13[%c0_224, %c0_225, %c0_226], %1069 {strides = array<i32>} : memref<16x8x384xf32, #tpu.memory_space<vmem>>, vector<16x8x384xf32>,
    %c0_227 = arith.constant 0 : index
    %c0_228 = arith.constant 0 : index
    %1071 = vector.load %arg14[%c0_227, %c0_228] : memref<8x128xf32, #tpu.memory_space<vmem>>, vector<8x128xf32>
    tpu.vector_store %arg14[%c0_227, %c0_228], %1021 {strides = array<i32>} : memref<8x128xf32, #tpu.memory_space<vmem>>, vector<8x128xf32>,
    %c0_229 = arith.constant 0 : index
    %c0_230 = arith.constant 0 : index
    %1072 = vector.load %arg15[%c0_229, %c0_230] : memref<8x128xf32, #tpu.memory_space<vmem>>, vector<8x128xf32>
    tpu.vector_store %arg15[%c0_229, %c0_230], %1019 {strides = array<i32>} : memref<8x128xf32, #tpu.memory_space<vmem>>, vector<8x128xf32>,
    %c0_231 = arith.constant 0 : index
    %c0_232 = arith.constant 0 : index
    %1073 = vector.load %arg16[%c0_231, %c0_232] : memref<8x128xf32, #tpu.memory_space<vmem>>, vector<8x128xf32>
    tpu.vector_store %arg16[%c0_231, %c0_232], %1051 {strides = array<i32>} : memref<8x128xf32, #tpu.memory_space<vmem>>, vector<8x128xf32>,
    %c0_233 = arith.constant 0 : index
    %c0_234 = arith.constant 0 : index
    %1074 = vector.load %arg17[%c0_233, %c0_234] : memref<8x128xf32, #tpu.memory_space<vmem>>, vector<8x128xf32>
    tpu.vector_store %arg17[%c0_233, %c0_234], %1049 {strides = array<i32>} : memref<8x128xf32, #tpu.memory_space<vmem>>, vector<8x128xf32>,
    return
  }
  func.func @transform_0(%arg0: i32) -> (i32, i32, i32) {
    %c0_i32 = arith.constant 0 : i32
    %c0_i32_0 = arith.constant 0 : i32
    %c0_i32_1 = arith.constant 0 : i32
    return %c0_i32, %arg0, %c0_i32_0 : i32, i32, i32
  }
  func.func @transform_1(%arg0: i32) -> (i32, i32) {
    %c0_i32 = arith.constant 0 : i32
    %c0_i32_0 = arith.constant 0 : i32
    return %arg0, %c0_i32 : i32, i32
  }
  func.func @transform_2(%arg0: i32) -> (i32, i32) {
    %c0_i32 = arith.constant 0 : i32
    %c0_i32_0 = arith.constant 0 : i32
    return %arg0, %c0_i32 : i32, i32
  }
  func.func @transform_3(%arg0: i32) -> (i32, i32) {
    %c0_i32 = arith.constant 0 : i32
    %c0_i32_0 = arith.constant 0 : i32
    return %arg0, %c0_i32 : i32, i32
  }
  func.func @transform_4(%arg0: i32) -> (i32, i32) {
    %c0_i32 = arith.constant 0 : i32
    %c0_i32_0 = arith.constant 0 : i32
    return %arg0, %c0_i32 : i32, i32
  }
  func.func @transform_5(%arg0: i32) -> (i32, i32) {
    %c0_i32 = arith.constant 0 : i32
    %c0_i32_0 = arith.constant 0 : i32
    %c0_i32_1 = arith.constant 0 : i32
    return %c0_i32, %c0_i32_0 : i32, i32
  }
  func.func @transform_6(%arg0: i32) -> (i32, i32) {
    %c0_i32 = arith.constant 0 : i32
    %c0_i32_0 = arith.constant 0 : i32
    %c0_i32_1 = arith.constant 0 : i32
    return %c0_i32, %c0_i32_0 : i32, i32
  }
  func.func @transform_7(%arg0: i32) -> (i32, i32) {
    %c0_i32 = arith.constant 0 : i32
    %c0_i32_0 = arith.constant 0 : i32
    %c0_i32_1 = arith.constant 0 : i32
    return %c0_i32, %c0_i32_0 : i32, i32
  }
  func.func @transform_8(%arg0: i32) -> (i32, i32) {
    %c0_i32 = arith.constant 0 : i32
    %c0_i32_0 = arith.constant 0 : i32
    %c0_i32_1 = arith.constant 0 : i32
    return %c0_i32, %c0_i32_0 : i32, i32
  }
  func.func @transform_9(%arg0: i32) -> (i32, i32) {
    %c0_i32 = arith.constant 0 : i32
    %c0_i32_0 = arith.constant 0 : i32
    return %arg0, %c0_i32 : i32, i32
  }
  func.func @transform_10(%arg0: i32) -> (i32, i32) {
    %c0_i32 = arith.constant 0 : i32
    %c0_i32_0 = arith.constant 0 : i32
    %c0_i32_1 = arith.constant 0 : i32
    return %c0_i32, %c0_i32_0 : i32, i32
  }
  func.func @transform_11(%arg0: i32) -> (i32, i32) {
    %c0_i32 = arith.constant 0 : i32
    %c0_i32_0 = arith.constant 0 : i32
    %c0_i32_1 = arith.constant 0 : i32
    return %c0_i32, %c0_i32_0 : i32, i32
  }
  func.func @transform_12(%arg0: i32) -> (i32, i32, i32) {
    %c0_i32 = arith.constant 0 : i32
    %c0_i32_0 = arith.constant 0 : i32
    %c0_i32_1 = arith.constant 0 : i32
    return %c0_i32, %arg0, %c0_i32_0 : i32, i32, i32
  }
  func.func @transform_13(%arg0: i32) -> (i32, i32) {
    %c0_i32 = arith.constant 0 : i32
    %c0_i32_0 = arith.constant 0 : i32
    return %arg0, %c0_i32 : i32, i32
  }
  func.func @transform_14(%arg0: i32) -> (i32, i32) {
    %c0_i32 = arith.constant 0 : i32
    %c0_i32_0 = arith.constant 0 : i32
    return %arg0, %c0_i32 : i32, i32
  }
  func.func @transform_15(%arg0: i32) -> (i32, i32) {
    %c0_i32 = arith.constant 0 : i32
    %c0_i32_0 = arith.constant 0 : i32
    return %arg0, %c0_i32 : i32, i32
  }
  func.func @transform_16(%arg0: i32) -> (i32, i32) {
    %c0_i32 = arith.constant 0 : i32
    %c0_i32_0 = arith.constant 0 : i32
    return %arg0, %c0_i32 : i32, i32
  }
}

</mosaic_0001>

<llo_original>
// kernel: seperation_block_forward.1
$region0: #{seperation_block_forward.1}
  #allocation0 [shape = 'u32[]', space=smem, size = 0x4, offset = 0x4, fixed_abs, tag = 'smem constant byte address 0x4 - core index']
  #allocation1 [shape = 'u32[144,128]{1,0:T(1,128)}', space=vmem, size = 0x12000, scoped, tag = 'internal scratch']
  #allocation2 [shape = 'f32[16,8,512]{2,1,0:T(8,128)}', space=vmem, size = 0x40000, scoped, tag = 'scratch operand']
  #allocation3 [shape = 'f32[16,8,128]{2,1,0:T(8,128)}', space=vmem, size = 0x10000, scoped, tag = 'scratch operand']
  %s0 = inlined_call_operand.vmem [shape: bf16[16,8,384], index: 0, kind: input, shape index: {}]
  %s1 = inlined_call_operand.vmem [shape: f32[8,128], index: 1, kind: input, shape index: {}]
  %s2 = inlined_call_operand.vmem [shape: f32[8,128], index: 2, kind: input, shape index: {}]
  %s3 = inlined_call_operand.vmem [shape: f32[8,128], index: 3, kind: input, shape index: {}]
  %s4 = inlined_call_operand.hbm [shape: f32[8,128], index: 4, kind: input, shape index: {}]
  %s5 = inlined_call_operand.vmem [shape: bf16[384,512], index: 5, kind: input, shape index: {}]
  %s6 = inlined_call_operand.vmem [shape: bf16[128,512], index: 6, kind: input, shape index: {}]
  %s7 = inlined_call_operand.vmem [shape: f32[1,512], index: 7, kind: input, shape index: {}]
  %s8 = inlined_call_operand.hbm [shape: bf16[256,512], index: 8, kind: input, shape index: {}]
  %s9 = inlined_call_operand.vmem [shape: f32[8,512], index: 9, kind: input, shape index: {}]
  %s10 = inlined_call_operand.hbm [shape: bf16[128,384], index: 10, kind: input, shape index: {}]
  %s11 = inlined_call_operand.hbm [shape: f32[1,384], index: 11, kind: input, shape index: {}]
  %s12 = inlined_call_operand.vmem [shape: f32[16,8,384], index: 12, kind: output, shape index: {0}]
  %s13 = inlined_call_operand.hbm [shape: f32[8,128], index: 13, kind: output, shape index: {1}]
  %s14 = inlined_call_operand.hbm [shape: f32[8,128], index: 14, kind: output, shape index: {2}]
  %s15 = inlined_call_operand.hbm [shape: f32[8,128], index: 15, kind: output, shape index: {3}]
  %s16 = inlined_call_operand.hbm [shape: f32[8,128], index: 16, kind: output, shape index: {4}]
  %17 = xla_tuple %s12, %s13, %s14, %s15, %s16
  %s18 = sld [smem:[#allocation0]]
  $region106: #{seperation_block_forward.1} parent=0
    _
  %s20 = ssub.s32 1, %s18
  %s21 = scalar_select 0, %s20, %s18
  $region1: #{seperation_block_forward.1} parent=0
    #allocation4 [shape = 'u8[4096]{0}', space=vmem, size = 0x1000, scoped, tag = 'input window, operand 4, single buffered']
    #allocation5 [shape = 's32[1]{0}', space=sflag, size = 0x4, scoped, tag = 'scoped memory for seperation_block_forward.1']
    #allocation6 [shape = 's32[1]{0}', space=sflag, size = 0x4, scoped, tag = 'scoped memory for seperation_block_forward.1']
    #allocation7 [shape = 'u8[262144]{0}', space=vmem, size = 0x40000, scoped, tag = 'input window, operand 8, single buffered']
    #allocation8 [shape = 's32[1]{0}', space=sflag, size = 0x4, scoped, tag = 'scoped memory for seperation_block_forward.1']
    #allocation9 [shape = 'u8[98304]{0}', space=vmem, size = 0x18000, scoped, tag = 'input window, operand 10, single buffered']
    #allocation10 [shape = 'u8[1536]{0}', space=vmem, size = 0x800, scoped, tag = 'input window, operand 11, single buffered']
    #allocation11 [shape = 's32[1]{0}', space=sflag, size = 0x4, scoped, tag = 'scoped memory for seperation_block_forward.1']
    #allocation12 [shape = 'u8[4096]{0}', space=vmem, size = 0x1000, scoped, tag = 'output window, operand 1, single buffered']
    #allocation13 [shape = 'u8[4096]{0}', space=vmem, size = 0x1000, scoped, tag = 'output window, operand 2, single buffered']
    #allocation14 [shape = 's32[1]{0}', space=sflag, size = 0x4, scoped, tag = 'scoped memory for seperation_block_forward.1']
    #allocation15 [shape = 'u8[4096]{0}', space=vmem, size = 0x1000, scoped, tag = 'output window, operand 3, single buffered']
    #allocation16 [shape = 'u8[4096]{0}', space=vmem, size = 0x1000, scoped, tag = 'output window, operand 4, single buffered']
    #allocation17 [shape = 's32[1]{0}', space=sflag, size = 0x4, scoped, tag = 'scoped memory for seperation_block_forward.1']
    %22 = vsyncpa [#allocation5], 0
    %23 = vsyncpa [#allocation8], 0
    %24 = vsyncpa [#allocation11], 0
    %25 = vsyncpa [#allocation6], 0
    %26 = vsyncpa [#allocation14], 0
    %27 = vsyncpa [#allocation17], 0
    // Predicated region
    $region2: #{seperation_block_forward.1} parent=1 // pred_check
      _
    $region3: #{seperation_block_forward.1} parent=1 // pred_check_branch
      %29 = sbr.rel (0) target = $region5
    $region4: #{seperation_block_forward.1} parent=1 // pred_region
      _
    $region5: #{seperation_block_forward.1} parent=1 // pred_fallthru
      _
    // Predicated region
    $region6: #{seperation_block_forward.1} parent=1 // pred_check
      _
    $region7: #{seperation_block_forward.1} parent=1 // pred_check_branch
      %31 = sbr.rel (0) target = $region9
    $region8: #{seperation_block_forward.1} parent=1 // pred_region
      _
    $region9: #{seperation_block_forward.1} parent=1 // pred_fallthru
      _
    // Predicated region
    $region10: #{seperation_block_forward.1} parent=1 // pred_check
      _
    $region11: #{seperation_block_forward.1} parent=1 // pred_check_branch
      %33 = sbr.rel (0) target = $region13
    $region12: #{seperation_block_forward.1} parent=1 // pred_region
      _
    $region13: #{seperation_block_forward.1} parent=1 // pred_fallthru
      _
    // Predicated region
    $region14: #{seperation_block_forward.1} parent=1 // pred_check
      _
    $region15: #{seperation_block_forward.1} parent=1 // pred_check_branch
      %35 = sbr.rel (0) target = $region17
    $region16: #{seperation_block_forward.1} parent=1 // pred_region
      _
    $region17: #{seperation_block_forward.1} parent=1 // pred_fallthru
      _
    // Predicated region
    $region18: #{seperation_block_forward.1} parent=1 // pred_check
      _
    $region19: #{seperation_block_forward.1} parent=1 // pred_check_branch
      %37 = sbr.rel (0) target = $region21
    $region20: #{seperation_block_forward.1} parent=1 // pred_region
      %s39 = ssub.s32 128, 128
      %40 = vsyncadd [#allocation5], %s39
      %s42 = sshll.u32 [#allocation4], 4
      %s43 = int_to_ptr.vmem [resolvable:$true] %s42
      %45 = dma.hbm_to_vmem [thread:$0]  %s4, 128, %s43, [#allocation5]
    $region21: #{seperation_block_forward.1} parent=1 // pred_fallthru
      _
    // Predicated region
    $region22: #{seperation_block_forward.1} parent=1 // pred_check
      _
    $region23: #{seperation_block_forward.1} parent=1 // pred_check_branch
      %47 = sbr.rel (0) target = $region25
    $region24: #{seperation_block_forward.1} parent=1 // pred_region
      _
    $region25: #{seperation_block_forward.1} parent=1 // pred_fallthru
      _
    // Predicated region
    $region26: #{seperation_block_forward.1} parent=1 // pred_check
      _
    $region27: #{seperation_block_forward.1} parent=1 // pred_check_branch
      %49 = sbr.rel (0) target = $region29
    $region28: #{seperation_block_forward.1} parent=1 // pred_region
      _
    $region29: #{seperation_block_forward.1} parent=1 // pred_fallthru
      _
    // Predicated region
    $region30: #{seperation_block_forward.1} parent=1 // pred_check
      _
    $region31: #{seperation_block_forward.1} parent=1 // pred_check_branch
      %51 = sbr.rel (0) target = $region33
    $region32: #{seperation_block_forward.1} parent=1 // pred_region
      _
    $region33: #{seperation_block_forward.1} parent=1 // pred_fallthru
      _
    // Predicated region
    $region34: #{seperation_block_forward.1} parent=1 // pred_check
      _
    $region35: #{seperation_block_forward.1} parent=1 // pred_check_branch
      %53 = sbr.rel (0) target = $region37
    $region36: #{seperation_block_forward.1} parent=1 // pred_region
      %s55 = ssub.s32 8192, 8192
      %56 = vsyncadd [#allocation8], %s55
      %s57 = sshll.u32 [#allocation7], 4
      %s58 = int_to_ptr.vmem [resolvable:$true] %s57
      %63 = dma.hbm_to_vmem [thread:$0]  %s8, 8192, %s58, [#allocation8], 256, 256, 16
    $region37: #{seperation_block_forward.1} parent=1 // pred_fallthru
      _
    // Predicated region
    $region38: #{seperation_block_forward.1} parent=1 // pred_check
      _
    $region39: #{seperation_block_forward.1} parent=1 // pred_check_branch
      %65 = sbr.rel (0) target = $region41
    $region40: #{seperation_block_forward.1} parent=1 // pred_region
      _
    $region41: #{seperation_block_forward.1} parent=1 // pred_fallthru
      _
    // Predicated region
    $region42: #{seperation_block_forward.1} parent=1 // pred_check
      _
    $region43: #{seperation_block_forward.1} parent=1 // pred_check_branch
      %67 = sbr.rel (0) target = $region45
    $region44: #{seperation_block_forward.1} parent=1 // pred_region
      %s69 = ssub.s32 3072, 3072
      %70 = vsyncadd [#allocation8], %s69
      %s71 = sshll.u32 [#allocation9], 4
      %s72 = int_to_ptr.vmem [resolvable:$true] %s71
      %77 = dma.hbm_to_vmem [thread:$0]  %s10, 3072, %s72, [#allocation8], 192, 192, 12
    $region45: #{seperation_block_forward.1} parent=1 // pred_fallthru
      _
    // Predicated region
    $region46: #{seperation_block_forward.1} parent=1 // pred_check
      _
    $region47: #{seperation_block_forward.1} parent=1 // pred_check_branch
      %79 = sbr.rel (0) target = $region49
    $region48: #{seperation_block_forward.1} parent=1 // pred_region
      %s81 = ssub.s32 48, 48
      %82 = vsyncadd [#allocation11], %s81
      %s84 = sshll.u32 [#allocation10], 4
      %s85 = int_to_ptr.vmem [resolvable:$true] %s84
      %87 = dma.hbm_to_vmem [thread:$0]  %s11, 48, %s85, [#allocation11]
    $region49: #{seperation_block_forward.1} parent=1 // pred_fallthru
      _
    // Predicated region
    $region50: #{seperation_block_forward.1} parent=1 // pred_check
      _
    $region51: #{seperation_block_forward.1} parent=1 // pred_check_branch
      %89 = sbr.rel (0) target = $region53
    $region52: #{seperation_block_forward.1} parent=1 // pred_region
      %90 = dma.done [#allocation5], 128
    $region53: #{seperation_block_forward.1} parent=1 // pred_fallthru
      _
    // Predicated region
    $region54: #{seperation_block_forward.1} parent=1 // pred_check
      _
    $region55: #{seperation_block_forward.1} parent=1 // pred_check_branch
      %92 = sbr.rel (0) target = $region57
    $region56: #{seperation_block_forward.1} parent=1 // pred_region
      %93 = dma.done [#allocation8], 8192
    $region57: #{seperation_block_forward.1} parent=1 // pred_fallthru
      _
    // Predicated region
    $region58: #{seperation_block_forward.1} parent=1 // pred_check
      _
    $region59: #{seperation_block_forward.1} parent=1 // pred_check_branch
      %95 = sbr.rel (0) target = $region61
    $region60: #{seperation_block_forward.1} parent=1 // pred_region
      %96 = dma.done [#allocation8], 3072
    $region61: #{seperation_block_forward.1} parent=1 // pred_fallthru
      _
    // Predicated region
    $region62: #{seperation_block_forward.1} parent=1 // pred_check
      _
    $region63: #{seperation_block_forward.1} parent=1 // pred_check_branch
      %98 = sbr.rel (0) target = $region65
    $region64: #{seperation_block_forward.1} parent=1 // pred_region
      %99 = dma.done [#allocation11], 48
    $region65: #{seperation_block_forward.1} parent=1 // pred_fallthru
      _
    %v101 = vld [vmem:[%s0] sm:$0xff]
    %v102 = vld [vmem:[%s0 + $0x8] sm:$0xf]
    %v103 = vld [vmem:[%s0 + $0xc] sm:$0xff]
    %v104 = vld [vmem:[%s0 + $0x14] sm:$0xf]
    %v105 = vld [vmem:[%s0 + $0x18] sm:$0xff]
    %v106 = vld [vmem:[%s0 + $0x20] sm:$0xf]
    %v107 = vld [vmem:[%s0 + $0x24] sm:$0xff]
    %v108 = vld [vmem:[%s0 + $0x2c] sm:$0xf]
    %v109 = vld [vmem:[%s0 + $0x30] sm:$0xff]
    %v110 = vld [vmem:[%s0 + $0x38] sm:$0xf]
    %v111 = vld [vmem:[%s0 + $0x3c] sm:$0xff]
    %v112 = vld [vmem:[%s0 + $0x44] sm:$0xf]
    %v113 = vld [vmem:[%s0 + $0x48] sm:$0xff]
    %v114 = vld [vmem:[%s0 + $0x50] sm:$0xf]
    %v115 = vld [vmem:[%s0 + $0x54] sm:$0xff]
    %v116 = vld [vmem:[%s0 + $0x5c] sm:$0xf]
    %v117 = vld [vmem:[%s0 + $0x60] sm:$0xff]
    %v118 = vld [vmem:[%s0 + $0x68] sm:$0xf]
    %v119 = vld [vmem:[%s0 + $0x6c] sm:$0xff]
    %v120 = vld [vmem:[%s0 + $0x74] sm:$0xf]
    %v121 = vld [vmem:[%s0 + $0x78] sm:$0xff]
    %v122 = vld [vmem:[%s0 + $0x80] sm:$0xf]
    %v123 = vld [vmem:[%s0 + $0x84] sm:$0xff]
    %v124 = vld [vmem:[%s0 + $0x8c] sm:$0xf]
    %v125 = vld [vmem:[%s0 + $0x90] sm:$0xff]
    %v126 = vld [vmem:[%s0 + $0x98] sm:$0xf]
    %v127 = vld [vmem:[%s0 + $0x9c] sm:$0xff]
    %v128 = vld [vmem:[%s0 + $0xa4] sm:$0xf]
    %v129 = vld [vmem:[%s0 + $0xa8] sm:$0xff]
    %v130 = vld [vmem:[%s0 + $0xb0] sm:$0xf]
    %v131 = vld [vmem:[%s0 + $0xb4] sm:$0xff]
    %v132 = vld [vmem:[%s0 + $0xbc] sm:$0xf]
    %v133 = vld [vmem:[%s5] sm:$0xff]
    %v134 = vld [vmem:[%s5 + $0x8] sm:$0xff]
    %v135 = vld [vmem:[%s5 + $0x10] sm:$0xff]
    %v136 = vld [vmem:[%s5 + $0x18] sm:$0xff]
    %v137 = vld [vmem:[%s5 + $0x20] sm:$0xff]
    %v138 = vld [vmem:[%s5 + $0x28] sm:$0xff]
    %v139 = vld [vmem:[%s5 + $0x30] sm:$0xff]
    %v140 = vld [vmem:[%s5 + $0x38] sm:$0xff]
    %v141 = vld [vmem:[%s5 + $0x40] sm:$0xff]
    %v142 = vld [vmem:[%s5 + $0x48] sm:$0xff]
    %v143 = vld [vmem:[%s5 + $0x50] sm:$0xff]
    %v144 = vld [vmem:[%s5 + $0x58] sm:$0xff]
    %v145 = vld [vmem:[%s5 + $0x60] sm:$0xff]
    %v146 = vld [vmem:[%s5 + $0x68] sm:$0xff]
    %v147 = vld [vmem:[%s5 + $0x70] sm:$0xff]
    %v148 = vld [vmem:[%s5 + $0x78] sm:$0xff]
    %v149 = vld [vmem:[%s5 + $0x80] sm:$0xff]
    %v150 = vld [vmem:[%s5 + $0x88] sm:$0xff]
    %v151 = vld [vmem:[%s5 + $0x90] sm:$0xff]
    %v152 = vld [vmem:[%s5 + $0x98] sm:$0xff]
    %v153 = vld [vmem:[%s5 + $0xa0] sm:$0xff]
    %v154 = vld [vmem:[%s5 + $0xa8] sm:$0xff]
    %v155 = vld [vmem:[%s5 + $0xb0] sm:$0xff]
    %v156 = vld [vmem:[%s5 + $0xb8] sm:$0xff]
    %v157 = vld [vmem:[%s5 + $0xc0] sm:$0xff]
    %v158 = vld [vmem:[%s5 + $0xc8] sm:$0xff]
    %v159 = vld [vmem:[%s5 + $0xd0] sm:$0xff]
    %v160 = vld [vmem:[%s5 + $0xd8] sm:$0xff]
    %v161 = vld [vmem:[%s5 + $0xe0] sm:$0xff]
    %v162 = vld [vmem:[%s5 + $0xe8] sm:$0xff]
    %v163 = vld [vmem:[%s5 + $0xf0] sm:$0xff]
    %v164 = vld [vmem:[%s5 + $0xf8] sm:$0xff]
    %v165 = vld [vmem:[%s5 + $0x100] sm:$0xff]
    %v166 = vld [vmem:[%s5 + $0x108] sm:$0xff]
    %v167 = vld [vmem:[%s5 + $0x110] sm:$0xff]
    %v168 = vld [vmem:[%s5 + $0x118] sm:$0xff]
    %v169 = vld [vmem:[%s5 + $0x120] sm:$0xff]
    %v170 = vld [vmem:[%s5 + $0x128] sm:$0xff]
    %v171 = vld [vmem:[%s5 + $0x130] sm:$0xff]
    %v172 = vld [vmem:[%s5 + $0x138] sm:$0xff]
    %v173 = vld [vmem:[%s5 + $0x140] sm:$0xff]
    %v174 = vld [vmem:[%s5 + $0x148] sm:$0xff]
    %v175 = vld [vmem:[%s5 + $0x150] sm:$0xff]
    %v176 = vld [vmem:[%s5 + $0x158] sm:$0xff]
    %v177 = vld [vmem:[%s5 + $0x160] sm:$0xff]
    %v178 = vld [vmem:[%s5 + $0x168] sm:$0xff]
    %v179 = vld [vmem:[%s5 + $0x170] sm:$0xff]
    %v180 = vld [vmem:[%s5 + $0x178] sm:$0xff]
    %v181 = vld [vmem:[%s5 + $0x180] sm:$0xff]
    %v182 = vld [vmem:[%s5 + $0x188] sm:$0xff]
    %v183 = vld [vmem:[%s5 + $0x190] sm:$0xff]
    %v184 = vld [vmem:[%s5 + $0x198] sm:$0xff]
    %v185 = vld [vmem:[%s5 + $0x1a0] sm:$0xff]
    %v186 = vld [vmem:[%s5 + $0x1a8] sm:$0xff]
    %v187 = vld [vmem:[%s5 + $0x1b0] sm:$0xff]
    %v188 = vld [vmem:[%s5 + $0x1b8] sm:$0xff]
    %v189 = vld [vmem:[%s5 + $0x1c0] sm:$0xff]
    %v190 = vld [vmem:[%s5 + $0x1c8] sm:$0xff]
    %v191 = vld [vmem:[%s5 + $0x1d0] sm:$0xff]
    %v192 = vld [vmem:[%s5 + $0x1d8] sm:$0xff]
    %v193 = vld [vmem:[%s5 + $0x1e0] sm:$0xff]
    %v194 = vld [vmem:[%s5 + $0x1e8] sm:$0xff]
    %v195 = vld [vmem:[%s5 + $0x1f0] sm:$0xff]
    %v196 = vld [vmem:[%s5 + $0x1f8] sm:$0xff]
    %v197 = vld [vmem:[%s5 + $0x200] sm:$0xff]
    %v198 = vld [vmem:[%s5 + $0x208] sm:$0xff]
    %v199 = vld [vmem:[%s5 + $0x210] sm:$0xff]
    %v200 = vld [vmem:[%s5 + $0x218] sm:$0xff]
    %v201 = vld [vmem:[%s5 + $0x220] sm:$0xff]
    %v202 = vld [vmem:[%s5 + $0x228] sm:$0xff]
    %v203 = vld [vmem:[%s5 + $0x230] sm:$0xff]
    %v204 = vld [vmem:[%s5 + $0x238] sm:$0xff]
    %v205 = vld [vmem:[%s5 + $0x240] sm:$0xff]
    %v206 = vld [vmem:[%s5 + $0x248] sm:$0xff]
    %v207 = vld [vmem:[%s5 + $0x250] sm:$0xff]
    %v208 = vld [vmem:[%s5 + $0x258] sm:$0xff]
    %v209 = vld [vmem:[%s5 + $0x260] sm:$0xff]
    %v210 = vld [vmem:[%s5 + $0x268] sm:$0xff]
    %v211 = vld [vmem:[%s5 + $0x270] sm:$0xff]
    %v212 = vld [vmem:[%s5 + $0x278] sm:$0xff]
    %v213 = vld [vmem:[%s5 + $0x280] sm:$0xff]
    %v214 = vld [vmem:[%s5 + $0x288] sm:$0xff]
    %v215 = vld [vmem:[%s5 + $0x290] sm:$0xff]
    %v216 = vld [vmem:[%s5 + $0x298] sm:$0xff]
    %v217 = vld [vmem:[%s5 + $0x2a0] sm:$0xff]
    %v218 = vld [vmem:[%s5 + $0x2a8] sm:$0xff]
    %v219 = vld [vmem:[%s5 + $0x2b0] sm:$0xff]
    %v220 = vld [vmem:[%s5 + $0x2b8] sm:$0xff]
    %v221 = vld [vmem:[%s5 + $0x2c0] sm:$0xff]
    %v222 = vld [vmem:[%s5 + $0x2c8] sm:$0xff]
    %v223 = vld [vmem:[%s5 + $0x2d0] sm:$0xff]
    %v224 = vld [vmem:[%s5 + $0x2d8] sm:$0xff]
    %v225 = vld [vmem:[%s5 + $0x2e0] sm:$0xff]
    %v226 = vld [vmem:[%s5 + $0x2e8] sm:$0xff]
    %v227 = vld [vmem:[%s5 + $0x2f0] sm:$0xff]
    %v228 = vld [vmem:[%s5 + $0x2f8] sm:$0xff]
    %v229 = vld [vmem:[%s7] sm:$0xf]
    %v231 = vlaneseq
    %v232 = vshrl.u32 %v231, 7
    %v233 = vsub.s32 0, %v232
    %v234 = vrot.slane %v229, %v233
    %v235 = vlaneseq
    %v236 = vshrl.u32 %v235, 7
    %v237 = vsub.s32 1, %v236
    %v238 = vrot.slane %v229, %v237
    %v239 = vlaneseq
    %v240 = vshrl.u32 %v239, 7
    %v241 = vsub.s32 2, %v240
    %v242 = vrot.slane %v229, %v241
    %v243 = vlaneseq
    %v244 = vshrl.u32 %v243, 7
    %v245 = vsub.s32 3, %v244
    %v246 = vrot.slane %v229, %v245
    %v283 = vunpack.c.l.b16 %v101
    %v284 = vunpack.c.h.b16 %v101
    %v285 = vunpack.c.l.b16 %v102
    %v286 = vunpack.c.l.b16 %v103
    %v287 = vunpack.c.h.b16 %v103
    %v288 = vunpack.c.l.b16 %v104
    %v289 = vunpack.c.l.b16 %v105
    %v290 = vunpack.c.h.b16 %v105
    %v291 = vunpack.c.l.b16 %v106
    %v292 = vunpack.c.l.b16 %v107
    %v293 = vunpack.c.h.b16 %v107
    %v294 = vunpack.c.l.b16 %v108
    %v295 = vunpack.c.l.b16 %v109
    %v296 = vunpack.c.h.b16 %v109
    %v297 = vunpack.c.l.b16 %v110
    %v298 = vunpack.c.l.b16 %v111
    %v299 = vunpack.c.h.b16 %v111
    %v300 = vunpack.c.l.b16 %v112
    %v301 = vunpack.c.l.b16 %v113
    %v302 = vunpack.c.h.b16 %v113
    %v303 = vunpack.c.l.b16 %v114
    %v304 = vunpack.c.l.b16 %v115
    %v305 = vunpack.c.h.b16 %v115
    %v306 = vunpack.c.l.b16 %v116
    %v307 = vunpack.c.l.b16 %v117
    %v308 = vunpack.c.h.b16 %v117
    %v309 = vunpack.c.l.b16 %v118
    %v310 = vunpack.c.l.b16 %v119
    %v311 = vunpack.c.h.b16 %v119
    %v312 = vunpack.c.l.b16 %v120
    %v313 = vunpack.c.l.b16 %v121
    %v314 = vunpack.c.h.b16 %v121
    %v315 = vunpack.c.l.b16 %v122
    %v316 = vunpack.c.l.b16 %v123
    %v317 = vunpack.c.h.b16 %v123
    %v318 = vunpack.c.l.b16 %v124
    %v319 = vunpack.c.l.b16 %v125
    %v320 = vunpack.c.h.b16 %v125
    %v321 = vunpack.c.l.b16 %v126
    %v322 = vunpack.c.l.b16 %v127
    %v323 = vunpack.c.h.b16 %v127
    %v324 = vunpack.c.l.b16 %v128
    %v325 = vunpack.c.l.b16 %v129
    %v326 = vunpack.c.h.b16 %v129
    %v327 = vunpack.c.l.b16 %v130
    %v328 = vunpack.c.l.b16 %v131
    %v329 = vunpack.c.h.b16 %v131
    %v330 = vunpack.c.l.b16 %v132
    %v331 = vpack.c.b16 %v286, %v283
    %v332 = vpack.c.b16 %v287, %v284
    %v333 = vpack.c.b16 %v288, %v285
    %v334 = vpack.c.b16 %v292, %v289
    %v335 = vpack.c.b16 %v293, %v290
    %v336 = vpack.c.b16 %v294, %v291
    %v337 = vpack.c.b16 %v298, %v295
    %v338 = vpack.c.b16 %v299, %v296
    %v339 = vpack.c.b16 %v300, %v297
    %v340 = vpack.c.b16 %v304, %v301
    %v341 = vpack.c.b16 %v305, %v302
    %v342 = vpack.c.b16 %v306, %v303
    %v343 = vpack.c.b16 %v310, %v307
    %v344 = vpack.c.b16 %v311, %v308
    %v345 = vpack.c.b16 %v312, %v309
    %v346 = vpack.c.b16 %v316, %v313
    %v347 = vpack.c.b16 %v317, %v314
    %v348 = vpack.c.b16 %v318, %v315
    %v349 = vpack.c.b16 %v322, %v319
    %v350 = vpack.c.b16 %v323, %v320
    %v351 = vpack.c.b16 %v324, %v321
    %v352 = vpack.c.b16 %v328, %v325
    %v353 = vpack.c.b16 %v329, %v326
    %v354 = vpack.c.b16 %v330, %v327
    %v475 = vunpack.c.l.b16 %v133
    %v476 = vunpack.c.h.b16 %v133
    %v477 = vunpack.c.l.b16 %v134
    %v478 = vunpack.c.h.b16 %v134
    %v479 = vunpack.c.l.b16 %v135
    %v480 = vunpack.c.h.b16 %v135
    %v481 = vunpack.c.l.b16 %v136
    %v482 = vunpack.c.h.b16 %v136
    %v483 = vunpack.c.l.b16 %v137
    %v484 = vunpack.c.h.b16 %v137
    %v485 = vunpack.c.l.b16 %v138
    %v486 = vunpack.c.h.b16 %v138
    %v487 = vunpack.c.l.b16 %v139
    %v488 = vunpack.c.h.b16 %v139
    %v489 = vunpack.c.l.b16 %v140
    %v490 = vunpack.c.h.b16 %v140
    %v491 = vunpack.c.l.b16 %v141
    %v492 = vunpack.c.h.b16 %v141
    %v493 = vunpack.c.l.b16 %v142
    %v494 = vunpack.c.h.b16 %v142
    %v495 = vunpack.c.l.b16 %v143
    %v496 = vunpack.c.h.b16 %v143
    %v497 = vunpack.c.l.b16 %v144
    %v498 = vunpack.c.h.b16 %v144
    %v499 = vunpack.c.l.b16 %v145
    %v500 = vunpack.c.h.b16 %v145
    %v501 = vunpack.c.l.b16 %v146
    %v502 = vunpack.c.h.b16 %v146
    %v503 = vunpack.c.l.b16 %v147
    %v504 = vunpack.c.h.b16 %v147
    %v505 = vunpack.c.l.b16 %v148
    %v506 = vunpack.c.h.b16 %v148
    %v507 = vunpack.c.l.b16 %v149
    %v508 = vunpack.c.h.b16 %v149
    %v509 = vunpack.c.l.b16 %v150
    %v510 = vunpack.c.h.b16 %v150
    %v511 = vunpack.c.l.b16 %v151
    %v512 = vunpack.c.h.b16 %v151
    %v513 = vunpack.c.l.b16 %v152
    %v514 = vunpack.c.h.b16 %v152
    %v515 = vunpack.c.l.b16 %v153
    %v516 = vunpack.c.h.b16 %v153
    %v517 = vunpack.c.l.b16 %v154
    %v518 = vunpack.c.h.b16 %v154
    %v519 = vunpack.c.l.b16 %v155
    %v520 = vunpack.c.h.b16 %v155
    %v521 = vunpack.c.l.b16 %v156
    %v522 = vunpack.c.h.b16 %v156
    %v523 = vunpack.c.l.b16 %v157
    %v524 = vunpack.c.h.b16 %v157
    %v525 = vunpack.c.l.b16 %v158
    %v526 = vunpack.c.h.b16 %v158
    %v527 = vunpack.c.l.b16 %v159
    %v528 = vunpack.c.h.b16 %v159
    %v529 = vunpack.c.l.b16 %v160
    %v530 = vunpack.c.h.b16 %v160
    %v531 = vunpack.c.l.b16 %v161
    %v532 = vunpack.c.h.b16 %v161
    %v533 = vunpack.c.l.b16 %v162
    %v534 = vunpack.c.h.b16 %v162
    %v535 = vunpack.c.l.b16 %v163
    %v536 = vunpack.c.h.b16 %v163
    %v537 = vunpack.c.l.b16 %v164
    %v538 = vunpack.c.h.b16 %v164
    %v539 = vunpack.c.l.b16 %v165
    %v540 = vunpack.c.h.b16 %v165
    %v541 = vunpack.c.l.b16 %v166
    %v542 = vunpack.c.h.b16 %v166
    %v543 = vunpack.c.l.b16 %v167
    %v544 = vunpack.c.h.b16 %v167
    %v545 = vunpack.c.l.b16 %v168
    %v546 = vunpack.c.h.b16 %v168
    %v547 = vunpack.c.l.b16 %v169
    %v548 = vunpack.c.h.b16 %v169
    %v549 = vunpack.c.l.b16 %v170
    %v550 = vunpack.c.h.b16 %v170
    %v551 = vunpack.c.l.b16 %v171
    %v552 = vunpack.c.h.b16 %v171
    %v553 = vunpack.c.l.b16 %v172
    %v554 = vunpack.c.h.b16 %v172
    %v555 = vunpack.c.l.b16 %v173
    %v556 = vunpack.c.h.b16 %v173
    %v557 = vunpack.c.l.b16 %v174
    %v558 = vunpack.c.h.b16 %v174
    %v559 = vunpack.c.l.b16 %v175
    %v560 = vunpack.c.h.b16 %v175
    %v561 = vunpack.c.l.b16 %v176
    %v562 = vunpack.c.h.b16 %v176
    %v563 = vunpack.c.l.b16 %v177
    %v564 = vunpack.c.h.b16 %v177
    %v565 = vunpack.c.l.b16 %v178
    %v566 = vunpack.c.h.b16 %v178
    %v567 = vunpack.c.l.b16 %v179
    %v568 = vunpack.c.h.b16 %v179
    %v569 = vunpack.c.l.b16 %v180
    %v570 = vunpack.c.h.b16 %v180
    %v571 = vunpack.c.l.b16 %v181
    %v572 = vunpack.c.h.b16 %v181
    %v573 = vunpack.c.l.b16 %v182
    %v574 = vunpack.c.h.b16 %v182
    %v575 = vunpack.c.l.b16 %v183
    %v576 = vunpack.c.h.b16 %v183
    %v577 = vunpack.c.l.b16 %v184
    %v578 = vunpack.c.h.b16 %v184
    %v579 = vunpack.c.l.b16 %v185
    %v580 = vunpack.c.h.b16 %v185
    %v581 = vunpack.c.l.b16 %v186
    %v582 = vunpack.c.h.b16 %v186
    %v583 = vunpack.c.l.b16 %v187
    %v584 = vunpack.c.h.b16 %v187
    %v585 = vunpack.c.l.b16 %v188
    %v586 = vunpack.c.h.b16 %v188
    %v587 = vunpack.c.l.b16 %v189
    %v588 = vunpack.c.h.b16 %v189
    %v589 = vunpack.c.l.b16 %v190
    %v590 = vunpack.c.h.b16 %v190
    %v591 = vunpack.c.l.b16 %v191
    %v592 = vunpack.c.h.b16 %v191
    %v593 = vunpack.c.l.b16 %v192
    %v594 = vunpack.c.h.b16 %v192
    %v595 = vunpack.c.l.b16 %v193
    %v596 = vunpack.c.h.b16 %v193
    %v597 = vunpack.c.l.b16 %v194
    %v598 = vunpack.c.h.b16 %v194
    %v599 = vunpack.c.l.b16 %v195
    %v600 = vunpack.c.h.b16 %v195
    %v601 = vunpack.c.l.b16 %v196
    %v602 = vunpack.c.h.b16 %v196
    %v603 = vunpack.c.l.b16 %v197
    %v604 = vunpack.c.h.b16 %v197
    %v605 = vunpack.c.l.b16 %v198
    %v606 = vunpack.c.h.b16 %v198
    %v607 = vunpack.c.l.b16 %v199
    %v608 = vunpack.c.h.b16 %v199
    %v609 = vunpack.c.l.b16 %v200
    %v610 = vunpack.c.h.b16 %v200
    %v611 = vunpack.c.l.b16 %v201
    %v612 = vunpack.c.h.b16 %v201
    %v613 = vunpack.c.l.b16 %v202
    %v614 = vunpack.c.h.b16 %v202
    %v615 = vunpack.c.l.b16 %v203
    %v616 = vunpack.c.h.b16 %v203
    %v617 = vunpack.c.l.b16 %v204
    %v618 = vunpack.c.h.b16 %v204
    %v619 = vunpack.c.l.b16 %v205
    %v620 = vunpack.c.h.b16 %v205
    %v621 = vunpack.c.l.b16 %v206
    %v622 = vunpack.c.h.b16 %v206
    %v623 = vunpack.c.l.b16 %v207
    %v624 = vunpack.c.h.b16 %v207
    %v625 = vunpack.c.l.b16 %v208
    %v626 = vunpack.c.h.b16 %v208
    %v627 = vunpack.c.l.b16 %v209
    %v628 = vunpack.c.h.b16 %v209
    %v629 = vunpack.c.l.b16 %v210
    %v630 = vunpack.c.h.b16 %v210
    %v631 = vunpack.c.l.b16 %v211
    %v632 = vunpack.c.h.b16 %v211
    %v633 = vunpack.c.l.b16 %v212
    %v634 = vunpack.c.h.b16 %v212
    %v635 = vunpack.c.l.b16 %v213
    %v636 = vunpack.c.h.b16 %v213
    %v637 = vunpack.c.l.b16 %v214
    %v638 = vunpack.c.h.b16 %v214
    %v639 = vunpack.c.l.b16 %v215
    %v640 = vunpack.c.h.b16 %v215
    %v641 = vunpack.c.l.b16 %v216
    %v642 = vunpack.c.h.b16 %v216
    %v643 = vunpack.c.l.b16 %v217
    %v644 = vunpack.c.h.b16 %v217
    %v645 = vunpack.c.l.b16 %v218
    %v646 = vunpack.c.h.b16 %v218
    %v647 = vunpack.c.l.b16 %v219
    %v648 = vunpack.c.h.b16 %v219
    %v649 = vunpack.c.l.b16 %v220
    %v650 = vunpack.c.h.b16 %v220
    %v651 = vunpack.c.l.b16 %v221
    %v652 = vunpack.c.h.b16 %v221
    %v653 = vunpack.c.l.b16 %v222
    %v654 = vunpack.c.h.b16 %v222
    %v655 = vunpack.c.l.b16 %v223
    %v656 = vunpack.c.h.b16 %v223
    %v657 = vunpack.c.l.b16 %v224
    %v658 = vunpack.c.h.b16 %v224
    %v659 = vunpack.c.l.b16 %v225
    %v660 = vunpack.c.h.b16 %v225
    %v661 = vunpack.c.l.b16 %v226
    %v662 = vunpack.c.h.b16 %v226
    %v663 = vunpack.c.l.b16 %v227
    %v664 = vunpack.c.h.b16 %v227
    %v665 = vunpack.c.l.b16 %v228
    %v666 = vunpack.c.h.b16 %v228
    %v667 = vpack.c.b16 %v479, %v475
    %v668 = vpack.c.b16 %v480, %v476
    %v669 = vpack.c.b16 %v481, %v477
    %v670 = vpack.c.b16 %v482, %v478
    %v671 = vpack.c.b16 %v487, %v483
    %v672 = vpack.c.b16 %v488, %v484
    %v673 = vpack.c.b16 %v489, %v485
    %v674 = vpack.c.b16 %v490, %v486
    %v675 = vpack.c.b16 %v495, %v491
    %v676 = vpack.c.b16 %v496, %v492
    %v677 = vpack.c.b16 %v497, %v493
    %v678 = vpack.c.b16 %v498, %v494
    %v679 = vpack.c.b16 %v503, %v499
    %v680 = vpack.c.b16 %v504, %v500
    %v681 = vpack.c.b16 %v505, %v501
    %v682 = vpack.c.b16 %v506, %v502
    %v683 = vpack.c.b16 %v511, %v507
    %v684 = vpack.c.b16 %v512, %v508
    %v685 = vpack.c.b16 %v513, %v509
    %v686 = vpack.c.b16 %v514, %v510
    %v687 = vpack.c.b16 %v519, %v515
    %v688 = vpack.c.b16 %v520, %v516
    %v689 = vpack.c.b16 %v521, %v517
    %v690 = vpack.c.b16 %v522, %v518
    %v691 = vpack.c.b16 %v527, %v523
    %v692 = vpack.c.b16 %v528, %v524
    %v693 = vpack.c.b16 %v529, %v525
    %v694 = vpack.c.b16 %v530, %v526
    %v695 = vpack.c.b16 %v535, %v531
    %v696 = vpack.c.b16 %v536, %v532
    %v697 = vpack.c.b16 %v537, %v533
    %v698 = vpack.c.b16 %v538, %v534
    %v699 = vpack.c.b16 %v543, %v539
    %v700 = vpack.c.b16 %v544, %v540
    %v701 = vpack.c.b16 %v545, %v541
    %v702 = vpack.c.b16 %v546, %v542
    %v703 = vpack.c.b16 %v551, %v547
    %v704 = vpack.c.b16 %v552, %v548
    %v705 = vpack.c.b16 %v553, %v549
    %v706 = vpack.c.b16 %v554, %v550
    %v707 = vpack.c.b16 %v559, %v555
    %v708 = vpack.c.b16 %v560, %v556
    %v709 = vpack.c.b16 %v561, %v557
    %v710 = vpack.c.b16 %v562, %v558
    %v711 = vpack.c.b16 %v567, %v563
    %v712 = vpack.c.b16 %v568, %v564
    %v713 = vpack.c.b16 %v569, %v565
    %v714 = vpack.c.b16 %v570, %v566
    %v715 = vpack.c.b16 %v575, %v571
    %v716 = vpack.c.b16 %v576, %v572
    %v717 = vpack.c.b16 %v577, %v573
    %v718 = vpack.c.b16 %v578, %v574
    %v719 = vpack.c.b16 %v583, %v579
    %v720 = vpack.c.b16 %v584, %v580
    %v721 = vpack.c.b16 %v585, %v581
    %v722 = vpack.c.b16 %v586, %v582
    %v723 = vpack.c.b16 %v591, %v587
    %v724 = vpack.c.b16 %v592, %v588
    %v725 = vpack.c.b16 %v593, %v589
    %v726 = vpack.c.b16 %v594, %v590
    %v727 = vpack.c.b16 %v599, %v595
    %v728 = vpack.c.b16 %v600, %v596
    %v729 = vpack.c.b16 %v601, %v597
    %v730 = vpack.c.b16 %v602, %v598
    %v731 = vpack.c.b16 %v607, %v603
    %v732 = vpack.c.b16 %v608, %v604
    %v733 = vpack.c.b16 %v609, %v605
    %v734 = vpack.c.b16 %v610, %v606
    %v735 = vpack.c.b16 %v615, %v611
    %v736 = vpack.c.b16 %v616, %v612
    %v737 = vpack.c.b16 %v617, %v613
    %v738 = vpack.c.b16 %v618, %v614
    %v739 = vpack.c.b16 %v623, %v619
    %v740 = vpack.c.b16 %v624, %v620
    %v741 = vpack.c.b16 %v625, %v621
    %v742 = vpack.c.b16 %v626, %v622
    %v743 = vpack.c.b16 %v631, %v627
    %v744 = vpack.c.b16 %v632, %v628
    %v745 = vpack.c.b16 %v633, %v629
    %v746 = vpack.c.b16 %v634, %v630
    %v747 = vpack.c.b16 %v639, %v635
    %v748 = vpack.c.b16 %v640, %v636
    %v749 = vpack.c.b16 %v641, %v637
    %v750 = vpack.c.b16 %v642, %v638
    %v751 = vpack.c.b16 %v647, %v643
    %v752 = vpack.c.b16 %v648, %v644
    %v753 = vpack.c.b16 %v649, %v645
    %v754 = vpack.c.b16 %v650, %v646
    %v755 = vpack.c.b16 %v655, %v651
    %v756 = vpack.c.b16 %v656, %v652
    %v757 = vpack.c.b16 %v657, %v653
    %v758 = vpack.c.b16 %v658, %v654
    %v759 = vpack.c.b16 %v663, %v659
    %v760 = vpack.c.b16 %v664, %v660
    %v761 = vpack.c.b16 %v665, %v661
    %v762 = vpack.c.b16 %v666, %v662
    %859 = vmatprep.subr.bf16.mxu0 %v668
    %860 = vmatpush1.bf16.msra.mxu0 %v667
    %861 = vmatprep.subr.bf16.mxu0 %v672
    %862 = vmatpush1.bf16.msra.mxu0 %v671
    %863 = vmatprep.subr.bf16.mxu0 %v676
    %864 = vmatpush1.bf16.msra.mxu0 %v675
    %865 = vmatprep.subr.bf16.mxu0 %v680
    %866 = vmatpush1.bf16.msra.mxu0 %v679
    %867 = vmatprep.subr.bf16.mxu0 %v684
    %868 = vmatpush1.bf16.msra.mxu0 %v683
    %869 = vmatprep.subr.bf16.mxu0 %v688
    %870 = vmatpush1.bf16.msra.mxu0 %v687
    %871 = vmatprep.subr.bf16.mxu0 %v692
    %872 = vmatpush1.bf16.msra.mxu0 %v691
    %873 = vmatprep.subr.bf16.mxu0 %v696
    %874 = vmatpush1.bf16.msra.mxu0 %v695
    %875 = vmatprep.subr.bf16.mxu0 %v700
    %876 = vmatpush1.bf16.msra.mxu0 %v699
    %877 = vmatprep.subr.bf16.mxu0 %v704
    %878 = vmatpush1.bf16.msra.mxu0 %v703
    %879 = vmatprep.subr.bf16.mxu0 %v708
    %880 = vmatpush1.bf16.msra.mxu0 %v707
    %881 = vmatprep.subr.bf16.mxu0 %v712
    %882 = vmatpush1.bf16.msra.mxu0 %v711
    %883 = vmatprep.subr.bf16.mxu0 %v716
    %884 = vmatpush1.bf16.msra.mxu0 %v715
    %885 = vmatprep.subr.bf16.mxu0 %v720
    %886 = vmatpush1.bf16.msra.mxu0 %v719
    %887 = vmatprep.subr.bf16.mxu0 %v724
    %888 = vmatpush1.bf16.msra.mxu0 %v723
    %889 = vmatprep.subr.bf16.mxu0 %v728
    %890 = vmatpush1.bf16.msra.mxu0 %v727
    %891 = vmatprep.mubr.bf16.mxu0 %v332
    %892 = vmatmul.mubr.bf16.gmra.mrb[0].mxu0 %v331
    %v893 = vpop.f32.mrb[0].mxu0
    %v894 = vadd.f32 %v234, %v893
    %v895 = vpop.f32.mrb[0].mxu0
    %v896 = vadd.f32 %v238, %v895
    %v897 = vpop.f32.mrb[0].mxu0
    %v898 = vadd.f32 %v234, %v897
    %v899 = vpop.f32.mrb[0].mxu0
    %v900 = vadd.f32 %v238, %v899
    %901 = vmatprep.mubr.bf16.mxu0 %v335
    %902 = vmatmul.mubr.bf16.gmra.mrb[0].mxu0 %v334
    %v903 = vpop.f32.mrb[0].mxu0
    %v904 = vadd.f32 %v234, %v903
    %v905 = vpop.f32.mrb[0].mxu0
    %v906 = vadd.f32 %v238, %v905
    %v907 = vpop.f32.mrb[0].mxu0
    %v908 = vadd.f32 %v234, %v907
    %v909 = vpop.f32.mrb[0].mxu0
    %v910 = vadd.f32 %v238, %v909
    %911 = vmatprep.mubr.bf16.mxu0 %v338
    %912 = vmatmul.mubr.bf16.gmra.mrb[0].mxu0 %v337
    %v913 = vpop.f32.mrb[0].mxu0
    %v914 = vadd.f32 %v234, %v913
    %v915 = vpop.f32.mrb[0].mxu0
    %v916 = vadd.f32 %v238, %v915
    %v917 = vpop.f32.mrb[0].mxu0
    %v918 = vadd.f32 %v234, %v917
    %v919 = vpop.f32.mrb[0].mxu0
    %v920 = vadd.f32 %v238, %v919
    %921 = vmatprep.mubr.bf16.mxu0 %v341
    %922 = vmatmul.mubr.bf16.gmra.mrb[0].mxu0 %v340
    %v923 = vpop.f32.mrb[0].mxu0
    %v924 = vadd.f32 %v234, %v923
    %v925 = vpop.f32.mrb[0].mxu0
    %v926 = vadd.f32 %v238, %v925
    %v927 = vpop.f32.mrb[0].mxu0
    %v928 = vadd.f32 %v234, %v927
    %v929 = vpop.f32.mrb[0].mxu0
    %v930 = vadd.f32 %v238, %v929
    %931 = vmatprep.mubr.bf16.mxu0 %v344
    %932 = vmatmul.mubr.bf16.gmra.mrb[0].mxu0 %v343
    %v933 = vpop.f32.mrb[0].mxu0
    %v934 = vadd.f32 %v234, %v933
    %v935 = vpop.f32.mrb[0].mxu0
    %v936 = vadd.f32 %v238, %v935
    %v937 = vpop.f32.mrb[0].mxu0
    %v938 = vadd.f32 %v234, %v937
    %v939 = vpop.f32.mrb[0].mxu0
    %v940 = vadd.f32 %v238, %v939
    %941 = vmatprep.mubr.bf16.mxu0 %v347
    %942 = vmatmul.mubr.bf16.gmra.mrb[0].mxu0 %v346
    %v943 = vpop.f32.mrb[0].mxu0
    %v944 = vadd.f32 %v234, %v943
    %v945 = vpop.f32.mrb[0].mxu0
    %v946 = vadd.f32 %v238, %v945
    %v947 = vpop.f32.mrb[0].mxu0
    %v948 = vadd.f32 %v234, %v947
    %v949 = vpop.f32.mrb[0].mxu0
    %v950 = vadd.f32 %v238, %v949
    %951 = vmatprep.mubr.bf16.mxu0 %v350
    %952 = vmatmul.mubr.bf16.gmra.mrb[0].mxu0 %v349
    %v953 = vpop.f32.mrb[0].mxu0
    %v954 = vadd.f32 %v234, %v953
    %v955 = vpop.f32.mrb[0].mxu0
    %v956 = vadd.f32 %v238, %v955
    %v957 = vpop.f32.mrb[0].mxu0
    %v958 = vadd.f32 %v234, %v957
    %v959 = vpop.f32.mrb[0].mxu0
    %v960 = vadd.f32 %v238, %v959
    %961 = vmatprep.mubr.bf16.mxu0 %v353
    %962 = vmatmul.mubr.bf16.gmra.mrb[0].mxu0 %v352
    %v963 = vpop.f32.mrb[0].mxu0
    %v964 = vadd.f32 %v234, %v963
    %v965 = vpop.f32.mrb[0].mxu0
    %v966 = vadd.f32 %v238, %v965
    %v967 = vpop.f32.mrb[0].mxu0
    %v968 = vadd.f32 %v234, %v967
    %v969 = vpop.f32.mrb[0].mxu0
    %v970 = vadd.f32 %v238, %v969
    %971 = vdwg.mxu0
    %972 = vmatprep.subr.bf16.mxu0 %v732
    %973 = vmatpush1.bf16.msra.mxu0 %v731
    %974 = vmatprep.subr.bf16.mxu0 %v736
    %975 = vmatpush1.bf16.msra.mxu0 %v735
    %976 = vmatprep.subr.bf16.mxu0 %v740
    %977 = vmatpush1.bf16.msra.mxu0 %v739
    %978 = vmatprep.subr.bf16.mxu0 %v744
    %979 = vmatpush1.bf16.msra.mxu0 %v743
    %980 = vmatprep.subr.bf16.mxu0 %v748
    %981 = vmatpush1.bf16.msra.mxu0 %v747
    %982 = vmatprep.subr.bf16.mxu0 %v752
    %983 = vmatpush1.bf16.msra.mxu0 %v751
    %984 = vmatprep.subr.bf16.mxu0 %v756
    %985 = vmatpush1.bf16.msra.mxu0 %v755
    %986 = vmatprep.subr.bf16.mxu0 %v760
    %987 = vmatpush1.bf16.msra.mxu0 %v759
    %988 = vmatprep.subr.bf16.mxu0 0
    %989 = vmatpush1.bf16.msra.mxu0 0
    %990 = vmatprep.subr.bf16.mxu0 0
    %991 = vmatpush1.bf16.msra.mxu0 0
    %992 = vmatprep.subr.bf16.mxu0 0
    %993 = vmatpush1.bf16.msra.mxu0 0
    %994 = vmatprep.subr.bf16.mxu0 0
    %995 = vmatpush1.bf16.msra.mxu0 0
    %996 = vmatprep.subr.bf16.mxu0 0
    %997 = vmatpush1.bf16.msra.mxu0 0
    %998 = vmatprep.subr.bf16.mxu0 0
    %999 = vmatpush1.bf16.msra.mxu0 0
    %1000 = vmatprep.subr.bf16.mxu0 0
    %1001 = vmatpush1.bf16.msra.mxu0 0
    %1002 = vmatprep.subr.bf16.mxu0 0
    %1003 = vmatpush1.bf16.msra.mxu0 0
    %1004 = vmatprep.mubr.bf16.mxu0 0
    %1005 = vmatmul.mubr.bf16.gmra.mrb[0].mxu0 %v333
    %v1006 = vpop.f32.mrb[0].mxu0
    %v1007 = vadd.f32 %v894, %v1006
    %v1008 = vpop.f32.mrb[0].mxu0
    %v1009 = vadd.f32 %v896, %v1008
    %v1010 = vpop.f32.mrb[0].mxu0
    %v1011 = vadd.f32 %v898, %v1010
    %v1012 = vpop.f32.mrb[0].mxu0
    %v1013 = vadd.f32 %v900, %v1012
    %1014 = vmatprep.mubr.bf16.mxu0 0
    %1015 = vmatmul.mubr.bf16.gmra.mrb[0].mxu0 %v336
    %v1016 = vpop.f32.mrb[0].mxu0
    %v1017 = vadd.f32 %v904, %v1016
    %v1018 = vpop.f32.mrb[0].mxu0
    %v1019 = vadd.f32 %v906, %v1018
    %v1020 = vpop.f32.mrb[0].mxu0
    %v1021 = vadd.f32 %v908, %v1020
    %v1022 = vpop.f32.mrb[0].mxu0
    %v1023 = vadd.f32 %v910, %v1022
    %1024 = vmatprep.mubr.bf16.mxu0 0
    %1025 = vmatmul.mubr.bf16.gmra.mrb[0].mxu0 %v339
    %v1026 = vpop.f32.mrb[0].mxu0
    %v1027 = vadd.f32 %v914, %v1026
    %v1028 = vpop.f32.mrb[0].mxu0
    %v1029 = vadd.f32 %v916, %v1028
    %v1030 = vpop.f32.mrb[0].mxu0
    %v1031 = vadd.f32 %v918, %v1030
    %v1032 = vpop.f32.mrb[0].mxu0
    %v1033 = vadd.f32 %v920, %v1032
    %1034 = vmatprep.mubr.bf16.mxu0 0
    %1035 = vmatmul.mubr.bf16.gmra.mrb[0].mxu0 %v342
    %v1036 = vpop.f32.mrb[0].mxu0
    %v1037 = vadd.f32 %v924, %v1036
    %v1038 = vpop.f32.mrb[0].mxu0
    %v1039 = vadd.f32 %v926, %v1038
    %v1040 = vpop.f32.mrb[0].mxu0
    %v1041 = vadd.f32 %v928, %v1040
    %v1042 = vpop.f32.mrb[0].mxu0
    %v1043 = vadd.f32 %v930, %v1042
    %1044 = vmatprep.mubr.bf16.mxu0 0
    %1045 = vmatmul.mubr.bf16.gmra.mrb[0].mxu0 %v345
    %v1046 = vpop.f32.mrb[0].mxu0
    %v1047 = vadd.f32 %v934, %v1046
    %v1048 = vpop.f32.mrb[0].mxu0
    %v1049 = vadd.f32 %v936, %v1048
    %v1050 = vpop.f32.mrb[0].mxu0
    %v1051 = vadd.f32 %v938, %v1050
    %v1052 = vpop.f32.mrb[0].mxu0
    %v1053 = vadd.f32 %v940, %v1052
    %1054 = vmatprep.mubr.bf16.mxu0 0
    %1055 = vmatmul.mubr.bf16.gmra.mrb[0].mxu0 %v348
    %v1056 = vpop.f32.mrb[0].mxu0
    %v1057 = vadd.f32 %v944, %v1056
    %v1058 = vpop.f32.mrb[0].mxu0
    %v1059 = vadd.f32 %v946, %v1058
    %v1060 = vpop.f32.mrb[0].mxu0
    %v1061 = vadd.f32 %v948, %v1060
    %v1062 = vpop.f32.mrb[0].mxu0
    %v1063 = vadd.f32 %v950, %v1062
    %1064 = vmatprep.mubr.bf16.mxu0 0
    %1065 = vmatmul.mubr.bf16.gmra.mrb[0].mxu0 %v351
    %v1066 = vpop.f32.mrb[0].mxu0
    %v1067 = vadd.f32 %v954, %v1066
    %v1068 = vpop.f32.mrb[0].mxu0
    %v1069 = vadd.f32 %v956, %v1068
    %v1070 = vpop.f32.mrb[0].mxu0
    %v1071 = vadd.f32 %v958, %v1070
    %v1072 = vpop.f32.mrb[0].mxu0
    %v1073 = vadd.f32 %v960, %v1072
    %1074 = vmatprep.mubr.bf16.mxu0 0
    %1075 = vmatmul.mubr.bf16.gmra.mrb[0].mxu0 %v354
    %v1076 = vpop.f32.mrb[0].mxu0
    %v1077 = vadd.f32 %v964, %v1076
    %v1078 = vpop.f32.mrb[0].mxu0
    %v1079 = vadd.f32 %v966, %v1078
    %v1080 = vpop.f32.mrb[0].mxu0
    %v1081 = vadd.f32 %v968, %v1080
    %v1082 = vpop.f32.mrb[0].mxu0
    %v1083 = vadd.f32 %v970, %v1082
    %1084 = vdwg.mxu0
    %1085 = vmatprep.subr.bf16.mxu0 %v670
    %1086 = vmatpush1.bf16.msra.mxu0 %v669
    %1087 = vmatprep.subr.bf16.mxu0 %v674
    %1088 = vmatpush1.bf16.msra.mxu0 %v673
    %1089 = vmatprep.subr.bf16.mxu0 %v678
    %1090 = vmatpush1.bf16.msra.mxu0 %v677
    %1091 = vmatprep.subr.bf16.mxu0 %v682
    %1092 = vmatpush1.bf16.msra.mxu0 %v681
    %1093 = vmatprep.subr.bf16.mxu0 %v686
    %1094 = vmatpush1.bf16.msra.mxu0 %v685
    %1095 = vmatprep.subr.bf16.mxu0 %v690
    %1096 = vmatpush1.bf16.msra.mxu0 %v689
    %1097 = vmatprep.subr.bf16.mxu0 %v694
    %1098 = vmatpush1.bf16.msra.mxu0 %v693
    %1099 = vmatprep.subr.bf16.mxu0 %v698
    %1100 = vmatpush1.bf16.msra.mxu0 %v697
    %1101 = vmatprep.subr.bf16.mxu0 %v702
    %1102 = vmatpush1.bf16.msra.mxu0 %v701
    %1103 = vmatprep.subr.bf16.mxu0 %v706
    %1104 = vmatpush1.bf16.msra.mxu0 %v705
    %1105 = vmatprep.subr.bf16.mxu0 %v710
    %1106 = vmatpush1.bf16.msra.mxu0 %v709
    %1107 = vmatprep.subr.bf16.mxu0 %v714
    %1108 = vmatpush1.bf16.msra.mxu0 %v713
    %1109 = vmatprep.subr.bf16.mxu0 %v718
    %1110 = vmatpush1.bf16.msra.mxu0 %v717
    %1111 = vmatprep.subr.bf16.mxu0 %v722
    %1112 = vmatpush1.bf16.msra.mxu0 %v721
    %1113 = vmatprep.subr.bf16.mxu0 %v726
    %1114 = vmatpush1.bf16.msra.mxu0 %v725
    %1115 = vmatprep.subr.bf16.mxu0 %v730
    %1116 = vmatpush1.bf16.msra.mxu0 %v729
    %1117 = vmatprep.mubr.bf16.mxu0 %v332
    %1118 = vmatmul.mubr.bf16.gmra.mrb[0].mxu0 %v331
    %v1119 = vpop.f32.mrb[0].mxu0
    %v1120 = vadd.f32 %v242, %v1119
    %v1121 = vpop.f32.mrb[0].mxu0
    %v1122 = vadd.f32 %v246, %v1121
    %v1123 = vpop.f32.mrb[0].mxu0
    %v1124 = vadd.f32 %v242, %v1123
    %v1125 = vpop.f32.mrb[0].mxu0
    %v1126 = vadd.f32 %v246, %v1125
    %1127 = vmatprep.mubr.bf16.mxu0 %v335
    %1128 = vmatmul.mubr.bf16.gmra.mrb[0].mxu0 %v334
    %v1129 = vpop.f32.mrb[0].mxu0
    %v1130 = vadd.f32 %v242, %v1129
    %v1131 = vpop.f32.mrb[0].mxu0
    %v1132 = vadd.f32 %v246, %v1131
    %v1133 = vpop.f32.mrb[0].mxu0
    %v1134 = vadd.f32 %v242, %v1133
    %v1135 = vpop.f32.mrb[0].mxu0
    %v1136 = vadd.f32 %v246, %v1135
    %1137 = vmatprep.mubr.bf16.mxu0 %v338
    %1138 = vmatmul.mubr.bf16.gmra.mrb[0].mxu0 %v337
    %v1139 = vpop.f32.mrb[0].mxu0
    %v1140 = vadd.f32 %v242, %v1139
    %v1141 = vpop.f32.mrb[0].mxu0
    %v1142 = vadd.f32 %v246, %v1141
    %v1143 = vpop.f32.mrb[0].mxu0
    %v1144 = vadd.f32 %v242, %v1143
    %v1145 = vpop.f32.mrb[0].mxu0
    %v1146 = vadd.f32 %v246, %v1145
    %1147 = vmatprep.mubr.bf16.mxu0 %v341
    %1148 = vmatmul.mubr.bf16.gmra.mrb[0].mxu0 %v340
    %v1149 = vpop.f32.mrb[0].mxu0
    %v1150 = vadd.f32 %v242, %v1149
    %v1151 = vpop.f32.mrb[0].mxu0
    %v1152 = vadd.f32 %v246, %v1151
    %v1153 = vpop.f32.mrb[0].mxu0
    %v1154 = vadd.f32 %v242, %v1153
    %v1155 = vpop.f32.mrb[0].mxu0
    %v1156 = vadd.f32 %v246, %v1155
    %1157 = vmatprep.mubr.bf16.mxu0 %v344
    %1158 = vmatmul.mubr.bf16.gmra.mrb[0].mxu0 %v343
    %v1159 = vpop.f32.mrb[0].mxu0
    %v1160 = vadd.f32 %v242, %v1159
    %v1161 = vpop.f32.mrb[0].mxu0
    %v1162 = vadd.f32 %v246, %v1161
    %v1163 = vpop.f32.mrb[0].mxu0
    %v1164 = vadd.f32 %v242, %v1163
    %v1165 = vpop.f32.mrb[0].mxu0
    %v1166 = vadd.f32 %v246, %v1165
    %1167 = vmatprep.mubr.bf16.mxu0 %v347
    %1168 = vmatmul.mubr.bf16.gmra.mrb[0].mxu0 %v346
    %v1169 = vpop.f32.mrb[0].mxu0
    %v1170 = vadd.f32 %v242, %v1169
    %v1171 = vpop.f32.mrb[0].mxu0
    %v1172 = vadd.f32 %v246, %v1171
    %v1173 = vpop.f32.mrb[0].mxu0
    %v1174 = vadd.f32 %v242, %v1173
    %v1175 = vpop.f32.mrb[0].mxu0
    %v1176 = vadd.f32 %v246, %v1175
    %1177 = vmatprep.mubr.bf16.mxu0 %v350
    %1178 = vmatmul.mubr.bf16.gmra.mrb[0].mxu0 %v349
    %v1179 = vpop.f32.mrb[0].mxu0
    %v1180 = vadd.f32 %v242, %v1179
    %v1181 = vpop.f32.mrb[0].mxu0
    %v1182 = vadd.f32 %v246, %v1181
    %v1183 = vpop.f32.mrb[0].mxu0
    %v1184 = vadd.f32 %v242, %v1183
    %v1185 = vpop.f32.mrb[0].mxu0
    %v1186 = vadd.f32 %v246, %v1185
    %1187 = vmatprep.mubr.bf16.mxu0 %v353
    %1188 = vmatmul.mubr.bf16.gmra.mrb[0].mxu0 %v352
    %v1189 = vpop.f32.mrb[0].mxu0
    %v1190 = vadd.f32 %v242, %v1189
    %v1191 = vpop.f32.mrb[0].mxu0
    %v1192 = vadd.f32 %v246, %v1191
    %v1193 = vpop.f32.mrb[0].mxu0
    %v1194 = vadd.f32 %v242, %v1193
    %v1195 = vpop.f32.mrb[0].mxu0
    %v1196 = vadd.f32 %v246, %v1195
    %1197 = vdwg.mxu0
    %1198 = vmatprep.subr.bf16.mxu0 %v734
    %1199 = vmatpush1.bf16.msra.mxu0 %v733
    %1200 = vmatprep.subr.bf16.mxu0 %v738
    %1201 = vmatpush1.bf16.msra.mxu0 %v737
    %1202 = vmatprep.subr.bf16.mxu0 %v742
    %1203 = vmatpush1.bf16.msra.mxu0 %v741
    %1204 = vmatprep.subr.bf16.mxu0 %v746
    %1205 = vmatpush1.bf16.msra.mxu0 %v745
    %1206 = vmatprep.subr.bf16.mxu0 %v750
    %1207 = vmatpush1.bf16.msra.mxu0 %v749
    %1208 = vmatprep.subr.bf16.mxu0 %v754
    %1209 = vmatpush1.bf16.msra.mxu0 %v753
    %1210 = vmatprep.subr.bf16.mxu0 %v758
    %1211 = vmatpush1.bf16.msra.mxu0 %v757
    %1212 = vmatprep.subr.bf16.mxu0 %v762
    %1213 = vmatpush1.bf16.msra.mxu0 %v761
    %1214 = vmatprep.subr.bf16.mxu0 0
    %1215 = vmatpush1.bf16.msra.mxu0 0
    %1216 = vmatprep.subr.bf16.mxu0 0
    %1217 = vmatpush1.bf16.msra.mxu0 0
    %1218 = vmatprep.subr.bf16.mxu0 0
    %1219 = vmatpush1.bf16.msra.mxu0 0
    %1220 = vmatprep.subr.bf16.mxu0 0
    %1221 = vmatpush1.bf16.msra.mxu0 0
    %1222 = vmatprep.subr.bf16.mxu0 0
    %1223 = vmatpush1.bf16.msra.mxu0 0
    %1224 = vmatprep.subr.bf16.mxu0 0
    %1225 = vmatpush1.bf16.msra.mxu0 0
    %1226 = vmatprep.subr.bf16.mxu0 0
    %1227 = vmatpush1.bf16.msra.mxu0 0
    %1228 = vmatprep.subr.bf16.mxu0 0
    %1229 = vmatpush1.bf16.msra.mxu0 0
    %1230 = vmatprep.mubr.bf16.mxu0 0
    %1231 = vmatmul.mubr.bf16.gmra.mrb[0].mxu0 %v333
    %v1232 = vpop.f32.mrb[0].mxu0
    %v1233 = vadd.f32 %v1120, %v1232
    %v1234 = vpop.f32.mrb[0].mxu0
    %v1235 = vadd.f32 %v1122, %v1234
    %v1236 = vpop.f32.mrb[0].mxu0
    %v1237 = vadd.f32 %v1124, %v1236
    %v1238 = vpop.f32.mrb[0].mxu0
    %v1239 = vadd.f32 %v1126, %v1238
    %1240 = vmatprep.mubr.bf16.mxu0 0
    %1241 = vmatmul.mubr.bf16.gmra.mrb[0].mxu0 %v336
    %v1242 = vpop.f32.mrb[0].mxu0
    %v1243 = vadd.f32 %v1130, %v1242
    %v1244 = vpop.f32.mrb[0].mxu0
    %v1245 = vadd.f32 %v1132, %v1244
    %v1246 = vpop.f32.mrb[0].mxu0
    %v1247 = vadd.f32 %v1134, %v1246
    %v1248 = vpop.f32.mrb[0].mxu0
    %v1249 = vadd.f32 %v1136, %v1248
    %1250 = vmatprep.mubr.bf16.mxu0 0
    %1251 = vmatmul.mubr.bf16.gmra.mrb[0].mxu0 %v339
    %v1252 = vpop.f32.mrb[0].mxu0
    %v1253 = vadd.f32 %v1140, %v1252
    %v1254 = vpop.f32.mrb[0].mxu0
    %v1255 = vadd.f32 %v1142, %v1254
    %v1256 = vpop.f32.mrb[0].mxu0
    %v1257 = vadd.f32 %v1144, %v1256
    %v1258 = vpop.f32.mrb[0].mxu0
    %v1259 = vadd.f32 %v1146, %v1258
    %1260 = vmatprep.mubr.bf16.mxu0 0
    %1261 = vmatmul.mubr.bf16.gmra.mrb[0].mxu0 %v342
    %v1262 = vpop.f32.mrb[0].mxu0
    %v1263 = vadd.f32 %v1150, %v1262
    %v1264 = vpop.f32.mrb[0].mxu0
    %v1265 = vadd.f32 %v1152, %v1264
    %v1266 = vpop.f32.mrb[0].mxu0
    %v1267 = vadd.f32 %v1154, %v1266
    %v1268 = vpop.f32.mrb[0].mxu0
    %v1269 = vadd.f32 %v1156, %v1268
    %1270 = vmatprep.mubr.bf16.mxu0 0
    %1271 = vmatmul.mubr.bf16.gmra.mrb[0].mxu0 %v345
    %v1272 = vpop.f32.mrb[0].mxu0
    %v1273 = vadd.f32 %v1160, %v1272
    %v1274 = vpop.f32.mrb[0].mxu0
    %v1275 = vadd.f32 %v1162, %v1274
    %v1276 = vpop.f32.mrb[0].mxu0
    %v1277 = vadd.f32 %v1164, %v1276
    %v1278 = vpop.f32.mrb[0].mxu0
    %v1279 = vadd.f32 %v1166, %v1278
    %1280 = vmatprep.mubr.bf16.mxu0 0
    %1281 = vmatmul.mubr.bf16.gmra.mrb[0].mxu0 %v348
    %v1282 = vpop.f32.mrb[0].mxu0
    %v1283 = vadd.f32 %v1170, %v1282
    %v1284 = vpop.f32.mrb[0].mxu0
    %v1285 = vadd.f32 %v1172, %v1284
    %v1286 = vpop.f32.mrb[0].mxu0
    %v1287 = vadd.f32 %v1174, %v1286
    %v1288 = vpop.f32.mrb[0].mxu0
    %v1289 = vadd.f32 %v1176, %v1288
    %1290 = vmatprep.mubr.bf16.mxu0 0
    %1291 = vmatmul.mubr.bf16.gmra.mrb[0].mxu0 %v351
    %v1292 = vpop.f32.mrb[0].mxu0
    %v1293 = vadd.f32 %v1180, %v1292
    %v1294 = vpop.f32.mrb[0].mxu0
    %v1295 = vadd.f32 %v1182, %v1294
    %v1296 = vpop.f32.mrb[0].mxu0
    %v1297 = vadd.f32 %v1184, %v1296
    %v1298 = vpop.f32.mrb[0].mxu0
    %v1299 = vadd.f32 %v1186, %v1298
    %1300 = vmatprep.mubr.bf16.mxu0 0
    %1301 = vmatmul.mubr.bf16.gmra.mrb[0].mxu0 %v354
    %v1302 = vpop.f32.mrb[0].mxu0
    %v1303 = vadd.f32 %v1190, %v1302
    %v1304 = vpop.f32.mrb[0].mxu0
    %v1305 = vadd.f32 %v1192, %v1304
    %v1306 = vpop.f32.mrb[0].mxu0
    %v1307 = vadd.f32 %v1194, %v1306
    %v1308 = vpop.f32.mrb[0].mxu0
    %v1309 = vadd.f32 %v1196, %v1308
    %1310 = vdwg.mxu0
    %1311 = vst [vmem:[#allocation2] sm:$0xff] %v1007
    %1312 = vst [vmem:[#allocation2 + $0x8] sm:$0xff] %v1009
    %1313 = vst [vmem:[#allocation2 + $0x10] sm:$0xff] %v1233
    %1314 = vst [vmem:[#allocation2 + $0x18] sm:$0xff] %v1235
    %1315 = vst [vmem:[#allocation2 + $0x20] sm:$0xff] %v1011
    %1316 = vst [vmem:[#allocation2 + $0x28] sm:$0xff] %v1013
    %1317 = vst [vmem:[#allocation2 + $0x30] sm:$0xff] %v1237
    %1318 = vst [vmem:[#allocation2 + $0x38] sm:$0xff] %v1239
    %1319 = vst [vmem:[#allocation2 + $0x40] sm:$0xff] %v1017
    %1320 = vst [vmem:[#allocation2 + $0x48] sm:$0xff] %v1019
    %1321 = vst [vmem:[#allocation2 + $0x50] sm:$0xff] %v1243
    %1322 = vst [vmem:[#allocation2 + $0x58] sm:$0xff] %v1245
    %1323 = vst [vmem:[#allocation2 + $0x60] sm:$0xff] %v1021
    %1324 = vst [vmem:[#allocation2 + $0x68] sm:$0xff] %v1023
    %1325 = vst [vmem:[#allocation2 + $0x70] sm:$0xff] %v1247
    %1326 = vst [vmem:[#allocation2 + $0x78] sm:$0xff] %v1249
    %1327 = vst [vmem:[#allocation2 + $0x80] sm:$0xff] %v1027
    %1328 = vst [vmem:[#allocation2 + $0x88] sm:$0xff] %v1029
    %1329 = vst [vmem:[#allocation2 + $0x90] sm:$0xff] %v1253
    %1330 = vst [vmem:[#allocation2 + $0x98] sm:$0xff] %v1255
    %1331 = vst [vmem:[#allocation2 + $0xa0] sm:$0xff] %v1031
    %1332 = vst [vmem:[#allocation2 + $0xa8] sm:$0xff] %v1033
    %1333 = vst [vmem:[#allocation2 + $0xb0] sm:$0xff] %v1257
    %1334 = vst [vmem:[#allocation2 + $0xb8] sm:$0xff] %v1259
    %1335 = vst [vmem:[#allocation2 + $0xc0] sm:$0xff] %v1037
    %1336 = vst [vmem:[#allocation2 + $0xc8] sm:$0xff] %v1039
    %1337 = vst [vmem:[#allocation2 + $0xd0] sm:$0xff] %v1263
    %1338 = vst [vmem:[#allocation2 + $0xd8] sm:$0xff] %v1265
    %1339 = vst [vmem:[#allocation2 + $0xe0] sm:$0xff] %v1041
    %1340 = vst [vmem:[#allocation2 + $0xe8] sm:$0xff] %v1043
    %1341 = vst [vmem:[#allocation2 + $0xf0] sm:$0xff] %v1267
    %1342 = vst [vmem:[#allocation2 + $0xf8] sm:$0xff] %v1269
    %1343 = vst [vmem:[#allocation2 + $0x100] sm:$0xff] %v1047
    %1344 = vst [vmem:[#allocation2 + $0x108] sm:$0xff] %v1049
    %1345 = vst [vmem:[#allocation2 + $0x110] sm:$0xff] %v1273
    %1346 = vst [vmem:[#allocation2 + $0x118] sm:$0xff] %v1275
    %1347 = vst [vmem:[#allocation2 + $0x120] sm:$0xff] %v1051
    %1348 = vst [vmem:[#allocation2 + $0x128] sm:$0xff] %v1053
    %1349 = vst [vmem:[#allocation2 + $0x130] sm:$0xff] %v1277
    %1350 = vst [vmem:[#allocation2 + $0x138] sm:$0xff] %v1279
    %1351 = vst [vmem:[#allocation2 + $0x140] sm:$0xff] %v1057
    %1352 = vst [vmem:[#allocation2 + $0x148] sm:$0xff] %v1059
    %1353 = vst [vmem:[#allocation2 + $0x150] sm:$0xff] %v1283
    %1354 = vst [vmem:[#allocation2 + $0x158] sm:$0xff] %v1285
    %1355 = vst [vmem:[#allocation2 + $0x160] sm:$0xff] %v1061
    %1356 = vst [vmem:[#allocation2 + $0x168] sm:$0xff] %v1063
    %1357 = vst [vmem:[#allocation2 + $0x170] sm:$0xff] %v1287
    %1358 = vst [vmem:[#allocation2 + $0x178] sm:$0xff] %v1289
    %1359 = vst [vmem:[#allocation2 + $0x180] sm:$0xff] %v1067
    %1360 = vst [vmem:[#allocation2 + $0x188] sm:$0xff] %v1069
    %1361 = vst [vmem:[#allocation2 + $0x190] sm:$0xff] %v1293
    %1362 = vst [vmem:[#allocation2 + $0x198] sm:$0xff] %v1295
    %1363 = vst [vmem:[#allocation2 + $0x1a0] sm:$0xff] %v1071
    %1364 = vst [vmem:[#allocation2 + $0x1a8] sm:$0xff] %v1073
    %1365 = vst [vmem:[#allocation2 + $0x1b0] sm:$0xff] %v1297
    %1366 = vst [vmem:[#allocation2 + $0x1b8] sm:$0xff] %v1299
    %1367 = vst [vmem:[#allocation2 + $0x1c0] sm:$0xff] %v1077
    %1368 = vst [vmem:[#allocation2 + $0x1c8] sm:$0xff] %v1079
    %1369 = vst [vmem:[#allocation2 + $0x1d0] sm:$0xff] %v1303
    %1370 = vst [vmem:[#allocation2 + $0x1d8] sm:$0xff] %v1305
    %1371 = vst [vmem:[#allocation2 + $0x1e0] sm:$0xff] %v1081
    %1372 = vst [vmem:[#allocation2 + $0x1e8] sm:$0xff] %v1083
    %1373 = vst [vmem:[#allocation2 + $0x1f0] sm:$0xff] %v1307
    %1374 = vst [vmem:[#allocation2 + $0x1f8] sm:$0xff] %v1309
    %v1375 = vld [vmem:[%s6] sm:$0xff]
    %v1376 = vld [vmem:[%s6 + $0x8] sm:$0xff]
    %v1377 = vld [vmem:[%s6 + $0x10] sm:$0xff]
    %v1378 = vld [vmem:[%s6 + $0x18] sm:$0xff]
    %v1379 = vld [vmem:[%s6 + $0x20] sm:$0xff]
    %v1380 = vld [vmem:[%s6 + $0x28] sm:$0xff]
    %v1381 = vld [vmem:[%s6 + $0x30] sm:$0xff]
    %v1382 = vld [vmem:[%s6 + $0x38] sm:$0xff]
    %v1383 = vld [vmem:[%s6 + $0x40] sm:$0xff]
    %v1384 = vld [vmem:[%s6 + $0x48] sm:$0xff]
    %v1385 = vld [vmem:[%s6 + $0x50] sm:$0xff]
    %v1386 = vld [vmem:[%s6 + $0x58] sm:$0xff]
    %v1387 = vld [vmem:[%s6 + $0x60] sm:$0xff]
    %v1388 = vld [vmem:[%s6 + $0x68] sm:$0xff]
    %v1389 = vld [vmem:[%s6 + $0x70] sm:$0xff]
    %v1390 = vld [vmem:[%s6 + $0x78] sm:$0xff]
    %v1391 = vld [vmem:[%s6 + $0x80] sm:$0xff]
    %v1392 = vld [vmem:[%s6 + $0x88] sm:$0xff]
    %v1393 = vld [vmem:[%s6 + $0x90] sm:$0xff]
    %v1394 = vld [vmem:[%s6 + $0x98] sm:$0xff]
    %v1395 = vld [vmem:[%s6 + $0xa0] sm:$0xff]
    %v1396 = vld [vmem:[%s6 + $0xa8] sm:$0xff]
    %v1397 = vld [vmem:[%s6 + $0xb0] sm:$0xff]
    %v1398 = vld [vmem:[%s6 + $0xb8] sm:$0xff]
    %v1399 = vld [vmem:[%s6 + $0xc0] sm:$0xff]
    %v1400 = vld [vmem:[%s6 + $0xc8] sm:$0xff]
    %v1401 = vld [vmem:[%s6 + $0xd0] sm:$0xff]
    %v1402 = vld [vmem:[%s6 + $0xd8] sm:$0xff]
    %v1403 = vld [vmem:[%s6 + $0xe0] sm:$0xff]
    %v1404 = vld [vmem:[%s6 + $0xe8] sm:$0xff]
    %v1405 = vld [vmem:[%s6 + $0xf0] sm:$0xff]
    %v1406 = vld [vmem:[%s6 + $0xf8] sm:$0xff]
    %v1407 = vld [vmem:[#allocation7] sm:$0xff]
    %v1408 = vld [vmem:[#allocation7 + $0x8] sm:$0xff]
    %v1409 = vld [vmem:[#allocation7 + $0x10] sm:$0xff]
    %v1410 = vld [vmem:[#allocation7 + $0x18] sm:$0xff]
    %v1411 = vld [vmem:[#allocation7 + $0x20] sm:$0xff]
    %v1412 = vld [vmem:[#allocation7 + $0x28] sm:$0xff]
    %v1413 = vld [vmem:[#allocation7 + $0x30] sm:$0xff]
    %v1414 = vld [vmem:[#allocation7 + $0x38] sm:$0xff]
    %v1415 = vld [vmem:[#allocation7 + $0x40] sm:$0xff]
    %v1416 = vld [vmem:[#allocation7 + $0x48] sm:$0xff]
    %v1417 = vld [vmem:[#allocation7 + $0x50] sm:$0xff]
    %v1418 = vld [vmem:[#allocation7 + $0x58] sm:$0xff]
    %v1419 = vld [vmem:[#allocation7 + $0x60] sm:$0xff]
    %v1420 = vld [vmem:[#allocation7 + $0x68] sm:$0xff]
    %v1421 = vld [vmem:[#allocation7 + $0x70] sm:$0xff]
    %v1422 = vld [vmem:[#allocation7 + $0x78] sm:$0xff]
    %v1423 = vld [vmem:[#allocation7 + $0x80] sm:$0xff]
    %v1424 = vld [vmem:[#allocation7 + $0x88] sm:$0xff]
    %v1425 = vld [vmem:[#allocation7 + $0x90] sm:$0xff]
    %v1426 = vld [vmem:[#allocation7 + $0x98] sm:$0xff]
    %v1427 = vld [vmem:[#allocation7 + $0xa0] sm:$0xff]
    %v1428 = vld [vmem:[#allocation7 + $0xa8] sm:$0xff]
    %v1429 = vld [vmem:[#allocation7 + $0xb0] sm:$0xff]
    %v1430 = vld [vmem:[#allocation7 + $0xb8] sm:$0xff]
    %v1431 = vld [vmem:[#allocation7 + $0xc0] sm:$0xff]
    %v1432 = vld [vmem:[#allocation7 + $0xc8] sm:$0xff]
    %v1433 = vld [vmem:[#allocation7 + $0xd0] sm:$0xff]
    %v1434 = vld [vmem:[#allocation7 + $0xd8] sm:$0xff]
    %v1435 = vld [vmem:[#allocation7 + $0xe0] sm:$0xff]
    %v1436 = vld [vmem:[#allocation7 + $0xe8] sm:$0xff]
    %v1437 = vld [vmem:[#allocation7 + $0xf0] sm:$0xff]
    %v1438 = vld [vmem:[#allocation7 + $0xf8] sm:$0xff]
    %v1439 = vld [vmem:[#allocation7 + $0x100] sm:$0xff]
    %v1440 = vld [vmem:[#allocation7 + $0x108] sm:$0xff]
    %v1441 = vld [vmem:[#allocation7 + $0x110] sm:$0xff]
    %v1442 = vld [vmem:[#allocation7 + $0x118] sm:$0xff]
    %v1443 = vld [vmem:[#allocation7 + $0x120] sm:$0xff]
    %v1444 = vld [vmem:[#allocation7 + $0x128] sm:$0xff]
    %v1445 = vld [vmem:[#allocation7 + $0x130] sm:$0xff]
    %v1446 = vld [vmem:[#allocation7 + $0x138] sm:$0xff]
    %v1447 = vld [vmem:[#allocation7 + $0x140] sm:$0xff]
    %v1448 = vld [vmem:[#allocation7 + $0x148] sm:$0xff]
    %v1449 = vld [vmem:[#allocation7 + $0x150] sm:$0xff]
    %v1450 = vld [vmem:[#allocation7 + $0x158] sm:$0xff]
    %v1451 = vld [vmem:[#allocation7 + $0x160] sm:$0xff]
    %v1452 = vld [vmem:[#allocation7 + $0x168] sm:$0xff]
    %v1453 = vld [vmem:[#allocation7 + $0x170] sm:$0xff]
    %v1454 = vld [vmem:[#allocation7 + $0x178] sm:$0xff]
    %v1455 = vld [vmem:[#allocation7 + $0x180] sm:$0xff]
    %v1456 = vld [vmem:[#allocation7 + $0x188] sm:$0xff]
    %v1457 = vld [vmem:[#allocation7 + $0x190] sm:$0xff]
    %v1458 = vld [vmem:[#allocation7 + $0x198] sm:$0xff]
    %v1459 = vld [vmem:[#allocation7 + $0x1a0] sm:$0xff]
    %v1460 = vld [vmem:[#allocation7 + $0x1a8] sm:$0xff]
    %v1461 = vld [vmem:[#allocation7 + $0x1b0] sm:$0xff]
    %v1462 = vld [vmem:[#allocation7 + $0x1b8] sm:$0xff]
    %v1463 = vld [vmem:[#allocation7 + $0x1c0] sm:$0xff]
    %v1464 = vld [vmem:[#allocation7 + $0x1c8] sm:$0xff]
    %v1465 = vld [vmem:[#allocation7 + $0x1d0] sm:$0xff]
    %v1466 = vld [vmem:[#allocation7 + $0x1d8] sm:$0xff]
    %v1467 = vld [vmem:[#allocation7 + $0x1e0] sm:$0xff]
    %v1468 = vld [vmem:[#allocation7 + $0x1e8] sm:$0xff]
    %v1469 = vld [vmem:[#allocation7 + $0x1f0] sm:$0xff]
    %v1470 = vld [vmem:[#allocation7 + $0x1f8] sm:$0xff]
    %v1471 = vld [vmem:[%s9] sm:$0xff]
    %v1472 = vld [vmem:[%s9 + $0x8] sm:$0xff]
    %v1473 = vld [vmem:[%s9 + $0x10] sm:$0xff]
    %v1474 = vld [vmem:[%s9 + $0x18] sm:$0xff]
    %v1475 = vld [vmem:[%s1] sm:$0xff]
    %v1476 = vld [vmem:[%s2] sm:$0xff]
    %v1477 = vld [vmem:[%s3] sm:$0xff]
    %v1478 = vld [vmem:[#allocation4] sm:$0xff]
    %v1479 = vld [vmem:[#allocation2] sm:$0xff]
    %v1480 = vld [vmem:[#allocation2 + $0x8] sm:$0xff]
    %v1481 = vld [vmem:[#allocation2 + $0x10] sm:$0xff]
    %v1482 = vld [vmem:[#allocation2 + $0x18] sm:$0xff]
    %v1483 = vpack.c.bf16 %v1475, %v1475
    %v1516 = vunpack.c.l.b16 %v1375
    %v1517 = vunpack.c.h.b16 %v1375
    %v1518 = vunpack.c.l.b16 %v1376
    %v1519 = vunpack.c.h.b16 %v1376
    %v1520 = vunpack.c.l.b16 %v1377
    %v1521 = vunpack.c.h.b16 %v1377
    %v1522 = vunpack.c.l.b16 %v1378
    %v1523 = vunpack.c.h.b16 %v1378
    %v1524 = vunpack.c.l.b16 %v1379
    %v1525 = vunpack.c.h.b16 %v1379
    %v1526 = vunpack.c.l.b16 %v1380
    %v1527 = vunpack.c.h.b16 %v1380
    %v1528 = vunpack.c.l.b16 %v1381
    %v1529 = vunpack.c.h.b16 %v1381
    %v1530 = vunpack.c.l.b16 %v1382
    %v1531 = vunpack.c.h.b16 %v1382
    %v1532 = vunpack.c.l.b16 %v1383
    %v1533 = vunpack.c.h.b16 %v1383
    %v1534 = vunpack.c.l.b16 %v1384
    %v1535 = vunpack.c.h.b16 %v1384
    %v1536 = vunpack.c.l.b16 %v1385
    %v1537 = vunpack.c.h.b16 %v1385
    %v1538 = vunpack.c.l.b16 %v1386
    %v1539 = vunpack.c.h.b16 %v1386
    %v1540 = vunpack.c.l.b16 %v1387
    %v1541 = vunpack.c.h.b16 %v1387
    %v1542 = vunpack.c.l.b16 %v1388
    %v1543 = vunpack.c.h.b16 %v1388
    %v1544 = vunpack.c.l.b16 %v1389
    %v1545 = vunpack.c.h.b16 %v1389
    %v1546 = vunpack.c.l.b16 %v1390
    %v1547 = vunpack.c.h.b16 %v1390
    %v1548 = vunpack.c.l.b16 %v1391
    %v1549 = vunpack.c.h.b16 %v1391
    %v1550 = vunpack.c.l.b16 %v1392
    %v1551 = vunpack.c.h.b16 %v1392
    %v1552 = vunpack.c.l.b16 %v1393
    %v1553 = vunpack.c.h.b16 %v1393
    %v1554 = vunpack.c.l.b16 %v1394
    %v1555 = vunpack.c.h.b16 %v1394
    %v1556 = vunpack.c.l.b16 %v1395
    %v1557 = vunpack.c.h.b16 %v1395
    %v1558 = vunpack.c.l.b16 %v1396
    %v1559 = vunpack.c.h.b16 %v1396
    %v1560 = vunpack.c.l.b16 %v1397
    %v1561 = vunpack.c.h.b16 %v1397
    %v1562 = vunpack.c.l.b16 %v1398
    %v1563 = vunpack.c.h.b16 %v1398
    %v1564 = vunpack.c.l.b16 %v1399
    %v1565 = vunpack.c.h.b16 %v1399
    %v1566 = vunpack.c.l.b16 %v1400
    %v1567 = vunpack.c.h.b16 %v1400
    %v1568 = vunpack.c.l.b16 %v1401
    %v1569 = vunpack.c.h.b16 %v1401
    %v1570 = vunpack.c.l.b16 %v1402
    %v1571 = vunpack.c.h.b16 %v1402
    %v1572 = vunpack.c.l.b16 %v1403
    %v1573 = vunpack.c.h.b16 %v1403
    %v1574 = vunpack.c.l.b16 %v1404
    %v1575 = vunpack.c.h.b16 %v1404
    %v1576 = vunpack.c.l.b16 %v1405
    %v1577 = vunpack.c.h.b16 %v1405
    %v1578 = vunpack.c.l.b16 %v1406
    %v1579 = vunpack.c.h.b16 %v1406
    %v1580 = vpack.c.b16 %v1520, %v1516
    %v1581 = vpack.c.b16 %v1521, %v1517
    %v1582 = vpack.c.b16 %v1522, %v1518
    %v1583 = vpack.c.b16 %v1523, %v1519
    %v1584 = vpack.c.b16 %v1528, %v1524
    %v1585 = vpack.c.b16 %v1529, %v1525
    %v1586 = vpack.c.b16 %v1530, %v1526
    %v1587 = vpack.c.b16 %v1531, %v1527
    %v1588 = vpack.c.b16 %v1536, %v1532
    %v1589 = vpack.c.b16 %v1537, %v1533
    %v1590 = vpack.c.b16 %v1538, %v1534
    %v1591 = vpack.c.b16 %v1539, %v1535
    %v1592 = vpack.c.b16 %v1544, %v1540
    %v1593 = vpack.c.b16 %v1545, %v1541
    %v1594 = vpack.c.b16 %v1546, %v1542
    %v1595 = vpack.c.b16 %v1547, %v1543
    %v1596 = vpack.c.b16 %v1552, %v1548
    %v1597 = vpack.c.b16 %v1553, %v1549
    %v1598 = vpack.c.b16 %v1554, %v1550
    %v1599 = vpack.c.b16 %v1555, %v1551
    %v1600 = vpack.c.b16 %v1560, %v1556
    %v1601 = vpack.c.b16 %v1561, %v1557
    %v1602 = vpack.c.b16 %v1562, %v1558
    %v1603 = vpack.c.b16 %v1563, %v1559
    %v1604 = vpack.c.b16 %v1568, %v1564
    %v1605 = vpack.c.b16 %v1569, %v1565
    %v1606 = vpack.c.b16 %v1570, %v1566
    %v1607 = vpack.c.b16 %v1571, %v1567
    %v1608 = vpack.c.b16 %v1576, %v1572
    %v1609 = vpack.c.b16 %v1577, %v1573
    %v1610 = vpack.c.b16 %v1578, %v1574
    %v1611 = vpack.c.b16 %v1579, %v1575
    %1644 = vmatprep.subr.bf16.mxu0 %v1581
    %1645 = vmatpush1.bf16.msra.mxu0 %v1580
    %1646 = vmatprep.subr.bf16.mxu0 %v1585
    %1647 = vmatpush1.bf16.msra.mxu0 %v1584
    %1648 = vmatprep.subr.bf16.mxu0 %v1589
    %1649 = vmatpush1.bf16.msra.mxu0 %v1588
    %1650 = vmatprep.subr.bf16.mxu0 %v1593
    %1651 = vmatpush1.bf16.msra.mxu0 %v1592
    %1652 = vmatprep.subr.bf16.mxu0 %v1597
    %1653 = vmatpush1.bf16.msra.mxu0 %v1596
    %1654 = vmatprep.subr.bf16.mxu0 %v1601
    %1655 = vmatpush1.bf16.msra.mxu0 %v1600
    %1656 = vmatprep.subr.bf16.mxu0 %v1605
    %1657 = vmatpush1.bf16.msra.mxu0 %v1604
    %1658 = vmatprep.subr.bf16.mxu0 %v1609
    %1659 = vmatpush1.bf16.msra.mxu0 %v1608
    %1660 = vmatprep.subr.bf16.mxu0 0
    %1661 = vmatpush1.bf16.msra.mxu0 0
    %1662 = vmatprep.subr.bf16.mxu0 0
    %1663 = vmatpush1.bf16.msra.mxu0 0
    %1664 = vmatprep.subr.bf16.mxu0 0
    %1665 = vmatpush1.bf16.msra.mxu0 0
    %1666 = vmatprep.subr.bf16.mxu0 0
    %1667 = vmatpush1.bf16.msra.mxu0 0
    %1668 = vmatprep.subr.bf16.mxu0 0
    %1669 = vmatpush1.bf16.msra.mxu0 0
    %1670 = vmatprep.subr.bf16.mxu0 0
    %1671 = vmatpush1.bf16.msra.mxu0 0
    %1672 = vmatprep.subr.bf16.mxu0 0
    %1673 = vmatpush1.bf16.msra.mxu0 0
    %1674 = vmatprep.subr.bf16.mxu0 0
    %1675 = vmatpush1.bf16.msra.mxu0 0
    %1676 = vmatprep.mubr.bf16.mxu0 0
    %1677 = vmatmul.mubr.bf16.gmra.mrb[0].mxu0 %v1483
    %v1678 = vpop.f32.mrb[0].mxu0
    %v1679 = vadd.f32 0.0, %v1678
    %v1680 = vpop.f32.mrb[0].mxu0
    %v1681 = vadd.f32 0.0, %v1680
    %v1682 = vpop.f32.mrb[0].mxu0
    %v1683 = vpop.f32.mrb[0].mxu0
    %1684 = vdwg.mxu0
    %1685 = vmatprep.subr.bf16.mxu0 %v1583
    %1686 = vmatpush1.bf16.msra.mxu0 %v1582
    %1687 = vmatprep.subr.bf16.mxu0 %v1587
    %1688 = vmatpush1.bf16.msra.mxu0 %v1586
    %1689 = vmatprep.subr.bf16.mxu0 %v1591
    %1690 = vmatpush1.bf16.msra.mxu0 %v1590
    %1691 = vmatprep.subr.bf16.mxu0 %v1595
    %1692 = vmatpush1.bf16.msra.mxu0 %v1594
    %1693 = vmatprep.subr.bf16.mxu0 %v1599
    %1694 = vmatpush1.bf16.msra.mxu0 %v1598
    %1695 = vmatprep.subr.bf16.mxu0 %v1603
    %1696 = vmatpush1.bf16.msra.mxu0 %v1602
    %1697 = vmatprep.subr.bf16.mxu0 %v1607
    %1698 = vmatpush1.bf16.msra.mxu0 %v1606
    %1699 = vmatprep.subr.bf16.mxu0 %v1611
    %1700 = vmatpush1.bf16.msra.mxu0 %v1610
    %1701 = vmatprep.subr.bf16.mxu0 0
    %1702 = vmatpush1.bf16.msra.mxu0 0
    %1703 = vmatprep.subr.bf16.mxu0 0
    %1704 = vmatpush1.bf16.msra.mxu0 0
    %1705 = vmatprep.subr.bf16.mxu0 0
    %1706 = vmatpush1.bf16.msra.mxu0 0
    %1707 = vmatprep.subr.bf16.mxu0 0
    %1708 = vmatpush1.bf16.msra.mxu0 0
    %1709 = vmatprep.subr.bf16.mxu0 0
    %1710 = vmatpush1.bf16.msra.mxu0 0
    %1711 = vmatprep.subr.bf16.mxu0 0
    %1712 = vmatpush1.bf16.msra.mxu0 0
    %1713 = vmatprep.subr.bf16.mxu0 0
    %1714 = vmatpush1.bf16.msra.mxu0 0
    %1715 = vmatprep.subr.bf16.mxu0 0
    %1716 = vmatpush1.bf16.msra.mxu0 0
    %1717 = vmatprep.mubr.bf16.mxu0 0
    %1718 = vmatmul.mubr.bf16.gmra.mrb[0].mxu0 %v1483
    %v1719 = vpop.f32.mrb[0].mxu0
    %v1720 = vadd.f32 0.0, %v1719
    %v1721 = vpop.f32.mrb[0].mxu0
    %v1722 = vadd.f32 0.0, %v1721
    %v1723 = vpop.f32.mrb[0].mxu0
    %v1724 = vpop.f32.mrb[0].mxu0
    %1725 = vdwg.mxu0
    %v1726 = vadd.f32 %v1479, %v1679
    %v1727 = vadd.f32 %v1480, %v1681
    %v1728 = vadd.f32 %v1481, %v1720
    %v1729 = vadd.f32 %v1482, %v1722
    %v1730 = vxor.u32 %v1726, 2147483648
    %v1731 = vmul.f32 %v1730, 1.442695
    %v1732 = vpow.pop %v1731
    %v1733 = vadd.f32 %v1732, 1.0
    %v1734 = vrcp.pop %v1733
    %v1735 = vmul.f32 1.0, %v1734
    %v1736 = vxor.u32 %v1727, 2147483648
    %v1737 = vmul.f32 %v1736, 1.442695
    %v1738 = vpow.pop %v1737
    %v1739 = vadd.f32 %v1738, 1.0
    %v1740 = vrcp.pop %v1739
    %v1741 = vmul.f32 1.0, %v1740
    %v1742 = vtanh.pop %v1728
    %v1743 = vxor.u32 %v1729, 2147483648
    %v1744 = vmul.f32 %v1743, 1.442695
    %v1745 = vpow.pop %v1744
    %v1746 = vadd.f32 %v1745, 1.0
    %v1747 = vrcp.pop %v1746
    %v1748 = vmul.f32 1.0, %v1747
    %v1749 = vmul.f32 %v1741, %v1476
    %v1750 = vmul.f32 %v1735, %v1742
    %v1751 = vadd.f32 %v1749, %v1750
    %v1752 = vtanh.pop %v1751
    %v1753 = vmul.f32 %v1748, %v1752
    %v1754 = vpack.c.bf16 %v1753, %v1753
    %v1755 = vpack.c.bf16 %v1477, %v1477
    %v1820 = vunpack.c.l.b16 %v1407
    %v1821 = vunpack.c.h.b16 %v1407
    %v1822 = vunpack.c.l.b16 %v1408
    %v1823 = vunpack.c.h.b16 %v1408
    %v1824 = vunpack.c.l.b16 %v1409
    %v1825 = vunpack.c.h.b16 %v1409
    %v1826 = vunpack.c.l.b16 %v1410
    %v1827 = vunpack.c.h.b16 %v1410
    %v1828 = vunpack.c.l.b16 %v1411
    %v1829 = vunpack.c.h.b16 %v1411
    %v1830 = vunpack.c.l.b16 %v1412
    %v1831 = vunpack.c.h.b16 %v1412
    %v1832 = vunpack.c.l.b16 %v1413
    %v1833 = vunpack.c.h.b16 %v1413
    %v1834 = vunpack.c.l.b16 %v1414
    %v1835 = vunpack.c.h.b16 %v1414
    %v1836 = vunpack.c.l.b16 %v1415
    %v1837 = vunpack.c.h.b16 %v1415
    %v1838 = vunpack.c.l.b16 %v1416
    %v1839 = vunpack.c.h.b16 %v1416
    %v1840 = vunpack.c.l.b16 %v1417
    %v1841 = vunpack.c.h.b16 %v1417
    %v1842 = vunpack.c.l.b16 %v1418
    %v1843 = vunpack.c.h.b16 %v1418
    %v1844 = vunpack.c.l.b16 %v1419
    %v1845 = vunpack.c.h.b16 %v1419
    %v1846 = vunpack.c.l.b16 %v1420
    %v1847 = vunpack.c.h.b16 %v1420
    %v1848 = vunpack.c.l.b16 %v1421
    %v1849 = vunpack.c.h.b16 %v1421
    %v1850 = vunpack.c.l.b16 %v1422
    %v1851 = vunpack.c.h.b16 %v1422
    %v1852 = vunpack.c.l.b16 %v1423
    %v1853 = vunpack.c.h.b16 %v1423
    %v1854 = vunpack.c.l.b16 %v1424
    %v1855 = vunpack.c.h.b16 %v1424
    %v1856 = vunpack.c.l.b16 %v1425
    %v1857 = vunpack.c.h.b16 %v1425
    %v1858 = vunpack.c.l.b16 %v1426
    %v1859 = vunpack.c.h.b16 %v1426
    %v1860 = vunpack.c.l.b16 %v1427
    %v1861 = vunpack.c.h.b16 %v1427
    %v1862 = vunpack.c.l.b16 %v1428
    %v1863 = vunpack.c.h.b16 %v1428
    %v1864 = vunpack.c.l.b16 %v1429
    %v1865 = vunpack.c.h.b16 %v1429
    %v1866 = vunpack.c.l.b16 %v1430
    %v1867 = vunpack.c.h.b16 %v1430
    %v1868 = vunpack.c.l.b16 %v1431
    %v1869 = vunpack.c.h.b16 %v1431
    %v1870 = vunpack.c.l.b16 %v1432
    %v1871 = vunpack.c.h.b16 %v1432
    %v1872 = vunpack.c.l.b16 %v1433
    %v1873 = vunpack.c.h.b16 %v1433
    %v1874 = vunpack.c.l.b16 %v1434
    %v1875 = vunpack.c.h.b16 %v1434
    %v1876 = vunpack.c.l.b16 %v1435
    %v1877 = vunpack.c.h.b16 %v1435
    %v1878 = vunpack.c.l.b16 %v1436
    %v1879 = vunpack.c.h.b16 %v1436
    %v1880 = vunpack.c.l.b16 %v1437
    %v1881 = vunpack.c.h.b16 %v1437
    %v1882 = vunpack.c.l.b16 %v1438
    %v1883 = vunpack.c.h.b16 %v1438
    %v1884 = vunpack.c.l.b16 %v1439
    %v1885 = vunpack.c.h.b16 %v1439
    %v1886 = vunpack.c.l.b16 %v1440
    %v1887 = vunpack.c.h.b16 %v1440
    %v1888 = vunpack.c.l.b16 %v1441
    %v1889 = vunpack.c.h.b16 %v1441
    %v1890 = vunpack.c.l.b16 %v1442
    %v1891 = vunpack.c.h.b16 %v1442
    %v1892 = vunpack.c.l.b16 %v1443
    %v1893 = vunpack.c.h.b16 %v1443
    %v1894 = vunpack.c.l.b16 %v1444
    %v1895 = vunpack.c.h.b16 %v1444
    %v1896 = vunpack.c.l.b16 %v1445
    %v1897 = vunpack.c.h.b16 %v1445
    %v1898 = vunpack.c.l.b16 %v1446
    %v1899 = vunpack.c.h.b16 %v1446
    %v1900 = vunpack.c.l.b16 %v1447
    %v1901 = vunpack.c.h.b16 %v1447
    %v1902 = vunpack.c.l.b16 %v1448
    %v1903 = vunpack.c.h.b16 %v1448
    %v1904 = vunpack.c.l.b16 %v1449
    %v1905 = vunpack.c.h.b16 %v1449
    %v1906 = vunpack.c.l.b16 %v1450
    %v1907 = vunpack.c.h.b16 %v1450
    %v1908 = vunpack.c.l.b16 %v1451
    %v1909 = vunpack.c.h.b16 %v1451
    %v1910 = vunpack.c.l.b16 %v1452
    %v1911 = vunpack.c.h.b16 %v1452
    %v1912 = vunpack.c.l.b16 %v1453
    %v1913 = vunpack.c.h.b16 %v1453
    %v1914 = vunpack.c.l.b16 %v1454
    %v1915 = vunpack.c.h.b16 %v1454
    %v1916 = vunpack.c.l.b16 %v1455
    %v1917 = vunpack.c.h.b16 %v1455
    %v1918 = vunpack.c.l.b16 %v1456
    %v1919 = vunpack.c.h.b16 %v1456
    %v1920 = vunpack.c.l.b16 %v1457
    %v1921 = vunpack.c.h.b16 %v1457
    %v1922 = vunpack.c.l.b16 %v1458
    %v1923 = vunpack.c.h.b16 %v1458
    %v1924 = vunpack.c.l.b16 %v1459
    %v1925 = vunpack.c.h.b16 %v1459
    %v1926 = vunpack.c.l.b16 %v1460
    %v1927 = vunpack.c.h.b16 %v1460
    %v1928 = vunpack.c.l.b16 %v1461
    %v1929 = vunpack.c.h.b16 %v1461
    %v1930 = vunpack.c.l.b16 %v1462
    %v1931 = vunpack.c.h.b16 %v1462
    %v1932 = vunpack.c.l.b16 %v1463
    %v1933 = vunpack.c.h.b16 %v1463
    %v1934 = vunpack.c.l.b16 %v1464
    %v1935 = vunpack.c.h.b16 %v1464
    %v1936 = vunpack.c.l.b16 %v1465
    %v1937 = vunpack.c.h.b16 %v1465
    %v1938 = vunpack.c.l.b16 %v1466
    %v1939 = vunpack.c.h.b16 %v1466
    %v1940 = vunpack.c.l.b16 %v1467
    %v1941 = vunpack.c.h.b16 %v1467
    %v1942 = vunpack.c.l.b16 %v1468
    %v1943 = vunpack.c.h.b16 %v1468
    %v1944 = vunpack.c.l.b16 %v1469
    %v1945 = vunpack.c.h.b16 %v1469
    %v1946 = vunpack.c.l.b16 %v1470
    %v1947 = vunpack.c.h.b16 %v1470
    %v1948 = vpack.c.b16 %v1824, %v1820
    %v1949 = vpack.c.b16 %v1825, %v1821
    %v1950 = vpack.c.b16 %v1826, %v1822
    %v1951 = vpack.c.b16 %v1827, %v1823
    %v1952 = vpack.c.b16 %v1832, %v1828
    %v1953 = vpack.c.b16 %v1833, %v1829
    %v1954 = vpack.c.b16 %v1834, %v1830
    %v1955 = vpack.c.b16 %v1835, %v1831
    %v1956 = vpack.c.b16 %v1840, %v1836
    %v1957 = vpack.c.b16 %v1841, %v1837
    %v1958 = vpack.c.b16 %v1842, %v1838
    %v1959 = vpack.c.b16 %v1843, %v1839
    %v1960 = vpack.c.b16 %v1848, %v1844
    %v1961 = vpack.c.b16 %v1849, %v1845
    %v1962 = vpack.c.b16 %v1850, %v1846
    %v1963 = vpack.c.b16 %v1851, %v1847
    %v1964 = vpack.c.b16 %v1856, %v1852
    %v1965 = vpack.c.b16 %v1857, %v1853
    %v1966 = vpack.c.b16 %v1858, %v1854
    %v1967 = vpack.c.b16 %v1859, %v1855
    %v1968 = vpack.c.b16 %v1864, %v1860
    %v1969 = vpack.c.b16 %v1865, %v1861
    %v1970 = vpack.c.b16 %v1866, %v1862
    %v1971 = vpack.c.b16 %v1867, %v1863
    %v1972 = vpack.c.b16 %v1872, %v1868
    %v1973 = vpack.c.b16 %v1873, %v1869
    %v1974 = vpack.c.b16 %v1874, %v1870
    %v1975 = vpack.c.b16 %v1875, %v1871
    %v1976 = vpack.c.b16 %v1880, %v1876
    %v1977 = vpack.c.b16 %v1881, %v1877
    %v1978 = vpack.c.b16 %v1882, %v1878
    %v1979 = vpack.c.b16 %v1883, %v1879
    %v1980 = vpack.c.b16 %v1888, %v1884
    %v1981 = vpack.c.b16 %v1889, %v1885
    %v1982 = vpack.c.b16 %v1890, %v1886
    %v1983 = vpack.c.b16 %v1891, %v1887
    %v1984 = vpack.c.b16 %v1896, %v1892
    %v1985 = vpack.c.b16 %v1897, %v1893
    %v1986 = vpack.c.b16 %v1898, %v1894
    %v1987 = vpack.c.b16 %v1899, %v1895
    %v1988 = vpack.c.b16 %v1904, %v1900
    %v1989 = vpack.c.b16 %v1905, %v1901
    %v1990 = vpack.c.b16 %v1906, %v1902
    %v1991 = vpack.c.b16 %v1907, %v1903
    %v1992 = vpack.c.b16 %v1912, %v1908
    %v1993 = vpack.c.b16 %v1913, %v1909
    %v1994 = vpack.c.b16 %v1914, %v1910
    %v1995 = vpack.c.b16 %v1915, %v1911
    %v1996 = vpack.c.b16 %v1920, %v1916
    %v1997 = vpack.c.b16 %v1921, %v1917
    %v1998 = vpack.c.b16 %v1922, %v1918
    %v1999 = vpack.c.b16 %v1923, %v1919
    %v2000 = vpack.c.b16 %v1928, %v1924
    %v2001 = vpack.c.b16 %v1929, %v1925
    %v2002 = vpack.c.b16 %v1930, %v1926
    %v2003 = vpack.c.b16 %v1931, %v1927
    %v2004 = vpack.c.b16 %v1936, %v1932
    %v2005 = vpack.c.b16 %v1937, %v1933
    %v2006 = vpack.c.b16 %v1938, %v1934
    %v2007 = vpack.c.b16 %v1939, %v1935
    %v2008 = vpack.c.b16 %v1944, %v1940
    %v2009 = vpack.c.b16 %v1945, %v1941
    %v2010 = vpack.c.b16 %v1946, %v1942
    %v2011 = vpack.c.b16 %v1947, %v1943
    %2076 = vmatprep.subr.bf16.mxu0 %v1949
    %2077 = vmatpush1.bf16.msra.mxu0 %v1948
    %2078 = vmatprep.subr.bf16.mxu0 %v1953
    %2079 = vmatpush1.bf16.msra.mxu0 %v1952
    %2080 = vmatprep.subr.bf16.mxu0 %v1957
    %2081 = vmatpush1.bf16.msra.mxu0 %v1956
    %2082 = vmatprep.subr.bf16.mxu0 %v1961
    %2083 = vmatpush1.bf16.msra.mxu0 %v1960
    %2084 = vmatprep.subr.bf16.mxu0 %v1965
    %2085 = vmatpush1.bf16.msra.mxu0 %v1964
    %2086 = vmatprep.subr.bf16.mxu0 %v1969
    %2087 = vmatpush1.bf16.msra.mxu0 %v1968
    %2088 = vmatprep.subr.bf16.mxu0 %v1973
    %2089 = vmatpush1.bf16.msra.mxu0 %v1972
    %2090 = vmatprep.subr.bf16.mxu0 %v1977
    %2091 = vmatpush1.bf16.msra.mxu0 %v1976
    %2092 = vmatprep.subr.bf16.mxu0 %v1981
    %2093 = vmatpush1.bf16.msra.mxu0 %v1980
    %2094 = vmatprep.subr.bf16.mxu0 %v1985
    %2095 = vmatpush1.bf16.msra.mxu0 %v1984
    %2096 = vmatprep.subr.bf16.mxu0 %v1989
    %2097 = vmatpush1.bf16.msra.mxu0 %v1988
    %2098 = vmatprep.subr.bf16.mxu0 %v1993
    %2099 = vmatpush1.bf16.msra.mxu0 %v1992
    %2100 = vmatprep.subr.bf16.mxu0 %v1997
    %2101 = vmatpush1.bf16.msra.mxu0 %v1996
    %2102 = vmatprep.subr.bf16.mxu0 %v2001
    %2103 = vmatpush1.bf16.msra.mxu0 %v2000
    %2104 = vmatprep.subr.bf16.mxu0 %v2005
    %2105 = vmatpush1.bf16.msra.mxu0 %v2004
    %2106 = vmatprep.subr.bf16.mxu0 %v2009
    %2107 = vmatpush1.bf16.msra.mxu0 %v2008
    %2108 = vmatprep.mubr.bf16.mxu0 %v1755
    %2109 = vmatmul.mubr.bf16.gmra.mrb[0].mxu0 %v1754
    %v2110 = vpop.f32.mrb[0].mxu0
    %v2111 = vadd.f32 %v1471, %v2110
    %v2112 = vpop.f32.mrb[0].mxu0
    %v2113 = vadd.f32 %v1472, %v2112
    %v2114 = vpop.f32.mrb[0].mxu0
    %v2115 = vpop.f32.mrb[0].mxu0
    %2116 = vdwg.mxu0
    %2117 = vmatprep.subr.bf16.mxu0 %v1951
    %2118 = vmatpush1.bf16.msra.mxu0 %v1950
    %2119 = vmatprep.subr.bf16.mxu0 %v1955
    %2120 = vmatpush1.bf16.msra.mxu0 %v1954
    %2121 = vmatprep.subr.bf16.mxu0 %v1959
    %2122 = vmatpush1.bf16.msra.mxu0 %v1958
    %2123 = vmatprep.subr.bf16.mxu0 %v1963
    %2124 = vmatpush1.bf16.msra.mxu0 %v1962
    %2125 = vmatprep.subr.bf16.mxu0 %v1967
    %2126 = vmatpush1.bf16.msra.mxu0 %v1966
    %2127 = vmatprep.subr.bf16.mxu0 %v1971
    %2128 = vmatpush1.bf16.msra.mxu0 %v1970
    %2129 = vmatprep.subr.bf16.mxu0 %v1975
    %2130 = vmatpush1.bf16.msra.mxu0 %v1974
    %2131 = vmatprep.subr.bf16.mxu0 %v1979
    %2132 = vmatpush1.bf16.msra.mxu0 %v1978
    %2133 = vmatprep.subr.bf16.mxu0 %v1983
    %2134 = vmatpush1.bf16.msra.mxu0 %v1982
    %2135 = vmatprep.subr.bf16.mxu0 %v1987
    %2136 = vmatpush1.bf16.msra.mxu0 %v1986
    %2137 = vmatprep.subr.bf16.mxu0 %v1991
    %2138 = vmatpush1.bf16.msra.mxu0 %v1990
    %2139 = vmatprep.subr.bf16.mxu0 %v1995
    %2140 = vmatpush1.bf16.msra.mxu0 %v1994
    %2141 = vmatprep.subr.bf16.mxu0 %v1999
    %2142 = vmatpush1.bf16.msra.mxu0 %v1998
    %2143 = vmatprep.subr.bf16.mxu0 %v2003
    %2144 = vmatpush1.bf16.msra.mxu0 %v2002
    %2145 = vmatprep.subr.bf16.mxu0 %v2007
    %2146 = vmatpush1.bf16.msra.mxu0 %v2006
    %2147 = vmatprep.subr.bf16.mxu0 %v2011
    %2148 = vmatpush1.bf16.msra.mxu0 %v2010
    %2149 = vmatprep.mubr.bf16.mxu0 %v1755
    %2150 = vmatmul.mubr.bf16.gmra.mrb[0].mxu0 %v1754
    %v2151 = vpop.f32.mrb[0].mxu0
    %v2152 = vadd.f32 %v1473, %v2151
    %v2153 = vpop.f32.mrb[0].mxu0
    %v2154 = vadd.f32 %v1474, %v2153
    %v2155 = vpop.f32.mrb[0].mxu0
    %v2156 = vpop.f32.mrb[0].mxu0
    %2157 = vdwg.mxu0
    %v2158 = vxor.u32 %v2111, 2147483648
    %v2159 = vmul.f32 %v2158, 1.442695
    %v2160 = vpow.pop %v2159
    %v2161 = vadd.f32 %v2160, 1.0
    %v2162 = vrcp.pop %v2161
    %v2163 = vmul.f32 1.0, %v2162
    %v2164 = vxor.u32 %v2113, 2147483648
    %v2165 = vmul.f32 %v2164, 1.442695
    %v2166 = vpow.pop %v2165
    %v2167 = vadd.f32 %v2166, 1.0
    %v2168 = vrcp.pop %v2167
    %v2169 = vmul.f32 1.0, %v2168
    %v2170 = vtanh.pop %v2152
    %v2171 = vxor.u32 %v2154, 2147483648
    %v2172 = vmul.f32 %v2171, 1.442695
    %v2173 = vpow.pop %v2172
    %v2174 = vadd.f32 %v2173, 1.0
    %v2175 = vrcp.pop %v2174
    %v2176 = vmul.f32 1.0, %v2175
    %v2177 = vmul.f32 %v2169, %v1478
    %v2178 = vmul.f32 %v2163, %v2170
    %v2179 = vadd.f32 %v2177, %v2178
    %v2180 = vtanh.pop %v2179
    %v2181 = vmul.f32 %v2176, %v2180
    %2182 = vst [vmem:[#allocation3] sm:$0xff] %v2181
    %s2183 = scalar_lea.vmem [#allocation2], 32
    %v2184 = vld [vmem:[%s2183] sm:$0xff]
    %v2185 = vld [vmem:[%s2183 + $0x8] sm:$0xff]
    %v2186 = vld [vmem:[%s2183 + $0x10] sm:$0xff]
    %v2187 = vld [vmem:[%s2183 + $0x18] sm:$0xff]
    %2188 = vmatprep.subr.bf16.mxu0 %v1581
    %2189 = vmatpush1.bf16.msra.mxu0 %v1580
    %2190 = vmatprep.subr.bf16.mxu0 %v1585
    %2191 = vmatpush1.bf16.msra.mxu0 %v1584
    %2192 = vmatprep.subr.bf16.mxu0 %v1589
    %2193 = vmatpush1.bf16.msra.mxu0 %v1588
    %2194 = vmatprep.subr.bf16.mxu0 %v1593
    %2195 = vmatpush1.bf16.msra.mxu0 %v1592
    %2196 = vmatprep.subr.bf16.mxu0 %v1597
    %2197 = vmatpush1.bf16.msra.mxu0 %v1596
    %2198 = vmatprep.subr.bf16.mxu0 %v1601
    %2199 = vmatpush1.bf16.msra.mxu0 %v1600
    %2200 = vmatprep.subr.bf16.mxu0 %v1605
    %2201 = vmatpush1.bf16.msra.mxu0 %v1604
    %2202 = vmatprep.subr.bf16.mxu0 %v1609
    %2203 = vmatpush1.bf16.msra.mxu0 %v1608
    %2204 = vmatprep.subr.bf16.mxu0 0
    %2205 = vmatpush1.bf16.msra.mxu0 0
    %2206 = vmatprep.subr.bf16.mxu0 0
    %2207 = vmatpush1.bf16.msra.mxu0 0
    %2208 = vmatprep.subr.bf16.mxu0 0
    %2209 = vmatpush1.bf16.msra.mxu0 0
    %2210 = vmatprep.subr.bf16.mxu0 0
    %2211 = vmatpush1.bf16.msra.mxu0 0
    %2212 = vmatprep.subr.bf16.mxu0 0
    %2213 = vmatpush1.bf16.msra.mxu0 0
    %2214 = vmatprep.subr.bf16.mxu0 0
    %2215 = vmatpush1.bf16.msra.mxu0 0
    %2216 = vmatprep.subr.bf16.mxu0 0
    %2217 = vmatpush1.bf16.msra.mxu0 0
    %2218 = vmatprep.subr.bf16.mxu0 0
    %2219 = vmatpush1.bf16.msra.mxu0 0
    %2220 = vmatprep.mubr.bf16.mxu0 0
    %2221 = vmatmul.mubr.bf16.gmra.mrb[0].mxu0 %v1754
    %v2222 = vpop.f32.mrb[0].mxu0
    %v2223 = vadd.f32 0.0, %v2222
    %v2224 = vpop.f32.mrb[0].mxu0
    %v2225 = vadd.f32 0.0, %v2224
    %v2226 = vpop.f32.mrb[0].mxu0
    %v2227 = vpop.f32.mrb[0].mxu0
    %2228 = vdwg.mxu0
    %2229 = vmatprep.subr.bf16.mxu0 %v1583
    %2230 = vmatpush1.bf16.msra.mxu0 %v1582
    %2231 = vmatprep.subr.bf16.mxu0 %v1587
    %2232 = vmatpush1.bf16.msra.mxu0 %v1586
    %2233 = vmatprep.subr.bf16.mxu0 %v1591
    %2234 = vmatpush1.bf16.msra.mxu0 %v1590
    %2235 = vmatprep.subr.bf16.mxu0 %v1595
    %2236 = vmatpush1.bf16.msra.mxu0 %v1594
    %2237 = vmatprep.subr.bf16.mxu0 %v1599
    %2238 = vmatpush1.bf16.msra.mxu0 %v1598
    %2239 = vmatprep.subr.bf16.mxu0 %v1603
    %2240 = vmatpush1.bf16.msra.mxu0 %v1602
    %2241 = vmatprep.subr.bf16.mxu0 %v1607
    %2242 = vmatpush1.bf16.msra.mxu0 %v1606
    %2243 = vmatprep.subr.bf16.mxu0 %v1611
    %2244 = vmatpush1.bf16.msra.mxu0 %v1610
    %2245 = vmatprep.subr.bf16.mxu0 0
    %2246 = vmatpush1.bf16.msra.mxu0 0
    %2247 = vmatprep.subr.bf16.mxu0 0
    %2248 = vmatpush1.bf16.msra.mxu0 0
    %2249 = vmatprep.subr.bf16.mxu0 0
    %2250 = vmatpush1.bf16.msra.mxu0 0
    %2251 = vmatprep.subr.bf16.mxu0 0
    %2252 = vmatpush1.bf16.msra.mxu0 0
    %2253 = vmatprep.subr.bf16.mxu0 0
    %2254 = vmatpush1.bf16.msra.mxu0 0
    %2255 = vmatprep.subr.bf16.mxu0 0
    %2256 = vmatpush1.bf16.msra.mxu0 0
    %2257 = vmatprep.subr.bf16.mxu0 0
    %2258 = vmatpush1.bf16.msra.mxu0 0
    %2259 = vmatprep.subr.bf16.mxu0 0
    %2260 = vmatpush1.bf16.msra.mxu0 0
    %2261 = vmatprep.mubr.bf16.mxu0 0
    %2262 = vmatmul.mubr.bf16.gmra.mrb[0].mxu0 %v1754
    %v2263 = vpop.f32.mrb[0].mxu0
    %v2264 = vadd.f32 0.0, %v2263
    %v2265 = vpop.f32.mrb[0].mxu0
    %v2266 = vadd.f32 0.0, %v2265
    %v2267 = vpop.f32.mrb[0].mxu0
    %v2268 = vpop.f32.mrb[0].mxu0
    %2269 = vdwg.mxu0
    %v2270 = vadd.f32 %v2184, %v2223
    %v2271 = vadd.f32 %v2185, %v2225
    %v2272 = vadd.f32 %v2186, %v2264
    %v2273 = vadd.f32 %v2187, %v2266
    %v2274 = vxor.u32 %v2270, 2147483648
    %v2275 = vmul.f32 %v2274, 1.442695
    %v2276 = vpow.pop %v2275
    %v2277 = vadd.f32 %v2276, 1.0
    %v2278 = vrcp.pop %v2277
    %v2279 = vmul.f32 1.0, %v2278
    %v2280 = vxor.u32 %v2271, 2147483648
    %v2281 = vmul.f32 %v2280, 1.442695
    %v2282 = vpow.pop %v2281
    %v2283 = vadd.f32 %v2282, 1.0
    %v2284 = vrcp.pop %v2283
    %v2285 = vmul.f32 1.0, %v2284
    %v2286 = vtanh.pop %v2272
    %v2287 = vxor.u32 %v2273, 2147483648
    %v2288 = vmul.f32 %v2287, 1.442695
    %v2289 = vpow.pop %v2288
    %v2290 = vadd.f32 %v2289, 1.0
    %v2291 = vrcp.pop %v2290
    %v2292 = vmul.f32 1.0, %v2291
    %v2293 = vmul.f32 %v2285, %v1751
    %v2294 = vmul.f32 %v2279, %v2286
    %v2295 = vadd.f32 %v2293, %v2294
    %v2296 = vtanh.pop %v2295
    %v2297 = vmul.f32 %v2292, %v2296
    %v2298 = vpack.c.bf16 %v2297, %v2297
    %v2299 = vpack.c.bf16 %v2181, %v2181
    %2300 = vmatprep.subr.bf16.mxu0 %v1949
    %2301 = vmatpush1.bf16.msra.mxu0 %v1948
    %2302 = vmatprep.subr.bf16.mxu0 %v1953
    %2303 = vmatpush1.bf16.msra.mxu0 %v1952
    %2304 = vmatprep.subr.bf16.mxu0 %v1957
    %2305 = vmatpush1.bf16.msra.mxu0 %v1956
    %2306 = vmatprep.subr.bf16.mxu0 %v1961
    %2307 = vmatpush1.bf16.msra.mxu0 %v1960
    %2308 = vmatprep.subr.bf16.mxu0 %v1965
    %2309 = vmatpush1.bf16.msra.mxu0 %v1964
    %2310 = vmatprep.subr.bf16.mxu0 %v1969
    %2311 = vmatpush1.bf16.msra.mxu0 %v1968
    %2312 = vmatprep.subr.bf16.mxu0 %v1973
    %2313 = vmatpush1.bf16.msra.mxu0 %v1972
    %2314 = vmatprep.subr.bf16.mxu0 %v1977
    %2315 = vmatpush1.bf16.msra.mxu0 %v1976
    %2316 = vmatprep.subr.bf16.mxu0 %v1981
    %2317 = vmatpush1.bf16.msra.mxu0 %v1980
    %2318 = vmatprep.subr.bf16.mxu0 %v1985
    %2319 = vmatpush1.bf16.msra.mxu0 %v1984
    %2320 = vmatprep.subr.bf16.mxu0 %v1989
    %2321 = vmatpush1.bf16.msra.mxu0 %v1988
    %2322 = vmatprep.subr.bf16.mxu0 %v1993
    %2323 = vmatpush1.bf16.msra.mxu0 %v1992
    %2324 = vmatprep.subr.bf16.mxu0 %v1997
    %2325 = vmatpush1.bf16.msra.mxu0 %v1996
    %2326 = vmatprep.subr.bf16.mxu0 %v2001
    %2327 = vmatpush1.bf16.msra.mxu0 %v2000
    %2328 = vmatprep.subr.bf16.mxu0 %v2005
    %2329 = vmatpush1.bf16.msra.mxu0 %v2004
    %2330 = vmatprep.subr.bf16.mxu0 %v2009
    %2331 = vmatpush1.bf16.msra.mxu0 %v2008
    %2332 = vmatprep.mubr.bf16.mxu0 %v2299
    %2333 = vmatmul.mubr.bf16.gmra.mrb[0].mxu0 %v2298
    %v2334 = vpop.f32.mrb[0].mxu0
    %v2335 = vadd.f32 %v1471, %v2334
    %v2336 = vpop.f32.mrb[0].mxu0
    %v2337 = vadd.f32 %v1472, %v2336
    %v2338 = vpop.f32.mrb[0].mxu0
    %v2339 = vpop.f32.mrb[0].mxu0
    %2340 = vdwg.mxu0
    %2341 = vmatprep.subr.bf16.mxu0 %v1951
    %2342 = vmatpush1.bf16.msra.mxu0 %v1950
    %2343 = vmatprep.subr.bf16.mxu0 %v1955
    %2344 = vmatpush1.bf16.msra.mxu0 %v1954
    %2345 = vmatprep.subr.bf16.mxu0 %v1959
    %2346 = vmatpush1.bf16.msra.mxu0 %v1958
    %2347 = vmatprep.subr.bf16.mxu0 %v1963
    %2348 = vmatpush1.bf16.msra.mxu0 %v1962
    %2349 = vmatprep.subr.bf16.mxu0 %v1967
    %2350 = vmatpush1.bf16.msra.mxu0 %v1966
    %2351 = vmatprep.subr.bf16.mxu0 %v1971
    %2352 = vmatpush1.bf16.msra.mxu0 %v1970
    %2353 = vmatprep.subr.bf16.mxu0 %v1975
    %2354 = vmatpush1.bf16.msra.mxu0 %v1974
    %2355 = vmatprep.subr.bf16.mxu0 %v1979
    %2356 = vmatpush1.bf16.msra.mxu0 %v1978
    %2357 = vmatprep.subr.bf16.mxu0 %v1983
    %2358 = vmatpush1.bf16.msra.mxu0 %v1982
    %2359 = vmatprep.subr.bf16.mxu0 %v1987
    %2360 = vmatpush1.bf16.msra.mxu0 %v1986
    %2361 = vmatprep.subr.bf16.mxu0 %v1991
    %2362 = vmatpush1.bf16.msra.mxu0 %v1990
    %2363 = vmatprep.subr.bf16.mxu0 %v1995
    %2364 = vmatpush1.bf16.msra.mxu0 %v1994
    %2365 = vmatprep.subr.bf16.mxu0 %v1999
    %2366 = vmatpush1.bf16.msra.mxu0 %v1998
    %2367 = vmatprep.subr.bf16.mxu0 %v2003
    %2368 = vmatpush1.bf16.msra.mxu0 %v2002
    %2369 = vmatprep.subr.bf16.mxu0 %v2007
    %2370 = vmatpush1.bf16.msra.mxu0 %v2006
    %2371 = vmatprep.subr.bf16.mxu0 %v2011
    %2372 = vmatpush1.bf16.msra.mxu0 %v2010
    %2373 = vmatprep.mubr.bf16.mxu0 %v2299
    %2374 = vmatmul.mubr.bf16.gmra.mrb[0].mxu0 %v2298
    %v2375 = vpop.f32.mrb[0].mxu0
    %v2376 = vadd.f32 %v1473, %v2375
    %v2377 = vpop.f32.mrb[0].mxu0
    %v2378 = vadd.f32 %v1474, %v2377
    %v2379 = vpop.f32.mrb[0].mxu0
    %v2380 = vpop.f32.mrb[0].mxu0
    %2381 = vdwg.mxu0
    %v2382 = vxor.u32 %v2335, 2147483648
    %v2383 = vmul.f32 %v2382, 1.442695
    %v2384 = vpow.pop %v2383
    %v2385 = vadd.f32 %v2384, 1.0
    %v2386 = vrcp.pop %v2385
    %v2387 = vmul.f32 1.0, %v2386
    %v2388 = vxor.u32 %v2337, 2147483648
    %v2389 = vmul.f32 %v2388, 1.442695
    %v2390 = vpow.pop %v2389
    %v2391 = vadd.f32 %v2390, 1.0
    %v2392 = vrcp.pop %v2391
    %v2393 = vmul.f32 1.0, %v2392
    %v2394 = vtanh.pop %v2376
    %v2395 = vxor.u32 %v2378, 2147483648
    %v2396 = vmul.f32 %v2395, 1.442695
    %v2397 = vpow.pop %v2396
    %v2398 = vadd.f32 %v2397, 1.0
    %v2399 = vrcp.pop %v2398
    %v2400 = vmul.f32 1.0, %v2399
    %v2401 = vmul.f32 %v2393, %v2179
    %v2402 = vmul.f32 %v2387, %v2394
    %v2403 = vadd.f32 %v2401, %v2402
    %v2404 = vtanh.pop %v2403
    %v2405 = vmul.f32 %v2400, %v2404
    %s2406 = scalar_lea.vmem [#allocation3], 8
    %2407 = vst [vmem:[%s2406] sm:$0xff] %v2405
    %s2408 = scalar_lea.vmem [#allocation2], 64
    %v2409 = vld [vmem:[%s2408] sm:$0xff]
    %v2410 = vld [vmem:[%s2408 + $0x8] sm:$0xff]
    %v2411 = vld [vmem:[%s2408 + $0x10] sm:$0xff]
    %v2412 = vld [vmem:[%s2408 + $0x18] sm:$0xff]
    %2413 = vmatprep.subr.bf16.mxu0 %v1581
    %2414 = vmatpush1.bf16.msra.mxu0 %v1580
    %2415 = vmatprep.subr.bf16.mxu0 %v1585
    %2416 = vmatpush1.bf16.msra.mxu0 %v1584
    %2417 = vmatprep.subr.bf16.mxu0 %v1589
    %2418 = vmatpush1.bf16.msra.mxu0 %v1588
    %2419 = vmatprep.subr.bf16.mxu0 %v1593
    %2420 = vmatpush1.bf16.msra.mxu0 %v1592
    %2421 = vmatprep.subr.bf16.mxu0 %v1597
    %2422 = vmatpush1.bf16.msra.mxu0 %v1596
    %2423 = vmatprep.subr.bf16.mxu0 %v1601
    %2424 = vmatpush1.bf16.msra.mxu0 %v1600
    %2425 = vmatprep.subr.bf16.mxu0 %v1605
    %2426 = vmatpush1.bf16.msra.mxu0 %v1604
    %2427 = vmatprep.subr.bf16.mxu0 %v1609
    %2428 = vmatpush1.bf16.msra.mxu0 %v1608
    %2429 = vmatprep.subr.bf16.mxu0 0
    %2430 = vmatpush1.bf16.msra.mxu0 0
    %2431 = vmatprep.subr.bf16.mxu0 0
    %2432 = vmatpush1.bf16.msra.mxu0 0
    %2433 = vmatprep.subr.bf16.mxu0 0
    %2434 = vmatpush1.bf16.msra.mxu0 0
    %2435 = vmatprep.subr.bf16.mxu0 0
    %2436 = vmatpush1.bf16.msra.mxu0 0
    %2437 = vmatprep.subr.bf16.mxu0 0
    %2438 = vmatpush1.bf16.msra.mxu0 0
    %2439 = vmatprep.subr.bf16.mxu0 0
    %2440 = vmatpush1.bf16.msra.mxu0 0
    %2441 = vmatprep.subr.bf16.mxu0 0
    %2442 = vmatpush1.bf16.msra.mxu0 0
    %2443 = vmatprep.subr.bf16.mxu0 0
    %2444 = vmatpush1.bf16.msra.mxu0 0
    %2445 = vmatprep.mubr.bf16.mxu0 0
    %2446 = vmatmul.mubr.bf16.gmra.mrb[0].mxu0 %v2298
    %v2447 = vpop.f32.mrb[0].mxu0
    %v2448 = vadd.f32 0.0, %v2447
    %v2449 = vpop.f32.mrb[0].mxu0
    %v2450 = vadd.f32 0.0, %v2449
    %v2451 = vpop.f32.mrb[0].mxu0
    %v2452 = vpop.f32.mrb[0].mxu0
    %2453 = vdwg.mxu0
    %2454 = vmatprep.subr.bf16.mxu0 %v1583
    %2455 = vmatpush1.bf16.msra.mxu0 %v1582
    %2456 = vmatprep.subr.bf16.mxu0 %v1587
    %2457 = vmatpush1.bf16.msra.mxu0 %v1586
    %2458 = vmatprep.subr.bf16.mxu0 %v1591
    %2459 = vmatpush1.bf16.msra.mxu0 %v1590
    %2460 = vmatprep.subr.bf16.mxu0 %v1595
    %2461 = vmatpush1.bf16.msra.mxu0 %v1594
    %2462 = vmatprep.subr.bf16.mxu0 %v1599
    %2463 = vmatpush1.bf16.msra.mxu0 %v1598
    %2464 = vmatprep.subr.bf16.mxu0 %v1603
    %2465 = vmatpush1.bf16.msra.mxu0 %v1602
    %2466 = vmatprep.subr.bf16.mxu0 %v1607
    %2467 = vmatpush1.bf16.msra.mxu0 %v1606
    %2468 = vmatprep.subr.bf16.mxu0 %v1611
    %2469 = vmatpush1.bf16.msra.mxu0 %v1610
    %2470 = vmatprep.subr.bf16.mxu0 0
    %2471 = vmatpush1.bf16.msra.mxu0 0
    %2472 = vmatprep.subr.bf16.mxu0 0
    %2473 = vmatpush1.bf16.msra.mxu0 0
    %2474 = vmatprep.subr.bf16.mxu0 0
    %2475 = vmatpush1.bf16.msra.mxu0 0
    %2476 = vmatprep.subr.bf16.mxu0 0
    %2477 = vmatpush1.bf16.msra.mxu0 0
    %2478 = vmatprep.subr.bf16.mxu0 0
    %2479 = vmatpush1.bf16.msra.mxu0 0
    %2480 = vmatprep.subr.bf16.mxu0 0
    %2481 = vmatpush1.bf16.msra.mxu0 0
    %2482 = vmatprep.subr.bf16.mxu0 0
    %2483 = vmatpush1.bf16.msra.mxu0 0
    %2484 = vmatprep.subr.bf16.mxu0 0
    %2485 = vmatpush1.bf16.msra.mxu0 0
    %2486 = vmatprep.mubr.bf16.mxu0 0
    %2487 = vmatmul.mubr.bf16.gmra.mrb[0].mxu0 %v2298
    %v2488 = vpop.f32.mrb[0].mxu0
    %v2489 = vadd.f32 0.0, %v2488
    %v2490 = vpop.f32.mrb[0].mxu0
    %v2491 = vadd.f32 0.0, %v2490
    %v2492 = vpop.f32.mrb[0].mxu0
    %v2493 = vpop.f32.mrb[0].mxu0
    %2494 = vdwg.mxu0
    %v2495 = vadd.f32 %v2409, %v2448
    %v2496 = vadd.f32 %v2410, %v2450
    %v2497 = vadd.f32 %v2411, %v2489
    %v2498 = vadd.f32 %v2412, %v2491
    %v2499 = vxor.u32 %v2495, 2147483648
    %v2500 = vmul.f32 %v2499, 1.442695
    %v2501 = vpow.pop %v2500
    %v2502 = vadd.f32 %v2501, 1.0
    %v2503 = vrcp.pop %v2502
    %v2504 = vmul.f32 1.0, %v2503
    %v2505 = vxor.u32 %v2496, 2147483648
    %v2506 = vmul.f32 %v2505, 1.442695
    %v2507 = vpow.pop %v2506
    %v2508 = vadd.f32 %v2507, 1.0
    %v2509 = vrcp.pop %v2508
    %v2510 = vmul.f32 1.0, %v2509
    %v2511 = vtanh.pop %v2497
    %v2512 = vxor.u32 %v2498, 2147483648
    %v2513 = vmul.f32 %v2512, 1.442695
    %v2514 = vpow.pop %v2513
    %v2515 = vadd.f32 %v2514, 1.0
    %v2516 = vrcp.pop %v2515
    %v2517 = vmul.f32 1.0, %v2516
    %v2518 = vmul.f32 %v2510, %v2295
    %v2519 = vmul.f32 %v2504, %v2511
    %v2520 = vadd.f32 %v2518, %v2519
    %v2521 = vtanh.pop %v2520
    %v2522 = vmul.f32 %v2517, %v2521
    %v2523 = vpack.c.bf16 %v2522, %v2522
    %v2524 = vpack.c.bf16 %v2405, %v2405
    %2525 = vmatprep.subr.bf16.mxu0 %v1949
    %2526 = vmatpush1.bf16.msra.mxu0 %v1948
    %2527 = vmatprep.subr.bf16.mxu0 %v1953
    %2528 = vmatpush1.bf16.msra.mxu0 %v1952
    %2529 = vmatprep.subr.bf16.mxu0 %v1957
    %2530 = vmatpush1.bf16.msra.mxu0 %v1956
    %2531 = vmatprep.subr.bf16.mxu0 %v1961
    %2532 = vmatpush1.bf16.msra.mxu0 %v1960
    %2533 = vmatprep.subr.bf16.mxu0 %v1965
    %2534 = vmatpush1.bf16.msra.mxu0 %v1964
    %2535 = vmatprep.subr.bf16.mxu0 %v1969
    %2536 = vmatpush1.bf16.msra.mxu0 %v1968
    %2537 = vmatprep.subr.bf16.mxu0 %v1973
    %2538 = vmatpush1.bf16.msra.mxu0 %v1972
    %2539 = vmatprep.subr.bf16.mxu0 %v1977
    %2540 = vmatpush1.bf16.msra.mxu0 %v1976
    %2541 = vmatprep.subr.bf16.mxu0 %v1981
    %2542 = vmatpush1.bf16.msra.mxu0 %v1980
    %2543 = vmatprep.subr.bf16.mxu0 %v1985
    %2544 = vmatpush1.bf16.msra.mxu0 %v1984
    %2545 = vmatprep.subr.bf16.mxu0 %v1989
    %2546 = vmatpush1.bf16.msra.mxu0 %v1988
    %2547 = vmatprep.subr.bf16.mxu0 %v1993
    %2548 = vmatpush1.bf16.msra.mxu0 %v1992
    %2549 = vmatprep.subr.bf16.mxu0 %v1997
    %2550 = vmatpush1.bf16.msra.mxu0 %v1996
    %2551 = vmatprep.subr.bf16.mxu0 %v2001
    %2552 = vmatpush1.bf16.msra.mxu0 %v2000
    %2553 = vmatprep.subr.bf16.mxu0 %v2005
    %2554 = vmatpush1.bf16.msra.mxu0 %v2004
    %2555 = vmatprep.subr.bf16.mxu0 %v2009
    %2556 = vmatpush1.bf16.msra.mxu0 %v2008
    %2557 = vmatprep.mubr.bf16.mxu0 %v2524
    %2558 = vmatmul.mubr.bf16.gmra.mrb[0].mxu0 %v2523
    %v2559 = vpop.f32.mrb[0].mxu0
    %v2560 = vadd.f32 %v1471, %v2559
    %v2561 = vpop.f32.mrb[0].mxu0
    %v2562 = vadd.f32 %v1472, %v2561
    %v2563 = vpop.f32.mrb[0].mxu0
    %v2564 = vpop.f32.mrb[0].mxu0
    %2565 = vdwg.mxu0
    %2566 = vmatprep.subr.bf16.mxu0 %v1951
    %2567 = vmatpush1.bf16.msra.mxu0 %v1950
    %2568 = vmatprep.subr.bf16.mxu0 %v1955
    %2569 = vmatpush1.bf16.msra.mxu0 %v1954
    %2570 = vmatprep.subr.bf16.mxu0 %v1959
    %2571 = vmatpush1.bf16.msra.mxu0 %v1958
    %2572 = vmatprep.subr.bf16.mxu0 %v1963
    %2573 = vmatpush1.bf16.msra.mxu0 %v1962
    %2574 = vmatprep.subr.bf16.mxu0 %v1967
    %2575 = vmatpush1.bf16.msra.mxu0 %v1966
    %2576 = vmatprep.subr.bf16.mxu0 %v1971
    %2577 = vmatpush1.bf16.msra.mxu0 %v1970
    %2578 = vmatprep.subr.bf16.mxu0 %v1975
    %2579 = vmatpush1.bf16.msra.mxu0 %v1974
    %2580 = vmatprep.subr.bf16.mxu0 %v1979
    %2581 = vmatpush1.bf16.msra.mxu0 %v1978
    %2582 = vmatprep.subr.bf16.mxu0 %v1983
    %2583 = vmatpush1.bf16.msra.mxu0 %v1982
    %2584 = vmatprep.subr.bf16.mxu0 %v1987
    %2585 = vmatpush1.bf16.msra.mxu0 %v1986
    %2586 = vmatprep.subr.bf16.mxu0 %v1991
    %2587 = vmatpush1.bf16.msra.mxu0 %v1990
    %2588 = vmatprep.subr.bf16.mxu0 %v1995
    %2589 = vmatpush1.bf16.msra.mxu0 %v1994
    %2590 = vmatprep.subr.bf16.mxu0 %v1999
    %2591 = vmatpush1.bf16.msra.mxu0 %v1998
    %2592 = vmatprep.subr.bf16.mxu0 %v2003
    %2593 = vmatpush1.bf16.msra.mxu0 %v2002
    %2594 = vmatprep.subr.bf16.mxu0 %v2007
    %2595 = vmatpush1.bf16.msra.mxu0 %v2006
    %2596 = vmatprep.subr.bf16.mxu0 %v2011
    %2597 = vmatpush1.bf16.msra.mxu0 %v2010
    %2598 = vmatprep.mubr.bf16.mxu0 %v2524
    %2599 = vmatmul.mubr.bf16.gmra.mrb[0].mxu0 %v2523
    %v2600 = vpop.f32.mrb[0].mxu0
    %v2601 = vadd.f32 %v1473, %v2600
    %v2602 = vpop.f32.mrb[0].mxu0
    %v2603 = vadd.f32 %v1474, %v2602
    %v2604 = vpop.f32.mrb[0].mxu0
    %v2605 = vpop.f32.mrb[0].mxu0
    %2606 = vdwg.mxu0
    %v2607 = vxor.u32 %v2560, 2147483648
    %v2608 = vmul.f32 %v2607, 1.442695
    %v2609 = vpow.pop %v2608
    %v2610 = vadd.f32 %v2609, 1.0
    %v2611 = vrcp.pop %v2610
    %v2612 = vmul.f32 1.0, %v2611
    %v2613 = vxor.u32 %v2562, 2147483648
    %v2614 = vmul.f32 %v2613, 1.442695
    %v2615 = vpow.pop %v2614
    %v2616 = vadd.f32 %v2615, 1.0
    %v2617 = vrcp.pop %v2616
    %v2618 = vmul.f32 1.0, %v2617
    %v2619 = vtanh.pop %v2601
    %v2620 = vxor.u32 %v2603, 2147483648
    %v2621 = vmul.f32 %v2620, 1.442695
    %v2622 = vpow.pop %v2621
    %v2623 = vadd.f32 %v2622, 1.0
    %v2624 = vrcp.pop %v2623
    %v2625 = vmul.f32 1.0, %v2624
    %v2626 = vmul.f32 %v2618, %v2403
    %v2627 = vmul.f32 %v2612, %v2619
    %v2628 = vadd.f32 %v2626, %v2627
    %v2629 = vtanh.pop %v2628
    %v2630 = vmul.f32 %v2625, %v2629
    %s2631 = scalar_lea.vmem [#allocation3], 16
    %2632 = vst [vmem:[%s2631] sm:$0xff] %v2630
    %s2633 = scalar_lea.vmem [#allocation2], 96
    %v2634 = vld [vmem:[%s2633] sm:$0xff]
    %v2635 = vld [vmem:[%s2633 + $0x8] sm:$0xff]
    %v2636 = vld [vmem:[%s2633 + $0x10] sm:$0xff]
    %v2637 = vld [vmem:[%s2633 + $0x18] sm:$0xff]
    %2638 = vmatprep.subr.bf16.mxu0 %v1581
    %2639 = vmatpush1.bf16.msra.mxu0 %v1580
    %2640 = vmatprep.subr.bf16.mxu0 %v1585
    %2641 = vmatpush1.bf16.msra.mxu0 %v1584
    %2642 = vmatprep.subr.bf16.mxu0 %v1589
    %2643 = vmatpush1.bf16.msra.mxu0 %v1588
    %2644 = vmatprep.subr.bf16.mxu0 %v1593
    %2645 = vmatpush1.bf16.msra.mxu0 %v1592
    %2646 = vmatprep.subr.bf16.mxu0 %v1597
    %2647 = vmatpush1.bf16.msra.mxu0 %v1596
    %2648 = vmatprep.subr.bf16.mxu0 %v1601
    %2649 = vmatpush1.bf16.msra.mxu0 %v1600
    %2650 = vmatprep.subr.bf16.mxu0 %v1605
    %2651 = vmatpush1.bf16.msra.mxu0 %v1604
    %2652 = vmatprep.subr.bf16.mxu0 %v1609
    %2653 = vmatpush1.bf16.msra.mxu0 %v1608
    %2654 = vmatprep.subr.bf16.mxu0 0
    %2655 = vmatpush1.bf16.msra.mxu0 0
    %2656 = vmatprep.subr.bf16.mxu0 0
    %2657 = vmatpush1.bf16.msra.mxu0 0
    %2658 = vmatprep.subr.bf16.mxu0 0
    %2659 = vmatpush1.bf16.msra.mxu0 0
    %2660 = vmatprep.subr.bf16.mxu0 0
    %2661 = vmatpush1.bf16.msra.mxu0 0
    %2662 = vmatprep.subr.bf16.mxu0 0
    %2663 = vmatpush1.bf16.msra.mxu0 0
    %2664 = vmatprep.subr.bf16.mxu0 0
    %2665 = vmatpush1.bf16.msra.mxu0 0
    %2666 = vmatprep.subr.bf16.mxu0 0
    %2667 = vmatpush1.bf16.msra.mxu0 0
    %2668 = vmatprep.subr.bf16.mxu0 0
    %2669 = vmatpush1.bf16.msra.mxu0 0
    %2670 = vmatprep.mubr.bf16.mxu0 0
    %2671 = vmatmul.mubr.bf16.gmra.mrb[0].mxu0 %v2523
    %v2672 = vpop.f32.mrb[0].mxu0
    %v2673 = vadd.f32 0.0, %v2672
    %v2674 = vpop.f32.mrb[0].mxu0
    %v2675 = vadd.f32 0.0, %v2674
    %v2676 = vpop.f32.mrb[0].mxu0
    %v2677 = vpop.f32.mrb[0].mxu0
    %2678 = vdwg.mxu0
    %2679 = vmatprep.subr.bf16.mxu0 %v1583
    %2680 = vmatpush1.bf16.msra.mxu0 %v1582
    %2681 = vmatprep.subr.bf16.mxu0 %v1587
    %2682 = vmatpush1.bf16.msra.mxu0 %v1586
    %2683 = vmatprep.subr.bf16.mxu0 %v1591
    %2684 = vmatpush1.bf16.msra.mxu0 %v1590
    %2685 = vmatprep.subr.bf16.mxu0 %v1595
    %2686 = vmatpush1.bf16.msra.mxu0 %v1594
    %2687 = vmatprep.subr.bf16.mxu0 %v1599
    %2688 = vmatpush1.bf16.msra.mxu0 %v1598
    %2689 = vmatprep.subr.bf16.mxu0 %v1603
    %2690 = vmatpush1.bf16.msra.mxu0 %v1602
    %2691 = vmatprep.subr.bf16.mxu0 %v1607
    %2692 = vmatpush1.bf16.msra.mxu0 %v1606
    %2693 = vmatprep.subr.bf16.mxu0 %v1611
    %2694 = vmatpush1.bf16.msra.mxu0 %v1610
    %2695 = vmatprep.subr.bf16.mxu0 0
    %2696 = vmatpush1.bf16.msra.mxu0 0
    %2697 = vmatprep.subr.bf16.mxu0 0
    %2698 = vmatpush1.bf16.msra.mxu0 0
    %2699 = vmatprep.subr.bf16.mxu0 0
    %2700 = vmatpush1.bf16.msra.mxu0 0
    %2701 = vmatprep.subr.bf16.mxu0 0
    %2702 = vmatpush1.bf16.msra.mxu0 0
    %2703 = vmatprep.subr.bf16.mxu0 0
    %2704 = vmatpush1.bf16.msra.mxu0 0
    %2705 = vmatprep.subr.bf16.mxu0 0
    %2706 = vmatpush1.bf16.msra.mxu0 0
    %2707 = vmatprep.subr.bf16.mxu0 0
    %2708 = vmatpush1.bf16.msra.mxu0 0
    %2709 = vmatprep.subr.bf16.mxu0 0
    %2710 = vmatpush1.bf16.msra.mxu0 0
    %2711 = vmatprep.mubr.bf16.mxu0 0
    %2712 = vmatmul.mubr.bf16.gmra.mrb[0].mxu0 %v2523
    %v2713 = vpop.f32.mrb[0].mxu0
    %v2714 = vadd.f32 0.0, %v2713
    %v2715 = vpop.f32.mrb[0].mxu0
    %v2716 = vadd.f32 0.0, %v2715
    %v2717 = vpop.f32.mrb[0].mxu0
    %v2718 = vpop.f32.mrb[0].mxu0
    %2719 = vdwg.mxu0
    %v2720 = vadd.f32 %v2634, %v2673
    %v2721 = vadd.f32 %v2635, %v2675
    %v2722 = vadd.f32 %v2636, %v2714
    %v2723 = vadd.f32 %v2637, %v2716
    %v2724 = vxor.u32 %v2720, 2147483648
    %v2725 = vmul.f32 %v2724, 1.442695
    %v2726 = vpow.pop %v2725
    %v2727 = vadd.f32 %v2726, 1.0
    %v2728 = vrcp.pop %v2727
    %v2729 = vmul.f32 1.0, %v2728
    %v2730 = vxor.u32 %v2721, 2147483648
    %v2731 = vmul.f32 %v2730, 1.442695
    %v2732 = vpow.pop %v2731
    %v2733 = vadd.f32 %v2732, 1.0
    %v2734 = vrcp.pop %v2733
    %v2735 = vmul.f32 1.0, %v2734
    %v2736 = vtanh.pop %v2722
    %v2737 = vxor.u32 %v2723, 2147483648
    %v2738 = vmul.f32 %v2737, 1.442695
    %v2739 = vpow.pop %v2738
    %v2740 = vadd.f32 %v2739, 1.0
    %v2741 = vrcp.pop %v2740
    %v2742 = vmul.f32 1.0, %v2741
    %v2743 = vmul.f32 %v2735, %v2520
    %v2744 = vmul.f32 %v2729, %v2736
    %v2745 = vadd.f32 %v2743, %v2744
    %v2746 = vtanh.pop %v2745
    %v2747 = vmul.f32 %v2742, %v2746
    %v2748 = vpack.c.bf16 %v2747, %v2747
    %v2749 = vpack.c.bf16 %v2630, %v2630
    %2750 = vmatprep.subr.bf16.mxu0 %v1949
    %2751 = vmatpush1.bf16.msra.mxu0 %v1948
    %2752 = vmatprep.subr.bf16.mxu0 %v1953
    %2753 = vmatpush1.bf16.msra.mxu0 %v1952
    %2754 = vmatprep.subr.bf16.mxu0 %v1957
    %2755 = vmatpush1.bf16.msra.mxu0 %v1956
    %2756 = vmatprep.subr.bf16.mxu0 %v1961
    %2757 = vmatpush1.bf16.msra.mxu0 %v1960
    %2758 = vmatprep.subr.bf16.mxu0 %v1965
    %2759 = vmatpush1.bf16.msra.mxu0 %v1964
    %2760 = vmatprep.subr.bf16.mxu0 %v1969
    %2761 = vmatpush1.bf16.msra.mxu0 %v1968
    %2762 = vmatprep.subr.bf16.mxu0 %v1973
    %2763 = vmatpush1.bf16.msra.mxu0 %v1972
    %2764 = vmatprep.subr.bf16.mxu0 %v1977
    %2765 = vmatpush1.bf16.msra.mxu0 %v1976
    %2766 = vmatprep.subr.bf16.mxu0 %v1981
    %2767 = vmatpush1.bf16.msra.mxu0 %v1980
    %2768 = vmatprep.subr.bf16.mxu0 %v1985
    %2769 = vmatpush1.bf16.msra.mxu0 %v1984
    %2770 = vmatprep.subr.bf16.mxu0 %v1989
    %2771 = vmatpush1.bf16.msra.mxu0 %v1988
    %2772 = vmatprep.subr.bf16.mxu0 %v1993
    %2773 = vmatpush1.bf16.msra.mxu0 %v1992
    %2774 = vmatprep.subr.bf16.mxu0 %v1997
    %2775 = vmatpush1.bf16.msra.mxu0 %v1996
    %2776 = vmatprep.subr.bf16.mxu0 %v2001
    %2777 = vmatpush1.bf16.msra.mxu0 %v2000
    %2778 = vmatprep.subr.bf16.mxu0 %v2005
    %2779 = vmatpush1.bf16.msra.mxu0 %v2004
    %2780 = vmatprep.subr.bf16.mxu0 %v2009
    %2781 = vmatpush1.bf16.msra.mxu0 %v2008
    %2782 = vmatprep.mubr.bf16.mxu0 %v2749
    %2783 = vmatmul.mubr.bf16.gmra.mrb[0].mxu0 %v2748
    %v2784 = vpop.f32.mrb[0].mxu0
    %v2785 = vadd.f32 %v1471, %v2784
    %v2786 = vpop.f32.mrb[0].mxu0
    %v2787 = vadd.f32 %v1472, %v2786
    %v2788 = vpop.f32.mrb[0].mxu0
    %v2789 = vpop.f32.mrb[0].mxu0
    %2790 = vdwg.mxu0
    %2791 = vmatprep.subr.bf16.mxu0 %v1951
    %2792 = vmatpush1.bf16.msra.mxu0 %v1950
    %2793 = vmatprep.subr.bf16.mxu0 %v1955
    %2794 = vmatpush1.bf16.msra.mxu0 %v1954
    %2795 = vmatprep.subr.bf16.mxu0 %v1959
    %2796 = vmatpush1.bf16.msra.mxu0 %v1958
    %2797 = vmatprep.subr.bf16.mxu0 %v1963
    %2798 = vmatpush1.bf16.msra.mxu0 %v1962
    %2799 = vmatprep.subr.bf16.mxu0 %v1967
    %2800 = vmatpush1.bf16.msra.mxu0 %v1966
    %2801 = vmatprep.subr.bf16.mxu0 %v1971
    %2802 = vmatpush1.bf16.msra.mxu0 %v1970
    %2803 = vmatprep.subr.bf16.mxu0 %v1975
    %2804 = vmatpush1.bf16.msra.mxu0 %v1974
    %2805 = vmatprep.subr.bf16.mxu0 %v1979
    %2806 = vmatpush1.bf16.msra.mxu0 %v1978
    %2807 = vmatprep.subr.bf16.mxu0 %v1983
    %2808 = vmatpush1.bf16.msra.mxu0 %v1982
    %2809 = vmatprep.subr.bf16.mxu0 %v1987
    %2810 = vmatpush1.bf16.msra.mxu0 %v1986
    %2811 = vmatprep.subr.bf16.mxu0 %v1991
    %2812 = vmatpush1.bf16.msra.mxu0 %v1990
    %2813 = vmatprep.subr.bf16.mxu0 %v1995
    %2814 = vmatpush1.bf16.msra.mxu0 %v1994
    %2815 = vmatprep.subr.bf16.mxu0 %v1999
    %2816 = vmatpush1.bf16.msra.mxu0 %v1998
    %2817 = vmatprep.subr.bf16.mxu0 %v2003
    %2818 = vmatpush1.bf16.msra.mxu0 %v2002
    %2819 = vmatprep.subr.bf16.mxu0 %v2007
    %2820 = vmatpush1.bf16.msra.mxu0 %v2006
    %2821 = vmatprep.subr.bf16.mxu0 %v2011
    %2822 = vmatpush1.bf16.msra.mxu0 %v2010
    %2823 = vmatprep.mubr.bf16.mxu0 %v2749
    %2824 = vmatmul.mubr.bf16.gmra.mrb[0].mxu0 %v2748
    %v2825 = vpop.f32.mrb[0].mxu0
    %v2826 = vadd.f32 %v1473, %v2825
    %v2827 = vpop.f32.mrb[0].mxu0
    %v2828 = vadd.f32 %v1474, %v2827
    %v2829 = vpop.f32.mrb[0].mxu0
    %v2830 = vpop.f32.mrb[0].mxu0
    %2831 = vdwg.mxu0
    %v2832 = vxor.u32 %v2785, 2147483648
    %v2833 = vmul.f32 %v2832, 1.442695
    %v2834 = vpow.pop %v2833
    %v2835 = vadd.f32 %v2834, 1.0
    %v2836 = vrcp.pop %v2835
    %v2837 = vmul.f32 1.0, %v2836
    %v2838 = vxor.u32 %v2787, 2147483648
    %v2839 = vmul.f32 %v2838, 1.442695
    %v2840 = vpow.pop %v2839
    %v2841 = vadd.f32 %v2840, 1.0
    %v2842 = vrcp.pop %v2841
    %v2843 = vmul.f32 1.0, %v2842
    %v2844 = vtanh.pop %v2826
    %v2845 = vxor.u32 %v2828, 2147483648
    %v2846 = vmul.f32 %v2845, 1.442695
    %v2847 = vpow.pop %v2846
    %v2848 = vadd.f32 %v2847, 1.0
    %v2849 = vrcp.pop %v2848
    %v2850 = vmul.f32 1.0, %v2849
    %v2851 = vmul.f32 %v2843, %v2628
    %v2852 = vmul.f32 %v2837, %v2844
    %v2853 = vadd.f32 %v2851, %v2852
    %v2854 = vtanh.pop %v2853
    %v2855 = vmul.f32 %v2850, %v2854
    %s2856 = scalar_lea.vmem [#allocation3], 24
    %2857 = vst [vmem:[%s2856] sm:$0xff] %v2855
    %s2858 = scalar_lea.vmem [#allocation2], 128
    %v2859 = vld [vmem:[%s2858] sm:$0xff]
    %v2860 = vld [vmem:[%s2858 + $0x8] sm:$0xff]
    %v2861 = vld [vmem:[%s2858 + $0x10] sm:$0xff]
    %v2862 = vld [vmem:[%s2858 + $0x18] sm:$0xff]
    %2863 = vmatprep.subr.bf16.mxu0 %v1581
    %2864 = vmatpush1.bf16.msra.mxu0 %v1580
    %2865 = vmatprep.subr.bf16.mxu0 %v1585
    %2866 = vmatpush1.bf16.msra.mxu0 %v1584
    %2867 = vmatprep.subr.bf16.mxu0 %v1589
    %2868 = vmatpush1.bf16.msra.mxu0 %v1588
    %2869 = vmatprep.subr.bf16.mxu0 %v1593
    %2870 = vmatpush1.bf16.msra.mxu0 %v1592
    %2871 = vmatprep.subr.bf16.mxu0 %v1597
    %2872 = vmatpush1.bf16.msra.mxu0 %v1596
    %2873 = vmatprep.subr.bf16.mxu0 %v1601
    %2874 = vmatpush1.bf16.msra.mxu0 %v1600
    %2875 = vmatprep.subr.bf16.mxu0 %v1605
    %2876 = vmatpush1.bf16.msra.mxu0 %v1604
    %2877 = vmatprep.subr.bf16.mxu0 %v1609
    %2878 = vmatpush1.bf16.msra.mxu0 %v1608
    %2879 = vmatprep.subr.bf16.mxu0 0
    %2880 = vmatpush1.bf16.msra.mxu0 0
    %2881 = vmatprep.subr.bf16.mxu0 0
    %2882 = vmatpush1.bf16.msra.mxu0 0
    %2883 = vmatprep.subr.bf16.mxu0 0
    %2884 = vmatpush1.bf16.msra.mxu0 0
    %2885 = vmatprep.subr.bf16.mxu0 0
    %2886 = vmatpush1.bf16.msra.mxu0 0
    %2887 = vmatprep.subr.bf16.mxu0 0
    %2888 = vmatpush1.bf16.msra.mxu0 0
    %2889 = vmatprep.subr.bf16.mxu0 0
    %2890 = vmatpush1.bf16.msra.mxu0 0
    %2891 = vmatprep.subr.bf16.mxu0 0
    %2892 = vmatpush1.bf16.msra.mxu0 0
    %2893 = vmatprep.subr.bf16.mxu0 0
    %2894 = vmatpush1.bf16.msra.mxu0 0
    %2895 = vmatprep.mubr.bf16.mxu0 0
    %2896 = vmatmul.mubr.bf16.gmra.mrb[0].mxu0 %v2748
    %v2897 = vpop.f32.mrb[0].mxu0
    %v2898 = vadd.f32 0.0, %v2897
    %v2899 = vpop.f32.mrb[0].mxu0
    %v2900 = vadd.f32 0.0, %v2899
    %v2901 = vpop.f32.mrb[0].mxu0
    %v2902 = vpop.f32.mrb[0].mxu0
    %2903 = vdwg.mxu0
    %2904 = vmatprep.subr.bf16.mxu0 %v1583
    %2905 = vmatpush1.bf16.msra.mxu0 %v1582
    %2906 = vmatprep.subr.bf16.mxu0 %v1587
    %2907 = vmatpush1.bf16.msra.mxu0 %v1586
    %2908 = vmatprep.subr.bf16.mxu0 %v1591
    %2909 = vmatpush1.bf16.msra.mxu0 %v1590
    %2910 = vmatprep.subr.bf16.mxu0 %v1595
    %2911 = vmatpush1.bf16.msra.mxu0 %v1594
    %2912 = vmatprep.subr.bf16.mxu0 %v1599
    %2913 = vmatpush1.bf16.msra.mxu0 %v1598
    %2914 = vmatprep.subr.bf16.mxu0 %v1603
    %2915 = vmatpush1.bf16.msra.mxu0 %v1602
    %2916 = vmatprep.subr.bf16.mxu0 %v1607
    %2917 = vmatpush1.bf16.msra.mxu0 %v1606
    %2918 = vmatprep.subr.bf16.mxu0 %v1611
    %2919 = vmatpush1.bf16.msra.mxu0 %v1610
    %2920 = vmatprep.subr.bf16.mxu0 0
    %2921 = vmatpush1.bf16.msra.mxu0 0
    %2922 = vmatprep.subr.bf16.mxu0 0
    %2923 = vmatpush1.bf16.msra.mxu0 0
    %2924 = vmatprep.subr.bf16.mxu0 0
    %2925 = vmatpush1.bf16.msra.mxu0 0
    %2926 = vmatprep.subr.bf16.mxu0 0
    %2927 = vmatpush1.bf16.msra.mxu0 0
    %2928 = vmatprep.subr.bf16.mxu0 0
    %2929 = vmatpush1.bf16.msra.mxu0 0
    %2930 = vmatprep.subr.bf16.mxu0 0
    %2931 = vmatpush1.bf16.msra.mxu0 0
    %2932 = vmatprep.subr.bf16.mxu0 0
    %2933 = vmatpush1.bf16.msra.mxu0 0
    %2934 = vmatprep.subr.bf16.mxu0 0
    %2935 = vmatpush1.bf16.msra.mxu0 0
    %2936 = vmatprep.mubr.bf16.mxu0 0
    %2937 = vmatmul.mubr.bf16.gmra.mrb[0].mxu0 %v2748
    %v2938 = vpop.f32.mrb[0].mxu0
    %v2939 = vadd.f32 0.0, %v2938
    %v2940 = vpop.f32.mrb[0].mxu0
    %v2941 = vadd.f32 0.0, %v2940
    %v2942 = vpop.f32.mrb[0].mxu0
    %v2943 = vpop.f32.mrb[0].mxu0
    %2944 = vdwg.mxu0
    %v2945 = vadd.f32 %v2859, %v2898
    %v2946 = vadd.f32 %v2860, %v2900
    %v2947 = vadd.f32 %v2861, %v2939
    %v2948 = vadd.f32 %v2862, %v2941
    %v2949 = vxor.u32 %v2945, 2147483648
    %v2950 = vmul.f32 %v2949, 1.442695
    %v2951 = vpow.pop %v2950
    %v2952 = vadd.f32 %v2951, 1.0
    %v2953 = vrcp.pop %v2952
    %v2954 = vmul.f32 1.0, %v2953
    %v2955 = vxor.u32 %v2946, 2147483648
    %v2956 = vmul.f32 %v2955, 1.442695
    %v2957 = vpow.pop %v2956
    %v2958 = vadd.f32 %v2957, 1.0
    %v2959 = vrcp.pop %v2958
    %v2960 = vmul.f32 1.0, %v2959
    %v2961 = vtanh.pop %v2947
    %v2962 = vxor.u32 %v2948, 2147483648
    %v2963 = vmul.f32 %v2962, 1.442695
    %v2964 = vpow.pop %v2963
    %v2965 = vadd.f32 %v2964, 1.0
    %v2966 = vrcp.pop %v2965
    %v2967 = vmul.f32 1.0, %v2966
    %v2968 = vmul.f32 %v2960, %v2745
    %v2969 = vmul.f32 %v2954, %v2961
    %v2970 = vadd.f32 %v2968, %v2969
    %v2971 = vtanh.pop %v2970
    %v2972 = vmul.f32 %v2967, %v2971
    %v2973 = vpack.c.bf16 %v2972, %v2972
    %v2974 = vpack.c.bf16 %v2855, %v2855
    %2975 = vmatprep.subr.bf16.mxu0 %v1949
    %2976 = vmatpush1.bf16.msra.mxu0 %v1948
    %2977 = vmatprep.subr.bf16.mxu0 %v1953
    %2978 = vmatpush1.bf16.msra.mxu0 %v1952
    %2979 = vmatprep.subr.bf16.mxu0 %v1957
    %2980 = vmatpush1.bf16.msra.mxu0 %v1956
    %2981 = vmatprep.subr.bf16.mxu0 %v1961
    %2982 = vmatpush1.bf16.msra.mxu0 %v1960
    %2983 = vmatprep.subr.bf16.mxu0 %v1965
    %2984 = vmatpush1.bf16.msra.mxu0 %v1964
    %2985 = vmatprep.subr.bf16.mxu0 %v1969
    %2986 = vmatpush1.bf16.msra.mxu0 %v1968
    %2987 = vmatprep.subr.bf16.mxu0 %v1973
    %2988 = vmatpush1.bf16.msra.mxu0 %v1972
    %2989 = vmatprep.subr.bf16.mxu0 %v1977
    %2990 = vmatpush1.bf16.msra.mxu0 %v1976
    %2991 = vmatprep.subr.bf16.mxu0 %v1981
    %2992 = vmatpush1.bf16.msra.mxu0 %v1980
    %2993 = vmatprep.subr.bf16.mxu0 %v1985
    %2994 = vmatpush1.bf16.msra.mxu0 %v1984
    %2995 = vmatprep.subr.bf16.mxu0 %v1989
    %2996 = vmatpush1.bf16.msra.mxu0 %v1988
    %2997 = vmatprep.subr.bf16.mxu0 %v1993
    %2998 = vmatpush1.bf16.msra.mxu0 %v1992
    %2999 = vmatprep.subr.bf16.mxu0 %v1997
    %3000 = vmatpush1.bf16.msra.mxu0 %v1996
    %3001 = vmatprep.subr.bf16.mxu0 %v2001
    %3002 = vmatpush1.bf16.msra.mxu0 %v2000
    %3003 = vmatprep.subr.bf16.mxu0 %v2005
    %3004 = vmatpush1.bf16.msra.mxu0 %v2004
    %3005 = vmatprep.subr.bf16.mxu0 %v2009
    %3006 = vmatpush1.bf16.msra.mxu0 %v2008
    %3007 = vmatprep.mubr.bf16.mxu0 %v2974
    %3008 = vmatmul.mubr.bf16.gmra.mrb[0].mxu0 %v2973
    %v3009 = vpop.f32.mrb[0].mxu0
    %v3010 = vadd.f32 %v1471, %v3009
    %v3011 = vpop.f32.mrb[0].mxu0
    %v3012 = vadd.f32 %v1472, %v3011
    %v3013 = vpop.f32.mrb[0].mxu0
    %v3014 = vpop.f32.mrb[0].mxu0
    %3015 = vdwg.mxu0
    %3016 = vmatprep.subr.bf16.mxu0 %v1951
    %3017 = vmatpush1.bf16.msra.mxu0 %v1950
    %3018 = vmatprep.subr.bf16.mxu0 %v1955
    %3019 = vmatpush1.bf16.msra.mxu0 %v1954
    %3020 = vmatprep.subr.bf16.mxu0 %v1959
    %3021 = vmatpush1.bf16.msra.mxu0 %v1958
    %3022 = vmatprep.subr.bf16.mxu0 %v1963
    %3023 = vmatpush1.bf16.msra.mxu0 %v1962
    %3024 = vmatprep.subr.bf16.mxu0 %v1967
    %3025 = vmatpush1.bf16.msra.mxu0 %v1966
    %3026 = vmatprep.subr.bf16.mxu0 %v1971
    %3027 = vmatpush1.bf16.msra.mxu0 %v1970
    %3028 = vmatprep.subr.bf16.mxu0 %v1975
    %3029 = vmatpush1.bf16.msra.mxu0 %v1974
    %3030 = vmatprep.subr.bf16.mxu0 %v1979
    %3031 = vmatpush1.bf16.msra.mxu0 %v1978
    %3032 = vmatprep.subr.bf16.mxu0 %v1983
    %3033 = vmatpush1.bf16.msra.mxu0 %v1982
    %3034 = vmatprep.subr.bf16.mxu0 %v1987
    %3035 = vmatpush1.bf16.msra.mxu0 %v1986
    %3036 = vmatprep.subr.bf16.mxu0 %v1991
    %3037 = vmatpush1.bf16.msra.mxu0 %v1990
    %3038 = vmatprep.subr.bf16.mxu0 %v1995
    %3039 = vmatpush1.bf16.msra.mxu0 %v1994
    %3040 = vmatprep.subr.bf16.mxu0 %v1999
    %3041 = vmatpush1.bf16.msra.mxu0 %v1998
    %3042 = vmatprep.subr.bf16.mxu0 %v2003
    %3043 = vmatpush1.bf16.msra.mxu0 %v2002
    %3044 = vmatprep.subr.bf16.mxu0 %v2007
    %3045 = vmatpush1.bf16.msra.mxu0 %v2006
    %3046 = vmatprep.subr.bf16.mxu0 %v2011
    %3047 = vmatpush1.bf16.msra.mxu0 %v2010
    %3048 = vmatprep.mubr.bf16.mxu0 %v2974
    %3049 = vmatmul.mubr.bf16.gmra.mrb[0].mxu0 %v2973
    %v3050 = vpop.f32.mrb[0].mxu0
    %v3051 = vadd.f32 %v1473, %v3050
    %v3052 = vpop.f32.mrb[0].mxu0
    %v3053 = vadd.f32 %v1474, %v3052
    %v3054 = vpop.f32.mrb[0].mxu0
    %v3055 = vpop.f32.mrb[0].mxu0
    %3056 = vdwg.mxu0
    %v3057 = vxor.u32 %v3010, 2147483648
    %v3058 = vmul.f32 %v3057, 1.442695
    %v3059 = vpow.pop %v3058
    %v3060 = vadd.f32 %v3059, 1.0
    %v3061 = vrcp.pop %v3060
    %v3062 = vmul.f32 1.0, %v3061
    %v3063 = vxor.u32 %v3012, 2147483648
    %v3064 = vmul.f32 %v3063, 1.442695
    %v3065 = vpow.pop %v3064
    %v3066 = vadd.f32 %v3065, 1.0
    %v3067 = vrcp.pop %v3066
    %v3068 = vmul.f32 1.0, %v3067
    %v3069 = vtanh.pop %v3051
    %v3070 = vxor.u32 %v3053, 2147483648
    %v3071 = vmul.f32 %v3070, 1.442695
    %v3072 = vpow.pop %v3071
    %v3073 = vadd.f32 %v3072, 1.0
    %v3074 = vrcp.pop %v3073
    %v3075 = vmul.f32 1.0, %v3074
    %v3076 = vmul.f32 %v3068, %v2853
    %v3077 = vmul.f32 %v3062, %v3069
    %v3078 = vadd.f32 %v3076, %v3077
    %v3079 = vtanh.pop %v3078
    %v3080 = vmul.f32 %v3075, %v3079
    %s3081 = scalar_lea.vmem [#allocation3], 32
    %3082 = vst [vmem:[%s3081] sm:$0xff] %v3080
    %s3083 = scalar_lea.vmem [#allocation2], 160
    %v3084 = vld [vmem:[%s3083] sm:$0xff]
    %v3085 = vld [vmem:[%s3083 + $0x8] sm:$0xff]
    %v3086 = vld [vmem:[%s3083 + $0x10] sm:$0xff]
    %v3087 = vld [vmem:[%s3083 + $0x18] sm:$0xff]
    %3088 = vmatprep.subr.bf16.mxu0 %v1581
    %3089 = vmatpush1.bf16.msra.mxu0 %v1580
    %3090 = vmatprep.subr.bf16.mxu0 %v1585
    %3091 = vmatpush1.bf16.msra.mxu0 %v1584
    %3092 = vmatprep.subr.bf16.mxu0 %v1589
    %3093 = vmatpush1.bf16.msra.mxu0 %v1588
    %3094 = vmatprep.subr.bf16.mxu0 %v1593
    %3095 = vmatpush1.bf16.msra.mxu0 %v1592
    %3096 = vmatprep.subr.bf16.mxu0 %v1597
    %3097 = vmatpush1.bf16.msra.mxu0 %v1596
    %3098 = vmatprep.subr.bf16.mxu0 %v1601
    %3099 = vmatpush1.bf16.msra.mxu0 %v1600
    %3100 = vmatprep.subr.bf16.mxu0 %v1605
    %3101 = vmatpush1.bf16.msra.mxu0 %v1604
    %3102 = vmatprep.subr.bf16.mxu0 %v1609
    %3103 = vmatpush1.bf16.msra.mxu0 %v1608
    %3104 = vmatprep.subr.bf16.mxu0 0
    %3105 = vmatpush1.bf16.msra.mxu0 0
    %3106 = vmatprep.subr.bf16.mxu0 0
    %3107 = vmatpush1.bf16.msra.mxu0 0
    %3108 = vmatprep.subr.bf16.mxu0 0
    %3109 = vmatpush1.bf16.msra.mxu0 0
    %3110 = vmatprep.subr.bf16.mxu0 0
    %3111 = vmatpush1.bf16.msra.mxu0 0
    %3112 = vmatprep.subr.bf16.mxu0 0
    %3113 = vmatpush1.bf16.msra.mxu0 0
    %3114 = vmatprep.subr.bf16.mxu0 0
    %3115 = vmatpush1.bf16.msra.mxu0 0
    %3116 = vmatprep.subr.bf16.mxu0 0
    %3117 = vmatpush1.bf16.msra.mxu0 0
    %3118 = vmatprep.subr.bf16.mxu0 0
    %3119 = vmatpush1.bf16.msra.mxu0 0
    %3120 = vmatprep.mubr.bf16.mxu0 0
    %3121 = vmatmul.mubr.bf16.gmra.mrb[0].mxu0 %v2973
    %v3122 = vpop.f32.mrb[0].mxu0
    %v3123 = vadd.f32 0.0, %v3122
    %v3124 = vpop.f32.mrb[0].mxu0
    %v3125 = vadd.f32 0.0, %v3124
    %v3126 = vpop.f32.mrb[0].mxu0
    %v3127 = vpop.f32.mrb[0].mxu0
    %3128 = vdwg.mxu0
    %3129 = vmatprep.subr.bf16.mxu0 %v1583
    %3130 = vmatpush1.bf16.msra.mxu0 %v1582
    %3131 = vmatprep.subr.bf16.mxu0 %v1587
    %3132 = vmatpush1.bf16.msra.mxu0 %v1586
    %3133 = vmatprep.subr.bf16.mxu0 %v1591
    %3134 = vmatpush1.bf16.msra.mxu0 %v1590
    %3135 = vmatprep.subr.bf16.mxu0 %v1595
    %3136 = vmatpush1.bf16.msra.mxu0 %v1594
    %3137 = vmatprep.subr.bf16.mxu0 %v1599
    %3138 = vmatpush1.bf16.msra.mxu0 %v1598
    %3139 = vmatprep.subr.bf16.mxu0 %v1603
    %3140 = vmatpush1.bf16.msra.mxu0 %v1602
    %3141 = vmatprep.subr.bf16.mxu0 %v1607
    %3142 = vmatpush1.bf16.msra.mxu0 %v1606
    %3143 = vmatprep.subr.bf16.mxu0 %v1611
    %3144 = vmatpush1.bf16.msra.mxu0 %v1610
    %3145 = vmatprep.subr.bf16.mxu0 0
    %3146 = vmatpush1.bf16.msra.mxu0 0
    %3147 = vmatprep.subr.bf16.mxu0 0
    %3148 = vmatpush1.bf16.msra.mxu0 0
    %3149 = vmatprep.subr.bf16.mxu0 0
    %3150 = vmatpush1.bf16.msra.mxu0 0
    %3151 = vmatprep.subr.bf16.mxu0 0
    %3152 = vmatpush1.bf16.msra.mxu0 0
    %3153 = vmatprep.subr.bf16.mxu0 0
    %3154 = vmatpush1.bf16.msra.mxu0 0
    %3155 = vmatprep.subr.bf16.mxu0 0
    %3156 = vmatpush1.bf16.msra.mxu0 0
    %3157 = vmatprep.subr.bf16.mxu0 0
    %3158 = vmatpush1.bf16.msra.mxu0 0
    %3159 = vmatprep.subr.bf16.mxu0 0
    %3160 = vmatpush1.bf16.msra.mxu0 0
    %3161 = vmatprep.mubr.bf16.mxu0 0
    %3162 = vmatmul.mubr.bf16.gmra.mrb[0].mxu0 %v2973
    %v3163 = vpop.f32.mrb[0].mxu0
    %v3164 = vadd.f32 0.0, %v3163
    %v3165 = vpop.f32.mrb[0].mxu0
    %v3166 = vadd.f32 0.0, %v3165
    %v3167 = vpop.f32.mrb[0].mxu0
    %v3168 = vpop.f32.mrb[0].mxu0
    %3169 = vdwg.mxu0
    %v3170 = vadd.f32 %v3084, %v3123
    %v3171 = vadd.f32 %v3085, %v3125
    %v3172 = vadd.f32 %v3086, %v3164
    %v3173 = vadd.f32 %v3087, %v3166
    %v3174 = vxor.u32 %v3170, 2147483648
    %v3175 = vmul.f32 %v3174, 1.442695
    %v3176 = vpow.pop %v3175
    %v3177 = vadd.f32 %v3176, 1.0
    %v3178 = vrcp.pop %v3177
    %v3179 = vmul.f32 1.0, %v3178
    %v3180 = vxor.u32 %v3171, 2147483648
    %v3181 = vmul.f32 %v3180, 1.442695
    %v3182 = vpow.pop %v3181
    %v3183 = vadd.f32 %v3182, 1.0
    %v3184 = vrcp.pop %v3183
    %v3185 = vmul.f32 1.0, %v3184
    %v3186 = vtanh.pop %v3172
    %v3187 = vxor.u32 %v3173, 2147483648
    %v3188 = vmul.f32 %v3187, 1.442695
    %v3189 = vpow.pop %v3188
    %v3190 = vadd.f32 %v3189, 1.0
    %v3191 = vrcp.pop %v3190
    %v3192 = vmul.f32 1.0, %v3191
    %v3193 = vmul.f32 %v3185, %v2970
    %v3194 = vmul.f32 %v3179, %v3186
    %v3195 = vadd.f32 %v3193, %v3194
    %v3196 = vtanh.pop %v3195
    %v3197 = vmul.f32 %v3192, %v3196
    %v3198 = vpack.c.bf16 %v3197, %v3197
    %v3199 = vpack.c.bf16 %v3080, %v3080
    %3200 = vmatprep.subr.bf16.mxu0 %v1949
    %3201 = vmatpush1.bf16.msra.mxu0 %v1948
    %3202 = vmatprep.subr.bf16.mxu0 %v1953
    %3203 = vmatpush1.bf16.msra.mxu0 %v1952
    %3204 = vmatprep.subr.bf16.mxu0 %v1957
    %3205 = vmatpush1.bf16.msra.mxu0 %v1956
    %3206 = vmatprep.subr.bf16.mxu0 %v1961
    %3207 = vmatpush1.bf16.msra.mxu0 %v1960
    %3208 = vmatprep.subr.bf16.mxu0 %v1965
    %3209 = vmatpush1.bf16.msra.mxu0 %v1964
    %3210 = vmatprep.subr.bf16.mxu0 %v1969
    %3211 = vmatpush1.bf16.msra.mxu0 %v1968
    %3212 = vmatprep.subr.bf16.mxu0 %v1973
    %3213 = vmatpush1.bf16.msra.mxu0 %v1972
    %3214 = vmatprep.subr.bf16.mxu0 %v1977
    %3215 = vmatpush1.bf16.msra.mxu0 %v1976
    %3216 = vmatprep.subr.bf16.mxu0 %v1981
    %3217 = vmatpush1.bf16.msra.mxu0 %v1980
    %3218 = vmatprep.subr.bf16.mxu0 %v1985
    %3219 = vmatpush1.bf16.msra.mxu0 %v1984
    %3220 = vmatprep.subr.bf16.mxu0 %v1989
    %3221 = vmatpush1.bf16.msra.mxu0 %v1988
    %3222 = vmatprep.subr.bf16.mxu0 %v1993
    %3223 = vmatpush1.bf16.msra.mxu0 %v1992
    %3224 = vmatprep.subr.bf16.mxu0 %v1997
    %3225 = vmatpush1.bf16.msra.mxu0 %v1996
    %3226 = vmatprep.subr.bf16.mxu0 %v2001
    %3227 = vmatpush1.bf16.msra.mxu0 %v2000
    %3228 = vmatprep.subr.bf16.mxu0 %v2005
    %3229 = vmatpush1.bf16.msra.mxu0 %v2004
    %3230 = vmatprep.subr.bf16.mxu0 %v2009
    %3231 = vmatpush1.bf16.msra.mxu0 %v2008
    %3232 = vmatprep.mubr.bf16.mxu0 %v3199
    %3233 = vmatmul.mubr.bf16.gmra.mrb[0].mxu0 %v3198
    %v3234 = vpop.f32.mrb[0].mxu0
    %v3235 = vadd.f32 %v1471, %v3234
    %v3236 = vpop.f32.mrb[0].mxu0
    %v3237 = vadd.f32 %v1472, %v3236
    %v3238 = vpop.f32.mrb[0].mxu0
    %v3239 = vpop.f32.mrb[0].mxu0
    %3240 = vdwg.mxu0
    %3241 = vmatprep.subr.bf16.mxu0 %v1951
    %3242 = vmatpush1.bf16.msra.mxu0 %v1950
    %3243 = vmatprep.subr.bf16.mxu0 %v1955
    %3244 = vmatpush1.bf16.msra.mxu0 %v1954
    %3245 = vmatprep.subr.bf16.mxu0 %v1959
    %3246 = vmatpush1.bf16.msra.mxu0 %v1958
    %3247 = vmatprep.subr.bf16.mxu0 %v1963
    %3248 = vmatpush1.bf16.msra.mxu0 %v1962
    %3249 = vmatprep.subr.bf16.mxu0 %v1967
    %3250 = vmatpush1.bf16.msra.mxu0 %v1966
    %3251 = vmatprep.subr.bf16.mxu0 %v1971
    %3252 = vmatpush1.bf16.msra.mxu0 %v1970
    %3253 = vmatprep.subr.bf16.mxu0 %v1975
    %3254 = vmatpush1.bf16.msra.mxu0 %v1974
    %3255 = vmatprep.subr.bf16.mxu0 %v1979
    %3256 = vmatpush1.bf16.msra.mxu0 %v1978
    %3257 = vmatprep.subr.bf16.mxu0 %v1983
    %3258 = vmatpush1.bf16.msra.mxu0 %v1982
    %3259 = vmatprep.subr.bf16.mxu0 %v1987
    %3260 = vmatpush1.bf16.msra.mxu0 %v1986
    %3261 = vmatprep.subr.bf16.mxu0 %v1991
    %3262 = vmatpush1.bf16.msra.mxu0 %v1990
    %3263 = vmatprep.subr.bf16.mxu0 %v1995
    %3264 = vmatpush1.bf16.msra.mxu0 %v1994
    %3265 = vmatprep.subr.bf16.mxu0 %v1999
    %3266 = vmatpush1.bf16.msra.mxu0 %v1998
    %3267 = vmatprep.subr.bf16.mxu0 %v2003
    %3268 = vmatpush1.bf16.msra.mxu0 %v2002
    %3269 = vmatprep.subr.bf16.mxu0 %v2007
    %3270 = vmatpush1.bf16.msra.mxu0 %v2006
    %3271 = vmatprep.subr.bf16.mxu0 %v2011
    %3272 = vmatpush1.bf16.msra.mxu0 %v2010
    %3273 = vmatprep.mubr.bf16.mxu0 %v3199
    %3274 = vmatmul.mubr.bf16.gmra.mrb[0].mxu0 %v3198
    %v3275 = vpop.f32.mrb[0].mxu0
    %v3276 = vadd.f32 %v1473, %v3275
    %v3277 = vpop.f32.mrb[0].mxu0
    %v3278 = vadd.f32 %v1474, %v3277
    %v3279 = vpop.f32.mrb[0].mxu0
    %v3280 = vpop.f32.mrb[0].mxu0
    %3281 = vdwg.mxu0
    %v3282 = vxor.u32 %v3235, 2147483648
    %v3283 = vmul.f32 %v3282, 1.442695
    %v3284 = vpow.pop %v3283
    %v3285 = vadd.f32 %v3284, 1.0
    %v3286 = vrcp.pop %v3285
    %v3287 = vmul.f32 1.0, %v3286
    %v3288 = vxor.u32 %v3237, 2147483648
    %v3289 = vmul.f32 %v3288, 1.442695
    %v3290 = vpow.pop %v3289
    %v3291 = vadd.f32 %v3290, 1.0
    %v3292 = vrcp.pop %v3291
    %v3293 = vmul.f32 1.0, %v3292
    %v3294 = vtanh.pop %v3276
    %v3295 = vxor.u32 %v3278, 2147483648
    %v3296 = vmul.f32 %v3295, 1.442695
    %v3297 = vpow.pop %v3296
    %v3298 = vadd.f32 %v3297, 1.0
    %v3299 = vrcp.pop %v3298
    %v3300 = vmul.f32 1.0, %v3299
    %v3301 = vmul.f32 %v3293, %v3078
    %v3302 = vmul.f32 %v3287, %v3294
    %v3303 = vadd.f32 %v3301, %v3302
    %v3304 = vtanh.pop %v3303
    %v3305 = vmul.f32 %v3300, %v3304
    %s3306 = scalar_lea.vmem [#allocation3], 40
    %3307 = vst [vmem:[%s3306] sm:$0xff] %v3305
    %s3308 = scalar_lea.vmem [#allocation2], 192
    %v3309 = vld [vmem:[%s3308] sm:$0xff]
    %v3310 = vld [vmem:[%s3308 + $0x8] sm:$0xff]
    %v3311 = vld [vmem:[%s3308 + $0x10] sm:$0xff]
    %v3312 = vld [vmem:[%s3308 + $0x18] sm:$0xff]
    %3313 = vmatprep.subr.bf16.mxu0 %v1581
    %3314 = vmatpush1.bf16.msra.mxu0 %v1580
    %3315 = vmatprep.subr.bf16.mxu0 %v1585
    %3316 = vmatpush1.bf16.msra.mxu0 %v1584
    %3317 = vmatprep.subr.bf16.mxu0 %v1589
    %3318 = vmatpush1.bf16.msra.mxu0 %v1588
    %3319 = vmatprep.subr.bf16.mxu0 %v1593
    %3320 = vmatpush1.bf16.msra.mxu0 %v1592
    %3321 = vmatprep.subr.bf16.mxu0 %v1597
    %3322 = vmatpush1.bf16.msra.mxu0 %v1596
    %3323 = vmatprep.subr.bf16.mxu0 %v1601
    %3324 = vmatpush1.bf16.msra.mxu0 %v1600
    %3325 = vmatprep.subr.bf16.mxu0 %v1605
    %3326 = vmatpush1.bf16.msra.mxu0 %v1604
    %3327 = vmatprep.subr.bf16.mxu0 %v1609
    %3328 = vmatpush1.bf16.msra.mxu0 %v1608
    %3329 = vmatprep.subr.bf16.mxu0 0
    %3330 = vmatpush1.bf16.msra.mxu0 0
    %3331 = vmatprep.subr.bf16.mxu0 0
    %3332 = vmatpush1.bf16.msra.mxu0 0
    %3333 = vmatprep.subr.bf16.mxu0 0
    %3334 = vmatpush1.bf16.msra.mxu0 0
    %3335 = vmatprep.subr.bf16.mxu0 0
    %3336 = vmatpush1.bf16.msra.mxu0 0
    %3337 = vmatprep.subr.bf16.mxu0 0
    %3338 = vmatpush1.bf16.msra.mxu0 0
    %3339 = vmatprep.subr.bf16.mxu0 0
    %3340 = vmatpush1.bf16.msra.mxu0 0
    %3341 = vmatprep.subr.bf16.mxu0 0
    %3342 = vmatpush1.bf16.msra.mxu0 0
    %3343 = vmatprep.subr.bf16.mxu0 0
    %3344 = vmatpush1.bf16.msra.mxu0 0
    %3345 = vmatprep.mubr.bf16.mxu0 0
    %3346 = vmatmul.mubr.bf16.gmra.mrb[0].mxu0 %v3198
    %v3347 = vpop.f32.mrb[0].mxu0
    %v3348 = vadd.f32 0.0, %v3347
    %v3349 = vpop.f32.mrb[0].mxu0
    %v3350 = vadd.f32 0.0, %v3349
    %v3351 = vpop.f32.mrb[0].mxu0
    %v3352 = vpop.f32.mrb[0].mxu0
    %3353 = vdwg.mxu0
    %3354 = vmatprep.subr.bf16.mxu0 %v1583
    %3355 = vmatpush1.bf16.msra.mxu0 %v1582
    %3356 = vmatprep.subr.bf16.mxu0 %v1587
    %3357 = vmatpush1.bf16.msra.mxu0 %v1586
    %3358 = vmatprep.subr.bf16.mxu0 %v1591
    %3359 = vmatpush1.bf16.msra.mxu0 %v1590
    %3360 = vmatprep.subr.bf16.mxu0 %v1595
    %3361 = vmatpush1.bf16.msra.mxu0 %v1594
    %3362 = vmatprep.subr.bf16.mxu0 %v1599
    %3363 = vmatpush1.bf16.msra.mxu0 %v1598
    %3364 = vmatprep.subr.bf16.mxu0 %v1603
    %3365 = vmatpush1.bf16.msra.mxu0 %v1602
    %3366 = vmatprep.subr.bf16.mxu0 %v1607
    %3367 = vmatpush1.bf16.msra.mxu0 %v1606
    %3368 = vmatprep.subr.bf16.mxu0 %v1611
    %3369 = vmatpush1.bf16.msra.mxu0 %v1610
    %3370 = vmatprep.subr.bf16.mxu0 0
    %3371 = vmatpush1.bf16.msra.mxu0 0
    %3372 = vmatprep.subr.bf16.mxu0 0
    %3373 = vmatpush1.bf16.msra.mxu0 0
    %3374 = vmatprep.subr.bf16.mxu0 0
    %3375 = vmatpush1.bf16.msra.mxu0 0
    %3376 = vmatprep.subr.bf16.mxu0 0
    %3377 = vmatpush1.bf16.msra.mxu0 0
    %3378 = vmatprep.subr.bf16.mxu0 0
    %3379 = vmatpush1.bf16.msra.mxu0 0
    %3380 = vmatprep.subr.bf16.mxu0 0
    %3381 = vmatpush1.bf16.msra.mxu0 0
    %3382 = vmatprep.subr.bf16.mxu0 0
    %3383 = vmatpush1.bf16.msra.mxu0 0
    %3384 = vmatprep.subr.bf16.mxu0 0
    %3385 = vmatpush1.bf16.msra.mxu0 0
    %3386 = vmatprep.mubr.bf16.mxu0 0
    %3387 = vmatmul.mubr.bf16.gmra.mrb[0].mxu0 %v3198
    %v3388 = vpop.f32.mrb[0].mxu0
    %v3389 = vadd.f32 0.0, %v3388
    %v3390 = vpop.f32.mrb[0].mxu0
    %v3391 = vadd.f32 0.0, %v3390
    %v3392 = vpop.f32.mrb[0].mxu0
    %v3393 = vpop.f32.mrb[0].mxu0
    %3394 = vdwg.mxu0
    %v3395 = vadd.f32 %v3309, %v3348
    %v3396 = vadd.f32 %v3310, %v3350
    %v3397 = vadd.f32 %v3311, %v3389
    %v3398 = vadd.f32 %v3312, %v3391
    %v3399 = vxor.u32 %v3395, 2147483648
    %v3400 = vmul.f32 %v3399, 1.442695
    %v3401 = vpow.pop %v3400
    %v3402 = vadd.f32 %v3401, 1.0
    %v3403 = vrcp.pop %v3402
    %v3404 = vmul.f32 1.0, %v3403
    %v3405 = vxor.u32 %v3396, 2147483648
    %v3406 = vmul.f32 %v3405, 1.442695
    %v3407 = vpow.pop %v3406
    %v3408 = vadd.f32 %v3407, 1.0
    %v3409 = vrcp.pop %v3408
    %v3410 = vmul.f32 1.0, %v3409
    %v3411 = vtanh.pop %v3397
    %v3412 = vxor.u32 %v3398, 2147483648
    %v3413 = vmul.f32 %v3412, 1.442695
    %v3414 = vpow.pop %v3413
    %v3415 = vadd.f32 %v3414, 1.0
    %v3416 = vrcp.pop %v3415
    %v3417 = vmul.f32 1.0, %v3416
    %v3418 = vmul.f32 %v3410, %v3195
    %v3419 = vmul.f32 %v3404, %v3411
    %v3420 = vadd.f32 %v3418, %v3419
    %v3421 = vtanh.pop %v3420
    %v3422 = vmul.f32 %v3417, %v3421
    %v3423 = vpack.c.bf16 %v3422, %v3422
    %v3424 = vpack.c.bf16 %v3305, %v3305
    %3425 = vmatprep.subr.bf16.mxu0 %v1949
    %3426 = vmatpush1.bf16.msra.mxu0 %v1948
    %3427 = vmatprep.subr.bf16.mxu0 %v1953
    %3428 = vmatpush1.bf16.msra.mxu0 %v1952
    %3429 = vmatprep.subr.bf16.mxu0 %v1957
    %3430 = vmatpush1.bf16.msra.mxu0 %v1956
    %3431 = vmatprep.subr.bf16.mxu0 %v1961
    %3432 = vmatpush1.bf16.msra.mxu0 %v1960
    %3433 = vmatprep.subr.bf16.mxu0 %v1965
    %3434 = vmatpush1.bf16.msra.mxu0 %v1964
    %3435 = vmatprep.subr.bf16.mxu0 %v1969
    %3436 = vmatpush1.bf16.msra.mxu0 %v1968
    %3437 = vmatprep.subr.bf16.mxu0 %v1973
    %3438 = vmatpush1.bf16.msra.mxu0 %v1972
    %3439 = vmatprep.subr.bf16.mxu0 %v1977
    %3440 = vmatpush1.bf16.msra.mxu0 %v1976
    %3441 = vmatprep.subr.bf16.mxu0 %v1981
    %3442 = vmatpush1.bf16.msra.mxu0 %v1980
    %3443 = vmatprep.subr.bf16.mxu0 %v1985
    %3444 = vmatpush1.bf16.msra.mxu0 %v1984
    %3445 = vmatprep.subr.bf16.mxu0 %v1989
    %3446 = vmatpush1.bf16.msra.mxu0 %v1988
    %3447 = vmatprep.subr.bf16.mxu0 %v1993
    %3448 = vmatpush1.bf16.msra.mxu0 %v1992
    %3449 = vmatprep.subr.bf16.mxu0 %v1997
    %3450 = vmatpush1.bf16.msra.mxu0 %v1996
    %3451 = vmatprep.subr.bf16.mxu0 %v2001
    %3452 = vmatpush1.bf16.msra.mxu0 %v2000
    %3453 = vmatprep.subr.bf16.mxu0 %v2005
    %3454 = vmatpush1.bf16.msra.mxu0 %v2004
    %3455 = vmatprep.subr.bf16.mxu0 %v2009
    %3456 = vmatpush1.bf16.msra.mxu0 %v2008
    %3457 = vmatprep.mubr.bf16.mxu0 %v3424
    %3458 = vmatmul.mubr.bf16.gmra.mrb[0].mxu0 %v3423
    %v3459 = vpop.f32.mrb[0].mxu0
    %v3460 = vadd.f32 %v1471, %v3459
    %v3461 = vpop.f32.mrb[0].mxu0
    %v3462 = vadd.f32 %v1472, %v3461
    %v3463 = vpop.f32.mrb[0].mxu0
    %v3464 = vpop.f32.mrb[0].mxu0
    %3465 = vdwg.mxu0
    %3466 = vmatprep.subr.bf16.mxu0 %v1951
    %3467 = vmatpush1.bf16.msra.mxu0 %v1950
    %3468 = vmatprep.subr.bf16.mxu0 %v1955
    %3469 = vmatpush1.bf16.msra.mxu0 %v1954
    %3470 = vmatprep.subr.bf16.mxu0 %v1959
    %3471 = vmatpush1.bf16.msra.mxu0 %v1958
    %3472 = vmatprep.subr.bf16.mxu0 %v1963
    %3473 = vmatpush1.bf16.msra.mxu0 %v1962
    %3474 = vmatprep.subr.bf16.mxu0 %v1967
    %3475 = vmatpush1.bf16.msra.mxu0 %v1966
    %3476 = vmatprep.subr.bf16.mxu0 %v1971
    %3477 = vmatpush1.bf16.msra.mxu0 %v1970
    %3478 = vmatprep.subr.bf16.mxu0 %v1975
    %3479 = vmatpush1.bf16.msra.mxu0 %v1974
    %3480 = vmatprep.subr.bf16.mxu0 %v1979
    %3481 = vmatpush1.bf16.msra.mxu0 %v1978
    %3482 = vmatprep.subr.bf16.mxu0 %v1983
    %3483 = vmatpush1.bf16.msra.mxu0 %v1982
    %3484 = vmatprep.subr.bf16.mxu0 %v1987
    %3485 = vmatpush1.bf16.msra.mxu0 %v1986
    %3486 = vmatprep.subr.bf16.mxu0 %v1991
    %3487 = vmatpush1.bf16.msra.mxu0 %v1990
    %3488 = vmatprep.subr.bf16.mxu0 %v1995
    %3489 = vmatpush1.bf16.msra.mxu0 %v1994
    %3490 = vmatprep.subr.bf16.mxu0 %v1999
    %3491 = vmatpush1.bf16.msra.mxu0 %v1998
    %3492 = vmatprep.subr.bf16.mxu0 %v2003
    %3493 = vmatpush1.bf16.msra.mxu0 %v2002
    %3494 = vmatprep.subr.bf16.mxu0 %v2007
    %3495 = vmatpush1.bf16.msra.mxu0 %v2006
    %3496 = vmatprep.subr.bf16.mxu0 %v2011
    %3497 = vmatpush1.bf16.msra.mxu0 %v2010
    %3498 = vmatprep.mubr.bf16.mxu0 %v3424
    %3499 = vmatmul.mubr.bf16.gmra.mrb[0].mxu0 %v3423
    %v3500 = vpop.f32.mrb[0].mxu0
    %v3501 = vadd.f32 %v1473, %v3500
    %v3502 = vpop.f32.mrb[0].mxu0
    %v3503 = vadd.f32 %v1474, %v3502
    %v3504 = vpop.f32.mrb[0].mxu0
    %v3505 = vpop.f32.mrb[0].mxu0
    %3506 = vdwg.mxu0
    %v3507 = vxor.u32 %v3460, 2147483648
    %v3508 = vmul.f32 %v3507, 1.442695
    %v3509 = vpow.pop %v3508
    %v3510 = vadd.f32 %v3509, 1.0
    %v3511 = vrcp.pop %v3510
    %v3512 = vmul.f32 1.0, %v3511
    %v3513 = vxor.u32 %v3462, 2147483648
    %v3514 = vmul.f32 %v3513, 1.442695
    %v3515 = vpow.pop %v3514
    %v3516 = vadd.f32 %v3515, 1.0
    %v3517 = vrcp.pop %v3516
    %v3518 = vmul.f32 1.0, %v3517
    %v3519 = vtanh.pop %v3501
    %v3520 = vxor.u32 %v3503, 2147483648
    %v3521 = vmul.f32 %v3520, 1.442695
    %v3522 = vpow.pop %v3521
    %v3523 = vadd.f32 %v3522, 1.0
    %v3524 = vrcp.pop %v3523
    %v3525 = vmul.f32 1.0, %v3524
    %v3526 = vmul.f32 %v3518, %v3303
    %v3527 = vmul.f32 %v3512, %v3519
    %v3528 = vadd.f32 %v3526, %v3527
    %v3529 = vtanh.pop %v3528
    %v3530 = vmul.f32 %v3525, %v3529
    %s3531 = scalar_lea.vmem [#allocation3], 48
    %3532 = vst [vmem:[%s3531] sm:$0xff] %v3530
    %s3533 = scalar_lea.vmem [#allocation2], 224
    %v3534 = vld [vmem:[%s3533] sm:$0xff]
    %v3535 = vld [vmem:[%s3533 + $0x8] sm:$0xff]
    %v3536 = vld [vmem:[%s3533 + $0x10] sm:$0xff]
    %v3537 = vld [vmem:[%s3533 + $0x18] sm:$0xff]
    %3538 = vmatprep.subr.bf16.mxu0 %v1581
    %3539 = vmatpush1.bf16.msra.mxu0 %v1580
    %3540 = vmatprep.subr.bf16.mxu0 %v1585
    %3541 = vmatpush1.bf16.msra.mxu0 %v1584
    %3542 = vmatprep.subr.bf16.mxu0 %v1589
    %3543 = vmatpush1.bf16.msra.mxu0 %v1588
    %3544 = vmatprep.subr.bf16.mxu0 %v1593
    %3545 = vmatpush1.bf16.msra.mxu0 %v1592
    %3546 = vmatprep.subr.bf16.mxu0 %v1597
    %3547 = vmatpush1.bf16.msra.mxu0 %v1596
    %3548 = vmatprep.subr.bf16.mxu0 %v1601
    %3549 = vmatpush1.bf16.msra.mxu0 %v1600
    %3550 = vmatprep.subr.bf16.mxu0 %v1605
    %3551 = vmatpush1.bf16.msra.mxu0 %v1604
    %3552 = vmatprep.subr.bf16.mxu0 %v1609
    %3553 = vmatpush1.bf16.msra.mxu0 %v1608
    %3554 = vmatprep.subr.bf16.mxu0 0
    %3555 = vmatpush1.bf16.msra.mxu0 0
    %3556 = vmatprep.subr.bf16.mxu0 0
    %3557 = vmatpush1.bf16.msra.mxu0 0
    %3558 = vmatprep.subr.bf16.mxu0 0
    %3559 = vmatpush1.bf16.msra.mxu0 0
    %3560 = vmatprep.subr.bf16.mxu0 0
    %3561 = vmatpush1.bf16.msra.mxu0 0
    %3562 = vmatprep.subr.bf16.mxu0 0
    %3563 = vmatpush1.bf16.msra.mxu0 0
    %3564 = vmatprep.subr.bf16.mxu0 0
    %3565 = vmatpush1.bf16.msra.mxu0 0
    %3566 = vmatprep.subr.bf16.mxu0 0
    %3567 = vmatpush1.bf16.msra.mxu0 0
    %3568 = vmatprep.subr.bf16.mxu0 0
    %3569 = vmatpush1.bf16.msra.mxu0 0
    %3570 = vmatprep.mubr.bf16.mxu0 0
    %3571 = vmatmul.mubr.bf16.gmra.mrb[0].mxu0 %v3423
    %v3572 = vpop.f32.mrb[0].mxu0
    %v3573 = vadd.f32 0.0, %v3572
    %v3574 = vpop.f32.mrb[0].mxu0
    %v3575 = vadd.f32 0.0, %v3574
    %v3576 = vpop.f32.mrb[0].mxu0
    %v3577 = vpop.f32.mrb[0].mxu0
    %3578 = vdwg.mxu0
    %3579 = vmatprep.subr.bf16.mxu0 %v1583
    %3580 = vmatpush1.bf16.msra.mxu0 %v1582
    %3581 = vmatprep.subr.bf16.mxu0 %v1587
    %3582 = vmatpush1.bf16.msra.mxu0 %v1586
    %3583 = vmatprep.subr.bf16.mxu0 %v1591
    %3584 = vmatpush1.bf16.msra.mxu0 %v1590
    %3585 = vmatprep.subr.bf16.mxu0 %v1595
    %3586 = vmatpush1.bf16.msra.mxu0 %v1594
    %3587 = vmatprep.subr.bf16.mxu0 %v1599
    %3588 = vmatpush1.bf16.msra.mxu0 %v1598
    %3589 = vmatprep.subr.bf16.mxu0 %v1603
    %3590 = vmatpush1.bf16.msra.mxu0 %v1602
    %3591 = vmatprep.subr.bf16.mxu0 %v1607
    %3592 = vmatpush1.bf16.msra.mxu0 %v1606
    %3593 = vmatprep.subr.bf16.mxu0 %v1611
    %3594 = vmatpush1.bf16.msra.mxu0 %v1610
    %3595 = vmatprep.subr.bf16.mxu0 0
    %3596 = vmatpush1.bf16.msra.mxu0 0
    %3597 = vmatprep.subr.bf16.mxu0 0
    %3598 = vmatpush1.bf16.msra.mxu0 0
    %3599 = vmatprep.subr.bf16.mxu0 0
    %3600 = vmatpush1.bf16.msra.mxu0 0
    %3601 = vmatprep.subr.bf16.mxu0 0
    %3602 = vmatpush1.bf16.msra.mxu0 0
    %3603 = vmatprep.subr.bf16.mxu0 0
    %3604 = vmatpush1.bf16.msra.mxu0 0
    %3605 = vmatprep.subr.bf16.mxu0 0
    %3606 = vmatpush1.bf16.msra.mxu0 0
    %3607 = vmatprep.subr.bf16.mxu0 0
    %3608 = vmatpush1.bf16.msra.mxu0 0
    %3609 = vmatprep.subr.bf16.mxu0 0
    %3610 = vmatpush1.bf16.msra.mxu0 0
    %3611 = vmatprep.mubr.bf16.mxu0 0
    %3612 = vmatmul.mubr.bf16.gmra.mrb[0].mxu0 %v3423
    %v3613 = vpop.f32.mrb[0].mxu0
    %v3614 = vadd.f32 0.0, %v3613
    %v3615 = vpop.f32.mrb[0].mxu0
    %v3616 = vadd.f32 0.0, %v3615
    %v3617 = vpop.f32.mrb[0].mxu0
    %v3618 = vpop.f32.mrb[0].mxu0
    %3619 = vdwg.mxu0
    %v3620 = vadd.f32 %v3534, %v3573
    %v3621 = vadd.f32 %v3535, %v3575
    %v3622 = vadd.f32 %v3536, %v3614
    %v3623 = vadd.f32 %v3537, %v3616
    %v3624 = vxor.u32 %v3620, 2147483648
    %v3625 = vmul.f32 %v3624, 1.442695
    %v3626 = vpow.pop %v3625
    %v3627 = vadd.f32 %v3626, 1.0
    %v3628 = vrcp.pop %v3627
    %v3629 = vmul.f32 1.0, %v3628
    %v3630 = vxor.u32 %v3621, 2147483648
    %v3631 = vmul.f32 %v3630, 1.442695
    %v3632 = vpow.pop %v3631
    %v3633 = vadd.f32 %v3632, 1.0
    %v3634 = vrcp.pop %v3633
    %v3635 = vmul.f32 1.0, %v3634
    %v3636 = vtanh.pop %v3622
    %v3637 = vxor.u32 %v3623, 2147483648
    %v3638 = vmul.f32 %v3637, 1.442695
    %v3639 = vpow.pop %v3638
    %v3640 = vadd.f32 %v3639, 1.0
    %v3641 = vrcp.pop %v3640
    %v3642 = vmul.f32 1.0, %v3641
    %v3643 = vmul.f32 %v3635, %v3420
    %v3644 = vmul.f32 %v3629, %v3636
    %v3645 = vadd.f32 %v3643, %v3644
    %v3646 = vtanh.pop %v3645
    %v3647 = vmul.f32 %v3642, %v3646
    %v3648 = vpack.c.bf16 %v3647, %v3647
    %v3649 = vpack.c.bf16 %v3530, %v3530
    %3650 = vmatprep.subr.bf16.mxu0 %v1949
    %3651 = vmatpush1.bf16.msra.mxu0 %v1948
    %3652 = vmatprep.subr.bf16.mxu0 %v1953
    %3653 = vmatpush1.bf16.msra.mxu0 %v1952
    %3654 = vmatprep.subr.bf16.mxu0 %v1957
    %3655 = vmatpush1.bf16.msra.mxu0 %v1956
    %3656 = vmatprep.subr.bf16.mxu0 %v1961
    %3657 = vmatpush1.bf16.msra.mxu0 %v1960
    %3658 = vmatprep.subr.bf16.mxu0 %v1965
    %3659 = vmatpush1.bf16.msra.mxu0 %v1964
    %3660 = vmatprep.subr.bf16.mxu0 %v1969
    %3661 = vmatpush1.bf16.msra.mxu0 %v1968
    %3662 = vmatprep.subr.bf16.mxu0 %v1973
    %3663 = vmatpush1.bf16.msra.mxu0 %v1972
    %3664 = vmatprep.subr.bf16.mxu0 %v1977
    %3665 = vmatpush1.bf16.msra.mxu0 %v1976
    %3666 = vmatprep.subr.bf16.mxu0 %v1981
    %3667 = vmatpush1.bf16.msra.mxu0 %v1980
    %3668 = vmatprep.subr.bf16.mxu0 %v1985
    %3669 = vmatpush1.bf16.msra.mxu0 %v1984
    %3670 = vmatprep.subr.bf16.mxu0 %v1989
    %3671 = vmatpush1.bf16.msra.mxu0 %v1988
    %3672 = vmatprep.subr.bf16.mxu0 %v1993
    %3673 = vmatpush1.bf16.msra.mxu0 %v1992
    %3674 = vmatprep.subr.bf16.mxu0 %v1997
    %3675 = vmatpush1.bf16.msra.mxu0 %v1996
    %3676 = vmatprep.subr.bf16.mxu0 %v2001
    %3677 = vmatpush1.bf16.msra.mxu0 %v2000
    %3678 = vmatprep.subr.bf16.mxu0 %v2005
    %3679 = vmatpush1.bf16.msra.mxu0 %v2004
    %3680 = vmatprep.subr.bf16.mxu0 %v2009
    %3681 = vmatpush1.bf16.msra.mxu0 %v2008
    %3682 = vmatprep.mubr.bf16.mxu0 %v3649
    %3683 = vmatmul.mubr.bf16.gmra.mrb[0].mxu0 %v3648
    %v3684 = vpop.f32.mrb[0].mxu0
    %v3685 = vadd.f32 %v1471, %v3684
    %v3686 = vpop.f32.mrb[0].mxu0
    %v3687 = vadd.f32 %v1472, %v3686
    %v3688 = vpop.f32.mrb[0].mxu0
    %v3689 = vpop.f32.mrb[0].mxu0
    %3690 = vdwg.mxu0
    %3691 = vmatprep.subr.bf16.mxu0 %v1951
    %3692 = vmatpush1.bf16.msra.mxu0 %v1950
    %3693 = vmatprep.subr.bf16.mxu0 %v1955
    %3694 = vmatpush1.bf16.msra.mxu0 %v1954
    %3695 = vmatprep.subr.bf16.mxu0 %v1959
    %3696 = vmatpush1.bf16.msra.mxu0 %v1958
    %3697 = vmatprep.subr.bf16.mxu0 %v1963
    %3698 = vmatpush1.bf16.msra.mxu0 %v1962
    %3699 = vmatprep.subr.bf16.mxu0 %v1967
    %3700 = vmatpush1.bf16.msra.mxu0 %v1966
    %3701 = vmatprep.subr.bf16.mxu0 %v1971
    %3702 = vmatpush1.bf16.msra.mxu0 %v1970
    %3703 = vmatprep.subr.bf16.mxu0 %v1975
    %3704 = vmatpush1.bf16.msra.mxu0 %v1974
    %3705 = vmatprep.subr.bf16.mxu0 %v1979
    %3706 = vmatpush1.bf16.msra.mxu0 %v1978
    %3707 = vmatprep.subr.bf16.mxu0 %v1983
    %3708 = vmatpush1.bf16.msra.mxu0 %v1982
    %3709 = vmatprep.subr.bf16.mxu0 %v1987
    %3710 = vmatpush1.bf16.msra.mxu0 %v1986
    %3711 = vmatprep.subr.bf16.mxu0 %v1991
    %3712 = vmatpush1.bf16.msra.mxu0 %v1990
    %3713 = vmatprep.subr.bf16.mxu0 %v1995
    %3714 = vmatpush1.bf16.msra.mxu0 %v1994
    %3715 = vmatprep.subr.bf16.mxu0 %v1999
    %3716 = vmatpush1.bf16.msra.mxu0 %v1998
    %3717 = vmatprep.subr.bf16.mxu0 %v2003
    %3718 = vmatpush1.bf16.msra.mxu0 %v2002
    %3719 = vmatprep.subr.bf16.mxu0 %v2007
    %3720 = vmatpush1.bf16.msra.mxu0 %v2006
    %3721 = vmatprep.subr.bf16.mxu0 %v2011
    %3722 = vmatpush1.bf16.msra.mxu0 %v2010
    %3723 = vmatprep.mubr.bf16.mxu0 %v3649
    %3724 = vmatmul.mubr.bf16.gmra.mrb[0].mxu0 %v3648
    %v3725 = vpop.f32.mrb[0].mxu0
    %v3726 = vadd.f32 %v1473, %v3725
    %v3727 = vpop.f32.mrb[0].mxu0
    %v3728 = vadd.f32 %v1474, %v3727
    %v3729 = vpop.f32.mrb[0].mxu0
    %v3730 = vpop.f32.mrb[0].mxu0
    %3731 = vdwg.mxu0
    %v3732 = vxor.u32 %v3685, 2147483648
    %v3733 = vmul.f32 %v3732, 1.442695
    %v3734 = vpow.pop %v3733
    %v3735 = vadd.f32 %v3734, 1.0
    %v3736 = vrcp.pop %v3735
    %v3737 = vmul.f32 1.0, %v3736
    %v3738 = vxor.u32 %v3687, 2147483648
    %v3739 = vmul.f32 %v3738, 1.442695
    %v3740 = vpow.pop %v3739
    %v3741 = vadd.f32 %v3740, 1.0
    %v3742 = vrcp.pop %v3741
    %v3743 = vmul.f32 1.0, %v3742
    %v3744 = vtanh.pop %v3726
    %v3745 = vxor.u32 %v3728, 2147483648
    %v3746 = vmul.f32 %v3745, 1.442695
    %v3747 = vpow.pop %v3746
    %v3748 = vadd.f32 %v3747, 1.0
    %v3749 = vrcp.pop %v3748
    %v3750 = vmul.f32 1.0, %v3749
    %v3751 = vmul.f32 %v3743, %v3528
    %v3752 = vmul.f32 %v3737, %v3744
    %v3753 = vadd.f32 %v3751, %v3752
    %v3754 = vtanh.pop %v3753
    %v3755 = vmul.f32 %v3750, %v3754
    %s3756 = scalar_lea.vmem [#allocation3], 56
    %3757 = vst [vmem:[%s3756] sm:$0xff] %v3755
    %s3758 = scalar_lea.vmem [#allocation2], 256
    %v3759 = vld [vmem:[%s3758] sm:$0xff]
    %v3760 = vld [vmem:[%s3758 + $0x8] sm:$0xff]
    %v3761 = vld [vmem:[%s3758 + $0x10] sm:$0xff]
    %v3762 = vld [vmem:[%s3758 + $0x18] sm:$0xff]
    %3763 = vmatprep.subr.bf16.mxu0 %v1581
    %3764 = vmatpush1.bf16.msra.mxu0 %v1580
    %3765 = vmatprep.subr.bf16.mxu0 %v1585
    %3766 = vmatpush1.bf16.msra.mxu0 %v1584
    %3767 = vmatprep.subr.bf16.mxu0 %v1589
    %3768 = vmatpush1.bf16.msra.mxu0 %v1588
    %3769 = vmatprep.subr.bf16.mxu0 %v1593
    %3770 = vmatpush1.bf16.msra.mxu0 %v1592
    %3771 = vmatprep.subr.bf16.mxu0 %v1597
    %3772 = vmatpush1.bf16.msra.mxu0 %v1596
    %3773 = vmatprep.subr.bf16.mxu0 %v1601
    %3774 = vmatpush1.bf16.msra.mxu0 %v1600
    %3775 = vmatprep.subr.bf16.mxu0 %v1605
    %3776 = vmatpush1.bf16.msra.mxu0 %v1604
    %3777 = vmatprep.subr.bf16.mxu0 %v1609
    %3778 = vmatpush1.bf16.msra.mxu0 %v1608
    %3779 = vmatprep.subr.bf16.mxu0 0
    %3780 = vmatpush1.bf16.msra.mxu0 0
    %3781 = vmatprep.subr.bf16.mxu0 0
    %3782 = vmatpush1.bf16.msra.mxu0 0
    %3783 = vmatprep.subr.bf16.mxu0 0
    %3784 = vmatpush1.bf16.msra.mxu0 0
    %3785 = vmatprep.subr.bf16.mxu0 0
    %3786 = vmatpush1.bf16.msra.mxu0 0
    %3787 = vmatprep.subr.bf16.mxu0 0
    %3788 = vmatpush1.bf16.msra.mxu0 0
    %3789 = vmatprep.subr.bf16.mxu0 0
    %3790 = vmatpush1.bf16.msra.mxu0 0
    %3791 = vmatprep.subr.bf16.mxu0 0
    %3792 = vmatpush1.bf16.msra.mxu0 0
    %3793 = vmatprep.subr.bf16.mxu0 0
    %3794 = vmatpush1.bf16.msra.mxu0 0
    %3795 = vmatprep.mubr.bf16.mxu0 0
    %3796 = vmatmul.mubr.bf16.gmra.mrb[0].mxu0 %v3648
    %v3797 = vpop.f32.mrb[0].mxu0
    %v3798 = vadd.f32 0.0, %v3797
    %v3799 = vpop.f32.mrb[0].mxu0
    %v3800 = vadd.f32 0.0, %v3799
    %v3801 = vpop.f32.mrb[0].mxu0
    %v3802 = vpop.f32.mrb[0].mxu0
    %3803 = vdwg.mxu0
    %3804 = vmatprep.subr.bf16.mxu0 %v1583
    %3805 = vmatpush1.bf16.msra.mxu0 %v1582
    %3806 = vmatprep.subr.bf16.mxu0 %v1587
    %3807 = vmatpush1.bf16.msra.mxu0 %v1586
    %3808 = vmatprep.subr.bf16.mxu0 %v1591
    %3809 = vmatpush1.bf16.msra.mxu0 %v1590
    %3810 = vmatprep.subr.bf16.mxu0 %v1595
    %3811 = vmatpush1.bf16.msra.mxu0 %v1594
    %3812 = vmatprep.subr.bf16.mxu0 %v1599
    %3813 = vmatpush1.bf16.msra.mxu0 %v1598
    %3814 = vmatprep.subr.bf16.mxu0 %v1603
    %3815 = vmatpush1.bf16.msra.mxu0 %v1602
    %3816 = vmatprep.subr.bf16.mxu0 %v1607
    %3817 = vmatpush1.bf16.msra.mxu0 %v1606
    %3818 = vmatprep.subr.bf16.mxu0 %v1611
    %3819 = vmatpush1.bf16.msra.mxu0 %v1610
    %3820 = vmatprep.subr.bf16.mxu0 0
    %3821 = vmatpush1.bf16.msra.mxu0 0
    %3822 = vmatprep.subr.bf16.mxu0 0
    %3823 = vmatpush1.bf16.msra.mxu0 0
    %3824 = vmatprep.subr.bf16.mxu0 0
    %3825 = vmatpush1.bf16.msra.mxu0 0
    %3826 = vmatprep.subr.bf16.mxu0 0
    %3827 = vmatpush1.bf16.msra.mxu0 0
    %3828 = vmatprep.subr.bf16.mxu0 0
    %3829 = vmatpush1.bf16.msra.mxu0 0
    %3830 = vmatprep.subr.bf16.mxu0 0
    %3831 = vmatpush1.bf16.msra.mxu0 0
    %3832 = vmatprep.subr.bf16.mxu0 0
    %3833 = vmatpush1.bf16.msra.mxu0 0
    %3834 = vmatprep.subr.bf16.mxu0 0
    %3835 = vmatpush1.bf16.msra.mxu0 0
    %3836 = vmatprep.mubr.bf16.mxu0 0
    %3837 = vmatmul.mubr.bf16.gmra.mrb[0].mxu0 %v3648
    %v3838 = vpop.f32.mrb[0].mxu0
    %v3839 = vadd.f32 0.0, %v3838
    %v3840 = vpop.f32.mrb[0].mxu0
    %v3841 = vadd.f32 0.0, %v3840
    %v3842 = vpop.f32.mrb[0].mxu0
    %v3843 = vpop.f32.mrb[0].mxu0
    %3844 = vdwg.mxu0
    %v3845 = vadd.f32 %v3759, %v3798
    %v3846 = vadd.f32 %v3760, %v3800
    %v3847 = vadd.f32 %v3761, %v3839
    %v3848 = vadd.f32 %v3762, %v3841
    %v3849 = vxor.u32 %v3845, 2147483648
    %v3850 = vmul.f32 %v3849, 1.442695
    %v3851 = vpow.pop %v3850
    %v3852 = vadd.f32 %v3851, 1.0
    %v3853 = vrcp.pop %v3852
    %v3854 = vmul.f32 1.0, %v3853
    %v3855 = vxor.u32 %v3846, 2147483648
    %v3856 = vmul.f32 %v3855, 1.442695
    %v3857 = vpow.pop %v3856
    %v3858 = vadd.f32 %v3857, 1.0
    %v3859 = vrcp.pop %v3858
    %v3860 = vmul.f32 1.0, %v3859
    %v3861 = vtanh.pop %v3847
    %v3862 = vxor.u32 %v3848, 2147483648
    %v3863 = vmul.f32 %v3862, 1.442695
    %v3864 = vpow.pop %v3863
    %v3865 = vadd.f32 %v3864, 1.0
    %v3866 = vrcp.pop %v3865
    %v3867 = vmul.f32 1.0, %v3866
    %v3868 = vmul.f32 %v3860, %v3645
    %v3869 = vmul.f32 %v3854, %v3861
    %v3870 = vadd.f32 %v3868, %v3869
    %v3871 = vtanh.pop %v3870
    %v3872 = vmul.f32 %v3867, %v3871
    %v3873 = vpack.c.bf16 %v3872, %v3872
    %v3874 = vpack.c.bf16 %v3755, %v3755
    %3875 = vmatprep.subr.bf16.mxu0 %v1949
    %3876 = vmatpush1.bf16.msra.mxu0 %v1948
    %3877 = vmatprep.subr.bf16.mxu0 %v1953
    %3878 = vmatpush1.bf16.msra.mxu0 %v1952
    %3879 = vmatprep.subr.bf16.mxu0 %v1957
    %3880 = vmatpush1.bf16.msra.mxu0 %v1956
    %3881 = vmatprep.subr.bf16.mxu0 %v1961
    %3882 = vmatpush1.bf16.msra.mxu0 %v1960
    %3883 = vmatprep.subr.bf16.mxu0 %v1965
    %3884 = vmatpush1.bf16.msra.mxu0 %v1964
    %3885 = vmatprep.subr.bf16.mxu0 %v1969
    %3886 = vmatpush1.bf16.msra.mxu0 %v1968
    %3887 = vmatprep.subr.bf16.mxu0 %v1973
    %3888 = vmatpush1.bf16.msra.mxu0 %v1972
    %3889 = vmatprep.subr.bf16.mxu0 %v1977
    %3890 = vmatpush1.bf16.msra.mxu0 %v1976
    %3891 = vmatprep.subr.bf16.mxu0 %v1981
    %3892 = vmatpush1.bf16.msra.mxu0 %v1980
    %3893 = vmatprep.subr.bf16.mxu0 %v1985
    %3894 = vmatpush1.bf16.msra.mxu0 %v1984
    %3895 = vmatprep.subr.bf16.mxu0 %v1989
    %3896 = vmatpush1.bf16.msra.mxu0 %v1988
    %3897 = vmatprep.subr.bf16.mxu0 %v1993
    %3898 = vmatpush1.bf16.msra.mxu0 %v1992
    %3899 = vmatprep.subr.bf16.mxu0 %v1997
    %3900 = vmatpush1.bf16.msra.mxu0 %v1996
    %3901 = vmatprep.subr.bf16.mxu0 %v2001
    %3902 = vmatpush1.bf16.msra.mxu0 %v2000
    %3903 = vmatprep.subr.bf16.mxu0 %v2005
    %3904 = vmatpush1.bf16.msra.mxu0 %v2004
    %3905 = vmatprep.subr.bf16.mxu0 %v2009
    %3906 = vmatpush1.bf16.msra.mxu0 %v2008
    %3907 = vmatprep.mubr.bf16.mxu0 %v3874
    %3908 = vmatmul.mubr.bf16.gmra.mrb[0].mxu0 %v3873
    %v3909 = vpop.f32.mrb[0].mxu0
    %v3910 = vadd.f32 %v1471, %v3909
    %v3911 = vpop.f32.mrb[0].mxu0
    %v3912 = vadd.f32 %v1472, %v3911
    %v3913 = vpop.f32.mrb[0].mxu0
    %v3914 = vpop.f32.mrb[0].mxu0
    %3915 = vdwg.mxu0
    %3916 = vmatprep.subr.bf16.mxu0 %v1951
    %3917 = vmatpush1.bf16.msra.mxu0 %v1950
    %3918 = vmatprep.subr.bf16.mxu0 %v1955
    %3919 = vmatpush1.bf16.msra.mxu0 %v1954
    %3920 = vmatprep.subr.bf16.mxu0 %v1959
    %3921 = vmatpush1.bf16.msra.mxu0 %v1958
    %3922 = vmatprep.subr.bf16.mxu0 %v1963
    %3923 = vmatpush1.bf16.msra.mxu0 %v1962
    %3924 = vmatprep.subr.bf16.mxu0 %v1967
    %3925 = vmatpush1.bf16.msra.mxu0 %v1966
    %3926 = vmatprep.subr.bf16.mxu0 %v1971
    %3927 = vmatpush1.bf16.msra.mxu0 %v1970
    %3928 = vmatprep.subr.bf16.mxu0 %v1975
    %3929 = vmatpush1.bf16.msra.mxu0 %v1974
    %3930 = vmatprep.subr.bf16.mxu0 %v1979
    %3931 = vmatpush1.bf16.msra.mxu0 %v1978
    %3932 = vmatprep.subr.bf16.mxu0 %v1983
    %3933 = vmatpush1.bf16.msra.mxu0 %v1982
    %3934 = vmatprep.subr.bf16.mxu0 %v1987
    %3935 = vmatpush1.bf16.msra.mxu0 %v1986
    %3936 = vmatprep.subr.bf16.mxu0 %v1991
    %3937 = vmatpush1.bf16.msra.mxu0 %v1990
    %3938 = vmatprep.subr.bf16.mxu0 %v1995
    %3939 = vmatpush1.bf16.msra.mxu0 %v1994
    %3940 = vmatprep.subr.bf16.mxu0 %v1999
    %3941 = vmatpush1.bf16.msra.mxu0 %v1998
    %3942 = vmatprep.subr.bf16.mxu0 %v2003
    %3943 = vmatpush1.bf16.msra.mxu0 %v2002
    %3944 = vmatprep.subr.bf16.mxu0 %v2007
    %3945 = vmatpush1.bf16.msra.mxu0 %v2006
    %3946 = vmatprep.subr.bf16.mxu0 %v2011
    %3947 = vmatpush1.bf16.msra.mxu0 %v2010
    %3948 = vmatprep.mubr.bf16.mxu0 %v3874
    %3949 = vmatmul.mubr.bf16.gmra.mrb[0].mxu0 %v3873
    %v3950 = vpop.f32.mrb[0].mxu0
    %v3951 = vadd.f32 %v1473, %v3950
    %v3952 = vpop.f32.mrb[0].mxu0
    %v3953 = vadd.f32 %v1474, %v3952
    %v3954 = vpop.f32.mrb[0].mxu0
    %v3955 = vpop.f32.mrb[0].mxu0
    %3956 = vdwg.mxu0
    %v3957 = vxor.u32 %v3910, 2147483648
    %v3958 = vmul.f32 %v3957, 1.442695
    %v3959 = vpow.pop %v3958
    %v3960 = vadd.f32 %v3959, 1.0
    %v3961 = vrcp.pop %v3960
    %v3962 = vmul.f32 1.0, %v3961
    %v3963 = vxor.u32 %v3912, 2147483648
    %v3964 = vmul.f32 %v3963, 1.442695
    %v3965 = vpow.pop %v3964
    %v3966 = vadd.f32 %v3965, 1.0
    %v3967 = vrcp.pop %v3966
    %v3968 = vmul.f32 1.0, %v3967
    %v3969 = vtanh.pop %v3951
    %v3970 = vxor.u32 %v3953, 2147483648
    %v3971 = vmul.f32 %v3970, 1.442695
    %v3972 = vpow.pop %v3971
    %v3973 = vadd.f32 %v3972, 1.0
    %v3974 = vrcp.pop %v3973
    %v3975 = vmul.f32 1.0, %v3974
    %v3976 = vmul.f32 %v3968, %v3753
    %v3977 = vmul.f32 %v3962, %v3969
    %v3978 = vadd.f32 %v3976, %v3977
    %v3979 = vtanh.pop %v3978
    %v3980 = vmul.f32 %v3975, %v3979
    %s3981 = scalar_lea.vmem [#allocation3], 64
    %3982 = vst [vmem:[%s3981] sm:$0xff] %v3980
    %s3983 = scalar_lea.vmem [#allocation2], 288
    %v3984 = vld [vmem:[%s3983] sm:$0xff]
    %v3985 = vld [vmem:[%s3983 + $0x8] sm:$0xff]
    %v3986 = vld [vmem:[%s3983 + $0x10] sm:$0xff]
    %v3987 = vld [vmem:[%s3983 + $0x18] sm:$0xff]
    %3988 = vmatprep.subr.bf16.mxu0 %v1581
    %3989 = vmatpush1.bf16.msra.mxu0 %v1580
    %3990 = vmatprep.subr.bf16.mxu0 %v1585
    %3991 = vmatpush1.bf16.msra.mxu0 %v1584
    %3992 = vmatprep.subr.bf16.mxu0 %v1589
    %3993 = vmatpush1.bf16.msra.mxu0 %v1588
    %3994 = vmatprep.subr.bf16.mxu0 %v1593
    %3995 = vmatpush1.bf16.msra.mxu0 %v1592
    %3996 = vmatprep.subr.bf16.mxu0 %v1597
    %3997 = vmatpush1.bf16.msra.mxu0 %v1596
    %3998 = vmatprep.subr.bf16.mxu0 %v1601
    %3999 = vmatpush1.bf16.msra.mxu0 %v1600
    %4000 = vmatprep.subr.bf16.mxu0 %v1605
    %4001 = vmatpush1.bf16.msra.mxu0 %v1604
    %4002 = vmatprep.subr.bf16.mxu0 %v1609
    %4003 = vmatpush1.bf16.msra.mxu0 %v1608
    %4004 = vmatprep.subr.bf16.mxu0 0
    %4005 = vmatpush1.bf16.msra.mxu0 0
    %4006 = vmatprep.subr.bf16.mxu0 0
    %4007 = vmatpush1.bf16.msra.mxu0 0
    %4008 = vmatprep.subr.bf16.mxu0 0
    %4009 = vmatpush1.bf16.msra.mxu0 0
    %4010 = vmatprep.subr.bf16.mxu0 0
    %4011 = vmatpush1.bf16.msra.mxu0 0
    %4012 = vmatprep.subr.bf16.mxu0 0
    %4013 = vmatpush1.bf16.msra.mxu0 0
    %4014 = vmatprep.subr.bf16.mxu0 0
    %4015 = vmatpush1.bf16.msra.mxu0 0
    %4016 = vmatprep.subr.bf16.mxu0 0
    %4017 = vmatpush1.bf16.msra.mxu0 0
    %4018 = vmatprep.subr.bf16.mxu0 0
    %4019 = vmatpush1.bf16.msra.mxu0 0
    %4020 = vmatprep.mubr.bf16.mxu0 0
    %4021 = vmatmul.mubr.bf16.gmra.mrb[0].mxu0 %v3873
    %v4022 = vpop.f32.mrb[0].mxu0
    %v4023 = vadd.f32 0.0, %v4022
    %v4024 = vpop.f32.mrb[0].mxu0
    %v4025 = vadd.f32 0.0, %v4024
    %v4026 = vpop.f32.mrb[0].mxu0
    %v4027 = vpop.f32.mrb[0].mxu0
    %4028 = vdwg.mxu0
    %4029 = vmatprep.subr.bf16.mxu0 %v1583
    %4030 = vmatpush1.bf16.msra.mxu0 %v1582
    %4031 = vmatprep.subr.bf16.mxu0 %v1587
    %4032 = vmatpush1.bf16.msra.mxu0 %v1586
    %4033 = vmatprep.subr.bf16.mxu0 %v1591
    %4034 = vmatpush1.bf16.msra.mxu0 %v1590
    %4035 = vmatprep.subr.bf16.mxu0 %v1595
    %4036 = vmatpush1.bf16.msra.mxu0 %v1594
    %4037 = vmatprep.subr.bf16.mxu0 %v1599
    %4038 = vmatpush1.bf16.msra.mxu0 %v1598
    %4039 = vmatprep.subr.bf16.mxu0 %v1603
    %4040 = vmatpush1.bf16.msra.mxu0 %v1602
    %4041 = vmatprep.subr.bf16.mxu0 %v1607
    %4042 = vmatpush1.bf16.msra.mxu0 %v1606
    %4043 = vmatprep.subr.bf16.mxu0 %v1611
    %4044 = vmatpush1.bf16.msra.mxu0 %v1610
    %4045 = vmatprep.subr.bf16.mxu0 0
    %4046 = vmatpush1.bf16.msra.mxu0 0
    %4047 = vmatprep.subr.bf16.mxu0 0
    %4048 = vmatpush1.bf16.msra.mxu0 0
    %4049 = vmatprep.subr.bf16.mxu0 0
    %4050 = vmatpush1.bf16.msra.mxu0 0
    %4051 = vmatprep.subr.bf16.mxu0 0
    %4052 = vmatpush1.bf16.msra.mxu0 0
    %4053 = vmatprep.subr.bf16.mxu0 0
    %4054 = vmatpush1.bf16.msra.mxu0 0
    %4055 = vmatprep.subr.bf16.mxu0 0
    %4056 = vmatpush1.bf16.msra.mxu0 0
    %4057 = vmatprep.subr.bf16.mxu0 0
    %4058 = vmatpush1.bf16.msra.mxu0 0
    %4059 = vmatprep.subr.bf16.mxu0 0
    %4060 = vmatpush1.bf16.msra.mxu0 0
    %4061 = vmatprep.mubr.bf16.mxu0 0
    %4062 = vmatmul.mubr.bf16.gmra.mrb[0].mxu0 %v3873
    %v4063 = vpop.f32.mrb[0].mxu0
    %v4064 = vadd.f32 0.0, %v4063
    %v4065 = vpop.f32.mrb[0].mxu0
    %v4066 = vadd.f32 0.0, %v4065
    %v4067 = vpop.f32.mrb[0].mxu0
    %v4068 = vpop.f32.mrb[0].mxu0
    %4069 = vdwg.mxu0
    %v4070 = vadd.f32 %v3984, %v4023
    %v4071 = vadd.f32 %v3985, %v4025
    %v4072 = vadd.f32 %v3986, %v4064
    %v4073 = vadd.f32 %v3987, %v4066
    %v4074 = vxor.u32 %v4070, 2147483648
    %v4075 = vmul.f32 %v4074, 1.442695
    %v4076 = vpow.pop %v4075
    %v4077 = vadd.f32 %v4076, 1.0
    %v4078 = vrcp.pop %v4077
    %v4079 = vmul.f32 1.0, %v4078
    %v4080 = vxor.u32 %v4071, 2147483648
    %v4081 = vmul.f32 %v4080, 1.442695
    %v4082 = vpow.pop %v4081
    %v4083 = vadd.f32 %v4082, 1.0
    %v4084 = vrcp.pop %v4083
    %v4085 = vmul.f32 1.0, %v4084
    %v4086 = vtanh.pop %v4072
    %v4087 = vxor.u32 %v4073, 2147483648
    %v4088 = vmul.f32 %v4087, 1.442695
    %v4089 = vpow.pop %v4088
    %v4090 = vadd.f32 %v4089, 1.0
    %v4091 = vrcp.pop %v4090
    %v4092 = vmul.f32 1.0, %v4091
    %v4093 = vmul.f32 %v4085, %v3870
    %v4094 = vmul.f32 %v4079, %v4086
    %v4095 = vadd.f32 %v4093, %v4094
    %v4096 = vtanh.pop %v4095
    %v4097 = vmul.f32 %v4092, %v4096
    %v4098 = vpack.c.bf16 %v4097, %v4097
    %v4099 = vpack.c.bf16 %v3980, %v3980
    %4100 = vmatprep.subr.bf16.mxu0 %v1949
    %4101 = vmatpush1.bf16.msra.mxu0 %v1948
    %4102 = vmatprep.subr.bf16.mxu0 %v1953
    %4103 = vmatpush1.bf16.msra.mxu0 %v1952
    %4104 = vmatprep.subr.bf16.mxu0 %v1957
    %4105 = vmatpush1.bf16.msra.mxu0 %v1956
    %4106 = vmatprep.subr.bf16.mxu0 %v1961
    %4107 = vmatpush1.bf16.msra.mxu0 %v1960
    %4108 = vmatprep.subr.bf16.mxu0 %v1965
    %4109 = vmatpush1.bf16.msra.mxu0 %v1964
    %4110 = vmatprep.subr.bf16.mxu0 %v1969
    %4111 = vmatpush1.bf16.msra.mxu0 %v1968
    %4112 = vmatprep.subr.bf16.mxu0 %v1973
    %4113 = vmatpush1.bf16.msra.mxu0 %v1972
    %4114 = vmatprep.subr.bf16.mxu0 %v1977
    %4115 = vmatpush1.bf16.msra.mxu0 %v1976
    %4116 = vmatprep.subr.bf16.mxu0 %v1981
    %4117 = vmatpush1.bf16.msra.mxu0 %v1980
    %4118 = vmatprep.subr.bf16.mxu0 %v1985
    %4119 = vmatpush1.bf16.msra.mxu0 %v1984
    %4120 = vmatprep.subr.bf16.mxu0 %v1989
    %4121 = vmatpush1.bf16.msra.mxu0 %v1988
    %4122 = vmatprep.subr.bf16.mxu0 %v1993
    %4123 = vmatpush1.bf16.msra.mxu0 %v1992
    %4124 = vmatprep.subr.bf16.mxu0 %v1997
    %4125 = vmatpush1.bf16.msra.mxu0 %v1996
    %4126 = vmatprep.subr.bf16.mxu0 %v2001
    %4127 = vmatpush1.bf16.msra.mxu0 %v2000
    %4128 = vmatprep.subr.bf16.mxu0 %v2005
    %4129 = vmatpush1.bf16.msra.mxu0 %v2004
    %4130 = vmatprep.subr.bf16.mxu0 %v2009
    %4131 = vmatpush1.bf16.msra.mxu0 %v2008
    %4132 = vmatprep.mubr.bf16.mxu0 %v4099
    %4133 = vmatmul.mubr.bf16.gmra.mrb[0].mxu0 %v4098
    %v4134 = vpop.f32.mrb[0].mxu0
    %v4135 = vadd.f32 %v1471, %v4134
    %v4136 = vpop.f32.mrb[0].mxu0
    %v4137 = vadd.f32 %v1472, %v4136
    %v4138 = vpop.f32.mrb[0].mxu0
    %v4139 = vpop.f32.mrb[0].mxu0
    %4140 = vdwg.mxu0
    %4141 = vmatprep.subr.bf16.mxu0 %v1951
    %4142 = vmatpush1.bf16.msra.mxu0 %v1950
    %4143 = vmatprep.subr.bf16.mxu0 %v1955
    %4144 = vmatpush1.bf16.msra.mxu0 %v1954
    %4145 = vmatprep.subr.bf16.mxu0 %v1959
    %4146 = vmatpush1.bf16.msra.mxu0 %v1958
    %4147 = vmatprep.subr.bf16.mxu0 %v1963
    %4148 = vmatpush1.bf16.msra.mxu0 %v1962
    %4149 = vmatprep.subr.bf16.mxu0 %v1967
    %4150 = vmatpush1.bf16.msra.mxu0 %v1966
    %4151 = vmatprep.subr.bf16.mxu0 %v1971
    %4152 = vmatpush1.bf16.msra.mxu0 %v1970
    %4153 = vmatprep.subr.bf16.mxu0 %v1975
    %4154 = vmatpush1.bf16.msra.mxu0 %v1974
    %4155 = vmatprep.subr.bf16.mxu0 %v1979
    %4156 = vmatpush1.bf16.msra.mxu0 %v1978
    %4157 = vmatprep.subr.bf16.mxu0 %v1983
    %4158 = vmatpush1.bf16.msra.mxu0 %v1982
    %4159 = vmatprep.subr.bf16.mxu0 %v1987
    %4160 = vmatpush1.bf16.msra.mxu0 %v1986
    %4161 = vmatprep.subr.bf16.mxu0 %v1991
    %4162 = vmatpush1.bf16.msra.mxu0 %v1990
    %4163 = vmatprep.subr.bf16.mxu0 %v1995
    %4164 = vmatpush1.bf16.msra.mxu0 %v1994
    %4165 = vmatprep.subr.bf16.mxu0 %v1999
    %4166 = vmatpush1.bf16.msra.mxu0 %v1998
    %4167 = vmatprep.subr.bf16.mxu0 %v2003
    %4168 = vmatpush1.bf16.msra.mxu0 %v2002
    %4169 = vmatprep.subr.bf16.mxu0 %v2007
    %4170 = vmatpush1.bf16.msra.mxu0 %v2006
    %4171 = vmatprep.subr.bf16.mxu0 %v2011
    %4172 = vmatpush1.bf16.msra.mxu0 %v2010
    %4173 = vmatprep.mubr.bf16.mxu0 %v4099
    %4174 = vmatmul.mubr.bf16.gmra.mrb[0].mxu0 %v4098
    %v4175 = vpop.f32.mrb[0].mxu0
    %v4176 = vadd.f32 %v1473, %v4175
    %v4177 = vpop.f32.mrb[0].mxu0
    %v4178 = vadd.f32 %v1474, %v4177
    %v4179 = vpop.f32.mrb[0].mxu0
    %v4180 = vpop.f32.mrb[0].mxu0
    %4181 = vdwg.mxu0
    %v4182 = vxor.u32 %v4135, 2147483648
    %v4183 = vmul.f32 %v4182, 1.442695
    %v4184 = vpow.pop %v4183
    %v4185 = vadd.f32 %v4184, 1.0
    %v4186 = vrcp.pop %v4185
    %v4187 = vmul.f32 1.0, %v4186
    %v4188 = vxor.u32 %v4137, 2147483648
    %v4189 = vmul.f32 %v4188, 1.442695
    %v4190 = vpow.pop %v4189
    %v4191 = vadd.f32 %v4190, 1.0
    %v4192 = vrcp.pop %v4191
    %v4193 = vmul.f32 1.0, %v4192
    %v4194 = vtanh.pop %v4176
    %v4195 = vxor.u32 %v4178, 2147483648
    %v4196 = vmul.f32 %v4195, 1.442695
    %v4197 = vpow.pop %v4196
    %v4198 = vadd.f32 %v4197, 1.0
    %v4199 = vrcp.pop %v4198
    %v4200 = vmul.f32 1.0, %v4199
    %v4201 = vmul.f32 %v4193, %v3978
    %v4202 = vmul.f32 %v4187, %v4194
    %v4203 = vadd.f32 %v4201, %v4202
    %v4204 = vtanh.pop %v4203
    %v4205 = vmul.f32 %v4200, %v4204
    %s4206 = scalar_lea.vmem [#allocation3], 72
    %4207 = vst [vmem:[%s4206] sm:$0xff] %v4205
    %s4208 = scalar_lea.vmem [#allocation2], 320
    %v4209 = vld [vmem:[%s4208] sm:$0xff]
    %v4210 = vld [vmem:[%s4208 + $0x8] sm:$0xff]
    %v4211 = vld [vmem:[%s4208 + $0x10] sm:$0xff]
    %v4212 = vld [vmem:[%s4208 + $0x18] sm:$0xff]
    %4213 = vmatprep.subr.bf16.mxu0 %v1581
    %4214 = vmatpush1.bf16.msra.mxu0 %v1580
    %4215 = vmatprep.subr.bf16.mxu0 %v1585
    %4216 = vmatpush1.bf16.msra.mxu0 %v1584
    %4217 = vmatprep.subr.bf16.mxu0 %v1589
    %4218 = vmatpush1.bf16.msra.mxu0 %v1588
    %4219 = vmatprep.subr.bf16.mxu0 %v1593
    %4220 = vmatpush1.bf16.msra.mxu0 %v1592
    %4221 = vmatprep.subr.bf16.mxu0 %v1597
    %4222 = vmatpush1.bf16.msra.mxu0 %v1596
    %4223 = vmatprep.subr.bf16.mxu0 %v1601
    %4224 = vmatpush1.bf16.msra.mxu0 %v1600
    %4225 = vmatprep.subr.bf16.mxu0 %v1605
    %4226 = vmatpush1.bf16.msra.mxu0 %v1604
    %4227 = vmatprep.subr.bf16.mxu0 %v1609
    %4228 = vmatpush1.bf16.msra.mxu0 %v1608
    %4229 = vmatprep.subr.bf16.mxu0 0
    %4230 = vmatpush1.bf16.msra.mxu0 0
    %4231 = vmatprep.subr.bf16.mxu0 0
    %4232 = vmatpush1.bf16.msra.mxu0 0
    %4233 = vmatprep.subr.bf16.mxu0 0
    %4234 = vmatpush1.bf16.msra.mxu0 0
    %4235 = vmatprep.subr.bf16.mxu0 0
    %4236 = vmatpush1.bf16.msra.mxu0 0
    %4237 = vmatprep.subr.bf16.mxu0 0
    %4238 = vmatpush1.bf16.msra.mxu0 0
    %4239 = vmatprep.subr.bf16.mxu0 0
    %4240 = vmatpush1.bf16.msra.mxu0 0
    %4241 = vmatprep.subr.bf16.mxu0 0
    %4242 = vmatpush1.bf16.msra.mxu0 0
    %4243 = vmatprep.subr.bf16.mxu0 0
    %4244 = vmatpush1.bf16.msra.mxu0 0
    %4245 = vmatprep.mubr.bf16.mxu0 0
    %4246 = vmatmul.mubr.bf16.gmra.mrb[0].mxu0 %v4098
    %v4247 = vpop.f32.mrb[0].mxu0
    %v4248 = vadd.f32 0.0, %v4247
    %v4249 = vpop.f32.mrb[0].mxu0
    %v4250 = vadd.f32 0.0, %v4249
    %v4251 = vpop.f32.mrb[0].mxu0
    %v4252 = vpop.f32.mrb[0].mxu0
    %4253 = vdwg.mxu0
    %4254 = vmatprep.subr.bf16.mxu0 %v1583
    %4255 = vmatpush1.bf16.msra.mxu0 %v1582
    %4256 = vmatprep.subr.bf16.mxu0 %v1587
    %4257 = vmatpush1.bf16.msra.mxu0 %v1586
    %4258 = vmatprep.subr.bf16.mxu0 %v1591
    %4259 = vmatpush1.bf16.msra.mxu0 %v1590
    %4260 = vmatprep.subr.bf16.mxu0 %v1595
    %4261 = vmatpush1.bf16.msra.mxu0 %v1594
    %4262 = vmatprep.subr.bf16.mxu0 %v1599
    %4263 = vmatpush1.bf16.msra.mxu0 %v1598
    %4264 = vmatprep.subr.bf16.mxu0 %v1603
    %4265 = vmatpush1.bf16.msra.mxu0 %v1602
    %4266 = vmatprep.subr.bf16.mxu0 %v1607
    %4267 = vmatpush1.bf16.msra.mxu0 %v1606
    %4268 = vmatprep.subr.bf16.mxu0 %v1611
    %4269 = vmatpush1.bf16.msra.mxu0 %v1610
    %4270 = vmatprep.subr.bf16.mxu0 0
    %4271 = vmatpush1.bf16.msra.mxu0 0
    %4272 = vmatprep.subr.bf16.mxu0 0
    %4273 = vmatpush1.bf16.msra.mxu0 0
    %4274 = vmatprep.subr.bf16.mxu0 0
    %4275 = vmatpush1.bf16.msra.mxu0 0
    %4276 = vmatprep.subr.bf16.mxu0 0
    %4277 = vmatpush1.bf16.msra.mxu0 0
    %4278 = vmatprep.subr.bf16.mxu0 0
    %4279 = vmatpush1.bf16.msra.mxu0 0
    %4280 = vmatprep.subr.bf16.mxu0 0
    %4281 = vmatpush1.bf16.msra.mxu0 0
    %4282 = vmatprep.subr.bf16.mxu0 0
    %4283 = vmatpush1.bf16.msra.mxu0 0
    %4284 = vmatprep.subr.bf16.mxu0 0
    %4285 = vmatpush1.bf16.msra.mxu0 0
    %4286 = vmatprep.mubr.bf16.mxu0 0
    %4287 = vmatmul.mubr.bf16.gmra.mrb[0].mxu0 %v4098
    %v4288 = vpop.f32.mrb[0].mxu0
    %v4289 = vadd.f32 0.0, %v4288
    %v4290 = vpop.f32.mrb[0].mxu0
    %v4291 = vadd.f32 0.0, %v4290
    %v4292 = vpop.f32.mrb[0].mxu0
    %v4293 = vpop.f32.mrb[0].mxu0
    %4294 = vdwg.mxu0
    %v4295 = vadd.f32 %v4209, %v4248
    %v4296 = vadd.f32 %v4210, %v4250
    %v4297 = vadd.f32 %v4211, %v4289
    %v4298 = vadd.f32 %v4212, %v4291
    %v4299 = vxor.u32 %v4295, 2147483648
    %v4300 = vmul.f32 %v4299, 1.442695
    %v4301 = vpow.pop %v4300
    %v4302 = vadd.f32 %v4301, 1.0
    %v4303 = vrcp.pop %v4302
    %v4304 = vmul.f32 1.0, %v4303
    %v4305 = vxor.u32 %v4296, 2147483648
    %v4306 = vmul.f32 %v4305, 1.442695
    %v4307 = vpow.pop %v4306
    %v4308 = vadd.f32 %v4307, 1.0
    %v4309 = vrcp.pop %v4308
    %v4310 = vmul.f32 1.0, %v4309
    %v4311 = vtanh.pop %v4297
    %v4312 = vxor.u32 %v4298, 2147483648
    %v4313 = vmul.f32 %v4312, 1.442695
    %v4314 = vpow.pop %v4313
    %v4315 = vadd.f32 %v4314, 1.0
    %v4316 = vrcp.pop %v4315
    %v4317 = vmul.f32 1.0, %v4316
    %v4318 = vmul.f32 %v4310, %v4095
    %v4319 = vmul.f32 %v4304, %v4311
    %v4320 = vadd.f32 %v4318, %v4319
    %v4321 = vtanh.pop %v4320
    %v4322 = vmul.f32 %v4317, %v4321
    %v4323 = vpack.c.bf16 %v4322, %v4322
    %v4324 = vpack.c.bf16 %v4205, %v4205
    %4325 = vmatprep.subr.bf16.mxu0 %v1949
    %4326 = vmatpush1.bf16.msra.mxu0 %v1948
    %4327 = vmatprep.subr.bf16.mxu0 %v1953
    %4328 = vmatpush1.bf16.msra.mxu0 %v1952
    %4329 = vmatprep.subr.bf16.mxu0 %v1957
    %4330 = vmatpush1.bf16.msra.mxu0 %v1956
    %4331 = vmatprep.subr.bf16.mxu0 %v1961
    %4332 = vmatpush1.bf16.msra.mxu0 %v1960
    %4333 = vmatprep.subr.bf16.mxu0 %v1965
    %4334 = vmatpush1.bf16.msra.mxu0 %v1964
    %4335 = vmatprep.subr.bf16.mxu0 %v1969
    %4336 = vmatpush1.bf16.msra.mxu0 %v1968
    %4337 = vmatprep.subr.bf16.mxu0 %v1973
    %4338 = vmatpush1.bf16.msra.mxu0 %v1972
    %4339 = vmatprep.subr.bf16.mxu0 %v1977
    %4340 = vmatpush1.bf16.msra.mxu0 %v1976
    %4341 = vmatprep.subr.bf16.mxu0 %v1981
    %4342 = vmatpush1.bf16.msra.mxu0 %v1980
    %4343 = vmatprep.subr.bf16.mxu0 %v1985
    %4344 = vmatpush1.bf16.msra.mxu0 %v1984
    %4345 = vmatprep.subr.bf16.mxu0 %v1989
    %4346 = vmatpush1.bf16.msra.mxu0 %v1988
    %4347 = vmatprep.subr.bf16.mxu0 %v1993
    %4348 = vmatpush1.bf16.msra.mxu0 %v1992
    %4349 = vmatprep.subr.bf16.mxu0 %v1997
    %4350 = vmatpush1.bf16.msra.mxu0 %v1996
    %4351 = vmatprep.subr.bf16.mxu0 %v2001
    %4352 = vmatpush1.bf16.msra.mxu0 %v2000
    %4353 = vmatprep.subr.bf16.mxu0 %v2005
    %4354 = vmatpush1.bf16.msra.mxu0 %v2004
    %4355 = vmatprep.subr.bf16.mxu0 %v2009
    %4356 = vmatpush1.bf16.msra.mxu0 %v2008
    %4357 = vmatprep.mubr.bf16.mxu0 %v4324
    %4358 = vmatmul.mubr.bf16.gmra.mrb[0].mxu0 %v4323
    %v4359 = vpop.f32.mrb[0].mxu0
    %v4360 = vadd.f32 %v1471, %v4359
    %v4361 = vpop.f32.mrb[0].mxu0
    %v4362 = vadd.f32 %v1472, %v4361
    %v4363 = vpop.f32.mrb[0].mxu0
    %v4364 = vpop.f32.mrb[0].mxu0
    %4365 = vdwg.mxu0
    %4366 = vmatprep.subr.bf16.mxu0 %v1951
    %4367 = vmatpush1.bf16.msra.mxu0 %v1950
    %4368 = vmatprep.subr.bf16.mxu0 %v1955
    %4369 = vmatpush1.bf16.msra.mxu0 %v1954
    %4370 = vmatprep.subr.bf16.mxu0 %v1959
    %4371 = vmatpush1.bf16.msra.mxu0 %v1958
    %4372 = vmatprep.subr.bf16.mxu0 %v1963
    %4373 = vmatpush1.bf16.msra.mxu0 %v1962
    %4374 = vmatprep.subr.bf16.mxu0 %v1967
    %4375 = vmatpush1.bf16.msra.mxu0 %v1966
    %4376 = vmatprep.subr.bf16.mxu0 %v1971
    %4377 = vmatpush1.bf16.msra.mxu0 %v1970
    %4378 = vmatprep.subr.bf16.mxu0 %v1975
    %4379 = vmatpush1.bf16.msra.mxu0 %v1974
    %4380 = vmatprep.subr.bf16.mxu0 %v1979
    %4381 = vmatpush1.bf16.msra.mxu0 %v1978
    %4382 = vmatprep.subr.bf16.mxu0 %v1983
    %4383 = vmatpush1.bf16.msra.mxu0 %v1982
    %4384 = vmatprep.subr.bf16.mxu0 %v1987
    %4385 = vmatpush1.bf16.msra.mxu0 %v1986
    %4386 = vmatprep.subr.bf16.mxu0 %v1991
    %4387 = vmatpush1.bf16.msra.mxu0 %v1990
    %4388 = vmatprep.subr.bf16.mxu0 %v1995
    %4389 = vmatpush1.bf16.msra.mxu0 %v1994
    %4390 = vmatprep.subr.bf16.mxu0 %v1999
    %4391 = vmatpush1.bf16.msra.mxu0 %v1998
    %4392 = vmatprep.subr.bf16.mxu0 %v2003
    %4393 = vmatpush1.bf16.msra.mxu0 %v2002
    %4394 = vmatprep.subr.bf16.mxu0 %v2007
    %4395 = vmatpush1.bf16.msra.mxu0 %v2006
    %4396 = vmatprep.subr.bf16.mxu0 %v2011
    %4397 = vmatpush1.bf16.msra.mxu0 %v2010
    %4398 = vmatprep.mubr.bf16.mxu0 %v4324
    %4399 = vmatmul.mubr.bf16.gmra.mrb[0].mxu0 %v4323
    %v4400 = vpop.f32.mrb[0].mxu0
    %v4401 = vadd.f32 %v1473, %v4400
    %v4402 = vpop.f32.mrb[0].mxu0
    %v4403 = vadd.f32 %v1474, %v4402
    %v4404 = vpop.f32.mrb[0].mxu0
    %v4405 = vpop.f32.mrb[0].mxu0
    %4406 = vdwg.mxu0
    %v4407 = vxor.u32 %v4360, 2147483648
    %v4408 = vmul.f32 %v4407, 1.442695
    %v4409 = vpow.pop %v4408
    %v4410 = vadd.f32 %v4409, 1.0
    %v4411 = vrcp.pop %v4410
    %v4412 = vmul.f32 1.0, %v4411
    %v4413 = vxor.u32 %v4362, 2147483648
    %v4414 = vmul.f32 %v4413, 1.442695
    %v4415 = vpow.pop %v4414
    %v4416 = vadd.f32 %v4415, 1.0
    %v4417 = vrcp.pop %v4416
    %v4418 = vmul.f32 1.0, %v4417
    %v4419 = vtanh.pop %v4401
    %v4420 = vxor.u32 %v4403, 2147483648
    %v4421 = vmul.f32 %v4420, 1.442695
    %v4422 = vpow.pop %v4421
    %v4423 = vadd.f32 %v4422, 1.0
    %v4424 = vrcp.pop %v4423
    %v4425 = vmul.f32 1.0, %v4424
    %v4426 = vmul.f32 %v4418, %v4203
    %v4427 = vmul.f32 %v4412, %v4419
    %v4428 = vadd.f32 %v4426, %v4427
    %v4429 = vtanh.pop %v4428
    %v4430 = vmul.f32 %v4425, %v4429
    %s4431 = scalar_lea.vmem [#allocation3], 80
    %4432 = vst [vmem:[%s4431] sm:$0xff] %v4430
    %s4433 = scalar_lea.vmem [#allocation2], 352
    %v4434 = vld [vmem:[%s4433] sm:$0xff]
    %v4435 = vld [vmem:[%s4433 + $0x8] sm:$0xff]
    %v4436 = vld [vmem:[%s4433 + $0x10] sm:$0xff]
    %v4437 = vld [vmem:[%s4433 + $0x18] sm:$0xff]
    %4438 = vmatprep.subr.bf16.mxu0 %v1581
    %4439 = vmatpush1.bf16.msra.mxu0 %v1580
    %4440 = vmatprep.subr.bf16.mxu0 %v1585
    %4441 = vmatpush1.bf16.msra.mxu0 %v1584
    %4442 = vmatprep.subr.bf16.mxu0 %v1589
    %4443 = vmatpush1.bf16.msra.mxu0 %v1588
    %4444 = vmatprep.subr.bf16.mxu0 %v1593
    %4445 = vmatpush1.bf16.msra.mxu0 %v1592
    %4446 = vmatprep.subr.bf16.mxu0 %v1597
    %4447 = vmatpush1.bf16.msra.mxu0 %v1596
    %4448 = vmatprep.subr.bf16.mxu0 %v1601
    %4449 = vmatpush1.bf16.msra.mxu0 %v1600
    %4450 = vmatprep.subr.bf16.mxu0 %v1605
    %4451 = vmatpush1.bf16.msra.mxu0 %v1604
    %4452 = vmatprep.subr.bf16.mxu0 %v1609
    %4453 = vmatpush1.bf16.msra.mxu0 %v1608
    %4454 = vmatprep.subr.bf16.mxu0 0
    %4455 = vmatpush1.bf16.msra.mxu0 0
    %4456 = vmatprep.subr.bf16.mxu0 0
    %4457 = vmatpush1.bf16.msra.mxu0 0
    %4458 = vmatprep.subr.bf16.mxu0 0
    %4459 = vmatpush1.bf16.msra.mxu0 0
    %4460 = vmatprep.subr.bf16.mxu0 0
    %4461 = vmatpush1.bf16.msra.mxu0 0
    %4462 = vmatprep.subr.bf16.mxu0 0
    %4463 = vmatpush1.bf16.msra.mxu0 0
    %4464 = vmatprep.subr.bf16.mxu0 0
    %4465 = vmatpush1.bf16.msra.mxu0 0
    %4466 = vmatprep.subr.bf16.mxu0 0
    %4467 = vmatpush1.bf16.msra.mxu0 0
    %4468 = vmatprep.subr.bf16.mxu0 0
    %4469 = vmatpush1.bf16.msra.mxu0 0
    %4470 = vmatprep.mubr.bf16.mxu0 0
    %4471 = vmatmul.mubr.bf16.gmra.mrb[0].mxu0 %v4323
    %v4472 = vpop.f32.mrb[0].mxu0
    %v4473 = vadd.f32 0.0, %v4472
    %v4474 = vpop.f32.mrb[0].mxu0
    %v4475 = vadd.f32 0.0, %v4474
    %v4476 = vpop.f32.mrb[0].mxu0
    %v4477 = vpop.f32.mrb[0].mxu0
    %4478 = vdwg.mxu0
    %4479 = vmatprep.subr.bf16.mxu0 %v1583
    %4480 = vmatpush1.bf16.msra.mxu0 %v1582
    %4481 = vmatprep.subr.bf16.mxu0 %v1587
    %4482 = vmatpush1.bf16.msra.mxu0 %v1586
    %4483 = vmatprep.subr.bf16.mxu0 %v1591
    %4484 = vmatpush1.bf16.msra.mxu0 %v1590
    %4485 = vmatprep.subr.bf16.mxu0 %v1595
    %4486 = vmatpush1.bf16.msra.mxu0 %v1594
    %4487 = vmatprep.subr.bf16.mxu0 %v1599
    %4488 = vmatpush1.bf16.msra.mxu0 %v1598
    %4489 = vmatprep.subr.bf16.mxu0 %v1603
    %4490 = vmatpush1.bf16.msra.mxu0 %v1602
    %4491 = vmatprep.subr.bf16.mxu0 %v1607
    %4492 = vmatpush1.bf16.msra.mxu0 %v1606
    %4493 = vmatprep.subr.bf16.mxu0 %v1611
    %4494 = vmatpush1.bf16.msra.mxu0 %v1610
    %4495 = vmatprep.subr.bf16.mxu0 0
    %4496 = vmatpush1.bf16.msra.mxu0 0
    %4497 = vmatprep.subr.bf16.mxu0 0
    %4498 = vmatpush1.bf16.msra.mxu0 0
    %4499 = vmatprep.subr.bf16.mxu0 0
    %4500 = vmatpush1.bf16.msra.mxu0 0
    %4501 = vmatprep.subr.bf16.mxu0 0
    %4502 = vmatpush1.bf16.msra.mxu0 0
    %4503 = vmatprep.subr.bf16.mxu0 0
    %4504 = vmatpush1.bf16.msra.mxu0 0
    %4505 = vmatprep.subr.bf16.mxu0 0
    %4506 = vmatpush1.bf16.msra.mxu0 0
    %4507 = vmatprep.subr.bf16.mxu0 0
    %4508 = vmatpush1.bf16.msra.mxu0 0
    %4509 = vmatprep.subr.bf16.mxu0 0
    %4510 = vmatpush1.bf16.msra.mxu0 0
    %4511 = vmatprep.mubr.bf16.mxu0 0
    %4512 = vmatmul.mubr.bf16.gmra.mrb[0].mxu0 %v4323
    %v4513 = vpop.f32.mrb[0].mxu0
    %v4514 = vadd.f32 0.0, %v4513
    %v4515 = vpop.f32.mrb[0].mxu0
    %v4516 = vadd.f32 0.0, %v4515
    %v4517 = vpop.f32.mrb[0].mxu0
    %v4518 = vpop.f32.mrb[0].mxu0
    %4519 = vdwg.mxu0
    %v4520 = vadd.f32 %v4434, %v4473
    %v4521 = vadd.f32 %v4435, %v4475
    %v4522 = vadd.f32 %v4436, %v4514
    %v4523 = vadd.f32 %v4437, %v4516
    %v4524 = vxor.u32 %v4520, 2147483648
    %v4525 = vmul.f32 %v4524, 1.442695
    %v4526 = vpow.pop %v4525
    %v4527 = vadd.f32 %v4526, 1.0
    %v4528 = vrcp.pop %v4527
    %v4529 = vmul.f32 1.0, %v4528
    %v4530 = vxor.u32 %v4521, 2147483648
    %v4531 = vmul.f32 %v4530, 1.442695
    %v4532 = vpow.pop %v4531
    %v4533 = vadd.f32 %v4532, 1.0
    %v4534 = vrcp.pop %v4533
    %v4535 = vmul.f32 1.0, %v4534
    %v4536 = vtanh.pop %v4522
    %v4537 = vxor.u32 %v4523, 2147483648
    %v4538 = vmul.f32 %v4537, 1.442695
    %v4539 = vpow.pop %v4538
    %v4540 = vadd.f32 %v4539, 1.0
    %v4541 = vrcp.pop %v4540
    %v4542 = vmul.f32 1.0, %v4541
    %v4543 = vmul.f32 %v4535, %v4320
    %v4544 = vmul.f32 %v4529, %v4536
    %v4545 = vadd.f32 %v4543, %v4544
    %v4546 = vtanh.pop %v4545
    %v4547 = vmul.f32 %v4542, %v4546
    %v4548 = vpack.c.bf16 %v4547, %v4547
    %v4549 = vpack.c.bf16 %v4430, %v4430
    %4550 = vmatprep.subr.bf16.mxu0 %v1949
    %4551 = vmatpush1.bf16.msra.mxu0 %v1948
    %4552 = vmatprep.subr.bf16.mxu0 %v1953
    %4553 = vmatpush1.bf16.msra.mxu0 %v1952
    %4554 = vmatprep.subr.bf16.mxu0 %v1957
    %4555 = vmatpush1.bf16.msra.mxu0 %v1956
    %4556 = vmatprep.subr.bf16.mxu0 %v1961
    %4557 = vmatpush1.bf16.msra.mxu0 %v1960
    %4558 = vmatprep.subr.bf16.mxu0 %v1965
    %4559 = vmatpush1.bf16.msra.mxu0 %v1964
    %4560 = vmatprep.subr.bf16.mxu0 %v1969
    %4561 = vmatpush1.bf16.msra.mxu0 %v1968
    %4562 = vmatprep.subr.bf16.mxu0 %v1973
    %4563 = vmatpush1.bf16.msra.mxu0 %v1972
    %4564 = vmatprep.subr.bf16.mxu0 %v1977
    %4565 = vmatpush1.bf16.msra.mxu0 %v1976
    %4566 = vmatprep.subr.bf16.mxu0 %v1981
    %4567 = vmatpush1.bf16.msra.mxu0 %v1980
    %4568 = vmatprep.subr.bf16.mxu0 %v1985
    %4569 = vmatpush1.bf16.msra.mxu0 %v1984
    %4570 = vmatprep.subr.bf16.mxu0 %v1989
    %4571 = vmatpush1.bf16.msra.mxu0 %v1988
    %4572 = vmatprep.subr.bf16.mxu0 %v1993
    %4573 = vmatpush1.bf16.msra.mxu0 %v1992
    %4574 = vmatprep.subr.bf16.mxu0 %v1997
    %4575 = vmatpush1.bf16.msra.mxu0 %v1996
    %4576 = vmatprep.subr.bf16.mxu0 %v2001
    %4577 = vmatpush1.bf16.msra.mxu0 %v2000
    %4578 = vmatprep.subr.bf16.mxu0 %v2005
    %4579 = vmatpush1.bf16.msra.mxu0 %v2004
    %4580 = vmatprep.subr.bf16.mxu0 %v2009
    %4581 = vmatpush1.bf16.msra.mxu0 %v2008
    %4582 = vmatprep.mubr.bf16.mxu0 %v4549
    %4583 = vmatmul.mubr.bf16.gmra.mrb[0].mxu0 %v4548
    %v4584 = vpop.f32.mrb[0].mxu0
    %v4585 = vadd.f32 %v1471, %v4584
    %v4586 = vpop.f32.mrb[0].mxu0
    %v4587 = vadd.f32 %v1472, %v4586
    %v4588 = vpop.f32.mrb[0].mxu0
    %v4589 = vpop.f32.mrb[0].mxu0
    %4590 = vdwg.mxu0
    %4591 = vmatprep.subr.bf16.mxu0 %v1951
    %4592 = vmatpush1.bf16.msra.mxu0 %v1950
    %4593 = vmatprep.subr.bf16.mxu0 %v1955
    %4594 = vmatpush1.bf16.msra.mxu0 %v1954
    %4595 = vmatprep.subr.bf16.mxu0 %v1959
    %4596 = vmatpush1.bf16.msra.mxu0 %v1958
    %4597 = vmatprep.subr.bf16.mxu0 %v1963
    %4598 = vmatpush1.bf16.msra.mxu0 %v1962
    %4599 = vmatprep.subr.bf16.mxu0 %v1967
    %4600 = vmatpush1.bf16.msra.mxu0 %v1966
    %4601 = vmatprep.subr.bf16.mxu0 %v1971
    %4602 = vmatpush1.bf16.msra.mxu0 %v1970
    %4603 = vmatprep.subr.bf16.mxu0 %v1975
    %4604 = vmatpush1.bf16.msra.mxu0 %v1974
    %4605 = vmatprep.subr.bf16.mxu0 %v1979
    %4606 = vmatpush1.bf16.msra.mxu0 %v1978
    %4607 = vmatprep.subr.bf16.mxu0 %v1983
    %4608 = vmatpush1.bf16.msra.mxu0 %v1982
    %4609 = vmatprep.subr.bf16.mxu0 %v1987
    %4610 = vmatpush1.bf16.msra.mxu0 %v1986
    %4611 = vmatprep.subr.bf16.mxu0 %v1991
    %4612 = vmatpush1.bf16.msra.mxu0 %v1990
    %4613 = vmatprep.subr.bf16.mxu0 %v1995
    %4614 = vmatpush1.bf16.msra.mxu0 %v1994
    %4615 = vmatprep.subr.bf16.mxu0 %v1999
    %4616 = vmatpush1.bf16.msra.mxu0 %v1998
    %4617 = vmatprep.subr.bf16.mxu0 %v2003
    %4618 = vmatpush1.bf16.msra.mxu0 %v2002
    %4619 = vmatprep.subr.bf16.mxu0 %v2007
    %4620 = vmatpush1.bf16.msra.mxu0 %v2006
    %4621 = vmatprep.subr.bf16.mxu0 %v2011
    %4622 = vmatpush1.bf16.msra.mxu0 %v2010
    %4623 = vmatprep.mubr.bf16.mxu0 %v4549
    %4624 = vmatmul.mubr.bf16.gmra.mrb[0].mxu0 %v4548
    %v4625 = vpop.f32.mrb[0].mxu0
    %v4626 = vadd.f32 %v1473, %v4625
    %v4627 = vpop.f32.mrb[0].mxu0
    %v4628 = vadd.f32 %v1474, %v4627
    %v4629 = vpop.f32.mrb[0].mxu0
    %v4630 = vpop.f32.mrb[0].mxu0
    %4631 = vdwg.mxu0
    %v4632 = vxor.u32 %v4585, 2147483648
    %v4633 = vmul.f32 %v4632, 1.442695
    %v4634 = vpow.pop %v4633
    %v4635 = vadd.f32 %v4634, 1.0
    %v4636 = vrcp.pop %v4635
    %v4637 = vmul.f32 1.0, %v4636
    %v4638 = vxor.u32 %v4587, 2147483648
    %v4639 = vmul.f32 %v4638, 1.442695
    %v4640 = vpow.pop %v4639
    %v4641 = vadd.f32 %v4640, 1.0
    %v4642 = vrcp.pop %v4641
    %v4643 = vmul.f32 1.0, %v4642
    %v4644 = vtanh.pop %v4626
    %v4645 = vxor.u32 %v4628, 2147483648
    %v4646 = vmul.f32 %v4645, 1.442695
    %v4647 = vpow.pop %v4646
    %v4648 = vadd.f32 %v4647, 1.0
    %v4649 = vrcp.pop %v4648
    %v4650 = vmul.f32 1.0, %v4649
    %v4651 = vmul.f32 %v4643, %v4428
    %v4652 = vmul.f32 %v4637, %v4644
    %v4653 = vadd.f32 %v4651, %v4652
    %v4654 = vtanh.pop %v4653
    %v4655 = vmul.f32 %v4650, %v4654
    %s4656 = scalar_lea.vmem [#allocation3], 88
    %4657 = vst [vmem:[%s4656] sm:$0xff] %v4655
    %s4658 = scalar_lea.vmem [#allocation2], 384
    %v4659 = vld [vmem:[%s4658] sm:$0xff]
    %v4660 = vld [vmem:[%s4658 + $0x8] sm:$0xff]
    %v4661 = vld [vmem:[%s4658 + $0x10] sm:$0xff]
    %v4662 = vld [vmem:[%s4658 + $0x18] sm:$0xff]
    %4663 = vmatprep.subr.bf16.mxu0 %v1581
    %4664 = vmatpush1.bf16.msra.mxu0 %v1580
    %4665 = vmatprep.subr.bf16.mxu0 %v1585
    %4666 = vmatpush1.bf16.msra.mxu0 %v1584
    %4667 = vmatprep.subr.bf16.mxu0 %v1589
    %4668 = vmatpush1.bf16.msra.mxu0 %v1588
    %4669 = vmatprep.subr.bf16.mxu0 %v1593
    %4670 = vmatpush1.bf16.msra.mxu0 %v1592
    %4671 = vmatprep.subr.bf16.mxu0 %v1597
    %4672 = vmatpush1.bf16.msra.mxu0 %v1596
    %4673 = vmatprep.subr.bf16.mxu0 %v1601
    %4674 = vmatpush1.bf16.msra.mxu0 %v1600
    %4675 = vmatprep.subr.bf16.mxu0 %v1605
    %4676 = vmatpush1.bf16.msra.mxu0 %v1604
    %4677 = vmatprep.subr.bf16.mxu0 %v1609
    %4678 = vmatpush1.bf16.msra.mxu0 %v1608
    %4679 = vmatprep.subr.bf16.mxu0 0
    %4680 = vmatpush1.bf16.msra.mxu0 0
    %4681 = vmatprep.subr.bf16.mxu0 0
    %4682 = vmatpush1.bf16.msra.mxu0 0
    %4683 = vmatprep.subr.bf16.mxu0 0
    %4684 = vmatpush1.bf16.msra.mxu0 0
    %4685 = vmatprep.subr.bf16.mxu0 0
    %4686 = vmatpush1.bf16.msra.mxu0 0
    %4687 = vmatprep.subr.bf16.mxu0 0
    %4688 = vmatpush1.bf16.msra.mxu0 0
    %4689 = vmatprep.subr.bf16.mxu0 0
    %4690 = vmatpush1.bf16.msra.mxu0 0
    %4691 = vmatprep.subr.bf16.mxu0 0
    %4692 = vmatpush1.bf16.msra.mxu0 0
    %4693 = vmatprep.subr.bf16.mxu0 0
    %4694 = vmatpush1.bf16.msra.mxu0 0
    %4695 = vmatprep.mubr.bf16.mxu0 0
    %4696 = vmatmul.mubr.bf16.gmra.mrb[0].mxu0 %v4548
    %v4697 = vpop.f32.mrb[0].mxu0
    %v4698 = vadd.f32 0.0, %v4697
    %v4699 = vpop.f32.mrb[0].mxu0
    %v4700 = vadd.f32 0.0, %v4699
    %v4701 = vpop.f32.mrb[0].mxu0
    %v4702 = vpop.f32.mrb[0].mxu0
    %4703 = vdwg.mxu0
    %4704 = vmatprep.subr.bf16.mxu0 %v1583
    %4705 = vmatpush1.bf16.msra.mxu0 %v1582
    %4706 = vmatprep.subr.bf16.mxu0 %v1587
    %4707 = vmatpush1.bf16.msra.mxu0 %v1586
    %4708 = vmatprep.subr.bf16.mxu0 %v1591
    %4709 = vmatpush1.bf16.msra.mxu0 %v1590
    %4710 = vmatprep.subr.bf16.mxu0 %v1595
    %4711 = vmatpush1.bf16.msra.mxu0 %v1594
    %4712 = vmatprep.subr.bf16.mxu0 %v1599
    %4713 = vmatpush1.bf16.msra.mxu0 %v1598
    %4714 = vmatprep.subr.bf16.mxu0 %v1603
    %4715 = vmatpush1.bf16.msra.mxu0 %v1602
    %4716 = vmatprep.subr.bf16.mxu0 %v1607
    %4717 = vmatpush1.bf16.msra.mxu0 %v1606
    %4718 = vmatprep.subr.bf16.mxu0 %v1611
    %4719 = vmatpush1.bf16.msra.mxu0 %v1610
    %4720 = vmatprep.subr.bf16.mxu0 0
    %4721 = vmatpush1.bf16.msra.mxu0 0
    %4722 = vmatprep.subr.bf16.mxu0 0
    %4723 = vmatpush1.bf16.msra.mxu0 0
    %4724 = vmatprep.subr.bf16.mxu0 0
    %4725 = vmatpush1.bf16.msra.mxu0 0
    %4726 = vmatprep.subr.bf16.mxu0 0
    %4727 = vmatpush1.bf16.msra.mxu0 0
    %4728 = vmatprep.subr.bf16.mxu0 0
    %4729 = vmatpush1.bf16.msra.mxu0 0
    %4730 = vmatprep.subr.bf16.mxu0 0
    %4731 = vmatpush1.bf16.msra.mxu0 0
    %4732 = vmatprep.subr.bf16.mxu0 0
    %4733 = vmatpush1.bf16.msra.mxu0 0
    %4734 = vmatprep.subr.bf16.mxu0 0
    %4735 = vmatpush1.bf16.msra.mxu0 0
    %4736 = vmatprep.mubr.bf16.mxu0 0
    %4737 = vmatmul.mubr.bf16.gmra.mrb[0].mxu0 %v4548
    %v4738 = vpop.f32.mrb[0].mxu0
    %v4739 = vadd.f32 0.0, %v4738
    %v4740 = vpop.f32.mrb[0].mxu0
    %v4741 = vadd.f32 0.0, %v4740
    %v4742 = vpop.f32.mrb[0].mxu0
    %v4743 = vpop.f32.mrb[0].mxu0
    %4744 = vdwg.mxu0
    %v4745 = vadd.f32 %v4659, %v4698
    %v4746 = vadd.f32 %v4660, %v4700
    %v4747 = vadd.f32 %v4661, %v4739
    %v4748 = vadd.f32 %v4662, %v4741
    %v4749 = vxor.u32 %v4745, 2147483648
    %v4750 = vmul.f32 %v4749, 1.442695
    %v4751 = vpow.pop %v4750
    %v4752 = vadd.f32 %v4751, 1.0
    %v4753 = vrcp.pop %v4752
    %v4754 = vmul.f32 1.0, %v4753
    %v4755 = vxor.u32 %v4746, 2147483648
    %v4756 = vmul.f32 %v4755, 1.442695
    %v4757 = vpow.pop %v4756
    %v4758 = vadd.f32 %v4757, 1.0
    %v4759 = vrcp.pop %v4758
    %v4760 = vmul.f32 1.0, %v4759
    %v4761 = vtanh.pop %v4747
    %v4762 = vxor.u32 %v4748, 2147483648
    %v4763 = vmul.f32 %v4762, 1.442695
    %v4764 = vpow.pop %v4763
    %v4765 = vadd.f32 %v4764, 1.0
    %v4766 = vrcp.pop %v4765
    %v4767 = vmul.f32 1.0, %v4766
    %v4768 = vmul.f32 %v4760, %v4545
    %v4769 = vmul.f32 %v4754, %v4761
    %v4770 = vadd.f32 %v4768, %v4769
    %v4771 = vtanh.pop %v4770
    %v4772 = vmul.f32 %v4767, %v4771
    %v4773 = vpack.c.bf16 %v4772, %v4772
    %v4774 = vpack.c.bf16 %v4655, %v4655
    %4775 = vmatprep.subr.bf16.mxu0 %v1949
    %4776 = vmatpush1.bf16.msra.mxu0 %v1948
    %4777 = vmatprep.subr.bf16.mxu0 %v1953
    %4778 = vmatpush1.bf16.msra.mxu0 %v1952
    %4779 = vmatprep.subr.bf16.mxu0 %v1957
    %4780 = vmatpush1.bf16.msra.mxu0 %v1956
    %4781 = vmatprep.subr.bf16.mxu0 %v1961
    %4782 = vmatpush1.bf16.msra.mxu0 %v1960
    %4783 = vmatprep.subr.bf16.mxu0 %v1965
    %4784 = vmatpush1.bf16.msra.mxu0 %v1964
    %4785 = vmatprep.subr.bf16.mxu0 %v1969
    %4786 = vmatpush1.bf16.msra.mxu0 %v1968
    %4787 = vmatprep.subr.bf16.mxu0 %v1973
    %4788 = vmatpush1.bf16.msra.mxu0 %v1972
    %4789 = vmatprep.subr.bf16.mxu0 %v1977
    %4790 = vmatpush1.bf16.msra.mxu0 %v1976
    %4791 = vmatprep.subr.bf16.mxu0 %v1981
    %4792 = vmatpush1.bf16.msra.mxu0 %v1980
    %4793 = vmatprep.subr.bf16.mxu0 %v1985
    %4794 = vmatpush1.bf16.msra.mxu0 %v1984
    %4795 = vmatprep.subr.bf16.mxu0 %v1989
    %4796 = vmatpush1.bf16.msra.mxu0 %v1988
    %4797 = vmatprep.subr.bf16.mxu0 %v1993
    %4798 = vmatpush1.bf16.msra.mxu0 %v1992
    %4799 = vmatprep.subr.bf16.mxu0 %v1997
    %4800 = vmatpush1.bf16.msra.mxu0 %v1996
    %4801 = vmatprep.subr.bf16.mxu0 %v2001
    %4802 = vmatpush1.bf16.msra.mxu0 %v2000
    %4803 = vmatprep.subr.bf16.mxu0 %v2005
    %4804 = vmatpush1.bf16.msra.mxu0 %v2004
    %4805 = vmatprep.subr.bf16.mxu0 %v2009
    %4806 = vmatpush1.bf16.msra.mxu0 %v2008
    %4807 = vmatprep.mubr.bf16.mxu0 %v4774
    %4808 = vmatmul.mubr.bf16.gmra.mrb[0].mxu0 %v4773
    %v4809 = vpop.f32.mrb[0].mxu0
    %v4810 = vadd.f32 %v1471, %v4809
    %v4811 = vpop.f32.mrb[0].mxu0
    %v4812 = vadd.f32 %v1472, %v4811
    %v4813 = vpop.f32.mrb[0].mxu0
    %v4814 = vpop.f32.mrb[0].mxu0
    %4815 = vdwg.mxu0
    %4816 = vmatprep.subr.bf16.mxu0 %v1951
    %4817 = vmatpush1.bf16.msra.mxu0 %v1950
    %4818 = vmatprep.subr.bf16.mxu0 %v1955
    %4819 = vmatpush1.bf16.msra.mxu0 %v1954
    %4820 = vmatprep.subr.bf16.mxu0 %v1959
    %4821 = vmatpush1.bf16.msra.mxu0 %v1958
    %4822 = vmatprep.subr.bf16.mxu0 %v1963
    %4823 = vmatpush1.bf16.msra.mxu0 %v1962
    %4824 = vmatprep.subr.bf16.mxu0 %v1967
    %4825 = vmatpush1.bf16.msra.mxu0 %v1966
    %4826 = vmatprep.subr.bf16.mxu0 %v1971
    %4827 = vmatpush1.bf16.msra.mxu0 %v1970
    %4828 = vmatprep.subr.bf16.mxu0 %v1975
    %4829 = vmatpush1.bf16.msra.mxu0 %v1974
    %4830 = vmatprep.subr.bf16.mxu0 %v1979
    %4831 = vmatpush1.bf16.msra.mxu0 %v1978
    %4832 = vmatprep.subr.bf16.mxu0 %v1983
    %4833 = vmatpush1.bf16.msra.mxu0 %v1982
    %4834 = vmatprep.subr.bf16.mxu0 %v1987
    %4835 = vmatpush1.bf16.msra.mxu0 %v1986
    %4836 = vmatprep.subr.bf16.mxu0 %v1991
    %4837 = vmatpush1.bf16.msra.mxu0 %v1990
    %4838 = vmatprep.subr.bf16.mxu0 %v1995
    %4839 = vmatpush1.bf16.msra.mxu0 %v1994
    %4840 = vmatprep.subr.bf16.mxu0 %v1999
    %4841 = vmatpush1.bf16.msra.mxu0 %v1998
    %4842 = vmatprep.subr.bf16.mxu0 %v2003
    %4843 = vmatpush1.bf16.msra.mxu0 %v2002
    %4844 = vmatprep.subr.bf16.mxu0 %v2007
    %4845 = vmatpush1.bf16.msra.mxu0 %v2006
    %4846 = vmatprep.subr.bf16.mxu0 %v2011
    %4847 = vmatpush1.bf16.msra.mxu0 %v2010
    %4848 = vmatprep.mubr.bf16.mxu0 %v4774
    %4849 = vmatmul.mubr.bf16.gmra.mrb[0].mxu0 %v4773
    %v4850 = vpop.f32.mrb[0].mxu0
    %v4851 = vadd.f32 %v1473, %v4850
    %v4852 = vpop.f32.mrb[0].mxu0
    %v4853 = vadd.f32 %v1474, %v4852
    %v4854 = vpop.f32.mrb[0].mxu0
    %v4855 = vpop.f32.mrb[0].mxu0
    %4856 = vdwg.mxu0
    %v4857 = vxor.u32 %v4810, 2147483648
    %v4858 = vmul.f32 %v4857, 1.442695
    %v4859 = vpow.pop %v4858
    %v4860 = vadd.f32 %v4859, 1.0
    %v4861 = vrcp.pop %v4860
    %v4862 = vmul.f32 1.0, %v4861
    %v4863 = vxor.u32 %v4812, 2147483648
    %v4864 = vmul.f32 %v4863, 1.442695
    %v4865 = vpow.pop %v4864
    %v4866 = vadd.f32 %v4865, 1.0
    %v4867 = vrcp.pop %v4866
    %v4868 = vmul.f32 1.0, %v4867
    %v4869 = vtanh.pop %v4851
    %v4870 = vxor.u32 %v4853, 2147483648
    %v4871 = vmul.f32 %v4870, 1.442695
    %v4872 = vpow.pop %v4871
    %v4873 = vadd.f32 %v4872, 1.0
    %v4874 = vrcp.pop %v4873
    %v4875 = vmul.f32 1.0, %v4874
    %v4876 = vmul.f32 %v4868, %v4653
    %v4877 = vmul.f32 %v4862, %v4869
    %v4878 = vadd.f32 %v4876, %v4877
    %v4879 = vtanh.pop %v4878
    %v4880 = vmul.f32 %v4875, %v4879
    %s4881 = scalar_lea.vmem [#allocation3], 96
    %4882 = vst [vmem:[%s4881] sm:$0xff] %v4880
    %s4883 = scalar_lea.vmem [#allocation2], 416
    %v4884 = vld [vmem:[%s4883] sm:$0xff]
    %v4885 = vld [vmem:[%s4883 + $0x8] sm:$0xff]
    %v4886 = vld [vmem:[%s4883 + $0x10] sm:$0xff]
    %v4887 = vld [vmem:[%s4883 + $0x18] sm:$0xff]
    %4888 = vmatprep.subr.bf16.mxu0 %v1581
    %4889 = vmatpush1.bf16.msra.mxu0 %v1580
    %4890 = vmatprep.subr.bf16.mxu0 %v1585
    %4891 = vmatpush1.bf16.msra.mxu0 %v1584
    %4892 = vmatprep.subr.bf16.mxu0 %v1589
    %4893 = vmatpush1.bf16.msra.mxu0 %v1588
    %4894 = vmatprep.subr.bf16.mxu0 %v1593
    %4895 = vmatpush1.bf16.msra.mxu0 %v1592
    %4896 = vmatprep.subr.bf16.mxu0 %v1597
    %4897 = vmatpush1.bf16.msra.mxu0 %v1596
    %4898 = vmatprep.subr.bf16.mxu0 %v1601
    %4899 = vmatpush1.bf16.msra.mxu0 %v1600
    %4900 = vmatprep.subr.bf16.mxu0 %v1605
    %4901 = vmatpush1.bf16.msra.mxu0 %v1604
    %4902 = vmatprep.subr.bf16.mxu0 %v1609
    %4903 = vmatpush1.bf16.msra.mxu0 %v1608
    %4904 = vmatprep.subr.bf16.mxu0 0
    %4905 = vmatpush1.bf16.msra.mxu0 0
    %4906 = vmatprep.subr.bf16.mxu0 0
    %4907 = vmatpush1.bf16.msra.mxu0 0
    %4908 = vmatprep.subr.bf16.mxu0 0
    %4909 = vmatpush1.bf16.msra.mxu0 0
    %4910 = vmatprep.subr.bf16.mxu0 0
    %4911 = vmatpush1.bf16.msra.mxu0 0
    %4912 = vmatprep.subr.bf16.mxu0 0
    %4913 = vmatpush1.bf16.msra.mxu0 0
    %4914 = vmatprep.subr.bf16.mxu0 0
    %4915 = vmatpush1.bf16.msra.mxu0 0
    %4916 = vmatprep.subr.bf16.mxu0 0
    %4917 = vmatpush1.bf16.msra.mxu0 0
    %4918 = vmatprep.subr.bf16.mxu0 0
    %4919 = vmatpush1.bf16.msra.mxu0 0
    %4920 = vmatprep.mubr.bf16.mxu0 0
    %4921 = vmatmul.mubr.bf16.gmra.mrb[0].mxu0 %v4773
    %v4922 = vpop.f32.mrb[0].mxu0
    %v4923 = vadd.f32 0.0, %v4922
    %v4924 = vpop.f32.mrb[0].mxu0
    %v4925 = vadd.f32 0.0, %v4924
    %v4926 = vpop.f32.mrb[0].mxu0
    %v4927 = vpop.f32.mrb[0].mxu0
    %4928 = vdwg.mxu0
    %4929 = vmatprep.subr.bf16.mxu0 %v1583
    %4930 = vmatpush1.bf16.msra.mxu0 %v1582
    %4931 = vmatprep.subr.bf16.mxu0 %v1587
    %4932 = vmatpush1.bf16.msra.mxu0 %v1586
    %4933 = vmatprep.subr.bf16.mxu0 %v1591
    %4934 = vmatpush1.bf16.msra.mxu0 %v1590
    %4935 = vmatprep.subr.bf16.mxu0 %v1595
    %4936 = vmatpush1.bf16.msra.mxu0 %v1594
    %4937 = vmatprep.subr.bf16.mxu0 %v1599
    %4938 = vmatpush1.bf16.msra.mxu0 %v1598
    %4939 = vmatprep.subr.bf16.mxu0 %v1603
    %4940 = vmatpush1.bf16.msra.mxu0 %v1602
    %4941 = vmatprep.subr.bf16.mxu0 %v1607
    %4942 = vmatpush1.bf16.msra.mxu0 %v1606
    %4943 = vmatprep.subr.bf16.mxu0 %v1611
    %4944 = vmatpush1.bf16.msra.mxu0 %v1610
    %4945 = vmatprep.subr.bf16.mxu0 0
    %4946 = vmatpush1.bf16.msra.mxu0 0
    %4947 = vmatprep.subr.bf16.mxu0 0
    %4948 = vmatpush1.bf16.msra.mxu0 0
    %4949 = vmatprep.subr.bf16.mxu0 0
    %4950 = vmatpush1.bf16.msra.mxu0 0
    %4951 = vmatprep.subr.bf16.mxu0 0
    %4952 = vmatpush1.bf16.msra.mxu0 0
    %4953 = vmatprep.subr.bf16.mxu0 0
    %4954 = vmatpush1.bf16.msra.mxu0 0
    %4955 = vmatprep.subr.bf16.mxu0 0
    %4956 = vmatpush1.bf16.msra.mxu0 0
    %4957 = vmatprep.subr.bf16.mxu0 0
    %4958 = vmatpush1.bf16.msra.mxu0 0
    %4959 = vmatprep.subr.bf16.mxu0 0
    %4960 = vmatpush1.bf16.msra.mxu0 0
    %4961 = vmatprep.mubr.bf16.mxu0 0
    %4962 = vmatmul.mubr.bf16.gmra.mrb[0].mxu0 %v4773
    %v4963 = vpop.f32.mrb[0].mxu0
    %v4964 = vadd.f32 0.0, %v4963
    %v4965 = vpop.f32.mrb[0].mxu0
    %v4966 = vadd.f32 0.0, %v4965
    %v4967 = vpop.f32.mrb[0].mxu0
    %v4968 = vpop.f32.mrb[0].mxu0
    %4969 = vdwg.mxu0
    %v4970 = vadd.f32 %v4884, %v4923
    %v4971 = vadd.f32 %v4885, %v4925
    %v4972 = vadd.f32 %v4886, %v4964
    %v4973 = vadd.f32 %v4887, %v4966
    %v4974 = vxor.u32 %v4970, 2147483648
    %v4975 = vmul.f32 %v4974, 1.442695
    %v4976 = vpow.pop %v4975
    %v4977 = vadd.f32 %v4976, 1.0
    %v4978 = vrcp.pop %v4977
    %v4979 = vmul.f32 1.0, %v4978
    %v4980 = vxor.u32 %v4971, 2147483648
    %v4981 = vmul.f32 %v4980, 1.442695
    %v4982 = vpow.pop %v4981
    %v4983 = vadd.f32 %v4982, 1.0
    %v4984 = vrcp.pop %v4983
    %v4985 = vmul.f32 1.0, %v4984
    %v4986 = vtanh.pop %v4972
    %v4987 = vxor.u32 %v4973, 2147483648
    %v4988 = vmul.f32 %v4987, 1.442695
    %v4989 = vpow.pop %v4988
    %v4990 = vadd.f32 %v4989, 1.0
    %v4991 = vrcp.pop %v4990
    %v4992 = vmul.f32 1.0, %v4991
    %v4993 = vmul.f32 %v4985, %v4770
    %v4994 = vmul.f32 %v4979, %v4986
    %v4995 = vadd.f32 %v4993, %v4994
    %v4996 = vtanh.pop %v4995
    %v4997 = vmul.f32 %v4992, %v4996
    %v4998 = vpack.c.bf16 %v4997, %v4997
    %v4999 = vpack.c.bf16 %v4880, %v4880
    %5000 = vmatprep.subr.bf16.mxu0 %v1949
    %5001 = vmatpush1.bf16.msra.mxu0 %v1948
    %5002 = vmatprep.subr.bf16.mxu0 %v1953
    %5003 = vmatpush1.bf16.msra.mxu0 %v1952
    %5004 = vmatprep.subr.bf16.mxu0 %v1957
    %5005 = vmatpush1.bf16.msra.mxu0 %v1956
    %5006 = vmatprep.subr.bf16.mxu0 %v1961
    %5007 = vmatpush1.bf16.msra.mxu0 %v1960
    %5008 = vmatprep.subr.bf16.mxu0 %v1965
    %5009 = vmatpush1.bf16.msra.mxu0 %v1964
    %5010 = vmatprep.subr.bf16.mxu0 %v1969
    %5011 = vmatpush1.bf16.msra.mxu0 %v1968
    %5012 = vmatprep.subr.bf16.mxu0 %v1973
    %5013 = vmatpush1.bf16.msra.mxu0 %v1972
    %5014 = vmatprep.subr.bf16.mxu0 %v1977
    %5015 = vmatpush1.bf16.msra.mxu0 %v1976
    %5016 = vmatprep.subr.bf16.mxu0 %v1981
    %5017 = vmatpush1.bf16.msra.mxu0 %v1980
    %5018 = vmatprep.subr.bf16.mxu0 %v1985
    %5019 = vmatpush1.bf16.msra.mxu0 %v1984
    %5020 = vmatprep.subr.bf16.mxu0 %v1989
    %5021 = vmatpush1.bf16.msra.mxu0 %v1988
    %5022 = vmatprep.subr.bf16.mxu0 %v1993
    %5023 = vmatpush1.bf16.msra.mxu0 %v1992
    %5024 = vmatprep.subr.bf16.mxu0 %v1997
    %5025 = vmatpush1.bf16.msra.mxu0 %v1996
    %5026 = vmatprep.subr.bf16.mxu0 %v2001
    %5027 = vmatpush1.bf16.msra.mxu0 %v2000
    %5028 = vmatprep.subr.bf16.mxu0 %v2005
    %5029 = vmatpush1.bf16.msra.mxu0 %v2004
    %5030 = vmatprep.subr.bf16.mxu0 %v2009
    %5031 = vmatpush1.bf16.msra.mxu0 %v2008
    %5032 = vmatprep.mubr.bf16.mxu0 %v4999
    %5033 = vmatmul.mubr.bf16.gmra.mrb[0].mxu0 %v4998
    %v5034 = vpop.f32.mrb[0].mxu0
    %v5035 = vadd.f32 %v1471, %v5034
    %v5036 = vpop.f32.mrb[0].mxu0
    %v5037 = vadd.f32 %v1472, %v5036
    %v5038 = vpop.f32.mrb[0].mxu0
    %v5039 = vpop.f32.mrb[0].mxu0
    %5040 = vdwg.mxu0
    %5041 = vmatprep.subr.bf16.mxu0 %v1951
    %5042 = vmatpush1.bf16.msra.mxu0 %v1950
    %5043 = vmatprep.subr.bf16.mxu0 %v1955
    %5044 = vmatpush1.bf16.msra.mxu0 %v1954
    %5045 = vmatprep.subr.bf16.mxu0 %v1959
    %5046 = vmatpush1.bf16.msra.mxu0 %v1958
    %5047 = vmatprep.subr.bf16.mxu0 %v1963
    %5048 = vmatpush1.bf16.msra.mxu0 %v1962
    %5049 = vmatprep.subr.bf16.mxu0 %v1967
    %5050 = vmatpush1.bf16.msra.mxu0 %v1966
    %5051 = vmatprep.subr.bf16.mxu0 %v1971
    %5052 = vmatpush1.bf16.msra.mxu0 %v1970
    %5053 = vmatprep.subr.bf16.mxu0 %v1975
    %5054 = vmatpush1.bf16.msra.mxu0 %v1974
    %5055 = vmatprep.subr.bf16.mxu0 %v1979
    %5056 = vmatpush1.bf16.msra.mxu0 %v1978
    %5057 = vmatprep.subr.bf16.mxu0 %v1983
    %5058 = vmatpush1.bf16.msra.mxu0 %v1982
    %5059 = vmatprep.subr.bf16.mxu0 %v1987
    %5060 = vmatpush1.bf16.msra.mxu0 %v1986
    %5061 = vmatprep.subr.bf16.mxu0 %v1991
    %5062 = vmatpush1.bf16.msra.mxu0 %v1990
    %5063 = vmatprep.subr.bf16.mxu0 %v1995
    %5064 = vmatpush1.bf16.msra.mxu0 %v1994
    %5065 = vmatprep.subr.bf16.mxu0 %v1999
    %5066 = vmatpush1.bf16.msra.mxu0 %v1998
    %5067 = vmatprep.subr.bf16.mxu0 %v2003
    %5068 = vmatpush1.bf16.msra.mxu0 %v2002
    %5069 = vmatprep.subr.bf16.mxu0 %v2007
    %5070 = vmatpush1.bf16.msra.mxu0 %v2006
    %5071 = vmatprep.subr.bf16.mxu0 %v2011
    %5072 = vmatpush1.bf16.msra.mxu0 %v2010
    %5073 = vmatprep.mubr.bf16.mxu0 %v4999
    %5074 = vmatmul.mubr.bf16.gmra.mrb[0].mxu0 %v4998
    %v5075 = vpop.f32.mrb[0].mxu0
    %v5076 = vadd.f32 %v1473, %v5075
    %v5077 = vpop.f32.mrb[0].mxu0
    %v5078 = vadd.f32 %v1474, %v5077
    %v5079 = vpop.f32.mrb[0].mxu0
    %v5080 = vpop.f32.mrb[0].mxu0
    %5081 = vdwg.mxu0
    %v5082 = vxor.u32 %v5035, 2147483648
    %v5083 = vmul.f32 %v5082, 1.442695
    %v5084 = vpow.pop %v5083
    %v5085 = vadd.f32 %v5084, 1.0
    %v5086 = vrcp.pop %v5085
    %v5087 = vmul.f32 1.0, %v5086
    %v5088 = vxor.u32 %v5037, 2147483648
    %v5089 = vmul.f32 %v5088, 1.442695
    %v5090 = vpow.pop %v5089
    %v5091 = vadd.f32 %v5090, 1.0
    %v5092 = vrcp.pop %v5091
    %v5093 = vmul.f32 1.0, %v5092
    %v5094 = vtanh.pop %v5076
    %v5095 = vxor.u32 %v5078, 2147483648
    %v5096 = vmul.f32 %v5095, 1.442695
    %v5097 = vpow.pop %v5096
    %v5098 = vadd.f32 %v5097, 1.0
    %v5099 = vrcp.pop %v5098
    %v5100 = vmul.f32 1.0, %v5099
    %v5101 = vmul.f32 %v5093, %v4878
    %v5102 = vmul.f32 %v5087, %v5094
    %v5103 = vadd.f32 %v5101, %v5102
    %v5104 = vtanh.pop %v5103
    %v5105 = vmul.f32 %v5100, %v5104
    %s5106 = scalar_lea.vmem [#allocation3], 104
    %5107 = vst [vmem:[%s5106] sm:$0xff] %v5105
    %s5108 = scalar_lea.vmem [#allocation2], 448
    %v5109 = vld [vmem:[%s5108] sm:$0xff]
    %v5110 = vld [vmem:[%s5108 + $0x8] sm:$0xff]
    %v5111 = vld [vmem:[%s5108 + $0x10] sm:$0xff]
    %v5112 = vld [vmem:[%s5108 + $0x18] sm:$0xff]
    %5113 = vmatprep.subr.bf16.mxu0 %v1581
    %5114 = vmatpush1.bf16.msra.mxu0 %v1580
    %5115 = vmatprep.subr.bf16.mxu0 %v1585
    %5116 = vmatpush1.bf16.msra.mxu0 %v1584
    %5117 = vmatprep.subr.bf16.mxu0 %v1589
    %5118 = vmatpush1.bf16.msra.mxu0 %v1588
    %5119 = vmatprep.subr.bf16.mxu0 %v1593
    %5120 = vmatpush1.bf16.msra.mxu0 %v1592
    %5121 = vmatprep.subr.bf16.mxu0 %v1597
    %5122 = vmatpush1.bf16.msra.mxu0 %v1596
    %5123 = vmatprep.subr.bf16.mxu0 %v1601
    %5124 = vmatpush1.bf16.msra.mxu0 %v1600
    %5125 = vmatprep.subr.bf16.mxu0 %v1605
    %5126 = vmatpush1.bf16.msra.mxu0 %v1604
    %5127 = vmatprep.subr.bf16.mxu0 %v1609
    %5128 = vmatpush1.bf16.msra.mxu0 %v1608
    %5129 = vmatprep.subr.bf16.mxu0 0
    %5130 = vmatpush1.bf16.msra.mxu0 0
    %5131 = vmatprep.subr.bf16.mxu0 0
    %5132 = vmatpush1.bf16.msra.mxu0 0
    %5133 = vmatprep.subr.bf16.mxu0 0
    %5134 = vmatpush1.bf16.msra.mxu0 0
    %5135 = vmatprep.subr.bf16.mxu0 0
    %5136 = vmatpush1.bf16.msra.mxu0 0
    %5137 = vmatprep.subr.bf16.mxu0 0
    %5138 = vmatpush1.bf16.msra.mxu0 0
    %5139 = vmatprep.subr.bf16.mxu0 0
    %5140 = vmatpush1.bf16.msra.mxu0 0
    %5141 = vmatprep.subr.bf16.mxu0 0
    %5142 = vmatpush1.bf16.msra.mxu0 0
    %5143 = vmatprep.subr.bf16.mxu0 0
    %5144 = vmatpush1.bf16.msra.mxu0 0
    %5145 = vmatprep.mubr.bf16.mxu0 0
    %5146 = vmatmul.mubr.bf16.gmra.mrb[0].mxu0 %v4998
    %v5147 = vpop.f32.mrb[0].mxu0
    %v5148 = vadd.f32 0.0, %v5147
    %v5149 = vpop.f32.mrb[0].mxu0
    %v5150 = vadd.f32 0.0, %v5149
    %v5151 = vpop.f32.mrb[0].mxu0
    %v5152 = vpop.f32.mrb[0].mxu0
    %5153 = vdwg.mxu0
    %5154 = vmatprep.subr.bf16.mxu0 %v1583
    %5155 = vmatpush1.bf16.msra.mxu0 %v1582
    %5156 = vmatprep.subr.bf16.mxu0 %v1587
    %5157 = vmatpush1.bf16.msra.mxu0 %v1586
    %5158 = vmatprep.subr.bf16.mxu0 %v1591
    %5159 = vmatpush1.bf16.msra.mxu0 %v1590
    %5160 = vmatprep.subr.bf16.mxu0 %v1595
    %5161 = vmatpush1.bf16.msra.mxu0 %v1594
    %5162 = vmatprep.subr.bf16.mxu0 %v1599
    %5163 = vmatpush1.bf16.msra.mxu0 %v1598
    %5164 = vmatprep.subr.bf16.mxu0 %v1603
    %5165 = vmatpush1.bf16.msra.mxu0 %v1602
    %5166 = vmatprep.subr.bf16.mxu0 %v1607
    %5167 = vmatpush1.bf16.msra.mxu0 %v1606
    %5168 = vmatprep.subr.bf16.mxu0 %v1611
    %5169 = vmatpush1.bf16.msra.mxu0 %v1610
    %5170 = vmatprep.subr.bf16.mxu0 0
    %5171 = vmatpush1.bf16.msra.mxu0 0
    %5172 = vmatprep.subr.bf16.mxu0 0
    %5173 = vmatpush1.bf16.msra.mxu0 0
    %5174 = vmatprep.subr.bf16.mxu0 0
    %5175 = vmatpush1.bf16.msra.mxu0 0
    %5176 = vmatprep.subr.bf16.mxu0 0
    %5177 = vmatpush1.bf16.msra.mxu0 0
    %5178 = vmatprep.subr.bf16.mxu0 0
    %5179 = vmatpush1.bf16.msra.mxu0 0
    %5180 = vmatprep.subr.bf16.mxu0 0
    %5181 = vmatpush1.bf16.msra.mxu0 0
    %5182 = vmatprep.subr.bf16.mxu0 0
    %5183 = vmatpush1.bf16.msra.mxu0 0
    %5184 = vmatprep.subr.bf16.mxu0 0
    %5185 = vmatpush1.bf16.msra.mxu0 0
    %5186 = vmatprep.mubr.bf16.mxu0 0
    %5187 = vmatmul.mubr.bf16.gmra.mrb[0].mxu0 %v4998
    %v5188 = vpop.f32.mrb[0].mxu0
    %v5189 = vadd.f32 0.0, %v5188
    %v5190 = vpop.f32.mrb[0].mxu0
    %v5191 = vadd.f32 0.0, %v5190
    %v5192 = vpop.f32.mrb[0].mxu0
    %v5193 = vpop.f32.mrb[0].mxu0
    %5194 = vdwg.mxu0
    %v5195 = vadd.f32 %v5109, %v5148
    %v5196 = vadd.f32 %v5110, %v5150
    %v5197 = vadd.f32 %v5111, %v5189
    %v5198 = vadd.f32 %v5112, %v5191
    %v5199 = vxor.u32 %v5195, 2147483648
    %v5200 = vmul.f32 %v5199, 1.442695
    %v5201 = vpow.pop %v5200
    %v5202 = vadd.f32 %v5201, 1.0
    %v5203 = vrcp.pop %v5202
    %v5204 = vmul.f32 1.0, %v5203
    %v5205 = vxor.u32 %v5196, 2147483648
    %v5206 = vmul.f32 %v5205, 1.442695
    %v5207 = vpow.pop %v5206
    %v5208 = vadd.f32 %v5207, 1.0
    %v5209 = vrcp.pop %v5208
    %v5210 = vmul.f32 1.0, %v5209
    %v5211 = vtanh.pop %v5197
    %v5212 = vxor.u32 %v5198, 2147483648
    %v5213 = vmul.f32 %v5212, 1.442695
    %v5214 = vpow.pop %v5213
    %v5215 = vadd.f32 %v5214, 1.0
    %v5216 = vrcp.pop %v5215
    %v5217 = vmul.f32 1.0, %v5216
    %v5218 = vmul.f32 %v5210, %v4995
    %v5219 = vmul.f32 %v5204, %v5211
    %v5220 = vadd.f32 %v5218, %v5219
    %v5221 = vtanh.pop %v5220
    %v5222 = vmul.f32 %v5217, %v5221
    %v5223 = vpack.c.bf16 %v5222, %v5222
    %v5224 = vpack.c.bf16 %v5105, %v5105
    %5225 = vmatprep.subr.bf16.mxu0 %v1949
    %5226 = vmatpush1.bf16.msra.mxu0 %v1948
    %5227 = vmatprep.subr.bf16.mxu0 %v1953
    %5228 = vmatpush1.bf16.msra.mxu0 %v1952
    %5229 = vmatprep.subr.bf16.mxu0 %v1957
    %5230 = vmatpush1.bf16.msra.mxu0 %v1956
    %5231 = vmatprep.subr.bf16.mxu0 %v1961
    %5232 = vmatpush1.bf16.msra.mxu0 %v1960
    %5233 = vmatprep.subr.bf16.mxu0 %v1965
    %5234 = vmatpush1.bf16.msra.mxu0 %v1964
    %5235 = vmatprep.subr.bf16.mxu0 %v1969
    %5236 = vmatpush1.bf16.msra.mxu0 %v1968
    %5237 = vmatprep.subr.bf16.mxu0 %v1973
    %5238 = vmatpush1.bf16.msra.mxu0 %v1972
    %5239 = vmatprep.subr.bf16.mxu0 %v1977
    %5240 = vmatpush1.bf16.msra.mxu0 %v1976
    %5241 = vmatprep.subr.bf16.mxu0 %v1981
    %5242 = vmatpush1.bf16.msra.mxu0 %v1980
    %5243 = vmatprep.subr.bf16.mxu0 %v1985
    %5244 = vmatpush1.bf16.msra.mxu0 %v1984
    %5245 = vmatprep.subr.bf16.mxu0 %v1989
    %5246 = vmatpush1.bf16.msra.mxu0 %v1988
    %5247 = vmatprep.subr.bf16.mxu0 %v1993
    %5248 = vmatpush1.bf16.msra.mxu0 %v1992
    %5249 = vmatprep.subr.bf16.mxu0 %v1997
    %5250 = vmatpush1.bf16.msra.mxu0 %v1996
    %5251 = vmatprep.subr.bf16.mxu0 %v2001
    %5252 = vmatpush1.bf16.msra.mxu0 %v2000
    %5253 = vmatprep.subr.bf16.mxu0 %v2005
    %5254 = vmatpush1.bf16.msra.mxu0 %v2004
    %5255 = vmatprep.subr.bf16.mxu0 %v2009
    %5256 = vmatpush1.bf16.msra.mxu0 %v2008
    %5257 = vmatprep.mubr.bf16.mxu0 %v5224
    %5258 = vmatmul.mubr.bf16.gmra.mrb[0].mxu0 %v5223
    %v5259 = vpop.f32.mrb[0].mxu0
    %v5260 = vadd.f32 %v1471, %v5259
    %v5261 = vpop.f32.mrb[0].mxu0
    %v5262 = vadd.f32 %v1472, %v5261
    %v5263 = vpop.f32.mrb[0].mxu0
    %v5264 = vpop.f32.mrb[0].mxu0
    %5265 = vdwg.mxu0
    %5266 = vmatprep.subr.bf16.mxu0 %v1951
    %5267 = vmatpush1.bf16.msra.mxu0 %v1950
    %5268 = vmatprep.subr.bf16.mxu0 %v1955
    %5269 = vmatpush1.bf16.msra.mxu0 %v1954
    %5270 = vmatprep.subr.bf16.mxu0 %v1959
    %5271 = vmatpush1.bf16.msra.mxu0 %v1958
    %5272 = vmatprep.subr.bf16.mxu0 %v1963
    %5273 = vmatpush1.bf16.msra.mxu0 %v1962
    %5274 = vmatprep.subr.bf16.mxu0 %v1967
    %5275 = vmatpush1.bf16.msra.mxu0 %v1966
    %5276 = vmatprep.subr.bf16.mxu0 %v1971
    %5277 = vmatpush1.bf16.msra.mxu0 %v1970
    %5278 = vmatprep.subr.bf16.mxu0 %v1975
    %5279 = vmatpush1.bf16.msra.mxu0 %v1974
    %5280 = vmatprep.subr.bf16.mxu0 %v1979
    %5281 = vmatpush1.bf16.msra.mxu0 %v1978
    %5282 = vmatprep.subr.bf16.mxu0 %v1983
    %5283 = vmatpush1.bf16.msra.mxu0 %v1982
    %5284 = vmatprep.subr.bf16.mxu0 %v1987
    %5285 = vmatpush1.bf16.msra.mxu0 %v1986
    %5286 = vmatprep.subr.bf16.mxu0 %v1991
    %5287 = vmatpush1.bf16.msra.mxu0 %v1990
    %5288 = vmatprep.subr.bf16.mxu0 %v1995
    %5289 = vmatpush1.bf16.msra.mxu0 %v1994
    %5290 = vmatprep.subr.bf16.mxu0 %v1999
    %5291 = vmatpush1.bf16.msra.mxu0 %v1998
    %5292 = vmatprep.subr.bf16.mxu0 %v2003
    %5293 = vmatpush1.bf16.msra.mxu0 %v2002
    %5294 = vmatprep.subr.bf16.mxu0 %v2007
    %5295 = vmatpush1.bf16.msra.mxu0 %v2006
    %5296 = vmatprep.subr.bf16.mxu0 %v2011
    %5297 = vmatpush1.bf16.msra.mxu0 %v2010
    %5298 = vmatprep.mubr.bf16.mxu0 %v5224
    %5299 = vmatmul.mubr.bf16.gmra.mrb[0].mxu0 %v5223
    %v5300 = vpop.f32.mrb[0].mxu0
    %v5301 = vadd.f32 %v1473, %v5300
    %v5302 = vpop.f32.mrb[0].mxu0
    %v5303 = vadd.f32 %v1474, %v5302
    %v5304 = vpop.f32.mrb[0].mxu0
    %v5305 = vpop.f32.mrb[0].mxu0
    %5306 = vdwg.mxu0
    %v5307 = vxor.u32 %v5260, 2147483648
    %v5308 = vmul.f32 %v5307, 1.442695
    %v5309 = vpow.pop %v5308
    %v5310 = vadd.f32 %v5309, 1.0
    %v5311 = vrcp.pop %v5310
    %v5312 = vmul.f32 1.0, %v5311
    %v5313 = vxor.u32 %v5262, 2147483648
    %v5314 = vmul.f32 %v5313, 1.442695
    %v5315 = vpow.pop %v5314
    %v5316 = vadd.f32 %v5315, 1.0
    %v5317 = vrcp.pop %v5316
    %v5318 = vmul.f32 1.0, %v5317
    %v5319 = vtanh.pop %v5301
    %v5320 = vxor.u32 %v5303, 2147483648
    %v5321 = vmul.f32 %v5320, 1.442695
    %v5322 = vpow.pop %v5321
    %v5323 = vadd.f32 %v5322, 1.0
    %v5324 = vrcp.pop %v5323
    %v5325 = vmul.f32 1.0, %v5324
    %v5326 = vmul.f32 %v5318, %v5103
    %v5327 = vmul.f32 %v5312, %v5319
    %v5328 = vadd.f32 %v5326, %v5327
    %v5329 = vtanh.pop %v5328
    %v5330 = vmul.f32 %v5325, %v5329
    %s5331 = scalar_lea.vmem [#allocation3], 112
    %5332 = vst [vmem:[%s5331] sm:$0xff] %v5330
    %s5333 = scalar_lea.vmem [#allocation2], 480
    %v5334 = vld [vmem:[%s5333] sm:$0xff]
    %v5335 = vld [vmem:[%s5333 + $0x8] sm:$0xff]
    %v5336 = vld [vmem:[%s5333 + $0x10] sm:$0xff]
    %v5337 = vld [vmem:[%s5333 + $0x18] sm:$0xff]
    %5338 = vmatprep.subr.bf16.mxu0 %v1581
    %5339 = vmatpush1.bf16.msra.mxu0 %v1580
    %5340 = vmatprep.subr.bf16.mxu0 %v1585
    %5341 = vmatpush1.bf16.msra.mxu0 %v1584
    %5342 = vmatprep.subr.bf16.mxu0 %v1589
    %5343 = vmatpush1.bf16.msra.mxu0 %v1588
    %5344 = vmatprep.subr.bf16.mxu0 %v1593
    %5345 = vmatpush1.bf16.msra.mxu0 %v1592
    %5346 = vmatprep.subr.bf16.mxu0 %v1597
    %5347 = vmatpush1.bf16.msra.mxu0 %v1596
    %5348 = vmatprep.subr.bf16.mxu0 %v1601
    %5349 = vmatpush1.bf16.msra.mxu0 %v1600
    %5350 = vmatprep.subr.bf16.mxu0 %v1605
    %5351 = vmatpush1.bf16.msra.mxu0 %v1604
    %5352 = vmatprep.subr.bf16.mxu0 %v1609
    %5353 = vmatpush1.bf16.msra.mxu0 %v1608
    %5354 = vmatprep.subr.bf16.mxu0 0
    %5355 = vmatpush1.bf16.msra.mxu0 0
    %5356 = vmatprep.subr.bf16.mxu0 0
    %5357 = vmatpush1.bf16.msra.mxu0 0
    %5358 = vmatprep.subr.bf16.mxu0 0
    %5359 = vmatpush1.bf16.msra.mxu0 0
    %5360 = vmatprep.subr.bf16.mxu0 0
    %5361 = vmatpush1.bf16.msra.mxu0 0
    %5362 = vmatprep.subr.bf16.mxu0 0
    %5363 = vmatpush1.bf16.msra.mxu0 0
    %5364 = vmatprep.subr.bf16.mxu0 0
    %5365 = vmatpush1.bf16.msra.mxu0 0
    %5366 = vmatprep.subr.bf16.mxu0 0
    %5367 = vmatpush1.bf16.msra.mxu0 0
    %5368 = vmatprep.subr.bf16.mxu0 0
    %5369 = vmatpush1.bf16.msra.mxu0 0
    %5370 = vmatprep.mubr.bf16.mxu0 0
    %5371 = vmatmul.mubr.bf16.gmra.mrb[0].mxu0 %v5223
    %v5372 = vpop.f32.mrb[0].mxu0
    %v5373 = vadd.f32 0.0, %v5372
    %v5374 = vpop.f32.mrb[0].mxu0
    %v5375 = vadd.f32 0.0, %v5374
    %v5376 = vpop.f32.mrb[0].mxu0
    %v5377 = vpop.f32.mrb[0].mxu0
    %5378 = vdwg.mxu0
    %5379 = vmatprep.subr.bf16.mxu0 %v1583
    %5380 = vmatpush1.bf16.msra.mxu0 %v1582
    %5381 = vmatprep.subr.bf16.mxu0 %v1587
    %5382 = vmatpush1.bf16.msra.mxu0 %v1586
    %5383 = vmatprep.subr.bf16.mxu0 %v1591
    %5384 = vmatpush1.bf16.msra.mxu0 %v1590
    %5385 = vmatprep.subr.bf16.mxu0 %v1595
    %5386 = vmatpush1.bf16.msra.mxu0 %v1594
    %5387 = vmatprep.subr.bf16.mxu0 %v1599
    %5388 = vmatpush1.bf16.msra.mxu0 %v1598
    %5389 = vmatprep.subr.bf16.mxu0 %v1603
    %5390 = vmatpush1.bf16.msra.mxu0 %v1602
    %5391 = vmatprep.subr.bf16.mxu0 %v1607
    %5392 = vmatpush1.bf16.msra.mxu0 %v1606
    %5393 = vmatprep.subr.bf16.mxu0 %v1611
    %5394 = vmatpush1.bf16.msra.mxu0 %v1610
    %5395 = vmatprep.subr.bf16.mxu0 0
    %5396 = vmatpush1.bf16.msra.mxu0 0
    %5397 = vmatprep.subr.bf16.mxu0 0
    %5398 = vmatpush1.bf16.msra.mxu0 0
    %5399 = vmatprep.subr.bf16.mxu0 0
    %5400 = vmatpush1.bf16.msra.mxu0 0
    %5401 = vmatprep.subr.bf16.mxu0 0
    %5402 = vmatpush1.bf16.msra.mxu0 0
    %5403 = vmatprep.subr.bf16.mxu0 0
    %5404 = vmatpush1.bf16.msra.mxu0 0
    %5405 = vmatprep.subr.bf16.mxu0 0
    %5406 = vmatpush1.bf16.msra.mxu0 0
    %5407 = vmatprep.subr.bf16.mxu0 0
    %5408 = vmatpush1.bf16.msra.mxu0 0
    %5409 = vmatprep.subr.bf16.mxu0 0
    %5410 = vmatpush1.bf16.msra.mxu0 0
    %5411 = vmatprep.mubr.bf16.mxu0 0
    %5412 = vmatmul.mubr.bf16.gmra.mrb[0].mxu0 %v5223
    %v5413 = vpop.f32.mrb[0].mxu0
    %v5414 = vadd.f32 0.0, %v5413
    %v5415 = vpop.f32.mrb[0].mxu0
    %v5416 = vadd.f32 0.0, %v5415
    %v5417 = vpop.f32.mrb[0].mxu0
    %v5418 = vpop.f32.mrb[0].mxu0
    %5419 = vdwg.mxu0
    %v5420 = vadd.f32 %v5334, %v5373
    %v5421 = vadd.f32 %v5335, %v5375
    %v5422 = vadd.f32 %v5336, %v5414
    %v5423 = vadd.f32 %v5337, %v5416
    %v5424 = vxor.u32 %v5420, 2147483648
    %v5425 = vmul.f32 %v5424, 1.442695
    %v5426 = vpow.pop %v5425
    %v5427 = vadd.f32 %v5426, 1.0
    %v5428 = vrcp.pop %v5427
    %v5429 = vmul.f32 1.0, %v5428
    %v5430 = vxor.u32 %v5421, 2147483648
    %v5431 = vmul.f32 %v5430, 1.442695
    %v5432 = vpow.pop %v5431
    %v5433 = vadd.f32 %v5432, 1.0
    %v5434 = vrcp.pop %v5433
    %v5435 = vmul.f32 1.0, %v5434
    %v5436 = vtanh.pop %v5422
    %v5437 = vxor.u32 %v5423, 2147483648
    %v5438 = vmul.f32 %v5437, 1.442695
    %v5439 = vpow.pop %v5438
    %v5440 = vadd.f32 %v5439, 1.0
    %v5441 = vrcp.pop %v5440
    %v5442 = vmul.f32 1.0, %v5441
    %v5443 = vmul.f32 %v5435, %v5220
    %v5444 = vmul.f32 %v5429, %v5436
    %v5445 = vadd.f32 %v5443, %v5444
    %v5446 = vtanh.pop %v5445
    %v5447 = vmul.f32 %v5442, %v5446
    %v5448 = vpack.c.bf16 %v5447, %v5447
    %v5449 = vpack.c.bf16 %v5330, %v5330
    %5450 = vmatprep.subr.bf16.mxu0 %v1949
    %5451 = vmatpush1.bf16.msra.mxu0 %v1948
    %5452 = vmatprep.subr.bf16.mxu0 %v1953
    %5453 = vmatpush1.bf16.msra.mxu0 %v1952
    %5454 = vmatprep.subr.bf16.mxu0 %v1957
    %5455 = vmatpush1.bf16.msra.mxu0 %v1956
    %5456 = vmatprep.subr.bf16.mxu0 %v1961
    %5457 = vmatpush1.bf16.msra.mxu0 %v1960
    %5458 = vmatprep.subr.bf16.mxu0 %v1965
    %5459 = vmatpush1.bf16.msra.mxu0 %v1964
    %5460 = vmatprep.subr.bf16.mxu0 %v1969
    %5461 = vmatpush1.bf16.msra.mxu0 %v1968
    %5462 = vmatprep.subr.bf16.mxu0 %v1973
    %5463 = vmatpush1.bf16.msra.mxu0 %v1972
    %5464 = vmatprep.subr.bf16.mxu0 %v1977
    %5465 = vmatpush1.bf16.msra.mxu0 %v1976
    %5466 = vmatprep.subr.bf16.mxu0 %v1981
    %5467 = vmatpush1.bf16.msra.mxu0 %v1980
    %5468 = vmatprep.subr.bf16.mxu0 %v1985
    %5469 = vmatpush1.bf16.msra.mxu0 %v1984
    %5470 = vmatprep.subr.bf16.mxu0 %v1989
    %5471 = vmatpush1.bf16.msra.mxu0 %v1988
    %5472 = vmatprep.subr.bf16.mxu0 %v1993
    %5473 = vmatpush1.bf16.msra.mxu0 %v1992
    %5474 = vmatprep.subr.bf16.mxu0 %v1997
    %5475 = vmatpush1.bf16.msra.mxu0 %v1996
    %5476 = vmatprep.subr.bf16.mxu0 %v2001
    %5477 = vmatpush1.bf16.msra.mxu0 %v2000
    %5478 = vmatprep.subr.bf16.mxu0 %v2005
    %5479 = vmatpush1.bf16.msra.mxu0 %v2004
    %5480 = vmatprep.subr.bf16.mxu0 %v2009
    %5481 = vmatpush1.bf16.msra.mxu0 %v2008
    %5482 = vmatprep.mubr.bf16.mxu0 %v5449
    %5483 = vmatmul.mubr.bf16.gmra.mrb[0].mxu0 %v5448
    %v5484 = vpop.f32.mrb[0].mxu0
    %v5485 = vadd.f32 %v1471, %v5484
    %v5486 = vpop.f32.mrb[0].mxu0
    %v5487 = vadd.f32 %v1472, %v5486
    %v5488 = vpop.f32.mrb[0].mxu0
    %v5489 = vpop.f32.mrb[0].mxu0
    %5490 = vdwg.mxu0
    %5491 = vmatprep.subr.bf16.mxu0 %v1951
    %5492 = vmatpush1.bf16.msra.mxu0 %v1950
    %5493 = vmatprep.subr.bf16.mxu0 %v1955
    %5494 = vmatpush1.bf16.msra.mxu0 %v1954
    %5495 = vmatprep.subr.bf16.mxu0 %v1959
    %5496 = vmatpush1.bf16.msra.mxu0 %v1958
    %5497 = vmatprep.subr.bf16.mxu0 %v1963
    %5498 = vmatpush1.bf16.msra.mxu0 %v1962
    %5499 = vmatprep.subr.bf16.mxu0 %v1967
    %5500 = vmatpush1.bf16.msra.mxu0 %v1966
    %5501 = vmatprep.subr.bf16.mxu0 %v1971
    %5502 = vmatpush1.bf16.msra.mxu0 %v1970
    %5503 = vmatprep.subr.bf16.mxu0 %v1975
    %5504 = vmatpush1.bf16.msra.mxu0 %v1974
    %5505 = vmatprep.subr.bf16.mxu0 %v1979
    %5506 = vmatpush1.bf16.msra.mxu0 %v1978
    %5507 = vmatprep.subr.bf16.mxu0 %v1983
    %5508 = vmatpush1.bf16.msra.mxu0 %v1982
    %5509 = vmatprep.subr.bf16.mxu0 %v1987
    %5510 = vmatpush1.bf16.msra.mxu0 %v1986
    %5511 = vmatprep.subr.bf16.mxu0 %v1991
    %5512 = vmatpush1.bf16.msra.mxu0 %v1990
    %5513 = vmatprep.subr.bf16.mxu0 %v1995
    %5514 = vmatpush1.bf16.msra.mxu0 %v1994
    %5515 = vmatprep.subr.bf16.mxu0 %v1999
    %5516 = vmatpush1.bf16.msra.mxu0 %v1998
    %5517 = vmatprep.subr.bf16.mxu0 %v2003
    %5518 = vmatpush1.bf16.msra.mxu0 %v2002
    %5519 = vmatprep.subr.bf16.mxu0 %v2007
    %5520 = vmatpush1.bf16.msra.mxu0 %v2006
    %5521 = vmatprep.subr.bf16.mxu0 %v2011
    %5522 = vmatpush1.bf16.msra.mxu0 %v2010
    %5523 = vmatprep.mubr.bf16.mxu0 %v5449
    %5524 = vmatmul.mubr.bf16.gmra.mrb[0].mxu0 %v5448
    %v5525 = vpop.f32.mrb[0].mxu0
    %v5526 = vadd.f32 %v1473, %v5525
    %v5527 = vpop.f32.mrb[0].mxu0
    %v5528 = vadd.f32 %v1474, %v5527
    %v5529 = vpop.f32.mrb[0].mxu0
    %v5530 = vpop.f32.mrb[0].mxu0
    %5531 = vdwg.mxu0
    %v5532 = vxor.u32 %v5485, 2147483648
    %v5533 = vmul.f32 %v5532, 1.442695
    %v5534 = vpow.pop %v5533
    %v5535 = vadd.f32 %v5534, 1.0
    %v5536 = vrcp.pop %v5535
    %v5537 = vmul.f32 1.0, %v5536
    %v5538 = vxor.u32 %v5487, 2147483648
    %v5539 = vmul.f32 %v5538, 1.442695
    %v5540 = vpow.pop %v5539
    %v5541 = vadd.f32 %v5540, 1.0
    %v5542 = vrcp.pop %v5541
    %v5543 = vmul.f32 1.0, %v5542
    %v5544 = vtanh.pop %v5526
    %v5545 = vxor.u32 %v5528, 2147483648
    %v5546 = vmul.f32 %v5545, 1.442695
    %v5547 = vpow.pop %v5546
    %v5548 = vadd.f32 %v5547, 1.0
    %v5549 = vrcp.pop %v5548
    %v5550 = vmul.f32 1.0, %v5549
    %v5551 = vmul.f32 %v5543, %v5328
    %v5552 = vmul.f32 %v5537, %v5544
    %v5553 = vadd.f32 %v5551, %v5552
    %v5554 = vtanh.pop %v5553
    %v5555 = vmul.f32 %v5550, %v5554
    %s5556 = scalar_lea.vmem [#allocation3], 120
    %5557 = vst [vmem:[%s5556] sm:$0xff] %v5555
    %v5558 = vld [vmem:[#allocation3] sm:$0xff]
    %v5559 = vld [vmem:[#allocation3 + $0x8] sm:$0xff]
    %v5560 = vld [vmem:[#allocation3 + $0x10] sm:$0xff]
    %v5561 = vld [vmem:[#allocation3 + $0x18] sm:$0xff]
    %v5562 = vld [vmem:[#allocation3 + $0x20] sm:$0xff]
    %v5563 = vld [vmem:[#allocation3 + $0x28] sm:$0xff]
    %v5564 = vld [vmem:[#allocation3 + $0x30] sm:$0xff]
    %v5565 = vld [vmem:[#allocation3 + $0x38] sm:$0xff]
    %v5566 = vld [vmem:[#allocation3 + $0x40] sm:$0xff]
    %v5567 = vld [vmem:[#allocation3 + $0x48] sm:$0xff]
    %v5568 = vld [vmem:[#allocation3 + $0x50] sm:$0xff]
    %v5569 = vld [vmem:[#allocation3 + $0x58] sm:$0xff]
    %v5570 = vld [vmem:[#allocation3 + $0x60] sm:$0xff]
    %v5571 = vld [vmem:[#allocation3 + $0x68] sm:$0xff]
    %v5572 = vld [vmem:[#allocation3 + $0x70] sm:$0xff]
    %v5573 = vld [vmem:[#allocation3 + $0x78] sm:$0xff]
    %v5574 = vpack.c.bf16 %v5559, %v5558
    %v5575 = vpack.c.bf16 %v5561, %v5560
    %v5576 = vpack.c.bf16 %v5563, %v5562
    %v5577 = vpack.c.bf16 %v5565, %v5564
    %v5578 = vpack.c.bf16 %v5567, %v5566
    %v5579 = vpack.c.bf16 %v5569, %v5568
    %v5580 = vpack.c.bf16 %v5571, %v5570
    %v5581 = vpack.c.bf16 %v5573, %v5572
    %v5582 = vld [vmem:[#allocation9] sm:$0xff]
    %v5583 = vld [vmem:[#allocation9 + $0x8] sm:$0xf]
    %v5584 = vld [vmem:[#allocation9 + $0xc] sm:$0xff]
    %v5585 = vld [vmem:[#allocation9 + $0x14] sm:$0xf]
    %v5586 = vld [vmem:[#allocation9 + $0x18] sm:$0xff]
    %v5587 = vld [vmem:[#allocation9 + $0x20] sm:$0xf]
    %v5588 = vld [vmem:[#allocation9 + $0x24] sm:$0xff]
    %v5589 = vld [vmem:[#allocation9 + $0x2c] sm:$0xf]
    %v5590 = vld [vmem:[#allocation9 + $0x30] sm:$0xff]
    %v5591 = vld [vmem:[#allocation9 + $0x38] sm:$0xf]
    %v5592 = vld [vmem:[#allocation9 + $0x3c] sm:$0xff]
    %v5593 = vld [vmem:[#allocation9 + $0x44] sm:$0xf]
    %v5594 = vld [vmem:[#allocation9 + $0x48] sm:$0xff]
    %v5595 = vld [vmem:[#allocation9 + $0x50] sm:$0xf]
    %v5596 = vld [vmem:[#allocation9 + $0x54] sm:$0xff]
    %v5597 = vld [vmem:[#allocation9 + $0x5c] sm:$0xf]
    %v5598 = vld [vmem:[#allocation9 + $0x60] sm:$0xff]
    %v5599 = vld [vmem:[#allocation9 + $0x68] sm:$0xf]
    %v5600 = vld [vmem:[#allocation9 + $0x6c] sm:$0xff]
    %v5601 = vld [vmem:[#allocation9 + $0x74] sm:$0xf]
    %v5602 = vld [vmem:[#allocation9 + $0x78] sm:$0xff]
    %v5603 = vld [vmem:[#allocation9 + $0x80] sm:$0xf]
    %v5604 = vld [vmem:[#allocation9 + $0x84] sm:$0xff]
    %v5605 = vld [vmem:[#allocation9 + $0x8c] sm:$0xf]
    %v5606 = vld [vmem:[#allocation9 + $0x90] sm:$0xff]
    %v5607 = vld [vmem:[#allocation9 + $0x98] sm:$0xf]
    %v5608 = vld [vmem:[#allocation9 + $0x9c] sm:$0xff]
    %v5609 = vld [vmem:[#allocation9 + $0xa4] sm:$0xf]
    %v5610 = vld [vmem:[#allocation9 + $0xa8] sm:$0xff]
    %v5611 = vld [vmem:[#allocation9 + $0xb0] sm:$0xf]
    %v5612 = vld [vmem:[#allocation9 + $0xb4] sm:$0xff]
    %v5613 = vld [vmem:[#allocation9 + $0xbc] sm:$0xf]
    %v5614 = vld [vmem:[#allocation10] sm:$0x7]
    %v5616 = vlaneseq
    %v5617 = vshrl.u32 %v5616, 7
    %v5618 = vsub.s32 0, %v5617
    %v5619 = vrot.slane %v5614, %v5618
    %v5620 = vlaneseq
    %v5621 = vshrl.u32 %v5620, 7
    %v5622 = vsub.s32 1, %v5621
    %v5623 = vrot.slane %v5614, %v5622
    %v5624 = vlaneseq
    %v5625 = vshrl.u32 %v5624, 7
    %v5626 = vsub.s32 2, %v5625
    %v5627 = vrot.slane %v5614, %v5626
    %v5663 = vunpack.c.l.b16 %v5582
    %v5664 = vunpack.c.h.b16 %v5582
    %v5665 = vunpack.c.l.b16 %v5583
    %v5666 = vunpack.c.l.b16 %v5584
    %v5667 = vunpack.c.h.b16 %v5584
    %v5668 = vunpack.c.l.b16 %v5585
    %v5669 = vunpack.c.l.b16 %v5586
    %v5670 = vunpack.c.h.b16 %v5586
    %v5671 = vunpack.c.l.b16 %v5587
    %v5672 = vunpack.c.l.b16 %v5588
    %v5673 = vunpack.c.h.b16 %v5588
    %v5674 = vunpack.c.l.b16 %v5589
    %v5675 = vunpack.c.l.b16 %v5590
    %v5676 = vunpack.c.h.b16 %v5590
    %v5677 = vunpack.c.l.b16 %v5591
    %v5678 = vunpack.c.l.b16 %v5592
    %v5679 = vunpack.c.h.b16 %v5592
    %v5680 = vunpack.c.l.b16 %v5593
    %v5681 = vunpack.c.l.b16 %v5594
    %v5682 = vunpack.c.h.b16 %v5594
    %v5683 = vunpack.c.l.b16 %v5595
    %v5684 = vunpack.c.l.b16 %v5596
    %v5685 = vunpack.c.h.b16 %v5596
    %v5686 = vunpack.c.l.b16 %v5597
    %v5687 = vunpack.c.l.b16 %v5598
    %v5688 = vunpack.c.h.b16 %v5598
    %v5689 = vunpack.c.l.b16 %v5599
    %v5690 = vunpack.c.l.b16 %v5600
    %v5691 = vunpack.c.h.b16 %v5600
    %v5692 = vunpack.c.l.b16 %v5601
    %v5693 = vunpack.c.l.b16 %v5602
    %v5694 = vunpack.c.h.b16 %v5602
    %v5695 = vunpack.c.l.b16 %v5603
    %v5696 = vunpack.c.l.b16 %v5604
    %v5697 = vunpack.c.h.b16 %v5604
    %v5698 = vunpack.c.l.b16 %v5605
    %v5699 = vunpack.c.l.b16 %v5606
    %v5700 = vunpack.c.h.b16 %v5606
    %v5701 = vunpack.c.l.b16 %v5607
    %v5702 = vunpack.c.l.b16 %v5608
    %v5703 = vunpack.c.h.b16 %v5608
    %v5704 = vunpack.c.l.b16 %v5609
    %v5705 = vunpack.c.l.b16 %v5610
    %v5706 = vunpack.c.h.b16 %v5610
    %v5707 = vunpack.c.l.b16 %v5611
    %v5708 = vunpack.c.l.b16 %v5612
    %v5709 = vunpack.c.h.b16 %v5612
    %v5710 = vunpack.c.l.b16 %v5613
    %v5711 = vpack.c.b16 %v5666, %v5663
    %v5712 = vpack.c.b16 %v5667, %v5664
    %v5713 = vpack.c.b16 %v5668, %v5665
    %v5714 = vpack.c.b16 %v5672, %v5669
    %v5715 = vpack.c.b16 %v5673, %v5670
    %v5716 = vpack.c.b16 %v5674, %v5671
    %v5717 = vpack.c.b16 %v5678, %v5675
    %v5718 = vpack.c.b16 %v5679, %v5676
    %v5719 = vpack.c.b16 %v5680, %v5677
    %v5720 = vpack.c.b16 %v5684, %v5681
    %v5721 = vpack.c.b16 %v5685, %v5682
    %v5722 = vpack.c.b16 %v5686, %v5683
    %v5723 = vpack.c.b16 %v5690, %v5687
    %v5724 = vpack.c.b16 %v5691, %v5688
    %v5725 = vpack.c.b16 %v5692, %v5689
    %v5726 = vpack.c.b16 %v5696, %v5693
    %v5727 = vpack.c.b16 %v5697, %v5694
    %v5728 = vpack.c.b16 %v5698, %v5695
    %v5729 = vpack.c.b16 %v5702, %v5699
    %v5730 = vpack.c.b16 %v5703, %v5700
    %v5731 = vpack.c.b16 %v5704, %v5701
    %v5732 = vpack.c.b16 %v5708, %v5705
    %v5733 = vpack.c.b16 %v5709, %v5706
    %v5734 = vpack.c.b16 %v5710, %v5707
    %5759 = vmatprep.subr.bf16.mxu0 %v5712
    %5760 = vmatpush1.bf16.msra.mxu0 %v5711
    %5761 = vmatprep.subr.bf16.mxu0 %v5715
    %5762 = vmatpush1.bf16.msra.mxu0 %v5714
    %5763 = vmatprep.subr.bf16.mxu0 %v5718
    %5764 = vmatpush1.bf16.msra.mxu0 %v5717
    %5765 = vmatprep.subr.bf16.mxu0 %v5721
    %5766 = vmatpush1.bf16.msra.mxu0 %v5720
    %5767 = vmatprep.subr.bf16.mxu0 %v5724
    %5768 = vmatpush1.bf16.msra.mxu0 %v5723
    %5769 = vmatprep.subr.bf16.mxu0 %v5727
    %5770 = vmatpush1.bf16.msra.mxu0 %v5726
    %5771 = vmatprep.subr.bf16.mxu0 %v5730
    %5772 = vmatpush1.bf16.msra.mxu0 %v5729
    %5773 = vmatprep.subr.bf16.mxu0 %v5733
    %5774 = vmatpush1.bf16.msra.mxu0 %v5732
    %5775 = vmatprep.subr.bf16.mxu0 0
    %5776 = vmatpush1.bf16.msra.mxu0 0
    %5777 = vmatprep.subr.bf16.mxu0 0
    %5778 = vmatpush1.bf16.msra.mxu0 0
    %5779 = vmatprep.subr.bf16.mxu0 0
    %5780 = vmatpush1.bf16.msra.mxu0 0
    %5781 = vmatprep.subr.bf16.mxu0 0
    %5782 = vmatpush1.bf16.msra.mxu0 0
    %5783 = vmatprep.subr.bf16.mxu0 0
    %5784 = vmatpush1.bf16.msra.mxu0 0
    %5785 = vmatprep.subr.bf16.mxu0 0
    %5786 = vmatpush1.bf16.msra.mxu0 0
    %5787 = vmatprep.subr.bf16.mxu0 0
    %5788 = vmatpush1.bf16.msra.mxu0 0
    %5789 = vmatprep.subr.bf16.mxu0 0
    %5790 = vmatpush1.bf16.msra.mxu0 0
    %5791 = vmatprep.mubr.bf16.mxu0 0
    %5792 = vmatmul.mubr.bf16.gmra.mrb[0].mxu0 %v5574
    %v5793 = vpop.f32.mrb[0].mxu0
    %v5794 = vadd.f32 %v5619, %v5793
    %v5795 = vpop.f32.mrb[0].mxu0
    %v5796 = vadd.f32 %v5623, %v5795
    %v5797 = vpop.f32.mrb[0].mxu0
    %v5798 = vadd.f32 %v5619, %v5797
    %v5799 = vpop.f32.mrb[0].mxu0
    %v5800 = vadd.f32 %v5623, %v5799
    %5801 = vmatprep.mubr.bf16.mxu0 0
    %5802 = vmatmul.mubr.bf16.gmra.mrb[0].mxu0 %v5575
    %v5803 = vpop.f32.mrb[0].mxu0
    %v5804 = vadd.f32 %v5619, %v5803
    %v5805 = vpop.f32.mrb[0].mxu0
    %v5806 = vadd.f32 %v5623, %v5805
    %v5807 = vpop.f32.mrb[0].mxu0
    %v5808 = vadd.f32 %v5619, %v5807
    %v5809 = vpop.f32.mrb[0].mxu0
    %v5810 = vadd.f32 %v5623, %v5809
    %5811 = vmatprep.mubr.bf16.mxu0 0
    %5812 = vmatmul.mubr.bf16.gmra.mrb[0].mxu0 %v5576
    %v5813 = vpop.f32.mrb[0].mxu0
    %v5814 = vadd.f32 %v5619, %v5813
    %v5815 = vpop.f32.mrb[0].mxu0
    %v5816 = vadd.f32 %v5623, %v5815
    %v5817 = vpop.f32.mrb[0].mxu0
    %v5818 = vadd.f32 %v5619, %v5817
    %v5819 = vpop.f32.mrb[0].mxu0
    %v5820 = vadd.f32 %v5623, %v5819
    %5821 = vmatprep.mubr.bf16.mxu0 0
    %5822 = vmatmul.mubr.bf16.gmra.mrb[0].mxu0 %v5577
    %v5823 = vpop.f32.mrb[0].mxu0
    %v5824 = vadd.f32 %v5619, %v5823
    %v5825 = vpop.f32.mrb[0].mxu0
    %v5826 = vadd.f32 %v5623, %v5825
    %v5827 = vpop.f32.mrb[0].mxu0
    %v5828 = vadd.f32 %v5619, %v5827
    %v5829 = vpop.f32.mrb[0].mxu0
    %v5830 = vadd.f32 %v5623, %v5829
    %5831 = vmatprep.mubr.bf16.mxu0 0
    %5832 = vmatmul.mubr.bf16.gmra.mrb[0].mxu0 %v5578
    %v5833 = vpop.f32.mrb[0].mxu0
    %v5834 = vadd.f32 %v5619, %v5833
    %v5835 = vpop.f32.mrb[0].mxu0
    %v5836 = vadd.f32 %v5623, %v5835
    %v5837 = vpop.f32.mrb[0].mxu0
    %v5838 = vadd.f32 %v5619, %v5837
    %v5839 = vpop.f32.mrb[0].mxu0
    %v5840 = vadd.f32 %v5623, %v5839
    %5841 = vmatprep.mubr.bf16.mxu0 0
    %5842 = vmatmul.mubr.bf16.gmra.mrb[0].mxu0 %v5579
    %v5843 = vpop.f32.mrb[0].mxu0
    %v5844 = vadd.f32 %v5619, %v5843
    %v5845 = vpop.f32.mrb[0].mxu0
    %v5846 = vadd.f32 %v5623, %v5845
    %v5847 = vpop.f32.mrb[0].mxu0
    %v5848 = vadd.f32 %v5619, %v5847
    %v5849 = vpop.f32.mrb[0].mxu0
    %v5850 = vadd.f32 %v5623, %v5849
    %5851 = vmatprep.mubr.bf16.mxu0 0
    %5852 = vmatmul.mubr.bf16.gmra.mrb[0].mxu0 %v5580
    %v5853 = vpop.f32.mrb[0].mxu0
    %v5854 = vadd.f32 %v5619, %v5853
    %v5855 = vpop.f32.mrb[0].mxu0
    %v5856 = vadd.f32 %v5623, %v5855
    %v5857 = vpop.f32.mrb[0].mxu0
    %v5858 = vadd.f32 %v5619, %v5857
    %v5859 = vpop.f32.mrb[0].mxu0
    %v5860 = vadd.f32 %v5623, %v5859
    %5861 = vmatprep.mubr.bf16.mxu0 0
    %5862 = vmatmul.mubr.bf16.gmra.mrb[0].mxu0 %v5581
    %v5863 = vpop.f32.mrb[0].mxu0
    %v5864 = vadd.f32 %v5619, %v5863
    %v5865 = vpop.f32.mrb[0].mxu0
    %v5866 = vadd.f32 %v5623, %v5865
    %v5867 = vpop.f32.mrb[0].mxu0
    %v5868 = vadd.f32 %v5619, %v5867
    %v5869 = vpop.f32.mrb[0].mxu0
    %v5870 = vadd.f32 %v5623, %v5869
    %5871 = vdwg.mxu0
    %5872 = vmatprep.subr.bf16.mxu0 0
    %5873 = vmatpush1.bf16.msra.mxu0 %v5713
    %5874 = vmatprep.subr.bf16.mxu0 0
    %5875 = vmatpush1.bf16.msra.mxu0 %v5716
    %5876 = vmatprep.subr.bf16.mxu0 0
    %5877 = vmatpush1.bf16.msra.mxu0 %v5719
    %5878 = vmatprep.subr.bf16.mxu0 0
    %5879 = vmatpush1.bf16.msra.mxu0 %v5722
    %5880 = vmatprep.subr.bf16.mxu0 0
    %5881 = vmatpush1.bf16.msra.mxu0 %v5725
    %5882 = vmatprep.subr.bf16.mxu0 0
    %5883 = vmatpush1.bf16.msra.mxu0 %v5728
    %5884 = vmatprep.subr.bf16.mxu0 0
    %5885 = vmatpush1.bf16.msra.mxu0 %v5731
    %5886 = vmatprep.subr.bf16.mxu0 0
    %5887 = vmatpush1.bf16.msra.mxu0 %v5734
    %5888 = vmatprep.subr.bf16.mxu0 0
    %5889 = vmatpush1.bf16.msra.mxu0 0
    %5890 = vmatprep.subr.bf16.mxu0 0
    %5891 = vmatpush1.bf16.msra.mxu0 0
    %5892 = vmatprep.subr.bf16.mxu0 0
    %5893 = vmatpush1.bf16.msra.mxu0 0
    %5894 = vmatprep.subr.bf16.mxu0 0
    %5895 = vmatpush1.bf16.msra.mxu0 0
    %5896 = vmatprep.subr.bf16.mxu0 0
    %5897 = vmatpush1.bf16.msra.mxu0 0
    %5898 = vmatprep.subr.bf16.mxu0 0
    %5899 = vmatpush1.bf16.msra.mxu0 0
    %5900 = vmatprep.subr.bf16.mxu0 0
    %5901 = vmatpush1.bf16.msra.mxu0 0
    %5902 = vmatprep.subr.bf16.mxu0 0
    %5903 = vmatpush1.bf16.msra.mxu0 0
    %5904 = vmatprep.mubr.bf16.mxu0 0
    %5905 = vmatmul.mubr.bf16.gmra.mrb[0].mxu0 %v5574
    %v5906 = vpop.f32.mrb[0].mxu0
    %v5907 = vadd.f32 %v5627, %v5906
    %v5908 = vpop.f32.mrb[0].mxu0
    %v5909 = vpop.f32.mrb[0].mxu0
    %v5910 = vadd.f32 %v5627, %v5909
    %v5911 = vpop.f32.mrb[0].mxu0
    %5912 = vmatprep.mubr.bf16.mxu0 0
    %5913 = vmatmul.mubr.bf16.gmra.mrb[0].mxu0 %v5575
    %v5914 = vpop.f32.mrb[0].mxu0
    %v5915 = vadd.f32 %v5627, %v5914
    %v5916 = vpop.f32.mrb[0].mxu0
    %v5917 = vpop.f32.mrb[0].mxu0
    %v5918 = vadd.f32 %v5627, %v5917
    %v5919 = vpop.f32.mrb[0].mxu0
    %5920 = vmatprep.mubr.bf16.mxu0 0
    %5921 = vmatmul.mubr.bf16.gmra.mrb[0].mxu0 %v5576
    %v5922 = vpop.f32.mrb[0].mxu0
    %v5923 = vadd.f32 %v5627, %v5922
    %v5924 = vpop.f32.mrb[0].mxu0
    %v5925 = vpop.f32.mrb[0].mxu0
    %v5926 = vadd.f32 %v5627, %v5925
    %v5927 = vpop.f32.mrb[0].mxu0
    %5928 = vmatprep.mubr.bf16.mxu0 0
    %5929 = vmatmul.mubr.bf16.gmra.mrb[0].mxu0 %v5577
    %v5930 = vpop.f32.mrb[0].mxu0
    %v5931 = vadd.f32 %v5627, %v5930
    %v5932 = vpop.f32.mrb[0].mxu0
    %v5933 = vpop.f32.mrb[0].mxu0
    %v5934 = vadd.f32 %v5627, %v5933
    %v5935 = vpop.f32.mrb[0].mxu0
    %5936 = vmatprep.mubr.bf16.mxu0 0
    %5937 = vmatmul.mubr.bf16.gmra.mrb[0].mxu0 %v5578
    %v5938 = vpop.f32.mrb[0].mxu0
    %v5939 = vadd.f32 %v5627, %v5938
    %v5940 = vpop.f32.mrb[0].mxu0
    %v5941 = vpop.f32.mrb[0].mxu0
    %v5942 = vadd.f32 %v5627, %v5941
    %v5943 = vpop.f32.mrb[0].mxu0
    %5944 = vmatprep.mubr.bf16.mxu0 0
    %5945 = vmatmul.mubr.bf16.gmra.mrb[0].mxu0 %v5579
    %v5946 = vpop.f32.mrb[0].mxu0
    %v5947 = vadd.f32 %v5627, %v5946
    %v5948 = vpop.f32.mrb[0].mxu0
    %v5949 = vpop.f32.mrb[0].mxu0
    %v5950 = vadd.f32 %v5627, %v5949
    %v5951 = vpop.f32.mrb[0].mxu0
    %5952 = vmatprep.mubr.bf16.mxu0 0
    %5953 = vmatmul.mubr.bf16.gmra.mrb[0].mxu0 %v5580
    %v5954 = vpop.f32.mrb[0].mxu0
    %v5955 = vadd.f32 %v5627, %v5954
    %v5956 = vpop.f32.mrb[0].mxu0
    %v5957 = vpop.f32.mrb[0].mxu0
    %v5958 = vadd.f32 %v5627, %v5957
    %v5959 = vpop.f32.mrb[0].mxu0
    %5960 = vmatprep.mubr.bf16.mxu0 0
    %5961 = vmatmul.mubr.bf16.gmra.mrb[0].mxu0 %v5581
    %v5962 = vpop.f32.mrb[0].mxu0
    %v5963 = vadd.f32 %v5627, %v5962
    %v5964 = vpop.f32.mrb[0].mxu0
    %v5965 = vpop.f32.mrb[0].mxu0
    %v5966 = vadd.f32 %v5627, %v5965
    %v5967 = vpop.f32.mrb[0].mxu0
    %5968 = vdwg.mxu0
    %v5969 = vxor.u32 %v5794, 2147483648
    %v5970 = vxor.u32 %v5796, 2147483648
    %v5971 = vxor.u32 %v5907, 2147483648
    %v5972 = vxor.u32 %v5798, 2147483648
    %v5973 = vxor.u32 %v5800, 2147483648
    %v5974 = vxor.u32 %v5910, 2147483648
    %v5975 = vxor.u32 %v5804, 2147483648
    %v5976 = vxor.u32 %v5806, 2147483648
    %v5977 = vxor.u32 %v5915, 2147483648
    %v5978 = vxor.u32 %v5808, 2147483648
    %v5979 = vxor.u32 %v5810, 2147483648
    %v5980 = vxor.u32 %v5918, 2147483648
    %v5981 = vxor.u32 %v5814, 2147483648
    %v5982 = vxor.u32 %v5816, 2147483648
    %v5983 = vxor.u32 %v5923, 2147483648
    %v5984 = vxor.u32 %v5818, 2147483648
    %v5985 = vxor.u32 %v5820, 2147483648
    %v5986 = vxor.u32 %v5926, 2147483648
    %v5987 = vxor.u32 %v5824, 2147483648
    %v5988 = vxor.u32 %v5826, 2147483648
    %v5989 = vxor.u32 %v5931, 2147483648
    %v5990 = vxor.u32 %v5828, 2147483648
    %v5991 = vxor.u32 %v5830, 2147483648
    %v5992 = vxor.u32 %v5934, 2147483648
    %v5993 = vxor.u32 %v5834, 2147483648
    %v5994 = vxor.u32 %v5836, 2147483648
    %v5995 = vxor.u32 %v5939, 2147483648
    %v5996 = vxor.u32 %v5838, 2147483648
    %v5997 = vxor.u32 %v5840, 2147483648
    %v5998 = vxor.u32 %v5942, 2147483648
    %v5999 = vxor.u32 %v5844, 2147483648
    %v6000 = vxor.u32 %v5846, 2147483648
    %v6001 = vxor.u32 %v5947, 2147483648
    %v6002 = vxor.u32 %v5848, 2147483648
    %v6003 = vxor.u32 %v5850, 2147483648
    %v6004 = vxor.u32 %v5950, 2147483648
    %v6005 = vxor.u32 %v5854, 2147483648
    %v6006 = vxor.u32 %v5856, 2147483648
    %v6007 = vxor.u32 %v5955, 2147483648
    %v6008 = vxor.u32 %v5858, 2147483648
    %v6009 = vxor.u32 %v5860, 2147483648
    %v6010 = vxor.u32 %v5958, 2147483648
    %v6011 = vxor.u32 %v5864, 2147483648
    %v6012 = vxor.u32 %v5866, 2147483648
    %v6013 = vxor.u32 %v5963, 2147483648
    %v6014 = vxor.u32 %v5868, 2147483648
    %v6015 = vxor.u32 %v5870, 2147483648
    %v6016 = vxor.u32 %v5966, 2147483648
    %v6017 = vmul.f32 %v5969, 1.442695
    %v6018 = vpow.pop %v6017
    %v6019 = vmul.f32 %v5970, 1.442695
    %v6020 = vpow.pop %v6019
    %v6021 = vmul.f32 %v5971, 1.442695
    %v6022 = vpow.pop %v6021
    %v6023 = vmul.f32 %v5972, 1.442695
    %v6024 = vpow.pop %v6023
    %v6025 = vmul.f32 %v5973, 1.442695
    %v6026 = vpow.pop %v6025
    %v6027 = vmul.f32 %v5974, 1.442695
    %v6028 = vpow.pop %v6027
    %v6029 = vmul.f32 %v5975, 1.442695
    %v6030 = vpow.pop %v6029
    %v6031 = vmul.f32 %v5976, 1.442695
    %v6032 = vpow.pop %v6031
    %v6033 = vmul.f32 %v5977, 1.442695
    %v6034 = vpow.pop %v6033
    %v6035 = vmul.f32 %v5978, 1.442695
    %v6036 = vpow.pop %v6035
    %v6037 = vmul.f32 %v5979, 1.442695
    %v6038 = vpow.pop %v6037
    %v6039 = vmul.f32 %v5980, 1.442695
    %v6040 = vpow.pop %v6039
    %v6041 = vmul.f32 %v5981, 1.442695
    %v6042 = vpow.pop %v6041
    %v6043 = vmul.f32 %v5982, 1.442695
    %v6044 = vpow.pop %v6043
    %v6045 = vmul.f32 %v5983, 1.442695
    %v6046 = vpow.pop %v6045
    %v6047 = vmul.f32 %v5984, 1.442695
    %v6048 = vpow.pop %v6047
    %v6049 = vmul.f32 %v5985, 1.442695
    %v6050 = vpow.pop %v6049
    %v6051 = vmul.f32 %v5986, 1.442695
    %v6052 = vpow.pop %v6051
    %v6053 = vmul.f32 %v5987, 1.442695
    %v6054 = vpow.pop %v6053
    %v6055 = vmul.f32 %v5988, 1.442695
    %v6056 = vpow.pop %v6055
    %v6057 = vmul.f32 %v5989, 1.442695
    %v6058 = vpow.pop %v6057
    %v6059 = vmul.f32 %v5990, 1.442695
    %v6060 = vpow.pop %v6059
    %v6061 = vmul.f32 %v5991, 1.442695
    %v6062 = vpow.pop %v6061
    %v6063 = vmul.f32 %v5992, 1.442695
    %v6064 = vpow.pop %v6063
    %v6065 = vmul.f32 %v5993, 1.442695
    %v6066 = vpow.pop %v6065
    %v6067 = vmul.f32 %v5994, 1.442695
    %v6068 = vpow.pop %v6067
    %v6069 = vmul.f32 %v5995, 1.442695
    %v6070 = vpow.pop %v6069
    %v6071 = vmul.f32 %v5996, 1.442695
    %v6072 = vpow.pop %v6071
    %v6073 = vmul.f32 %v5997, 1.442695
    %v6074 = vpow.pop %v6073
    %v6075 = vmul.f32 %v5998, 1.442695
    %v6076 = vpow.pop %v6075
    %v6077 = vmul.f32 %v5999, 1.442695
    %v6078 = vpow.pop %v6077
    %v6079 = vmul.f32 %v6000, 1.442695
    %v6080 = vpow.pop %v6079
    %v6081 = vmul.f32 %v6001, 1.442695
    %v6082 = vpow.pop %v6081
    %v6083 = vmul.f32 %v6002, 1.442695
    %v6084 = vpow.pop %v6083
    %v6085 = vmul.f32 %v6003, 1.442695
    %v6086 = vpow.pop %v6085
    %v6087 = vmul.f32 %v6004, 1.442695
    %v6088 = vpow.pop %v6087
    %v6089 = vmul.f32 %v6005, 1.442695
    %v6090 = vpow.pop %v6089
    %v6091 = vmul.f32 %v6006, 1.442695
    %v6092 = vpow.pop %v6091
    %v6093 = vmul.f32 %v6007, 1.442695
    %v6094 = vpow.pop %v6093
    %v6095 = vmul.f32 %v6008, 1.442695
    %v6096 = vpow.pop %v6095
    %v6097 = vmul.f32 %v6009, 1.442695
    %v6098 = vpow.pop %v6097
    %v6099 = vmul.f32 %v6010, 1.442695
    %v6100 = vpow.pop %v6099
    %v6101 = vmul.f32 %v6011, 1.442695
    %v6102 = vpow.pop %v6101
    %v6103 = vmul.f32 %v6012, 1.442695
    %v6104 = vpow.pop %v6103
    %v6105 = vmul.f32 %v6013, 1.442695
    %v6106 = vpow.pop %v6105
    %v6107 = vmul.f32 %v6014, 1.442695
    %v6108 = vpow.pop %v6107
    %v6109 = vmul.f32 %v6015, 1.442695
    %v6110 = vpow.pop %v6109
    %v6111 = vmul.f32 %v6016, 1.442695
    %v6112 = vpow.pop %v6111
    %v6113 = vadd.f32 %v6018, 1.0
    %v6114 = vadd.f32 %v6020, 1.0
    %v6115 = vadd.f32 %v6022, 1.0
    %v6116 = vadd.f32 %v6024, 1.0
    %v6117 = vadd.f32 %v6026, 1.0
    %v6118 = vadd.f32 %v6028, 1.0
    %v6119 = vadd.f32 %v6030, 1.0
    %v6120 = vadd.f32 %v6032, 1.0
    %v6121 = vadd.f32 %v6034, 1.0
    %v6122 = vadd.f32 %v6036, 1.0
    %v6123 = vadd.f32 %v6038, 1.0
    %v6124 = vadd.f32 %v6040, 1.0
    %v6125 = vadd.f32 %v6042, 1.0
    %v6126 = vadd.f32 %v6044, 1.0
    %v6127 = vadd.f32 %v6046, 1.0
    %v6128 = vadd.f32 %v6048, 1.0
    %v6129 = vadd.f32 %v6050, 1.0
    %v6130 = vadd.f32 %v6052, 1.0
    %v6131 = vadd.f32 %v6054, 1.0
    %v6132 = vadd.f32 %v6056, 1.0
    %v6133 = vadd.f32 %v6058, 1.0
    %v6134 = vadd.f32 %v6060, 1.0
    %v6135 = vadd.f32 %v6062, 1.0
    %v6136 = vadd.f32 %v6064, 1.0
    %v6137 = vadd.f32 %v6066, 1.0
    %v6138 = vadd.f32 %v6068, 1.0
    %v6139 = vadd.f32 %v6070, 1.0
    %v6140 = vadd.f32 %v6072, 1.0
    %v6141 = vadd.f32 %v6074, 1.0
    %v6142 = vadd.f32 %v6076, 1.0
    %v6143 = vadd.f32 %v6078, 1.0
    %v6144 = vadd.f32 %v6080, 1.0
    %v6145 = vadd.f32 %v6082, 1.0
    %v6146 = vadd.f32 %v6084, 1.0
    %v6147 = vadd.f32 %v6086, 1.0
    %v6148 = vadd.f32 %v6088, 1.0
    %v6149 = vadd.f32 %v6090, 1.0
    %v6150 = vadd.f32 %v6092, 1.0
    %v6151 = vadd.f32 %v6094, 1.0
    %v6152 = vadd.f32 %v6096, 1.0
    %v6153 = vadd.f32 %v6098, 1.0
    %v6154 = vadd.f32 %v6100, 1.0
    %v6155 = vadd.f32 %v6102, 1.0
    %v6156 = vadd.f32 %v6104, 1.0
    %v6157 = vadd.f32 %v6106, 1.0
    %v6158 = vadd.f32 %v6108, 1.0
    %v6159 = vadd.f32 %v6110, 1.0
    %v6160 = vadd.f32 %v6112, 1.0
    %v6161 = vrcp.pop %v6113
    %v6162 = vmul.f32 1.0, %v6161
    %v6163 = vrcp.pop %v6114
    %v6164 = vmul.f32 1.0, %v6163
    %v6165 = vrcp.pop %v6115
    %v6166 = vmul.f32 1.0, %v6165
    %v6167 = vrcp.pop %v6116
    %v6168 = vmul.f32 1.0, %v6167
    %v6169 = vrcp.pop %v6117
    %v6170 = vmul.f32 1.0, %v6169
    %v6171 = vrcp.pop %v6118
    %v6172 = vmul.f32 1.0, %v6171
    %v6173 = vrcp.pop %v6119
    %v6174 = vmul.f32 1.0, %v6173
    %v6175 = vrcp.pop %v6120
    %v6176 = vmul.f32 1.0, %v6175
    %v6177 = vrcp.pop %v6121
    %v6178 = vmul.f32 1.0, %v6177
    %v6179 = vrcp.pop %v6122
    %v6180 = vmul.f32 1.0, %v6179
    %v6181 = vrcp.pop %v6123
    %v6182 = vmul.f32 1.0, %v6181
    %v6183 = vrcp.pop %v6124
    %v6184 = vmul.f32 1.0, %v6183
    %v6185 = vrcp.pop %v6125
    %v6186 = vmul.f32 1.0, %v6185
    %v6187 = vrcp.pop %v6126
    %v6188 = vmul.f32 1.0, %v6187
    %v6189 = vrcp.pop %v6127
    %v6190 = vmul.f32 1.0, %v6189
    %v6191 = vrcp.pop %v6128
    %v6192 = vmul.f32 1.0, %v6191
    %v6193 = vrcp.pop %v6129
    %v6194 = vmul.f32 1.0, %v6193
    %v6195 = vrcp.pop %v6130
    %v6196 = vmul.f32 1.0, %v6195
    %v6197 = vrcp.pop %v6131
    %v6198 = vmul.f32 1.0, %v6197
    %v6199 = vrcp.pop %v6132
    %v6200 = vmul.f32 1.0, %v6199
    %v6201 = vrcp.pop %v6133
    %v6202 = vmul.f32 1.0, %v6201
    %v6203 = vrcp.pop %v6134
    %v6204 = vmul.f32 1.0, %v6203
    %v6205 = vrcp.pop %v6135
    %v6206 = vmul.f32 1.0, %v6205
    %v6207 = vrcp.pop %v6136
    %v6208 = vmul.f32 1.0, %v6207
    %v6209 = vrcp.pop %v6137
    %v6210 = vmul.f32 1.0, %v6209
    %v6211 = vrcp.pop %v6138
    %v6212 = vmul.f32 1.0, %v6211
    %v6213 = vrcp.pop %v6139
    %v6214 = vmul.f32 1.0, %v6213
    %v6215 = vrcp.pop %v6140
    %v6216 = vmul.f32 1.0, %v6215
    %v6217 = vrcp.pop %v6141
    %v6218 = vmul.f32 1.0, %v6217
    %v6219 = vrcp.pop %v6142
    %v6220 = vmul.f32 1.0, %v6219
    %v6221 = vrcp.pop %v6143
    %v6222 = vmul.f32 1.0, %v6221
    %v6223 = vrcp.pop %v6144
    %v6224 = vmul.f32 1.0, %v6223
    %v6225 = vrcp.pop %v6145
    %v6226 = vmul.f32 1.0, %v6225
    %v6227 = vrcp.pop %v6146
    %v6228 = vmul.f32 1.0, %v6227
    %v6229 = vrcp.pop %v6147
    %v6230 = vmul.f32 1.0, %v6229
    %v6231 = vrcp.pop %v6148
    %v6232 = vmul.f32 1.0, %v6231
    %v6233 = vrcp.pop %v6149
    %v6234 = vmul.f32 1.0, %v6233
    %v6235 = vrcp.pop %v6150
    %v6236 = vmul.f32 1.0, %v6235
    %v6237 = vrcp.pop %v6151
    %v6238 = vmul.f32 1.0, %v6237
    %v6239 = vrcp.pop %v6152
    %v6240 = vmul.f32 1.0, %v6239
    %v6241 = vrcp.pop %v6153
    %v6242 = vmul.f32 1.0, %v6241
    %v6243 = vrcp.pop %v6154
    %v6244 = vmul.f32 1.0, %v6243
    %v6245 = vrcp.pop %v6155
    %v6246 = vmul.f32 1.0, %v6245
    %v6247 = vrcp.pop %v6156
    %v6248 = vmul.f32 1.0, %v6247
    %v6249 = vrcp.pop %v6157
    %v6250 = vmul.f32 1.0, %v6249
    %v6251 = vrcp.pop %v6158
    %v6252 = vmul.f32 1.0, %v6251
    %v6253 = vrcp.pop %v6159
    %v6254 = vmul.f32 1.0, %v6253
    %v6255 = vrcp.pop %v6160
    %v6256 = vmul.f32 1.0, %v6255
    %6257 = vst [vmem:[%s12] sm:$0xff] %v6162
    %6258 = vst [vmem:[%s12 + $0x8] sm:$0xff] %v6164
    %6259 = vst [vmem:[%s12 + $0x10] sm:$0xff] %v6166
    %6260 = vst [vmem:[%s12 + $0x18] sm:$0xff] %v6168
    %6261 = vst [vmem:[%s12 + $0x20] sm:$0xff] %v6170
    %6262 = vst [vmem:[%s12 + $0x28] sm:$0xff] %v6172
    %6263 = vst [vmem:[%s12 + $0x30] sm:$0xff] %v6174
    %6264 = vst [vmem:[%s12 + $0x38] sm:$0xff] %v6176
    %6265 = vst [vmem:[%s12 + $0x40] sm:$0xff] %v6178
    %6266 = vst [vmem:[%s12 + $0x48] sm:$0xff] %v6180
    %6267 = vst [vmem:[%s12 + $0x50] sm:$0xff] %v6182
    %6268 = vst [vmem:[%s12 + $0x58] sm:$0xff] %v6184
    %6269 = vst [vmem:[%s12 + $0x60] sm:$0xff] %v6186
    %6270 = vst [vmem:[%s12 + $0x68] sm:$0xff] %v6188
    %6271 = vst [vmem:[%s12 + $0x70] sm:$0xff] %v6190
    %6272 = vst [vmem:[%s12 + $0x78] sm:$0xff] %v6192
    %6273 = vst [vmem:[%s12 + $0x80] sm:$0xff] %v6194
    %6274 = vst [vmem:[%s12 + $0x88] sm:$0xff] %v6196
    %6275 = vst [vmem:[%s12 + $0x90] sm:$0xff] %v6198
    %6276 = vst [vmem:[%s12 + $0x98] sm:$0xff] %v6200
    %6277 = vst [vmem:[%s12 + $0xa0] sm:$0xff] %v6202
    %6278 = vst [vmem:[%s12 + $0xa8] sm:$0xff] %v6204
    %6279 = vst [vmem:[%s12 + $0xb0] sm:$0xff] %v6206
    %6280 = vst [vmem:[%s12 + $0xb8] sm:$0xff] %v6208
    %6281 = vst [vmem:[%s12 + $0xc0] sm:$0xff] %v6210
    %6282 = vst [vmem:[%s12 + $0xc8] sm:$0xff] %v6212
    %6283 = vst [vmem:[%s12 + $0xd0] sm:$0xff] %v6214
    %6284 = vst [vmem:[%s12 + $0xd8] sm:$0xff] %v6216
    %6285 = vst [vmem:[%s12 + $0xe0] sm:$0xff] %v6218
    %6286 = vst [vmem:[%s12 + $0xe8] sm:$0xff] %v6220
    %6287 = vst [vmem:[%s12 + $0xf0] sm:$0xff] %v6222
    %6288 = vst [vmem:[%s12 + $0xf8] sm:$0xff] %v6224
    %6289 = vst [vmem:[%s12 + $0x100] sm:$0xff] %v6226
    %6290 = vst [vmem:[%s12 + $0x108] sm:$0xff] %v6228
    %6291 = vst [vmem:[%s12 + $0x110] sm:$0xff] %v6230
    %6292 = vst [vmem:[%s12 + $0x118] sm:$0xff] %v6232
    %6293 = vst [vmem:[%s12 + $0x120] sm:$0xff] %v6234
    %6294 = vst [vmem:[%s12 + $0x128] sm:$0xff] %v6236
    %6295 = vst [vmem:[%s12 + $0x130] sm:$0xff] %v6238
    %6296 = vst [vmem:[%s12 + $0x138] sm:$0xff] %v6240
    %6297 = vst [vmem:[%s12 + $0x140] sm:$0xff] %v6242
    %6298 = vst [vmem:[%s12 + $0x148] sm:$0xff] %v6244
    %6299 = vst [vmem:[%s12 + $0x150] sm:$0xff] %v6246
    %6300 = vst [vmem:[%s12 + $0x158] sm:$0xff] %v6248
    %6301 = vst [vmem:[%s12 + $0x160] sm:$0xff] %v6250
    %6302 = vst [vmem:[%s12 + $0x168] sm:$0xff] %v6252
    %6303 = vst [vmem:[%s12 + $0x170] sm:$0xff] %v6254
    %6304 = vst [vmem:[%s12 + $0x178] sm:$0xff] %v6256
    %6305 = vst [vmem:[#allocation12] sm:$0xff] %v5447
    %6306 = vst [vmem:[#allocation13] sm:$0xff] %v5445
    %6307 = vst [vmem:[#allocation15] sm:$0xff] %v5555
    %6308 = vst [vmem:[#allocation16] sm:$0xff] %v5553
    // Predicated region
    $region66: #{seperation_block_forward.1} parent=1 // pred_check
      _
    $region67: #{seperation_block_forward.1} parent=1 // pred_check_branch
      %6310 = sbr.rel (0) target = $region69
    $region68: #{seperation_block_forward.1} parent=1 // pred_region
      _
    $region69: #{seperation_block_forward.1} parent=1 // pred_fallthru
      _
    // Predicated region
    $region70: #{seperation_block_forward.1} parent=1 // pred_check
      _
    $region71: #{seperation_block_forward.1} parent=1 // pred_check_branch
      %6312 = sbr.rel (0) target = $region73
    $region72: #{seperation_block_forward.1} parent=1 // pred_region
      %s6314 = ssub.s32 128, 128
      %6315 = vsyncadd [#allocation6], %s6314
      %s6317 = sshll.u32 [#allocation12], 4
      %s6318 = int_to_ptr.vmem [resolvable:$true] %s6317
      %6320 = dma.vmem_to_hbm [thread:$0]  %s6318, 128, %s13, [#allocation6]
    $region73: #{seperation_block_forward.1} parent=1 // pred_fallthru
      _
    // Predicated region
    $region74: #{seperation_block_forward.1} parent=1 // pred_check
      _
    $region75: #{seperation_block_forward.1} parent=1 // pred_check_branch
      %6322 = sbr.rel (0) target = $region77
    $region76: #{seperation_block_forward.1} parent=1 // pred_region
      %s6324 = ssub.s32 128, 128
      %6325 = vsyncadd [#allocation14], %s6324
      %s6327 = sshll.u32 [#allocation13], 4
      %s6328 = int_to_ptr.vmem [resolvable:$true] %s6327
      %6330 = dma.vmem_to_hbm [thread:$0]  %s6328, 128, %s14, [#allocation14]
    $region77: #{seperation_block_forward.1} parent=1 // pred_fallthru
      _
    // Predicated region
    $region78: #{seperation_block_forward.1} parent=1 // pred_check
      _
    $region79: #{seperation_block_forward.1} parent=1 // pred_check_branch
      %6332 = sbr.rel (0) target = $region81
    $region80: #{seperation_block_forward.1} parent=1 // pred_region
      %s6334 = ssub.s32 128, 128
      %6335 = vsyncadd [#allocation14], %s6334
      %s6337 = sshll.u32 [#allocation15], 4
      %s6338 = int_to_ptr.vmem [resolvable:$true] %s6337
      %6340 = dma.vmem_to_hbm [thread:$0]  %s6338, 128, %s15, [#allocation14]
    $region81: #{seperation_block_forward.1} parent=1 // pred_fallthru
      _
    // Predicated region
    $region82: #{seperation_block_forward.1} parent=1 // pred_check
      _
    $region83: #{seperation_block_forward.1} parent=1 // pred_check_branch
      %6342 = sbr.rel (0) target = $region85
    $region84: #{seperation_block_forward.1} parent=1 // pred_region
      %s6344 = ssub.s32 128, 128
      %6345 = vsyncadd [#allocation17], %s6344
      %s6347 = sshll.u32 [#allocation16], 4
      %s6348 = int_to_ptr.vmem [resolvable:$true] %s6347
      %6350 = dma.vmem_to_hbm [thread:$0]  %s6348, 128, %s16, [#allocation17]
    $region85: #{seperation_block_forward.1} parent=1 // pred_fallthru
      _
    // Predicated region
    $region86: #{seperation_block_forward.1} parent=1 // pred_check
      _
    $region87: #{seperation_block_forward.1} parent=1 // pred_check_branch
      %6352 = sbr.rel (0) target = $region89
    $region88: #{seperation_block_forward.1} parent=1 // pred_region
      _
    $region89: #{seperation_block_forward.1} parent=1 // pred_fallthru
      _
    // Predicated region
    $region90: #{seperation_block_forward.1} parent=1 // pred_check
      _
    $region91: #{seperation_block_forward.1} parent=1 // pred_check_branch
      %6354 = sbr.rel (0) target = $region93
    $region92: #{seperation_block_forward.1} parent=1 // pred_region
      %6355 = dma.done [#allocation6], 128
    $region93: #{seperation_block_forward.1} parent=1 // pred_fallthru
      _
    // Predicated region
    $region94: #{seperation_block_forward.1} parent=1 // pred_check
      _
    $region95: #{seperation_block_forward.1} parent=1 // pred_check_branch
      %6357 = sbr.rel (0) target = $region97
    $region96: #{seperation_block_forward.1} parent=1 // pred_region
      %6358 = dma.done [#allocation14], 128
    $region97: #{seperation_block_forward.1} parent=1 // pred_fallthru
      _
    // Predicated region
    $region98: #{seperation_block_forward.1} parent=1 // pred_check
      _
    $region99: #{seperation_block_forward.1} parent=1 // pred_check_branch
      %6360 = sbr.rel (0) target = $region101
    $region100: #{seperation_block_forward.1} parent=1 // pred_region
      %6361 = dma.done [#allocation14], 128
    $region101: #{seperation_block_forward.1} parent=1 // pred_fallthru
      _
    // Predicated region
    $region102: #{seperation_block_forward.1} parent=1 // pred_check
      _
    $region103: #{seperation_block_forward.1} parent=1 // pred_check_branch
      %6363 = sbr.rel (0) target = $region105
    $region104: #{seperation_block_forward.1} parent=1 // pred_region
      %6364 = dma.done [#allocation17], 128
    $region105: #{seperation_block_forward.1} parent=1 // pred_fallthru
      _
    %6365 = vsyncpa [#allocation5], 1
    %6366 = vsyncpa [#allocation8], 1
    %6367 = vsyncpa [#allocation11], 1
    %6368 = vsyncpa [#allocation6], 1
    %6369 = vsyncpa [#allocation14], 1
    %6370 = vsyncpa [#allocation17], 1

</llo_original>
